<compile_context>
chip_gen: v6e
topology: v6e:2x2x1
jax: 0.10.0
libtpu: 0.0.40
codegen_flags: <defaults>
</compile_context>

<pallas_src>
import functools

import jax
import jax.numpy as jnp
from jax.experimental import pallas as pl
from jax.experimental.pallas import tpu as pltpu

C_IN = 2048      # fixed by the module
C_OUT = 1024     # fixed by the module (Linear(2048, 1024))
EPS = 1e-5       # BatchNorm1d default eps


# ---------------- Pallas kernel ----------------

def avgmax_fc_kernel(x_ref, w_ref, b_ref, g_ref, beta_ref, oa_ref, om_ref):
    # x_ref: (B, HW, C_IN) f32, C lane-dense; same block for every grid step.
    x = x_ref[...]
    avg = jnp.mean(x, axis=1)          # (B, C_IN)  sublane reduce
    mx = jnp.max(x, axis=1)            # (B, C_IN)

    w = w_ref[...]                     # (C_IN, n_tile), bf16 (or f32)
    b = b_ref[...]                     # (1, n_tile)
    za = jnp.dot(avg.astype(w.dtype), w, preferred_element_type=jnp.float32) + b
    zm = jnp.dot(mx.astype(w.dtype), w, preferred_element_type=jnp.float32) + b

    g = g_ref[...]
    beta = beta_ref[...]

    def bn_relu(z):
        # BatchNorm1d, training mode: biased batch stats over the (full) batch axis.
        mu = jnp.mean(z, axis=0, keepdims=True)
        var = jnp.mean((z - mu) ** 2, axis=0, keepdims=True)
        zn = (z - mu) * jax.lax.rsqrt(var + EPS)
        return jnp.maximum(zn * g + beta, 0.0)

    oa_ref[...] = bn_relu(za)          # shared fc applied to avg branch
    om_ref[...] = bn_relu(zm)          # shared fc applied to max branch


# ---------------- wrapper ----------------

@functools.partial(jax.jit, static_argnames=("n_tile",))
def avgmax_share_cat_forward(x, w_t, b, gamma, beta, *, n_tile=512):
    """x: (B, 2048, H, W) NCHW.  w_t: (2048, 1024) = Linear weight transposed (in, out)."""
    B, Cin, H, W = x.shape
    Cout = w_t.shape[1]
    HW = H * W

    # NCHW -> (B, HW, C): C on the lane axis => lane-dense DMA, cheap sublane reduce.
    x3 = jnp.transpose(x, (0, 2, 3, 1)).reshape(B, HW, Cin)

    oa, om = pl.pallas_call(
        avgmax_fc_kernel,
        out_shape=(jax.ShapeDtypeStruct((B, Cout), jnp.float32),
                   jax.ShapeDtypeStruct((B, Cout), jnp.float32)),
        grid=(Cout // n_tile,),
        in_specs=[
            pl.BlockSpec((B, HW, Cin), lambda j: (0, 0, 0)),   # constant block: fetched once per core
            pl.BlockSpec((Cin, n_tile), lambda j: (0, j)),     # weight tile (dominant HBM stream)
            pl.BlockSpec((1, n_tile), lambda j: (0, j)),       # bias
            pl.BlockSpec((1, n_tile), lambda j: (0, j)),       # BN gamma
            pl.BlockSpec((1, n_tile), lambda j: (0, j)),       # BN beta
        ],
        out_specs=(pl.BlockSpec((B, n_tile), lambda j: (0, j)),
                   pl.BlockSpec((B, n_tile), lambda j: (0, j))),
        compiler_params=pltpu.CompilerParams(
            dimension_semantics=("parallel",)),                # grid=(2,): one step per TC on v7x
    )(x3, w_t, b.reshape(1, Cout), gamma.reshape(1, Cout), beta.reshape(1, Cout))

    return jnp.concatenate([oa, om], axis=1)                   # (B, 2*C_OUT)


# ---------------- pure-JAX reference (for correctness check) ----------------

def reference(x, w_t, b, gamma, beta, *, compute_dtype=jnp.float32):
    avg = jnp.mean(x, axis=(2, 3))
    mx = jnp.max(x, axis=(2, 3))
    w = w_t.astype(compute_dtype)

    def fc_bn_relu(v):
        z = jnp.dot(v.astype(compute_dtype), w,
                    preferred_element_type=jnp.float32) + b
        mu = jnp.mean(z, axis=0, keepdims=True)
        var = jnp.mean((z - mu) ** 2, axis=0, keepdims=True)
        zn = (z - mu) / jnp.sqrt(var + EPS)
        return jnp.maximum(zn * gamma + beta, 0.0)

    return jnp.concatenate([fc_bn_relu(avg), fc_bn_relu(mx)], axis=1)


if __name__ == "__main__":
    key = jax.random.PRNGKey(0)
    kx, kw, kg = jax.random.split(key, 3)

    # Channels are fixed at 2048 by the module; small batch / spatial for the test.
    B, H, W = 8, 4, 4
    x = jax.random.normal(kx, (B, C_IN, H, W), jnp.float32)

    # Linear(2048, 1024): kaiming_normal mode='fan_out' -> std = sqrt(2/1024); bias = 0.
    # Stored transposed (in, out) so kernels compute x @ W.
    w_f32 = jax.random.normal(kw, (C_IN, C_OUT), jnp.float32) * jnp.sqrt(2.0 / C_OUT)
    w_bf16 = w_f32.astype(jnp.bfloat16)   # stored parameter in bf16: halves the dominant HBM stream
    bfc = jnp.zeros((C_OUT,), jnp.float32)
    # BatchNorm1d: weight ~ N(1, 0.02), bias = 0.
    gamma = 1.0 + 0.02 * jax.random.normal(kg, (C_OUT,), jnp.float32)
    beta = jnp.zeros((C_OUT,), jnp.float32)

    out = avgmax_share_cat_forward(x, w_bf16, bfc, gamma, beta)
    jax.block_until_ready(out)
    assert out.shape == (B, 2 * C_OUT) and out.dtype == jnp.float32

    # Tight structural check: reference with the same bf16 weight/activation
    # quantization as the kernel (only accumulation order differs).
    ref_q = reference(x, w_bf16, bfc, gamma, beta, compute_dtype=jnp.bfloat16)
    assert jnp.allclose(out, ref_q, atol=2e-3, rtol=2e-3), \
        "Pallas output mismatch vs bf16-consistent reference"

    # Loose fidelity check vs exact f32 PyTorch math (bf16 weight storage is an
    # intentional compression; this only guards against gross/structural errors).
    ref_f = reference(x, w_f32, bfc, gamma, beta)
    assert float(jnp.max(jnp.abs(out - ref_f))) < 0.5, "gross mismatch vs f32 reference"

    print("KERNEL_OK")
</pallas_src>

<mosaic_0001>
module attributes {stable_mosaic.version = 11 : i64} {
  func.func @avgmax_fc_kernel(%arg0: i32, %arg1: memref<8x16x2048xf32, #tpu.memory_space<vmem>>, %arg2: memref<2048x512xbf16, #tpu.memory_space<vmem>>, %arg3: memref<1x512xf32, #tpu.memory_space<vmem>>, %arg4: memref<1x512xf32, #tpu.memory_space<vmem>>, %arg5: memref<1x512xf32, #tpu.memory_space<vmem>>, %arg6: memref<8x512xf32, #tpu.memory_space<vmem>>, %arg7: memref<8x512xf32, #tpu.memory_space<vmem>>) attributes {dimension_semantics = [#tpu.dimension_semantics<parallel>], iteration_bounds = array<i64: 2>, scalar_prefetch = 0 : i64, scratch_operands = 0 : i64, tpu.core_type = #tpu.core_type<tc>, window_params = [{pipeline_mode = #tpu.pipeline_mode<synchronous>, transform_indices = @transform_0, window_bounds = array<i64: 8, 16, 2048>}, {transform_indices = @transform_1, window_bounds = array<i64: 2048, 512>}, {transform_indices = @transform_2, window_bounds = array<i64: 1, 512>}, {transform_indices = @transform_3, window_bounds = array<i64: 1, 512>}, {transform_indices = @transform_4, window_bounds = array<i64: 1, 512>}, {transform_indices = @transform_5, window_bounds = array<i64: 8, 512>}, {transform_indices = @transform_6, window_bounds = array<i64: 8, 512>}]} {
    %c0 = arith.constant 0 : index
    %c0_0 = arith.constant 0 : index
    %c0_1 = arith.constant 0 : index
    %0 = vector.load %arg1[%c0, %c0_0, %c0_1] : memref<8x16x2048xf32, #tpu.memory_space<vmem>>, vector<8x16x2048xf32>
    %cst = arith.constant dense<0.000000e+00> : vector<8x2048xf32>
    %1 = vector.multi_reduction <add>, %0, %cst [1] : vector<8x16x2048xf32> to vector<8x2048xf32>
    %cst_2 = arith.constant 1.600000e+01 : f32
    %2 = vector.broadcast %cst_2 : f32 to vector<8x2048xf32>
    %3 = arith.divf %1, %2 : vector<8x2048xf32>
    %cst_3 = arith.constant dense<0xFF800000> : vector<8x2048xf32>
    %4 = vector.multi_reduction <maximumf>, %0, %cst_3 [1] : vector<8x16x2048xf32> to vector<8x2048xf32>
    %c0_4 = arith.constant 0 : index
    %c0_5 = arith.constant 0 : index
    %5 = vector.load %arg2[%c0_4, %c0_5] : memref<2048x512xbf16, #tpu.memory_space<vmem>>, vector<2048x512xbf16>
    %c0_6 = arith.constant 0 : index
    %c0_7 = arith.constant 0 : index
    %6 = vector.load %arg3[%c0_6, %c0_7] : memref<1x512xf32, #tpu.memory_space<vmem>>, vector<1x512xf32>
    %7 = arith.truncf %3 : vector<8x2048xf32> to vector<8x2048xbf16>
    %cst_8 = arith.constant dense<0.000000e+00> : vector<8x512xf32>
    %8 = tpu.matmul %7, %5, %cst_8 {dimension_numbers = #tpu.dot_dimension_numbers<[1], [0], [0], [1], [0, 0, 1, 1], [], []>} : vector<8x2048xbf16>, vector<2048x512xbf16>, vector<8x512xf32> -> vector<8x512xf32>
    %9 = vector.broadcast %6 : vector<1x512xf32> to vector<8x512xf32>
    %10 = arith.addf %8, %9 : vector<8x512xf32>
    %11 = arith.truncf %4 : vector<8x2048xf32> to vector<8x2048xbf16>
    %cst_9 = arith.constant dense<0.000000e+00> : vector<8x512xf32>
    %12 = tpu.matmul %11, %5, %cst_9 {dimension_numbers = #tpu.dot_dimension_numbers<[1], [0], [0], [1], [0, 0, 1, 1], [], []>} : vector<8x2048xbf16>, vector<2048x512xbf16>, vector<8x512xf32> -> vector<8x512xf32>
    %13 = vector.broadcast %6 : vector<1x512xf32> to vector<8x512xf32>
    %14 = arith.addf %12, %13 : vector<8x512xf32>
    %c0_10 = arith.constant 0 : index
    %c0_11 = arith.constant 0 : index
    %15 = vector.load %arg4[%c0_10, %c0_11] : memref<1x512xf32, #tpu.memory_space<vmem>>, vector<1x512xf32>
    %c0_12 = arith.constant 0 : index
    %c0_13 = arith.constant 0 : index
    %16 = vector.load %arg5[%c0_12, %c0_13] : memref<1x512xf32, #tpu.memory_space<vmem>>, vector<1x512xf32>
    %cst_14 = arith.constant dense<0.000000e+00> : vector<512xf32>
    %17 = vector.multi_reduction <add>, %10, %cst_14 [0] : vector<8x512xf32> to vector<512xf32>
    %18 = vector.shape_cast %17 : vector<512xf32> to vector<1x512xf32>
    %cst_15 = arith.constant 8.000000e+00 : f32
    %19 = vector.broadcast %cst_15 : f32 to vector<1x512xf32>
    %20 = arith.divf %18, %19 : vector<1x512xf32>
    %21 = vector.broadcast %20 : vector<1x512xf32> to vector<8x512xf32>
    %22 = arith.subf %10, %21 : vector<8x512xf32>
    %23 = arith.mulf %22, %22 : vector<8x512xf32>
    %cst_16 = arith.constant dense<0.000000e+00> : vector<512xf32>
    %24 = vector.multi_reduction <add>, %23, %cst_16 [0] : vector<8x512xf32> to vector<512xf32>
    %25 = vector.shape_cast %24 : vector<512xf32> to vector<1x512xf32>
    %cst_17 = arith.constant 8.000000e+00 : f32
    %26 = vector.broadcast %cst_17 : f32 to vector<1x512xf32>
    %27 = arith.divf %25, %26 : vector<1x512xf32>
    %28 = vector.broadcast %20 : vector<1x512xf32> to vector<8x512xf32>
    %29 = arith.subf %10, %28 : vector<8x512xf32>
    %cst_18 = arith.constant 9.99999974E-6 : f32
    %30 = vector.broadcast %cst_18 : f32 to vector<1x512xf32>
    %31 = arith.addf %27, %30 : vector<1x512xf32>
    %32 = math.rsqrt %31 : vector<1x512xf32>
    %33 = vector.broadcast %32 : vector<1x512xf32> to vector<8x512xf32>
    %34 = arith.mulf %29, %33 : vector<8x512xf32>
    %35 = vector.broadcast %15 : vector<1x512xf32> to vector<8x512xf32>
    %36 = arith.mulf %34, %35 : vector<8x512xf32>
    %37 = vector.broadcast %16 : vector<1x512xf32> to vector<8x512xf32>
    %38 = arith.addf %36, %37 : vector<8x512xf32>
    %cst_19 = arith.constant 0.000000e+00 : f32
    %39 = vector.broadcast %cst_19 : f32 to vector<8x512xf32>
    %40 = arith.maximumf %38, %39 : vector<8x512xf32>
    %c0_20 = arith.constant 0 : index
    %c0_21 = arith.constant 0 : index
    %41 = vector.load %arg6[%c0_20, %c0_21] : memref<8x512xf32, #tpu.memory_space<vmem>>, vector<8x512xf32>
    tpu.vector_store %arg6[%c0_20, %c0_21], %40 {strides = array<i32>} : memref<8x512xf32, #tpu.memory_space<vmem>>, vector<8x512xf32>,
    %cst_22 = arith.constant dense<0.000000e+00> : vector<512xf32>
    %42 = vector.multi_reduction <add>, %14, %cst_22 [0] : vector<8x512xf32> to vector<512xf32>
    %43 = vector.shape_cast %42 : vector<512xf32> to vector<1x512xf32>
    %cst_23 = arith.constant 8.000000e+00 : f32
    %44 = vector.broadcast %cst_23 : f32 to vector<1x512xf32>
    %45 = arith.divf %43, %44 : vector<1x512xf32>
    %46 = vector.broadcast %45 : vector<1x512xf32> to vector<8x512xf32>
    %47 = arith.subf %14, %46 : vector<8x512xf32>
    %48 = arith.mulf %47, %47 : vector<8x512xf32>
    %cst_24 = arith.constant dense<0.000000e+00> : vector<512xf32>
    %49 = vector.multi_reduction <add>, %48, %cst_24 [0] : vector<8x512xf32> to vector<512xf32>
    %50 = vector.shape_cast %49 : vector<512xf32> to vector<1x512xf32>
    %cst_25 = arith.constant 8.000000e+00 : f32
    %51 = vector.broadcast %cst_25 : f32 to vector<1x512xf32>
    %52 = arith.divf %50, %51 : vector<1x512xf32>
    %53 = vector.broadcast %45 : vector<1x512xf32> to vector<8x512xf32>
    %54 = arith.subf %14, %53 : vector<8x512xf32>
    %cst_26 = arith.constant 9.99999974E-6 : f32
    %55 = vector.broadcast %cst_26 : f32 to vector<1x512xf32>
    %56 = arith.addf %52, %55 : vector<1x512xf32>
    %57 = math.rsqrt %56 : vector<1x512xf32>
    %58 = vector.broadcast %57 : vector<1x512xf32> to vector<8x512xf32>
    %59 = arith.mulf %54, %58 : vector<8x512xf32>
    %60 = vector.broadcast %15 : vector<1x512xf32> to vector<8x512xf32>
    %61 = arith.mulf %59, %60 : vector<8x512xf32>
    %62 = vector.broadcast %16 : vector<1x512xf32> to vector<8x512xf32>
    %63 = arith.addf %61, %62 : vector<8x512xf32>
    %cst_27 = arith.constant 0.000000e+00 : f32
    %64 = vector.broadcast %cst_27 : f32 to vector<8x512xf32>
    %65 = arith.maximumf %63, %64 : vector<8x512xf32>
    %c0_28 = arith.constant 0 : index
    %c0_29 = arith.constant 0 : index
    %66 = vector.load %arg7[%c0_28, %c0_29] : memref<8x512xf32, #tpu.memory_space<vmem>>, vector<8x512xf32>
    tpu.vector_store %arg7[%c0_28, %c0_29], %65 {strides = array<i32>} : memref<8x512xf32, #tpu.memory_space<vmem>>, vector<8x512xf32>,
    return
  }
  func.func @transform_0(%arg0: i32) -> (i32, i32, i32) {
    %c0_i32 = arith.constant 0 : i32
    %c0_i32_0 = arith.constant 0 : i32
    %c0_i32_1 = arith.constant 0 : i32
    %c0_i32_2 = arith.constant 0 : i32
    return %c0_i32, %c0_i32_0, %c0_i32_1 : i32, i32, i32
  }
  func.func @transform_1(%arg0: i32) -> (i32, i32) {
    %c0_i32 = arith.constant 0 : i32
    %c0_i32_0 = arith.constant 0 : i32
    return %c0_i32, %arg0 : i32, i32
  }
  func.func @transform_2(%arg0: i32) -> (i32, i32) {
    %c0_i32 = arith.constant 0 : i32
    %c0_i32_0 = arith.constant 0 : i32
    return %c0_i32, %arg0 : i32, i32
  }
  func.func @transform_3(%arg0: i32) -> (i32, i32) {
    %c0_i32 = arith.constant 0 : i32
    %c0_i32_0 = arith.constant 0 : i32
    return %c0_i32, %arg0 : i32, i32
  }
  func.func @transform_4(%arg0: i32) -> (i32, i32) {
    %c0_i32 = arith.constant 0 : i32
    %c0_i32_0 = arith.constant 0 : i32
    return %c0_i32, %arg0 : i32, i32
  }
  func.func @transform_5(%arg0: i32) -> (i32, i32) {
    %c0_i32 = arith.constant 0 : i32
    %c0_i32_0 = arith.constant 0 : i32
    return %c0_i32, %arg0 : i32, i32
  }
  func.func @transform_6(%arg0: i32) -> (i32, i32) {
    %c0_i32 = arith.constant 0 : i32
    %c0_i32_0 = arith.constant 0 : i32
    return %c0_i32, %arg0 : i32, i32
  }
}

</mosaic_0001>

<llo_original>
// kernel: avgmax_share_cat_forward.1
$region0: #{avgmax_share_cat_forward.1}
  #allocation0 [shape = 'u32[]', space=smem, size = 0x4, offset = 0x4, fixed_abs, tag = 'smem constant byte address 0x4 - core index']
  #allocation1 [shape = 'u32[144,128]{1,0:T(1,128)}', space=vmem, size = 0x12000, scoped, tag = 'internal scratch']
  %s0 = inlined_call_operand.vmem [shape: f32[8,16,2048], index: 0, kind: input, shape index: {}]
  %s1 = inlined_call_operand.hbm [shape: bf16[2048,1024], index: 1, kind: input, shape index: {}]
  %s2 = inlined_call_operand.hbm [shape: f32[1,1024], index: 2, kind: input, shape index: {}]
  %s3 = inlined_call_operand.hbm [shape: f32[1,1024], index: 3, kind: input, shape index: {}]
  %s4 = inlined_call_operand.hbm [shape: f32[1,1024], index: 4, kind: input, shape index: {}]
  %s5 = inlined_call_operand.vmem [shape: f32[8,1024], index: 5, kind: output, shape index: {0}]
  %s6 = inlined_call_operand.vmem [shape: f32[8,1024], index: 6, kind: output, shape index: {1}]
  %7 = xla_tuple %s5, %s6
  %s8 = sld [smem:[#allocation0]]
  $region77: #{avgmax_share_cat_forward.1} parent=0
    _
  %s10 = ssub.s32 1, %s8
  %s11 = scalar_select 0, %s10, %s8
  $region1: #{avgmax_share_cat_forward.1} parent=0
    #allocation2 [shape = 'u8[4194304]{0}', space=vmem, size = 0x400000, scoped, tag = 'input window, operand 1']
    #allocation3 [shape = 's32[2]{0}', space=sflag, size = 0x8, scoped, tag = 'scoped memory for avgmax_share_cat_forward.1']
    #allocation4 [shape = 'u8[4096]{0}', space=vmem, size = 0x1000, scoped, tag = 'input window, operand 2']
    #allocation5 [shape = 's32[2]{0}', space=sflag, size = 0x8, scoped, tag = 'scoped memory for avgmax_share_cat_forward.1']
    #allocation6 [shape = 'u8[4096]{0}', space=vmem, size = 0x1000, scoped, tag = 'input window, operand 3']
    #allocation7 [shape = 'u8[4096]{0}', space=vmem, size = 0x1000, scoped, tag = 'input window, operand 4']
    #allocation8 [shape = 's32[2]{0}', space=sflag, size = 0x8, scoped, tag = 'scoped memory for avgmax_share_cat_forward.1']
    %12 = vsyncpa [#allocation3], 0
    %s13 = scalar_lea.sflag [#allocation3], 1
    %14 = vsyncpa %s13, 0
    %15 = vsyncpa [#allocation5], 0
    %s16 = scalar_lea.sflag [#allocation5], 1
    %17 = vsyncpa %s16, 0
    %18 = vsyncpa [#allocation8], 0
    %s19 = scalar_lea.sflag [#allocation8], 1
    %20 = vsyncpa %s19, 0
    loop: start=0, step=1, limit=4
    $region2: #{avgmax_share_cat_forward.1} parent=1 // loop_pre_header
      _
    $region3: #{avgmax_share_cat_forward.1} parent=1 // loop_header
      %s22 = sphi 0, %s26
      %p23 = scmp.ge.s32.totalorder %s22, 4
      %s30 = sphi 0, %s30
      %s32 = sphi 0, %s30
      %s33 = sphi 0, %s32
      %s47 = sphi 0, %s33
      %s53 = sphi 0, %s55
      %s56 = sphi 0, %s53
      %s57 = sphi 0, %s56
      %s73 = sphi 0, %s57
      %s79 = sphi 0, %s81
      %s82 = sphi 0, %s79
      %s83 = sphi 0, %s82
      %s99 = sphi 0, %s83
      %s105 = sphi 0, %s107
      %s108 = sphi 0, %s105
      %s109 = sphi 0, %s108
      %s125 = sphi 0, %s109
      %s131 = sphi 0, %s133
      %s134 = sphi 0, %s131
      %s135 = sphi 0, %s134
      %s151 = sphi 0, %s135
      %s157 = sphi 0, %s159
      %s160 = sphi 0, %s157
      %s161 = sphi 0, %s160
      %s177 = sphi 0, %s161
      %s183 = sphi 0, %s185
      %s186 = sphi 0, %s183
      %s187 = sphi 0, %s186
      %s203 = sphi 0, %s187
    $region4: #{avgmax_share_cat_forward.1} parent=1 // loop_header_branch
      %25 = sbr.rel (%p23) target = $region8
    $region5: #{avgmax_share_cat_forward.1} parent=1 // loop_body
      %s27 = ssub.s32 %s22, 1
      %s28 = ssub.s32 %s22, 2
      %s29 = sadd.s32 %s22, 1
      %s31 = sadd.s32 %s30, 1
      %p34 = scmp.eq.s32.totalorder %s22, 1
      %p35 = scmp.ne.s32.totalorder %s30, %s32
      %p36 = scmp.eq.s32.totalorder %s22, 0
      %p37 = por %p35, %p36
      %p38 = scmp.ne.s32.totalorder %s30, %s32
      %p39 = scmp.eq.s32.totalorder %s27, 1
      %p40 = por %p38, %p39
      %p41 = scmp.ne.s32.totalorder %s32, %s33
      %p42 = scmp.eq.s32.totalorder %s27, 0
      %p43 = por %p41, %p42
      %p44 = scmp.ne.s32.totalorder %s32, %s33
      %p45 = scmp.eq.s32.totalorder %s28, 1
      %p46 = por %p44, %p45
      %p48 = scmp.ne.s32.totalorder %s33, %s47
      %p49 = scmp.eq.s32.totalorder %s28, 0
      %p50 = por %p48, %p49
      %s51 = ssub.s32 %s22, %s29
      %p52 = scmp.eq.s32.totalorder %s51, 0
      %s54 = sadd.s32 %s53, 1
      %s55 = scalar_select %p52, %s53, %s54
      %p58 = pneg %p52
      %p59 = scmp.eq.s32.totalorder %s22, 1
      %p60 = por %p58, %p59
      %p61 = scmp.ne.s32.totalorder %s53, %s56
      %p62 = scmp.eq.s32.totalorder %s22, 0
      %p63 = por %p61, %p62
      %p64 = scmp.ne.s32.totalorder %s53, %s56
      %p65 = scmp.eq.s32.totalorder %s27, 1
      %p66 = por %p64, %p65
      %p67 = scmp.ne.s32.totalorder %s56, %s57
      %p68 = scmp.eq.s32.totalorder %s27, 0
      %p69 = por %p67, %p68
      %p70 = scmp.ne.s32.totalorder %s56, %s57
      %p71 = scmp.eq.s32.totalorder %s28, 1
      %p72 = por %p70, %p71
      %p74 = scmp.ne.s32.totalorder %s57, %s73
      %p75 = scmp.eq.s32.totalorder %s28, 0
      %p76 = por %p74, %p75
      %s77 = ssub.s32 %s22, %s29
      %p78 = scmp.eq.s32.totalorder %s77, 0
      %s80 = sadd.s32 %s79, 1
      %s81 = scalar_select %p78, %s79, %s80
      %p84 = pneg %p78
      %p85 = scmp.eq.s32.totalorder %s22, 1
      %p86 = por %p84, %p85
      %p87 = scmp.ne.s32.totalorder %s79, %s82
      %p88 = scmp.eq.s32.totalorder %s22, 0
      %p89 = por %p87, %p88
      %p90 = scmp.ne.s32.totalorder %s79, %s82
      %p91 = scmp.eq.s32.totalorder %s27, 1
      %p92 = por %p90, %p91
      %p93 = scmp.ne.s32.totalorder %s82, %s83
      %p94 = scmp.eq.s32.totalorder %s27, 0
      %p95 = por %p93, %p94
      %p96 = scmp.ne.s32.totalorder %s82, %s83
      %p97 = scmp.eq.s32.totalorder %s28, 1
      %p98 = por %p96, %p97
      %p100 = scmp.ne.s32.totalorder %s83, %s99
      %p101 = scmp.eq.s32.totalorder %s28, 0
      %p102 = por %p100, %p101
      %s103 = ssub.s32 %s22, %s29
      %p104 = scmp.eq.s32.totalorder %s103, 0
      %s106 = sadd.s32 %s105, 1
      %s107 = scalar_select %p104, %s105, %s106
      %p110 = pneg %p104
      %p111 = scmp.eq.s32.totalorder %s22, 1
      %p112 = por %p110, %p111
      %p113 = scmp.ne.s32.totalorder %s105, %s108
      %p114 = scmp.eq.s32.totalorder %s22, 0
      %p115 = por %p113, %p114
      %p116 = scmp.ne.s32.totalorder %s105, %s108
      %p117 = scmp.eq.s32.totalorder %s27, 1
      %p118 = por %p116, %p117
      %p119 = scmp.ne.s32.totalorder %s108, %s109
      %p120 = scmp.eq.s32.totalorder %s27, 0
      %p121 = por %p119, %p120
      %p122 = scmp.ne.s32.totalorder %s108, %s109
      %p123 = scmp.eq.s32.totalorder %s28, 1
      %p124 = por %p122, %p123
      %p126 = scmp.ne.s32.totalorder %s109, %s125
      %p127 = scmp.eq.s32.totalorder %s28, 0
      %p128 = por %p126, %p127
      %s129 = ssub.s32 %s22, %s29
      %p130 = scmp.eq.s32.totalorder %s129, 0
      %s132 = sadd.s32 %s131, 1
      %s133 = scalar_select %p130, %s131, %s132
      %p136 = pneg %p130
      %p137 = scmp.eq.s32.totalorder %s22, 1
      %p138 = por %p136, %p137
      %p139 = scmp.ne.s32.totalorder %s131, %s134
      %p140 = scmp.eq.s32.totalorder %s22, 0
      %p141 = por %p139, %p140
      %p142 = scmp.ne.s32.totalorder %s131, %s134
      %p143 = scmp.eq.s32.totalorder %s27, 1
      %p144 = por %p142, %p143
      %p145 = scmp.ne.s32.totalorder %s134, %s135
      %p146 = scmp.eq.s32.totalorder %s27, 0
      %p147 = por %p145, %p146
      %p148 = scmp.ne.s32.totalorder %s134, %s135
      %p149 = scmp.eq.s32.totalorder %s28, 1
      %p150 = por %p148, %p149
      %p152 = scmp.ne.s32.totalorder %s135, %s151
      %p153 = scmp.eq.s32.totalorder %s28, 0
      %p154 = por %p152, %p153
      %s155 = ssub.s32 %s22, %s29
      %p156 = scmp.eq.s32.totalorder %s155, 0
      %s158 = sadd.s32 %s157, 1
      %s159 = scalar_select %p156, %s157, %s158
      %p162 = pneg %p156
      %p163 = scmp.eq.s32.totalorder %s22, 1
      %p164 = por %p162, %p163
      %p165 = scmp.ne.s32.totalorder %s157, %s160
      %p166 = scmp.eq.s32.totalorder %s22, 0
      %p167 = por %p165, %p166
      %p168 = scmp.ne.s32.totalorder %s157, %s160
      %p169 = scmp.eq.s32.totalorder %s27, 1
      %p170 = por %p168, %p169
      %p171 = scmp.ne.s32.totalorder %s160, %s161
      %p172 = scmp.eq.s32.totalorder %s27, 0
      %p173 = por %p171, %p172
      %p174 = scmp.ne.s32.totalorder %s160, %s161
      %p175 = scmp.eq.s32.totalorder %s28, 1
      %p176 = por %p174, %p175
      %p178 = scmp.ne.s32.totalorder %s161, %s177
      %p179 = scmp.eq.s32.totalorder %s28, 0
      %p180 = por %p178, %p179
      %s181 = ssub.s32 %s22, %s29
      %p182 = scmp.eq.s32.totalorder %s181, 0
      %s184 = sadd.s32 %s183, 1
      %s185 = scalar_select %p182, %s183, %s184
      %p188 = pneg %p182
      %p189 = scmp.eq.s32.totalorder %s22, 1
      %p190 = por %p188, %p189
      %p191 = scmp.ne.s32.totalorder %s183, %s186
      %p192 = scmp.eq.s32.totalorder %s22, 0
      %p193 = por %p191, %p192
      %p194 = scmp.ne.s32.totalorder %s183, %s186
      %p195 = scmp.eq.s32.totalorder %s27, 1
      %p196 = por %p194, %p195
      %p197 = scmp.ne.s32.totalorder %s186, %s187
      %p198 = scmp.eq.s32.totalorder %s27, 0
      %p199 = por %p197, %p198
      %p200 = scmp.ne.s32.totalorder %s186, %s187
      %p201 = scmp.eq.s32.totalorder %s28, 1
      %p202 = por %p200, %p201
      %p204 = scmp.ne.s32.totalorder %s187, %s203
      %p205 = scmp.eq.s32.totalorder %s28, 0
      %p206 = por %p204, %p205
      %p207 = scmp.le.s32.totalorder 1, %s22
      %p208 = scmp.lt.s32.totalorder %s22, 3
      %p209 = pnand %p207, %p208
      %p210 = pneg %p209
      // Predicated region
      $region9: #{avgmax_share_cat_forward.1} parent=5 // pred_check
        _
      $region10: #{avgmax_share_cat_forward.1} parent=5 // pred_check_branch
        %212 = sbr.rel (%p209) target = $region12
      $region11: #{avgmax_share_cat_forward.1} parent=5 // pred_region
        %s213 = ssub.s32 %s22, 1
        // Predicated region
        $region13: #{avgmax_share_cat_forward.1} parent=11 // pred_check
          %p214 = pneg %p43
        $region14: #{avgmax_share_cat_forward.1} parent=11 // pred_check_branch
          %216 = sbr.rel (%p214) target = $region16
        $region15: #{avgmax_share_cat_forward.1} parent=11 // pred_region
          _
        $region16: #{avgmax_share_cat_forward.1} parent=11 // pred_fallthru
          _
      $region12: #{avgmax_share_cat_forward.1} parent=5 // pred_fallthru
        _
      %p217 = scmp.lt.s32.totalorder %s22, 2
      // Predicated region
      $region17: #{avgmax_share_cat_forward.1} parent=5 // pred_check
        %p218 = pneg %p217
      $region18: #{avgmax_share_cat_forward.1} parent=5 // pred_check_branch
        %220 = sbr.rel (%p218) target = $region20
      $region19: #{avgmax_share_cat_forward.1} parent=5 // pred_region
        // Predicated region
        $region21: #{avgmax_share_cat_forward.1} parent=19 // pred_check
          %p221 = pneg %p63
        $region22: #{avgmax_share_cat_forward.1} parent=19 // pred_check_branch
          %223 = sbr.rel (%p221) target = $region24
        $region23: #{avgmax_share_cat_forward.1} parent=19 // pred_region
          %s224 = sand.u32 %s53, 1
          %s225 = scalar_lea.sflag [#allocation3], %s224
          %s226 = sand.u32 %s53, 1
          %s227 = smul.addr %s226, 4096
          %s228 = scalar_lea.vmem [#allocation2], %s227
          %s229 = smul.u32 4, %s22
          %s231 = ssub.s32 65536, 65536
          %232 = vsyncadd %s225, %s231
          %s233 = smul.addr %s229, 64
          %s234 = scalar_lea.hbm %s1, %s233
          %s235 = sshll.u32 %s228, 4
          %s236 = int_to_ptr.vmem [resolvable:$true] %s235
          %241 = dma.hbm_to_vmem [thread:$0]  %s234, 65536, %s236, %s225, 512, 256, 16
        $region24: #{avgmax_share_cat_forward.1} parent=19 // pred_fallthru
          _
        // Predicated region
        $region25: #{avgmax_share_cat_forward.1} parent=19 // pred_check
          %p242 = pneg %p89
        $region26: #{avgmax_share_cat_forward.1} parent=19 // pred_check_branch
          %244 = sbr.rel (%p242) target = $region28
        $region27: #{avgmax_share_cat_forward.1} parent=19 // pred_region
          %s245 = sand.u32 %s22, 1
          %s246 = scalar_lea.sflag [#allocation5], %s245
          %s247 = sand.u32 %s79, 1
          %s248 = smul.addr %s247, 4
          %s249 = scalar_lea.vmem [#allocation4], %s248
          %s250 = smul.u32 4, %s22
          %s252 = ssub.s32 64, 64
          %253 = vsyncadd %s246, %s252
          %s254 = smul.addr %s250, 16
          %s255 = scalar_lea.hbm %s2, %s254
          %s257 = sshll.u32 %s249, 4
          %s258 = int_to_ptr.vmem [resolvable:$true] %s257
          %260 = dma.hbm_to_vmem [thread:$0]  %s255, 64, %s258, %s246
        $region28: #{avgmax_share_cat_forward.1} parent=19 // pred_fallthru
          _
        // Predicated region
        $region29: #{avgmax_share_cat_forward.1} parent=19 // pred_check
          %p261 = pneg %p115
        $region30: #{avgmax_share_cat_forward.1} parent=19 // pred_check_branch
          %263 = sbr.rel (%p261) target = $region32
        $region31: #{avgmax_share_cat_forward.1} parent=19 // pred_region
          %s264 = sand.u32 %s22, 1
          %s265 = scalar_lea.sflag [#allocation5], %s264
          %s266 = sand.u32 %s105, 1
          %s267 = smul.addr %s266, 4
          %s268 = scalar_lea.vmem [#allocation6], %s267
          %s269 = smul.u32 4, %s22
          %s271 = ssub.s32 64, 64
          %272 = vsyncadd %s265, %s271
          %s273 = smul.addr %s269, 16
          %s274 = scalar_lea.hbm %s3, %s273
          %s276 = sshll.u32 %s268, 4
          %s277 = int_to_ptr.vmem [resolvable:$true] %s276
          %279 = dma.hbm_to_vmem [thread:$0]  %s274, 64, %s277, %s265
        $region32: #{avgmax_share_cat_forward.1} parent=19 // pred_fallthru
          _
        // Predicated region
        $region33: #{avgmax_share_cat_forward.1} parent=19 // pred_check
          %p280 = pneg %p141
        $region34: #{avgmax_share_cat_forward.1} parent=19 // pred_check_branch
          %282 = sbr.rel (%p280) target = $region36
        $region35: #{avgmax_share_cat_forward.1} parent=19 // pred_region
          %s283 = sand.u32 %s131, 1
          %s284 = scalar_lea.sflag [#allocation8], %s283
          %s285 = sand.u32 %s131, 1
          %s286 = smul.addr %s285, 4
          %s287 = scalar_lea.vmem [#allocation7], %s286
          %s288 = smul.u32 4, %s22
          %s290 = ssub.s32 64, 64
          %291 = vsyncadd %s284, %s290
          %s292 = smul.addr %s288, 16
          %s293 = scalar_lea.hbm %s4, %s292
          %s295 = sshll.u32 %s287, 4
          %s296 = int_to_ptr.vmem [resolvable:$true] %s295
          %298 = dma.hbm_to_vmem [thread:$0]  %s293, 64, %s296, %s284
        $region36: #{avgmax_share_cat_forward.1} parent=19 // pred_fallthru
          _
      $region20: #{avgmax_share_cat_forward.1} parent=5 // pred_fallthru
        _
      %p299 = scmp.le.s32.totalorder 1, %s22
      %p300 = scmp.lt.s32.totalorder %s22, 3
      %p301 = pnand %p299, %p300
      %p302 = pneg %p301
      // Predicated region
      $region37: #{avgmax_share_cat_forward.1} parent=5 // pred_check
        _
      $region38: #{avgmax_share_cat_forward.1} parent=5 // pred_check_branch
        %304 = sbr.rel (%p301) target = $region40
      $region39: #{avgmax_share_cat_forward.1} parent=5 // pred_region
        %s305 = ssub.s32 %s22, 1
        %s306 = sand.u32 %s56, 1
        %s307 = scalar_lea.sflag [#allocation3], %s306
        %s308 = sand.u32 %s56, 1
        %s309 = smul.addr %s308, 4096
        %s310 = scalar_lea.vmem [#allocation2], %s309
        // Predicated region
        $region41: #{avgmax_share_cat_forward.1} parent=39 // pred_check
          %p311 = pneg %p69
        $region42: #{avgmax_share_cat_forward.1} parent=39 // pred_check_branch
          %313 = sbr.rel (%p311) target = $region44
        $region43: #{avgmax_share_cat_forward.1} parent=39 // pred_region
          %314 = dma.done %s307, 65536
        $region44: #{avgmax_share_cat_forward.1} parent=39 // pred_fallthru
          _
        %s315 = sand.u32 %s27, 1
        %s316 = scalar_lea.sflag [#allocation5], %s315
        %s317 = sand.u32 %s82, 1
        %s318 = smul.addr %s317, 4
        %s319 = scalar_lea.vmem [#allocation4], %s318
        // Predicated region
        $region45: #{avgmax_share_cat_forward.1} parent=39 // pred_check
          %p320 = pneg %p95
        $region46: #{avgmax_share_cat_forward.1} parent=39 // pred_check_branch
          %322 = sbr.rel (%p320) target = $region48
        $region47: #{avgmax_share_cat_forward.1} parent=39 // pred_region
          %323 = dma.done %s316, 64
        $region48: #{avgmax_share_cat_forward.1} parent=39 // pred_fallthru
          _
        %s324 = sand.u32 %s27, 1
        %s325 = scalar_lea.sflag [#allocation5], %s324
        %s326 = sand.u32 %s108, 1
        %s327 = smul.addr %s326, 4
        %s328 = scalar_lea.vmem [#allocation6], %s327
        // Predicated region
        $region49: #{avgmax_share_cat_forward.1} parent=39 // pred_check
          %p329 = pneg %p121
        $region50: #{avgmax_share_cat_forward.1} parent=39 // pred_check_branch
          %331 = sbr.rel (%p329) target = $region52
        $region51: #{avgmax_share_cat_forward.1} parent=39 // pred_region
          %332 = dma.done %s325, 64
        $region52: #{avgmax_share_cat_forward.1} parent=39 // pred_fallthru
          _
        %s333 = sand.u32 %s134, 1
        %s334 = scalar_lea.sflag [#allocation8], %s333
        %s335 = sand.u32 %s134, 1
        %s336 = smul.addr %s335, 4
        %s337 = scalar_lea.vmem [#allocation7], %s336
        // Predicated region
        $region53: #{avgmax_share_cat_forward.1} parent=39 // pred_check
          %p338 = pneg %p147
        $region54: #{avgmax_share_cat_forward.1} parent=39 // pred_check_branch
          %340 = sbr.rel (%p338) target = $region56
        $region55: #{avgmax_share_cat_forward.1} parent=39 // pred_region
          %341 = dma.done %s334, 64
        $region56: #{avgmax_share_cat_forward.1} parent=39 // pred_fallthru
          _
        %p342 = pneg %p43
        %p343 = pneg %p40
        %s344 = sand.u32 %s56, 1
        %s345 = scalar_lea.sflag [#allocation3], %s344
        %s346 = sand.u32 %s56, 1
        %s347 = smul.addr %s346, 4096
        %s348 = scalar_lea.vmem [#allocation2], %s347
        %p349 = pneg %p69
        %p350 = pneg %p66
        %s351 = sand.u32 %s27, 1
        %s352 = scalar_lea.sflag [#allocation5], %s351
        %s353 = sand.u32 %s82, 1
        %s354 = smul.addr %s353, 4
        %s355 = scalar_lea.vmem [#allocation4], %s354
        %p356 = pneg %p95
        %p357 = pneg %p92
        %s358 = sand.u32 %s27, 1
        %s359 = scalar_lea.sflag [#allocation5], %s358
        %s360 = sand.u32 %s108, 1
        %s361 = smul.addr %s360, 4
        %s362 = scalar_lea.vmem [#allocation6], %s361
        %p363 = pneg %p121
        %p364 = pneg %p118
        %s365 = sand.u32 %s134, 1
        %s366 = scalar_lea.sflag [#allocation8], %s365
        %s367 = sand.u32 %s134, 1
        %s368 = smul.addr %s367, 4
        %s369 = scalar_lea.vmem [#allocation7], %s368
        %p370 = pneg %p147
        %p371 = pneg %p144
        %p372 = pneg %p173
        %p373 = pneg %p170
        %s374 = smul.u32 4, %s27
        %p375 = scmp.lt.s32.totalorder %s374, 7
        %s376 = scalar_select %p375, %s374, 7
        %s377 = smul.addr %s376, 8
        %s378 = scalar_lea.vmem %s5, %s377
        %p379 = pneg %p199
        %p380 = pneg %p196
        %s381 = smul.u32 4, %s27
        %p382 = scmp.lt.s32.totalorder %s381, 7
        %s383 = scalar_select %p382, %s381, 7
        %s384 = smul.addr %s383, 8
        %s385 = scalar_lea.vmem %s6, %s384
        %s386 = smul.u32 4, %s27
        %s387 = smul.u32 4, %s27
        %s388 = smul.u32 4, %s27
        %s389 = smul.u32 4, %s27
        %s390 = smul.u32 4, %s27
        %p391 = scmp.lt.s32.totalorder %s390, 7
        %s392 = scalar_select %p391, %s390, 7
        %s393 = smul.addr %s392, 8
        %s394 = scalar_lea.vmem %s5, %s393
        %s395 = smul.u32 4, %s27
        %s396 = smul.u32 4, %s27
        %p397 = scmp.lt.s32.totalorder %s396, 7
        %s398 = scalar_select %p397, %s396, 7
        %s399 = smul.addr %s398, 8
        %s400 = scalar_lea.vmem %s6, %s399
        %s401 = smul.u32 4, %s27
        %v402 = vld [vmem:[%s0] sm:$0xff]
        %v403 = vld [vmem:[%s0 + $0x8] sm:$0xff]
        %v404 = vld [vmem:[%s0 + $0x10] sm:$0xff]
        %v405 = vld [vmem:[%s0 + $0x18] sm:$0xff]
        %v406 = vld [vmem:[%s0 + $0x20] sm:$0xff]
        %v407 = vld [vmem:[%s0 + $0x28] sm:$0xff]
        %v408 = vld [vmem:[%s0 + $0x30] sm:$0xff]
        %v409 = vld [vmem:[%s0 + $0x38] sm:$0xff]
        %v410 = vld [vmem:[%s0 + $0x40] sm:$0xff]
        %v411 = vld [vmem:[%s0 + $0x48] sm:$0xff]
        %v412 = vld [vmem:[%s0 + $0x50] sm:$0xff]
        %v413 = vld [vmem:[%s0 + $0x58] sm:$0xff]
        %v414 = vld [vmem:[%s0 + $0x60] sm:$0xff]
        %v415 = vld [vmem:[%s0 + $0x68] sm:$0xff]
        %v416 = vld [vmem:[%s0 + $0x70] sm:$0xff]
        %v417 = vld [vmem:[%s0 + $0x78] sm:$0xff]
        %v418 = vld [vmem:[%s0 + $0x80] sm:$0xff]
        %v419 = vld [vmem:[%s0 + $0x88] sm:$0xff]
        %v420 = vld [vmem:[%s0 + $0x90] sm:$0xff]
        %v421 = vld [vmem:[%s0 + $0x98] sm:$0xff]
        %v422 = vld [vmem:[%s0 + $0xa0] sm:$0xff]
        %v423 = vld [vmem:[%s0 + $0xa8] sm:$0xff]
        %v424 = vld [vmem:[%s0 + $0xb0] sm:$0xff]
        %v425 = vld [vmem:[%s0 + $0xb8] sm:$0xff]
        %v426 = vld [vmem:[%s0 + $0xc0] sm:$0xff]
        %v427 = vld [vmem:[%s0 + $0xc8] sm:$0xff]
        %v428 = vld [vmem:[%s0 + $0xd0] sm:$0xff]
        %v429 = vld [vmem:[%s0 + $0xd8] sm:$0xff]
        %v430 = vld [vmem:[%s0 + $0xe0] sm:$0xff]
        %v431 = vld [vmem:[%s0 + $0xe8] sm:$0xff]
        %v432 = vld [vmem:[%s0 + $0xf0] sm:$0xff]
        %v433 = vld [vmem:[%s0 + $0xf8] sm:$0xff]
        %v434 = vld [vmem:[%s0 + $0x100] sm:$0xff]
        %v435 = vld [vmem:[%s0 + $0x108] sm:$0xff]
        %v436 = vld [vmem:[%s0 + $0x110] sm:$0xff]
        %v437 = vld [vmem:[%s0 + $0x118] sm:$0xff]
        %v438 = vld [vmem:[%s0 + $0x120] sm:$0xff]
        %v439 = vld [vmem:[%s0 + $0x128] sm:$0xff]
        %v440 = vld [vmem:[%s0 + $0x130] sm:$0xff]
        %v441 = vld [vmem:[%s0 + $0x138] sm:$0xff]
        %v442 = vld [vmem:[%s0 + $0x140] sm:$0xff]
        %v443 = vld [vmem:[%s0 + $0x148] sm:$0xff]
        %v444 = vld [vmem:[%s0 + $0x150] sm:$0xff]
        %v445 = vld [vmem:[%s0 + $0x158] sm:$0xff]
        %v446 = vld [vmem:[%s0 + $0x160] sm:$0xff]
        %v447 = vld [vmem:[%s0 + $0x168] sm:$0xff]
        %v448 = vld [vmem:[%s0 + $0x170] sm:$0xff]
        %v449 = vld [vmem:[%s0 + $0x178] sm:$0xff]
        %v450 = vld [vmem:[%s0 + $0x180] sm:$0xff]
        %v451 = vld [vmem:[%s0 + $0x188] sm:$0xff]
        %v452 = vld [vmem:[%s0 + $0x190] sm:$0xff]
        %v453 = vld [vmem:[%s0 + $0x198] sm:$0xff]
        %v454 = vld [vmem:[%s0 + $0x1a0] sm:$0xff]
        %v455 = vld [vmem:[%s0 + $0x1a8] sm:$0xff]
        %v456 = vld [vmem:[%s0 + $0x1b0] sm:$0xff]
        %v457 = vld [vmem:[%s0 + $0x1b8] sm:$0xff]
        %v458 = vld [vmem:[%s0 + $0x1c0] sm:$0xff]
        %v459 = vld [vmem:[%s0 + $0x1c8] sm:$0xff]
        %v460 = vld [vmem:[%s0 + $0x1d0] sm:$0xff]
        %v461 = vld [vmem:[%s0 + $0x1d8] sm:$0xff]
        %v462 = vld [vmem:[%s0 + $0x1e0] sm:$0xff]
        %v463 = vld [vmem:[%s0 + $0x1e8] sm:$0xff]
        %v464 = vld [vmem:[%s0 + $0x1f0] sm:$0xff]
        %v465 = vld [vmem:[%s0 + $0x1f8] sm:$0xff]
        %v466 = vld [vmem:[%s0 + $0x200] sm:$0xff]
        %v467 = vld [vmem:[%s0 + $0x208] sm:$0xff]
        %v468 = vld [vmem:[%s0 + $0x210] sm:$0xff]
        %v469 = vld [vmem:[%s0 + $0x218] sm:$0xff]
        %v470 = vld [vmem:[%s0 + $0x220] sm:$0xff]
        %v471 = vld [vmem:[%s0 + $0x228] sm:$0xff]
        %v472 = vld [vmem:[%s0 + $0x230] sm:$0xff]
        %v473 = vld [vmem:[%s0 + $0x238] sm:$0xff]
        %v474 = vld [vmem:[%s0 + $0x240] sm:$0xff]
        %v475 = vld [vmem:[%s0 + $0x248] sm:$0xff]
        %v476 = vld [vmem:[%s0 + $0x250] sm:$0xff]
        %v477 = vld [vmem:[%s0 + $0x258] sm:$0xff]
        %v478 = vld [vmem:[%s0 + $0x260] sm:$0xff]
        %v479 = vld [vmem:[%s0 + $0x268] sm:$0xff]
        %v480 = vld [vmem:[%s0 + $0x270] sm:$0xff]
        %v481 = vld [vmem:[%s0 + $0x278] sm:$0xff]
        %v482 = vld [vmem:[%s0 + $0x280] sm:$0xff]
        %v483 = vld [vmem:[%s0 + $0x288] sm:$0xff]
        %v484 = vld [vmem:[%s0 + $0x290] sm:$0xff]
        %v485 = vld [vmem:[%s0 + $0x298] sm:$0xff]
        %v486 = vld [vmem:[%s0 + $0x2a0] sm:$0xff]
        %v487 = vld [vmem:[%s0 + $0x2a8] sm:$0xff]
        %v488 = vld [vmem:[%s0 + $0x2b0] sm:$0xff]
        %v489 = vld [vmem:[%s0 + $0x2b8] sm:$0xff]
        %v490 = vld [vmem:[%s0 + $0x2c0] sm:$0xff]
        %v491 = vld [vmem:[%s0 + $0x2c8] sm:$0xff]
        %v492 = vld [vmem:[%s0 + $0x2d0] sm:$0xff]
        %v493 = vld [vmem:[%s0 + $0x2d8] sm:$0xff]
        %v494 = vld [vmem:[%s0 + $0x2e0] sm:$0xff]
        %v495 = vld [vmem:[%s0 + $0x2e8] sm:$0xff]
        %v496 = vld [vmem:[%s0 + $0x2f0] sm:$0xff]
        %v497 = vld [vmem:[%s0 + $0x2f8] sm:$0xff]
        %v498 = vld [vmem:[%s0 + $0x300] sm:$0xff]
        %v499 = vld [vmem:[%s0 + $0x308] sm:$0xff]
        %v500 = vld [vmem:[%s0 + $0x310] sm:$0xff]
        %v501 = vld [vmem:[%s0 + $0x318] sm:$0xff]
        %v502 = vld [vmem:[%s0 + $0x320] sm:$0xff]
        %v503 = vld [vmem:[%s0 + $0x328] sm:$0xff]
        %v504 = vld [vmem:[%s0 + $0x330] sm:$0xff]
        %v505 = vld [vmem:[%s0 + $0x338] sm:$0xff]
        %v506 = vld [vmem:[%s0 + $0x340] sm:$0xff]
        %v507 = vld [vmem:[%s0 + $0x348] sm:$0xff]
        %v508 = vld [vmem:[%s0 + $0x350] sm:$0xff]
        %v509 = vld [vmem:[%s0 + $0x358] sm:$0xff]
        %v510 = vld [vmem:[%s0 + $0x360] sm:$0xff]
        %v511 = vld [vmem:[%s0 + $0x368] sm:$0xff]
        %v512 = vld [vmem:[%s0 + $0x370] sm:$0xff]
        %v513 = vld [vmem:[%s0 + $0x378] sm:$0xff]
        %v514 = vld [vmem:[%s0 + $0x380] sm:$0xff]
        %v515 = vld [vmem:[%s0 + $0x388] sm:$0xff]
        %v516 = vld [vmem:[%s0 + $0x390] sm:$0xff]
        %v517 = vld [vmem:[%s0 + $0x398] sm:$0xff]
        %v518 = vld [vmem:[%s0 + $0x3a0] sm:$0xff]
        %v519 = vld [vmem:[%s0 + $0x3a8] sm:$0xff]
        %v520 = vld [vmem:[%s0 + $0x3b0] sm:$0xff]
        %v521 = vld [vmem:[%s0 + $0x3b8] sm:$0xff]
        %v522 = vld [vmem:[%s0 + $0x3c0] sm:$0xff]
        %v523 = vld [vmem:[%s0 + $0x3c8] sm:$0xff]
        %v524 = vld [vmem:[%s0 + $0x3d0] sm:$0xff]
        %v525 = vld [vmem:[%s0 + $0x3d8] sm:$0xff]
        %v526 = vld [vmem:[%s0 + $0x3e0] sm:$0xff]
        %v527 = vld [vmem:[%s0 + $0x3e8] sm:$0xff]
        %v528 = vld [vmem:[%s0 + $0x3f0] sm:$0xff]
        %v529 = vld [vmem:[%s0 + $0x3f8] sm:$0xff]
        %v530 = vld [vmem:[%s0 + $0x400] sm:$0xff]
        %v531 = vld [vmem:[%s0 + $0x408] sm:$0xff]
        %v532 = vld [vmem:[%s0 + $0x410] sm:$0xff]
        %v533 = vld [vmem:[%s0 + $0x418] sm:$0xff]
        %v534 = vld [vmem:[%s0 + $0x420] sm:$0xff]
        %v535 = vld [vmem:[%s0 + $0x428] sm:$0xff]
        %v536 = vld [vmem:[%s0 + $0x430] sm:$0xff]
        %v537 = vld [vmem:[%s0 + $0x438] sm:$0xff]
        %v538 = vld [vmem:[%s0 + $0x440] sm:$0xff]
        %v539 = vld [vmem:[%s0 + $0x448] sm:$0xff]
        %v540 = vld [vmem:[%s0 + $0x450] sm:$0xff]
        %v541 = vld [vmem:[%s0 + $0x458] sm:$0xff]
        %v542 = vld [vmem:[%s0 + $0x460] sm:$0xff]
        %v543 = vld [vmem:[%s0 + $0x468] sm:$0xff]
        %v544 = vld [vmem:[%s0 + $0x470] sm:$0xff]
        %v545 = vld [vmem:[%s0 + $0x478] sm:$0xff]
        %v546 = vld [vmem:[%s0 + $0x480] sm:$0xff]
        %v547 = vld [vmem:[%s0 + $0x488] sm:$0xff]
        %v548 = vld [vmem:[%s0 + $0x490] sm:$0xff]
        %v549 = vld [vmem:[%s0 + $0x498] sm:$0xff]
        %v550 = vld [vmem:[%s0 + $0x4a0] sm:$0xff]
        %v551 = vld [vmem:[%s0 + $0x4a8] sm:$0xff]
        %v552 = vld [vmem:[%s0 + $0x4b0] sm:$0xff]
        %v553 = vld [vmem:[%s0 + $0x4b8] sm:$0xff]
        %v554 = vld [vmem:[%s0 + $0x4c0] sm:$0xff]
        %v555 = vld [vmem:[%s0 + $0x4c8] sm:$0xff]
        %v556 = vld [vmem:[%s0 + $0x4d0] sm:$0xff]
        %v557 = vld [vmem:[%s0 + $0x4d8] sm:$0xff]
        %v558 = vld [vmem:[%s0 + $0x4e0] sm:$0xff]
        %v559 = vld [vmem:[%s0 + $0x4e8] sm:$0xff]
        %v560 = vld [vmem:[%s0 + $0x4f0] sm:$0xff]
        %v561 = vld [vmem:[%s0 + $0x4f8] sm:$0xff]
        %v562 = vld [vmem:[%s0 + $0x500] sm:$0xff]
        %v563 = vld [vmem:[%s0 + $0x508] sm:$0xff]
        %v564 = vld [vmem:[%s0 + $0x510] sm:$0xff]
        %v565 = vld [vmem:[%s0 + $0x518] sm:$0xff]
        %v566 = vld [vmem:[%s0 + $0x520] sm:$0xff]
        %v567 = vld [vmem:[%s0 + $0x528] sm:$0xff]
        %v568 = vld [vmem:[%s0 + $0x530] sm:$0xff]
        %v569 = vld [vmem:[%s0 + $0x538] sm:$0xff]
        %v570 = vld [vmem:[%s0 + $0x540] sm:$0xff]
        %v571 = vld [vmem:[%s0 + $0x548] sm:$0xff]
        %v572 = vld [vmem:[%s0 + $0x550] sm:$0xff]
        %v573 = vld [vmem:[%s0 + $0x558] sm:$0xff]
        %v574 = vld [vmem:[%s0 + $0x560] sm:$0xff]
        %v575 = vld [vmem:[%s0 + $0x568] sm:$0xff]
        %v576 = vld [vmem:[%s0 + $0x570] sm:$0xff]
        %v577 = vld [vmem:[%s0 + $0x578] sm:$0xff]
        %v578 = vld [vmem:[%s0 + $0x580] sm:$0xff]
        %v579 = vld [vmem:[%s0 + $0x588] sm:$0xff]
        %v580 = vld [vmem:[%s0 + $0x590] sm:$0xff]
        %v581 = vld [vmem:[%s0 + $0x598] sm:$0xff]
        %v582 = vld [vmem:[%s0 + $0x5a0] sm:$0xff]
        %v583 = vld [vmem:[%s0 + $0x5a8] sm:$0xff]
        %v584 = vld [vmem:[%s0 + $0x5b0] sm:$0xff]
        %v585 = vld [vmem:[%s0 + $0x5b8] sm:$0xff]
        %v586 = vld [vmem:[%s0 + $0x5c0] sm:$0xff]
        %v587 = vld [vmem:[%s0 + $0x5c8] sm:$0xff]
        %v588 = vld [vmem:[%s0 + $0x5d0] sm:$0xff]
        %v589 = vld [vmem:[%s0 + $0x5d8] sm:$0xff]
        %v590 = vld [vmem:[%s0 + $0x5e0] sm:$0xff]
        %v591 = vld [vmem:[%s0 + $0x5e8] sm:$0xff]
        %v592 = vld [vmem:[%s0 + $0x5f0] sm:$0xff]
        %v593 = vld [vmem:[%s0 + $0x5f8] sm:$0xff]
        %v594 = vld [vmem:[%s0 + $0x600] sm:$0xff]
        %v595 = vld [vmem:[%s0 + $0x608] sm:$0xff]
        %v596 = vld [vmem:[%s0 + $0x610] sm:$0xff]
        %v597 = vld [vmem:[%s0 + $0x618] sm:$0xff]
        %v598 = vld [vmem:[%s0 + $0x620] sm:$0xff]
        %v599 = vld [vmem:[%s0 + $0x628] sm:$0xff]
        %v600 = vld [vmem:[%s0 + $0x630] sm:$0xff]
        %v601 = vld [vmem:[%s0 + $0x638] sm:$0xff]
        %v602 = vld [vmem:[%s0 + $0x640] sm:$0xff]
        %v603 = vld [vmem:[%s0 + $0x648] sm:$0xff]
        %v604 = vld [vmem:[%s0 + $0x650] sm:$0xff]
        %v605 = vld [vmem:[%s0 + $0x658] sm:$0xff]
        %v606 = vld [vmem:[%s0 + $0x660] sm:$0xff]
        %v607 = vld [vmem:[%s0 + $0x668] sm:$0xff]
        %v608 = vld [vmem:[%s0 + $0x670] sm:$0xff]
        %v609 = vld [vmem:[%s0 + $0x678] sm:$0xff]
        %v610 = vld [vmem:[%s0 + $0x680] sm:$0xff]
        %v611 = vld [vmem:[%s0 + $0x688] sm:$0xff]
        %v612 = vld [vmem:[%s0 + $0x690] sm:$0xff]
        %v613 = vld [vmem:[%s0 + $0x698] sm:$0xff]
        %v614 = vld [vmem:[%s0 + $0x6a0] sm:$0xff]
        %v615 = vld [vmem:[%s0 + $0x6a8] sm:$0xff]
        %v616 = vld [vmem:[%s0 + $0x6b0] sm:$0xff]
        %v617 = vld [vmem:[%s0 + $0x6b8] sm:$0xff]
        %v618 = vld [vmem:[%s0 + $0x6c0] sm:$0xff]
        %v619 = vld [vmem:[%s0 + $0x6c8] sm:$0xff]
        %v620 = vld [vmem:[%s0 + $0x6d0] sm:$0xff]
        %v621 = vld [vmem:[%s0 + $0x6d8] sm:$0xff]
        %v622 = vld [vmem:[%s0 + $0x6e0] sm:$0xff]
        %v623 = vld [vmem:[%s0 + $0x6e8] sm:$0xff]
        %v624 = vld [vmem:[%s0 + $0x6f0] sm:$0xff]
        %v625 = vld [vmem:[%s0 + $0x6f8] sm:$0xff]
        %v626 = vld [vmem:[%s0 + $0x700] sm:$0xff]
        %v627 = vld [vmem:[%s0 + $0x708] sm:$0xff]
        %v628 = vld [vmem:[%s0 + $0x710] sm:$0xff]
        %v629 = vld [vmem:[%s0 + $0x718] sm:$0xff]
        %v630 = vld [vmem:[%s0 + $0x720] sm:$0xff]
        %v631 = vld [vmem:[%s0 + $0x728] sm:$0xff]
        %v632 = vld [vmem:[%s0 + $0x730] sm:$0xff]
        %v633 = vld [vmem:[%s0 + $0x738] sm:$0xff]
        %v634 = vld [vmem:[%s0 + $0x740] sm:$0xff]
        %v635 = vld [vmem:[%s0 + $0x748] sm:$0xff]
        %v636 = vld [vmem:[%s0 + $0x750] sm:$0xff]
        %v637 = vld [vmem:[%s0 + $0x758] sm:$0xff]
        %v638 = vld [vmem:[%s0 + $0x760] sm:$0xff]
        %v639 = vld [vmem:[%s0 + $0x768] sm:$0xff]
        %v640 = vld [vmem:[%s0 + $0x770] sm:$0xff]
        %v641 = vld [vmem:[%s0 + $0x778] sm:$0xff]
        %v642 = vld [vmem:[%s0 + $0x780] sm:$0xff]
        %v643 = vld [vmem:[%s0 + $0x788] sm:$0xff]
        %v644 = vld [vmem:[%s0 + $0x790] sm:$0xff]
        %v645 = vld [vmem:[%s0 + $0x798] sm:$0xff]
        %v646 = vld [vmem:[%s0 + $0x7a0] sm:$0xff]
        %v647 = vld [vmem:[%s0 + $0x7a8] sm:$0xff]
        %v648 = vld [vmem:[%s0 + $0x7b0] sm:$0xff]
        %v649 = vld [vmem:[%s0 + $0x7b8] sm:$0xff]
        %v650 = vld [vmem:[%s0 + $0x7c0] sm:$0xff]
        %v651 = vld [vmem:[%s0 + $0x7c8] sm:$0xff]
        %v652 = vld [vmem:[%s0 + $0x7d0] sm:$0xff]
        %v653 = vld [vmem:[%s0 + $0x7d8] sm:$0xff]
        %v654 = vld [vmem:[%s0 + $0x7e0] sm:$0xff]
        %v655 = vld [vmem:[%s0 + $0x7e8] sm:$0xff]
        %v656 = vld [vmem:[%s0 + $0x7f0] sm:$0xff]
        %v657 = vld [vmem:[%s0 + $0x7f8] sm:$0xff]
        %v658 = vadd.f32 %v402, %v418
        %v659 = vrot.slane %v658, 4
        %v660 = vadd.f32 %v658, %v659
        %v661 = vrot.slane %v660, 2
        %v662 = vadd.f32 %v660, %v661
        %v663 = vrot.slane %v662, 1
        %v664 = vadd.f32 %v662, %v663
        %v665 = vadd.f32 %v403, %v419
        %v666 = vrot.slane %v665, 4
        %v667 = vadd.f32 %v665, %v666
        %v668 = vrot.slane %v667, 2
        %v669 = vadd.f32 %v667, %v668
        %v670 = vrot.slane %v669, 1
        %v671 = vadd.f32 %v669, %v670
        %v672 = vadd.f32 %v404, %v420
        %v673 = vrot.slane %v672, 4
        %v674 = vadd.f32 %v672, %v673
        %v675 = vrot.slane %v674, 2
        %v676 = vadd.f32 %v674, %v675
        %v677 = vrot.slane %v676, 1
        %v678 = vadd.f32 %v676, %v677
        %v679 = vadd.f32 %v405, %v421
        %v680 = vrot.slane %v679, 4
        %v681 = vadd.f32 %v679, %v680
        %v682 = vrot.slane %v681, 2
        %v683 = vadd.f32 %v681, %v682
        %v684 = vrot.slane %v683, 1
        %v685 = vadd.f32 %v683, %v684
        %v686 = vadd.f32 %v406, %v422
        %v687 = vrot.slane %v686, 4
        %v688 = vadd.f32 %v686, %v687
        %v689 = vrot.slane %v688, 2
        %v690 = vadd.f32 %v688, %v689
        %v691 = vrot.slane %v690, 1
        %v692 = vadd.f32 %v690, %v691
        %v693 = vadd.f32 %v407, %v423
        %v694 = vrot.slane %v693, 4
        %v695 = vadd.f32 %v693, %v694
        %v696 = vrot.slane %v695, 2
        %v697 = vadd.f32 %v695, %v696
        %v698 = vrot.slane %v697, 1
        %v699 = vadd.f32 %v697, %v698
        %v700 = vadd.f32 %v408, %v424
        %v701 = vrot.slane %v700, 4
        %v702 = vadd.f32 %v700, %v701
        %v703 = vrot.slane %v702, 2
        %v704 = vadd.f32 %v702, %v703
        %v705 = vrot.slane %v704, 1
        %v706 = vadd.f32 %v704, %v705
        %v707 = vadd.f32 %v409, %v425
        %v708 = vrot.slane %v707, 4
        %v709 = vadd.f32 %v707, %v708
        %v710 = vrot.slane %v709, 2
        %v711 = vadd.f32 %v709, %v710
        %v712 = vrot.slane %v711, 1
        %v713 = vadd.f32 %v711, %v712
        %v714 = vadd.f32 %v410, %v426
        %v715 = vrot.slane %v714, 4
        %v716 = vadd.f32 %v714, %v715
        %v717 = vrot.slane %v716, 2
        %v718 = vadd.f32 %v716, %v717
        %v719 = vrot.slane %v718, 1
        %v720 = vadd.f32 %v718, %v719
        %v721 = vadd.f32 %v411, %v427
        %v722 = vrot.slane %v721, 4
        %v723 = vadd.f32 %v721, %v722
        %v724 = vrot.slane %v723, 2
        %v725 = vadd.f32 %v723, %v724
        %v726 = vrot.slane %v725, 1
        %v727 = vadd.f32 %v725, %v726
        %v728 = vadd.f32 %v412, %v428
        %v729 = vrot.slane %v728, 4
        %v730 = vadd.f32 %v728, %v729
        %v731 = vrot.slane %v730, 2
        %v732 = vadd.f32 %v730, %v731
        %v733 = vrot.slane %v732, 1
        %v734 = vadd.f32 %v732, %v733
        %v735 = vadd.f32 %v413, %v429
        %v736 = vrot.slane %v735, 4
        %v737 = vadd.f32 %v735, %v736
        %v738 = vrot.slane %v737, 2
        %v739 = vadd.f32 %v737, %v738
        %v740 = vrot.slane %v739, 1
        %v741 = vadd.f32 %v739, %v740
        %v742 = vadd.f32 %v414, %v430
        %v743 = vrot.slane %v742, 4
        %v744 = vadd.f32 %v742, %v743
        %v745 = vrot.slane %v744, 2
        %v746 = vadd.f32 %v744, %v745
        %v747 = vrot.slane %v746, 1
        %v748 = vadd.f32 %v746, %v747
        %v749 = vadd.f32 %v415, %v431
        %v750 = vrot.slane %v749, 4
        %v751 = vadd.f32 %v749, %v750
        %v752 = vrot.slane %v751, 2
        %v753 = vadd.f32 %v751, %v752
        %v754 = vrot.slane %v753, 1
        %v755 = vadd.f32 %v753, %v754
        %v756 = vadd.f32 %v416, %v432
        %v757 = vrot.slane %v756, 4
        %v758 = vadd.f32 %v756, %v757
        %v759 = vrot.slane %v758, 2
        %v760 = vadd.f32 %v758, %v759
        %v761 = vrot.slane %v760, 1
        %v762 = vadd.f32 %v760, %v761
        %v763 = vadd.f32 %v417, %v433
        %v764 = vrot.slane %v763, 4
        %v765 = vadd.f32 %v763, %v764
        %v766 = vrot.slane %v765, 2
        %v767 = vadd.f32 %v765, %v766
        %v768 = vrot.slane %v767, 1
        %v769 = vadd.f32 %v767, %v768
        %v770 = vadd.f32 %v434, %v450
        %v771 = vrot.slane %v770, 4
        %v772 = vadd.f32 %v770, %v771
        %v773 = vrot.slane %v772, 2
        %v774 = vadd.f32 %v772, %v773
        %v775 = vrot.slane %v774, 1
        %v776 = vadd.f32 %v774, %v775
        %v777 = vadd.f32 %v435, %v451
        %v778 = vrot.slane %v777, 4
        %v779 = vadd.f32 %v777, %v778
        %v780 = vrot.slane %v779, 2
        %v781 = vadd.f32 %v779, %v780
        %v782 = vrot.slane %v781, 1
        %v783 = vadd.f32 %v781, %v782
        %v784 = vadd.f32 %v436, %v452
        %v785 = vrot.slane %v784, 4
        %v786 = vadd.f32 %v784, %v785
        %v787 = vrot.slane %v786, 2
        %v788 = vadd.f32 %v786, %v787
        %v789 = vrot.slane %v788, 1
        %v790 = vadd.f32 %v788, %v789
        %v791 = vadd.f32 %v437, %v453
        %v792 = vrot.slane %v791, 4
        %v793 = vadd.f32 %v791, %v792
        %v794 = vrot.slane %v793, 2
        %v795 = vadd.f32 %v793, %v794
        %v796 = vrot.slane %v795, 1
        %v797 = vadd.f32 %v795, %v796
        %v798 = vadd.f32 %v438, %v454
        %v799 = vrot.slane %v798, 4
        %v800 = vadd.f32 %v798, %v799
        %v801 = vrot.slane %v800, 2
        %v802 = vadd.f32 %v800, %v801
        %v803 = vrot.slane %v802, 1
        %v804 = vadd.f32 %v802, %v803
        %v805 = vadd.f32 %v439, %v455
        %v806 = vrot.slane %v805, 4
        %v807 = vadd.f32 %v805, %v806
        %v808 = vrot.slane %v807, 2
        %v809 = vadd.f32 %v807, %v808
        %v810 = vrot.slane %v809, 1
        %v811 = vadd.f32 %v809, %v810
        %v812 = vadd.f32 %v440, %v456
        %v813 = vrot.slane %v812, 4
        %v814 = vadd.f32 %v812, %v813
        %v815 = vrot.slane %v814, 2
        %v816 = vadd.f32 %v814, %v815
        %v817 = vrot.slane %v816, 1
        %v818 = vadd.f32 %v816, %v817
        %v819 = vadd.f32 %v441, %v457
        %v820 = vrot.slane %v819, 4
        %v821 = vadd.f32 %v819, %v820
        %v822 = vrot.slane %v821, 2
        %v823 = vadd.f32 %v821, %v822
        %v824 = vrot.slane %v823, 1
        %v825 = vadd.f32 %v823, %v824
        %v826 = vadd.f32 %v442, %v458
        %v827 = vrot.slane %v826, 4
        %v828 = vadd.f32 %v826, %v827
        %v829 = vrot.slane %v828, 2
        %v830 = vadd.f32 %v828, %v829
        %v831 = vrot.slane %v830, 1
        %v832 = vadd.f32 %v830, %v831
        %v833 = vadd.f32 %v443, %v459
        %v834 = vrot.slane %v833, 4
        %v835 = vadd.f32 %v833, %v834
        %v836 = vrot.slane %v835, 2
        %v837 = vadd.f32 %v835, %v836
        %v838 = vrot.slane %v837, 1
        %v839 = vadd.f32 %v837, %v838
        %v840 = vadd.f32 %v444, %v460
        %v841 = vrot.slane %v840, 4
        %v842 = vadd.f32 %v840, %v841
        %v843 = vrot.slane %v842, 2
        %v844 = vadd.f32 %v842, %v843
        %v845 = vrot.slane %v844, 1
        %v846 = vadd.f32 %v844, %v845
        %v847 = vadd.f32 %v445, %v461
        %v848 = vrot.slane %v847, 4
        %v849 = vadd.f32 %v847, %v848
        %v850 = vrot.slane %v849, 2
        %v851 = vadd.f32 %v849, %v850
        %v852 = vrot.slane %v851, 1
        %v853 = vadd.f32 %v851, %v852
        %v854 = vadd.f32 %v446, %v462
        %v855 = vrot.slane %v854, 4
        %v856 = vadd.f32 %v854, %v855
        %v857 = vrot.slane %v856, 2
        %v858 = vadd.f32 %v856, %v857
        %v859 = vrot.slane %v858, 1
        %v860 = vadd.f32 %v858, %v859
        %v861 = vadd.f32 %v447, %v463
        %v862 = vrot.slane %v861, 4
        %v863 = vadd.f32 %v861, %v862
        %v864 = vrot.slane %v863, 2
        %v865 = vadd.f32 %v863, %v864
        %v866 = vrot.slane %v865, 1
        %v867 = vadd.f32 %v865, %v866
        %v868 = vadd.f32 %v448, %v464
        %v869 = vrot.slane %v868, 4
        %v870 = vadd.f32 %v868, %v869
        %v871 = vrot.slane %v870, 2
        %v872 = vadd.f32 %v870, %v871
        %v873 = vrot.slane %v872, 1
        %v874 = vadd.f32 %v872, %v873
        %v875 = vadd.f32 %v449, %v465
        %v876 = vrot.slane %v875, 4
        %v877 = vadd.f32 %v875, %v876
        %v878 = vrot.slane %v877, 2
        %v879 = vadd.f32 %v877, %v878
        %v880 = vrot.slane %v879, 1
        %v881 = vadd.f32 %v879, %v880
        %v882 = vadd.f32 %v466, %v482
        %v883 = vrot.slane %v882, 4
        %v884 = vadd.f32 %v882, %v883
        %v885 = vrot.slane %v884, 2
        %v886 = vadd.f32 %v884, %v885
        %v887 = vrot.slane %v886, 1
        %v888 = vadd.f32 %v886, %v887
        %v889 = vadd.f32 %v467, %v483
        %v890 = vrot.slane %v889, 4
        %v891 = vadd.f32 %v889, %v890
        %v892 = vrot.slane %v891, 2
        %v893 = vadd.f32 %v891, %v892
        %v894 = vrot.slane %v893, 1
        %v895 = vadd.f32 %v893, %v894
        %v896 = vadd.f32 %v468, %v484
        %v897 = vrot.slane %v896, 4
        %v898 = vadd.f32 %v896, %v897
        %v899 = vrot.slane %v898, 2
        %v900 = vadd.f32 %v898, %v899
        %v901 = vrot.slane %v900, 1
        %v902 = vadd.f32 %v900, %v901
        %v903 = vadd.f32 %v469, %v485
        %v904 = vrot.slane %v903, 4
        %v905 = vadd.f32 %v903, %v904
        %v906 = vrot.slane %v905, 2
        %v907 = vadd.f32 %v905, %v906
        %v908 = vrot.slane %v907, 1
        %v909 = vadd.f32 %v907, %v908
        %v910 = vadd.f32 %v470, %v486
        %v911 = vrot.slane %v910, 4
        %v912 = vadd.f32 %v910, %v911
        %v913 = vrot.slane %v912, 2
        %v914 = vadd.f32 %v912, %v913
        %v915 = vrot.slane %v914, 1
        %v916 = vadd.f32 %v914, %v915
        %v917 = vadd.f32 %v471, %v487
        %v918 = vrot.slane %v917, 4
        %v919 = vadd.f32 %v917, %v918
        %v920 = vrot.slane %v919, 2
        %v921 = vadd.f32 %v919, %v920
        %v922 = vrot.slane %v921, 1
        %v923 = vadd.f32 %v921, %v922
        %v924 = vadd.f32 %v472, %v488
        %v925 = vrot.slane %v924, 4
        %v926 = vadd.f32 %v924, %v925
        %v927 = vrot.slane %v926, 2
        %v928 = vadd.f32 %v926, %v927
        %v929 = vrot.slane %v928, 1
        %v930 = vadd.f32 %v928, %v929
        %v931 = vadd.f32 %v473, %v489
        %v932 = vrot.slane %v931, 4
        %v933 = vadd.f32 %v931, %v932
        %v934 = vrot.slane %v933, 2
        %v935 = vadd.f32 %v933, %v934
        %v936 = vrot.slane %v935, 1
        %v937 = vadd.f32 %v935, %v936
        %v938 = vadd.f32 %v474, %v490
        %v939 = vrot.slane %v938, 4
        %v940 = vadd.f32 %v938, %v939
        %v941 = vrot.slane %v940, 2
        %v942 = vadd.f32 %v940, %v941
        %v943 = vrot.slane %v942, 1
        %v944 = vadd.f32 %v942, %v943
        %v945 = vadd.f32 %v475, %v491
        %v946 = vrot.slane %v945, 4
        %v947 = vadd.f32 %v945, %v946
        %v948 = vrot.slane %v947, 2
        %v949 = vadd.f32 %v947, %v948
        %v950 = vrot.slane %v949, 1
        %v951 = vadd.f32 %v949, %v950
        %v952 = vadd.f32 %v476, %v492
        %v953 = vrot.slane %v952, 4
        %v954 = vadd.f32 %v952, %v953
        %v955 = vrot.slane %v954, 2
        %v956 = vadd.f32 %v954, %v955
        %v957 = vrot.slane %v956, 1
        %v958 = vadd.f32 %v956, %v957
        %v959 = vadd.f32 %v477, %v493
        %v960 = vrot.slane %v959, 4
        %v961 = vadd.f32 %v959, %v960
        %v962 = vrot.slane %v961, 2
        %v963 = vadd.f32 %v961, %v962
        %v964 = vrot.slane %v963, 1
        %v965 = vadd.f32 %v963, %v964
        %v966 = vadd.f32 %v478, %v494
        %v967 = vrot.slane %v966, 4
        %v968 = vadd.f32 %v966, %v967
        %v969 = vrot.slane %v968, 2
        %v970 = vadd.f32 %v968, %v969
        %v971 = vrot.slane %v970, 1
        %v972 = vadd.f32 %v970, %v971
        %v973 = vadd.f32 %v479, %v495
        %v974 = vrot.slane %v973, 4
        %v975 = vadd.f32 %v973, %v974
        %v976 = vrot.slane %v975, 2
        %v977 = vadd.f32 %v975, %v976
        %v978 = vrot.slane %v977, 1
        %v979 = vadd.f32 %v977, %v978
        %v980 = vadd.f32 %v480, %v496
        %v981 = vrot.slane %v980, 4
        %v982 = vadd.f32 %v980, %v981
        %v983 = vrot.slane %v982, 2
        %v984 = vadd.f32 %v982, %v983
        %v985 = vrot.slane %v984, 1
        %v986 = vadd.f32 %v984, %v985
        %v987 = vadd.f32 %v481, %v497
        %v988 = vrot.slane %v987, 4
        %v989 = vadd.f32 %v987, %v988
        %v990 = vrot.slane %v989, 2
        %v991 = vadd.f32 %v989, %v990
        %v992 = vrot.slane %v991, 1
        %v993 = vadd.f32 %v991, %v992
        %v994 = vadd.f32 %v498, %v514
        %v995 = vrot.slane %v994, 4
        %v996 = vadd.f32 %v994, %v995
        %v997 = vrot.slane %v996, 2
        %v998 = vadd.f32 %v996, %v997
        %v999 = vrot.slane %v998, 1
        %v1000 = vadd.f32 %v998, %v999
        %v1001 = vadd.f32 %v499, %v515
        %v1002 = vrot.slane %v1001, 4
        %v1003 = vadd.f32 %v1001, %v1002
        %v1004 = vrot.slane %v1003, 2
        %v1005 = vadd.f32 %v1003, %v1004
        %v1006 = vrot.slane %v1005, 1
        %v1007 = vadd.f32 %v1005, %v1006
        %v1008 = vadd.f32 %v500, %v516
        %v1009 = vrot.slane %v1008, 4
        %v1010 = vadd.f32 %v1008, %v1009
        %v1011 = vrot.slane %v1010, 2
        %v1012 = vadd.f32 %v1010, %v1011
        %v1013 = vrot.slane %v1012, 1
        %v1014 = vadd.f32 %v1012, %v1013
        %v1015 = vadd.f32 %v501, %v517
        %v1016 = vrot.slane %v1015, 4
        %v1017 = vadd.f32 %v1015, %v1016
        %v1018 = vrot.slane %v1017, 2
        %v1019 = vadd.f32 %v1017, %v1018
        %v1020 = vrot.slane %v1019, 1
        %v1021 = vadd.f32 %v1019, %v1020
        %v1022 = vadd.f32 %v502, %v518
        %v1023 = vrot.slane %v1022, 4
        %v1024 = vadd.f32 %v1022, %v1023
        %v1025 = vrot.slane %v1024, 2
        %v1026 = vadd.f32 %v1024, %v1025
        %v1027 = vrot.slane %v1026, 1
        %v1028 = vadd.f32 %v1026, %v1027
        %v1029 = vadd.f32 %v503, %v519
        %v1030 = vrot.slane %v1029, 4
        %v1031 = vadd.f32 %v1029, %v1030
        %v1032 = vrot.slane %v1031, 2
        %v1033 = vadd.f32 %v1031, %v1032
        %v1034 = vrot.slane %v1033, 1
        %v1035 = vadd.f32 %v1033, %v1034
        %v1036 = vadd.f32 %v504, %v520
        %v1037 = vrot.slane %v1036, 4
        %v1038 = vadd.f32 %v1036, %v1037
        %v1039 = vrot.slane %v1038, 2
        %v1040 = vadd.f32 %v1038, %v1039
        %v1041 = vrot.slane %v1040, 1
        %v1042 = vadd.f32 %v1040, %v1041
        %v1043 = vadd.f32 %v505, %v521
        %v1044 = vrot.slane %v1043, 4
        %v1045 = vadd.f32 %v1043, %v1044
        %v1046 = vrot.slane %v1045, 2
        %v1047 = vadd.f32 %v1045, %v1046
        %v1048 = vrot.slane %v1047, 1
        %v1049 = vadd.f32 %v1047, %v1048
        %v1050 = vadd.f32 %v506, %v522
        %v1051 = vrot.slane %v1050, 4
        %v1052 = vadd.f32 %v1050, %v1051
        %v1053 = vrot.slane %v1052, 2
        %v1054 = vadd.f32 %v1052, %v1053
        %v1055 = vrot.slane %v1054, 1
        %v1056 = vadd.f32 %v1054, %v1055
        %v1057 = vadd.f32 %v507, %v523
        %v1058 = vrot.slane %v1057, 4
        %v1059 = vadd.f32 %v1057, %v1058
        %v1060 = vrot.slane %v1059, 2
        %v1061 = vadd.f32 %v1059, %v1060
        %v1062 = vrot.slane %v1061, 1
        %v1063 = vadd.f32 %v1061, %v1062
        %v1064 = vadd.f32 %v508, %v524
        %v1065 = vrot.slane %v1064, 4
        %v1066 = vadd.f32 %v1064, %v1065
        %v1067 = vrot.slane %v1066, 2
        %v1068 = vadd.f32 %v1066, %v1067
        %v1069 = vrot.slane %v1068, 1
        %v1070 = vadd.f32 %v1068, %v1069
        %v1071 = vadd.f32 %v509, %v525
        %v1072 = vrot.slane %v1071, 4
        %v1073 = vadd.f32 %v1071, %v1072
        %v1074 = vrot.slane %v1073, 2
        %v1075 = vadd.f32 %v1073, %v1074
        %v1076 = vrot.slane %v1075, 1
        %v1077 = vadd.f32 %v1075, %v1076
        %v1078 = vadd.f32 %v510, %v526
        %v1079 = vrot.slane %v1078, 4
        %v1080 = vadd.f32 %v1078, %v1079
        %v1081 = vrot.slane %v1080, 2
        %v1082 = vadd.f32 %v1080, %v1081
        %v1083 = vrot.slane %v1082, 1
        %v1084 = vadd.f32 %v1082, %v1083
        %v1085 = vadd.f32 %v511, %v527
        %v1086 = vrot.slane %v1085, 4
        %v1087 = vadd.f32 %v1085, %v1086
        %v1088 = vrot.slane %v1087, 2
        %v1089 = vadd.f32 %v1087, %v1088
        %v1090 = vrot.slane %v1089, 1
        %v1091 = vadd.f32 %v1089, %v1090
        %v1092 = vadd.f32 %v512, %v528
        %v1093 = vrot.slane %v1092, 4
        %v1094 = vadd.f32 %v1092, %v1093
        %v1095 = vrot.slane %v1094, 2
        %v1096 = vadd.f32 %v1094, %v1095
        %v1097 = vrot.slane %v1096, 1
        %v1098 = vadd.f32 %v1096, %v1097
        %v1099 = vadd.f32 %v513, %v529
        %v1100 = vrot.slane %v1099, 4
        %v1101 = vadd.f32 %v1099, %v1100
        %v1102 = vrot.slane %v1101, 2
        %v1103 = vadd.f32 %v1101, %v1102
        %v1104 = vrot.slane %v1103, 1
        %v1105 = vadd.f32 %v1103, %v1104
        %v1106 = vadd.f32 %v530, %v546
        %v1107 = vrot.slane %v1106, 4
        %v1108 = vadd.f32 %v1106, %v1107
        %v1109 = vrot.slane %v1108, 2
        %v1110 = vadd.f32 %v1108, %v1109
        %v1111 = vrot.slane %v1110, 1
        %v1112 = vadd.f32 %v1110, %v1111
        %v1113 = vadd.f32 %v531, %v547
        %v1114 = vrot.slane %v1113, 4
        %v1115 = vadd.f32 %v1113, %v1114
        %v1116 = vrot.slane %v1115, 2
        %v1117 = vadd.f32 %v1115, %v1116
        %v1118 = vrot.slane %v1117, 1
        %v1119 = vadd.f32 %v1117, %v1118
        %v1120 = vadd.f32 %v532, %v548
        %v1121 = vrot.slane %v1120, 4
        %v1122 = vadd.f32 %v1120, %v1121
        %v1123 = vrot.slane %v1122, 2
        %v1124 = vadd.f32 %v1122, %v1123
        %v1125 = vrot.slane %v1124, 1
        %v1126 = vadd.f32 %v1124, %v1125
        %v1127 = vadd.f32 %v533, %v549
        %v1128 = vrot.slane %v1127, 4
        %v1129 = vadd.f32 %v1127, %v1128
        %v1130 = vrot.slane %v1129, 2
        %v1131 = vadd.f32 %v1129, %v1130
        %v1132 = vrot.slane %v1131, 1
        %v1133 = vadd.f32 %v1131, %v1132
        %v1134 = vadd.f32 %v534, %v550
        %v1135 = vrot.slane %v1134, 4
        %v1136 = vadd.f32 %v1134, %v1135
        %v1137 = vrot.slane %v1136, 2
        %v1138 = vadd.f32 %v1136, %v1137
        %v1139 = vrot.slane %v1138, 1
        %v1140 = vadd.f32 %v1138, %v1139
        %v1141 = vadd.f32 %v535, %v551
        %v1142 = vrot.slane %v1141, 4
        %v1143 = vadd.f32 %v1141, %v1142
        %v1144 = vrot.slane %v1143, 2
        %v1145 = vadd.f32 %v1143, %v1144
        %v1146 = vrot.slane %v1145, 1
        %v1147 = vadd.f32 %v1145, %v1146
        %v1148 = vadd.f32 %v536, %v552
        %v1149 = vrot.slane %v1148, 4
        %v1150 = vadd.f32 %v1148, %v1149
        %v1151 = vrot.slane %v1150, 2
        %v1152 = vadd.f32 %v1150, %v1151
        %v1153 = vrot.slane %v1152, 1
        %v1154 = vadd.f32 %v1152, %v1153
        %v1155 = vadd.f32 %v537, %v553
        %v1156 = vrot.slane %v1155, 4
        %v1157 = vadd.f32 %v1155, %v1156
        %v1158 = vrot.slane %v1157, 2
        %v1159 = vadd.f32 %v1157, %v1158
        %v1160 = vrot.slane %v1159, 1
        %v1161 = vadd.f32 %v1159, %v1160
        %v1162 = vadd.f32 %v538, %v554
        %v1163 = vrot.slane %v1162, 4
        %v1164 = vadd.f32 %v1162, %v1163
        %v1165 = vrot.slane %v1164, 2
        %v1166 = vadd.f32 %v1164, %v1165
        %v1167 = vrot.slane %v1166, 1
        %v1168 = vadd.f32 %v1166, %v1167
        %v1169 = vadd.f32 %v539, %v555
        %v1170 = vrot.slane %v1169, 4
        %v1171 = vadd.f32 %v1169, %v1170
        %v1172 = vrot.slane %v1171, 2
        %v1173 = vadd.f32 %v1171, %v1172
        %v1174 = vrot.slane %v1173, 1
        %v1175 = vadd.f32 %v1173, %v1174
        %v1176 = vadd.f32 %v540, %v556
        %v1177 = vrot.slane %v1176, 4
        %v1178 = vadd.f32 %v1176, %v1177
        %v1179 = vrot.slane %v1178, 2
        %v1180 = vadd.f32 %v1178, %v1179
        %v1181 = vrot.slane %v1180, 1
        %v1182 = vadd.f32 %v1180, %v1181
        %v1183 = vadd.f32 %v541, %v557
        %v1184 = vrot.slane %v1183, 4
        %v1185 = vadd.f32 %v1183, %v1184
        %v1186 = vrot.slane %v1185, 2
        %v1187 = vadd.f32 %v1185, %v1186
        %v1188 = vrot.slane %v1187, 1
        %v1189 = vadd.f32 %v1187, %v1188
        %v1190 = vadd.f32 %v542, %v558
        %v1191 = vrot.slane %v1190, 4
        %v1192 = vadd.f32 %v1190, %v1191
        %v1193 = vrot.slane %v1192, 2
        %v1194 = vadd.f32 %v1192, %v1193
        %v1195 = vrot.slane %v1194, 1
        %v1196 = vadd.f32 %v1194, %v1195
        %v1197 = vadd.f32 %v543, %v559
        %v1198 = vrot.slane %v1197, 4
        %v1199 = vadd.f32 %v1197, %v1198
        %v1200 = vrot.slane %v1199, 2
        %v1201 = vadd.f32 %v1199, %v1200
        %v1202 = vrot.slane %v1201, 1
        %v1203 = vadd.f32 %v1201, %v1202
        %v1204 = vadd.f32 %v544, %v560
        %v1205 = vrot.slane %v1204, 4
        %v1206 = vadd.f32 %v1204, %v1205
        %v1207 = vrot.slane %v1206, 2
        %v1208 = vadd.f32 %v1206, %v1207
        %v1209 = vrot.slane %v1208, 1
        %v1210 = vadd.f32 %v1208, %v1209
        %v1211 = vadd.f32 %v545, %v561
        %v1212 = vrot.slane %v1211, 4
        %v1213 = vadd.f32 %v1211, %v1212
        %v1214 = vrot.slane %v1213, 2
        %v1215 = vadd.f32 %v1213, %v1214
        %v1216 = vrot.slane %v1215, 1
        %v1217 = vadd.f32 %v1215, %v1216
        %v1218 = vadd.f32 %v562, %v578
        %v1219 = vrot.slane %v1218, 4
        %v1220 = vadd.f32 %v1218, %v1219
        %v1221 = vrot.slane %v1220, 2
        %v1222 = vadd.f32 %v1220, %v1221
        %v1223 = vrot.slane %v1222, 1
        %v1224 = vadd.f32 %v1222, %v1223
        %v1225 = vadd.f32 %v563, %v579
        %v1226 = vrot.slane %v1225, 4
        %v1227 = vadd.f32 %v1225, %v1226
        %v1228 = vrot.slane %v1227, 2
        %v1229 = vadd.f32 %v1227, %v1228
        %v1230 = vrot.slane %v1229, 1
        %v1231 = vadd.f32 %v1229, %v1230
        %v1232 = vadd.f32 %v564, %v580
        %v1233 = vrot.slane %v1232, 4
        %v1234 = vadd.f32 %v1232, %v1233
        %v1235 = vrot.slane %v1234, 2
        %v1236 = vadd.f32 %v1234, %v1235
        %v1237 = vrot.slane %v1236, 1
        %v1238 = vadd.f32 %v1236, %v1237
        %v1239 = vadd.f32 %v565, %v581
        %v1240 = vrot.slane %v1239, 4
        %v1241 = vadd.f32 %v1239, %v1240
        %v1242 = vrot.slane %v1241, 2
        %v1243 = vadd.f32 %v1241, %v1242
        %v1244 = vrot.slane %v1243, 1
        %v1245 = vadd.f32 %v1243, %v1244
        %v1246 = vadd.f32 %v566, %v582
        %v1247 = vrot.slane %v1246, 4
        %v1248 = vadd.f32 %v1246, %v1247
        %v1249 = vrot.slane %v1248, 2
        %v1250 = vadd.f32 %v1248, %v1249
        %v1251 = vrot.slane %v1250, 1
        %v1252 = vadd.f32 %v1250, %v1251
        %v1253 = vadd.f32 %v567, %v583
        %v1254 = vrot.slane %v1253, 4
        %v1255 = vadd.f32 %v1253, %v1254
        %v1256 = vrot.slane %v1255, 2
        %v1257 = vadd.f32 %v1255, %v1256
        %v1258 = vrot.slane %v1257, 1
        %v1259 = vadd.f32 %v1257, %v1258
        %v1260 = vadd.f32 %v568, %v584
        %v1261 = vrot.slane %v1260, 4
        %v1262 = vadd.f32 %v1260, %v1261
        %v1263 = vrot.slane %v1262, 2
        %v1264 = vadd.f32 %v1262, %v1263
        %v1265 = vrot.slane %v1264, 1
        %v1266 = vadd.f32 %v1264, %v1265
        %v1267 = vadd.f32 %v569, %v585
        %v1268 = vrot.slane %v1267, 4
        %v1269 = vadd.f32 %v1267, %v1268
        %v1270 = vrot.slane %v1269, 2
        %v1271 = vadd.f32 %v1269, %v1270
        %v1272 = vrot.slane %v1271, 1
        %v1273 = vadd.f32 %v1271, %v1272
        %v1274 = vadd.f32 %v570, %v586
        %v1275 = vrot.slane %v1274, 4
        %v1276 = vadd.f32 %v1274, %v1275
        %v1277 = vrot.slane %v1276, 2
        %v1278 = vadd.f32 %v1276, %v1277
        %v1279 = vrot.slane %v1278, 1
        %v1280 = vadd.f32 %v1278, %v1279
        %v1281 = vadd.f32 %v571, %v587
        %v1282 = vrot.slane %v1281, 4
        %v1283 = vadd.f32 %v1281, %v1282
        %v1284 = vrot.slane %v1283, 2
        %v1285 = vadd.f32 %v1283, %v1284
        %v1286 = vrot.slane %v1285, 1
        %v1287 = vadd.f32 %v1285, %v1286
        %v1288 = vadd.f32 %v572, %v588
        %v1289 = vrot.slane %v1288, 4
        %v1290 = vadd.f32 %v1288, %v1289
        %v1291 = vrot.slane %v1290, 2
        %v1292 = vadd.f32 %v1290, %v1291
        %v1293 = vrot.slane %v1292, 1
        %v1294 = vadd.f32 %v1292, %v1293
        %v1295 = vadd.f32 %v573, %v589
        %v1296 = vrot.slane %v1295, 4
        %v1297 = vadd.f32 %v1295, %v1296
        %v1298 = vrot.slane %v1297, 2
        %v1299 = vadd.f32 %v1297, %v1298
        %v1300 = vrot.slane %v1299, 1
        %v1301 = vadd.f32 %v1299, %v1300
        %v1302 = vadd.f32 %v574, %v590
        %v1303 = vrot.slane %v1302, 4
        %v1304 = vadd.f32 %v1302, %v1303
        %v1305 = vrot.slane %v1304, 2
        %v1306 = vadd.f32 %v1304, %v1305
        %v1307 = vrot.slane %v1306, 1
        %v1308 = vadd.f32 %v1306, %v1307
        %v1309 = vadd.f32 %v575, %v591
        %v1310 = vrot.slane %v1309, 4
        %v1311 = vadd.f32 %v1309, %v1310
        %v1312 = vrot.slane %v1311, 2
        %v1313 = vadd.f32 %v1311, %v1312
        %v1314 = vrot.slane %v1313, 1
        %v1315 = vadd.f32 %v1313, %v1314
        %v1316 = vadd.f32 %v576, %v592
        %v1317 = vrot.slane %v1316, 4
        %v1318 = vadd.f32 %v1316, %v1317
        %v1319 = vrot.slane %v1318, 2
        %v1320 = vadd.f32 %v1318, %v1319
        %v1321 = vrot.slane %v1320, 1
        %v1322 = vadd.f32 %v1320, %v1321
        %v1323 = vadd.f32 %v577, %v593
        %v1324 = vrot.slane %v1323, 4
        %v1325 = vadd.f32 %v1323, %v1324
        %v1326 = vrot.slane %v1325, 2
        %v1327 = vadd.f32 %v1325, %v1326
        %v1328 = vrot.slane %v1327, 1
        %v1329 = vadd.f32 %v1327, %v1328
        %v1330 = vadd.f32 %v594, %v610
        %v1331 = vrot.slane %v1330, 4
        %v1332 = vadd.f32 %v1330, %v1331
        %v1333 = vrot.slane %v1332, 2
        %v1334 = vadd.f32 %v1332, %v1333
        %v1335 = vrot.slane %v1334, 1
        %v1336 = vadd.f32 %v1334, %v1335
        %v1337 = vadd.f32 %v595, %v611
        %v1338 = vrot.slane %v1337, 4
        %v1339 = vadd.f32 %v1337, %v1338
        %v1340 = vrot.slane %v1339, 2
        %v1341 = vadd.f32 %v1339, %v1340
        %v1342 = vrot.slane %v1341, 1
        %v1343 = vadd.f32 %v1341, %v1342
        %v1344 = vadd.f32 %v596, %v612
        %v1345 = vrot.slane %v1344, 4
        %v1346 = vadd.f32 %v1344, %v1345
        %v1347 = vrot.slane %v1346, 2
        %v1348 = vadd.f32 %v1346, %v1347
        %v1349 = vrot.slane %v1348, 1
        %v1350 = vadd.f32 %v1348, %v1349
        %v1351 = vadd.f32 %v597, %v613
        %v1352 = vrot.slane %v1351, 4
        %v1353 = vadd.f32 %v1351, %v1352
        %v1354 = vrot.slane %v1353, 2
        %v1355 = vadd.f32 %v1353, %v1354
        %v1356 = vrot.slane %v1355, 1
        %v1357 = vadd.f32 %v1355, %v1356
        %v1358 = vadd.f32 %v598, %v614
        %v1359 = vrot.slane %v1358, 4
        %v1360 = vadd.f32 %v1358, %v1359
        %v1361 = vrot.slane %v1360, 2
        %v1362 = vadd.f32 %v1360, %v1361
        %v1363 = vrot.slane %v1362, 1
        %v1364 = vadd.f32 %v1362, %v1363
        %v1365 = vadd.f32 %v599, %v615
        %v1366 = vrot.slane %v1365, 4
        %v1367 = vadd.f32 %v1365, %v1366
        %v1368 = vrot.slane %v1367, 2
        %v1369 = vadd.f32 %v1367, %v1368
        %v1370 = vrot.slane %v1369, 1
        %v1371 = vadd.f32 %v1369, %v1370
        %v1372 = vadd.f32 %v600, %v616
        %v1373 = vrot.slane %v1372, 4
        %v1374 = vadd.f32 %v1372, %v1373
        %v1375 = vrot.slane %v1374, 2
        %v1376 = vadd.f32 %v1374, %v1375
        %v1377 = vrot.slane %v1376, 1
        %v1378 = vadd.f32 %v1376, %v1377
        %v1379 = vadd.f32 %v601, %v617
        %v1380 = vrot.slane %v1379, 4
        %v1381 = vadd.f32 %v1379, %v1380
        %v1382 = vrot.slane %v1381, 2
        %v1383 = vadd.f32 %v1381, %v1382
        %v1384 = vrot.slane %v1383, 1
        %v1385 = vadd.f32 %v1383, %v1384
        %v1386 = vadd.f32 %v602, %v618
        %v1387 = vrot.slane %v1386, 4
        %v1388 = vadd.f32 %v1386, %v1387
        %v1389 = vrot.slane %v1388, 2
        %v1390 = vadd.f32 %v1388, %v1389
        %v1391 = vrot.slane %v1390, 1
        %v1392 = vadd.f32 %v1390, %v1391
        %v1393 = vadd.f32 %v603, %v619
        %v1394 = vrot.slane %v1393, 4
        %v1395 = vadd.f32 %v1393, %v1394
        %v1396 = vrot.slane %v1395, 2
        %v1397 = vadd.f32 %v1395, %v1396
        %v1398 = vrot.slane %v1397, 1
        %v1399 = vadd.f32 %v1397, %v1398
        %v1400 = vadd.f32 %v604, %v620
        %v1401 = vrot.slane %v1400, 4
        %v1402 = vadd.f32 %v1400, %v1401
        %v1403 = vrot.slane %v1402, 2
        %v1404 = vadd.f32 %v1402, %v1403
        %v1405 = vrot.slane %v1404, 1
        %v1406 = vadd.f32 %v1404, %v1405
        %v1407 = vadd.f32 %v605, %v621
        %v1408 = vrot.slane %v1407, 4
        %v1409 = vadd.f32 %v1407, %v1408
        %v1410 = vrot.slane %v1409, 2
        %v1411 = vadd.f32 %v1409, %v1410
        %v1412 = vrot.slane %v1411, 1
        %v1413 = vadd.f32 %v1411, %v1412
        %v1414 = vadd.f32 %v606, %v622
        %v1415 = vrot.slane %v1414, 4
        %v1416 = vadd.f32 %v1414, %v1415
        %v1417 = vrot.slane %v1416, 2
        %v1418 = vadd.f32 %v1416, %v1417
        %v1419 = vrot.slane %v1418, 1
        %v1420 = vadd.f32 %v1418, %v1419
        %v1421 = vadd.f32 %v607, %v623
        %v1422 = vrot.slane %v1421, 4
        %v1423 = vadd.f32 %v1421, %v1422
        %v1424 = vrot.slane %v1423, 2
        %v1425 = vadd.f32 %v1423, %v1424
        %v1426 = vrot.slane %v1425, 1
        %v1427 = vadd.f32 %v1425, %v1426
        %v1428 = vadd.f32 %v608, %v624
        %v1429 = vrot.slane %v1428, 4
        %v1430 = vadd.f32 %v1428, %v1429
        %v1431 = vrot.slane %v1430, 2
        %v1432 = vadd.f32 %v1430, %v1431
        %v1433 = vrot.slane %v1432, 1
        %v1434 = vadd.f32 %v1432, %v1433
        %v1435 = vadd.f32 %v609, %v625
        %v1436 = vrot.slane %v1435, 4
        %v1437 = vadd.f32 %v1435, %v1436
        %v1438 = vrot.slane %v1437, 2
        %v1439 = vadd.f32 %v1437, %v1438
        %v1440 = vrot.slane %v1439, 1
        %v1441 = vadd.f32 %v1439, %v1440
        %v1442 = vadd.f32 %v626, %v642
        %v1443 = vrot.slane %v1442, 4
        %v1444 = vadd.f32 %v1442, %v1443
        %v1445 = vrot.slane %v1444, 2
        %v1446 = vadd.f32 %v1444, %v1445
        %v1447 = vrot.slane %v1446, 1
        %v1448 = vadd.f32 %v1446, %v1447
        %v1449 = vadd.f32 %v627, %v643
        %v1450 = vrot.slane %v1449, 4
        %v1451 = vadd.f32 %v1449, %v1450
        %v1452 = vrot.slane %v1451, 2
        %v1453 = vadd.f32 %v1451, %v1452
        %v1454 = vrot.slane %v1453, 1
        %v1455 = vadd.f32 %v1453, %v1454
        %v1456 = vadd.f32 %v628, %v644
        %v1457 = vrot.slane %v1456, 4
        %v1458 = vadd.f32 %v1456, %v1457
        %v1459 = vrot.slane %v1458, 2
        %v1460 = vadd.f32 %v1458, %v1459
        %v1461 = vrot.slane %v1460, 1
        %v1462 = vadd.f32 %v1460, %v1461
        %v1463 = vadd.f32 %v629, %v645
        %v1464 = vrot.slane %v1463, 4
        %v1465 = vadd.f32 %v1463, %v1464
        %v1466 = vrot.slane %v1465, 2
        %v1467 = vadd.f32 %v1465, %v1466
        %v1468 = vrot.slane %v1467, 1
        %v1469 = vadd.f32 %v1467, %v1468
        %v1470 = vadd.f32 %v630, %v646
        %v1471 = vrot.slane %v1470, 4
        %v1472 = vadd.f32 %v1470, %v1471
        %v1473 = vrot.slane %v1472, 2
        %v1474 = vadd.f32 %v1472, %v1473
        %v1475 = vrot.slane %v1474, 1
        %v1476 = vadd.f32 %v1474, %v1475
        %v1477 = vadd.f32 %v631, %v647
        %v1478 = vrot.slane %v1477, 4
        %v1479 = vadd.f32 %v1477, %v1478
        %v1480 = vrot.slane %v1479, 2
        %v1481 = vadd.f32 %v1479, %v1480
        %v1482 = vrot.slane %v1481, 1
        %v1483 = vadd.f32 %v1481, %v1482
        %v1484 = vadd.f32 %v632, %v648
        %v1485 = vrot.slane %v1484, 4
        %v1486 = vadd.f32 %v1484, %v1485
        %v1487 = vrot.slane %v1486, 2
        %v1488 = vadd.f32 %v1486, %v1487
        %v1489 = vrot.slane %v1488, 1
        %v1490 = vadd.f32 %v1488, %v1489
        %v1491 = vadd.f32 %v633, %v649
        %v1492 = vrot.slane %v1491, 4
        %v1493 = vadd.f32 %v1491, %v1492
        %v1494 = vrot.slane %v1493, 2
        %v1495 = vadd.f32 %v1493, %v1494
        %v1496 = vrot.slane %v1495, 1
        %v1497 = vadd.f32 %v1495, %v1496
        %v1498 = vadd.f32 %v634, %v650
        %v1499 = vrot.slane %v1498, 4
        %v1500 = vadd.f32 %v1498, %v1499
        %v1501 = vrot.slane %v1500, 2
        %v1502 = vadd.f32 %v1500, %v1501
        %v1503 = vrot.slane %v1502, 1
        %v1504 = vadd.f32 %v1502, %v1503
        %v1505 = vadd.f32 %v635, %v651
        %v1506 = vrot.slane %v1505, 4
        %v1507 = vadd.f32 %v1505, %v1506
        %v1508 = vrot.slane %v1507, 2
        %v1509 = vadd.f32 %v1507, %v1508
        %v1510 = vrot.slane %v1509, 1
        %v1511 = vadd.f32 %v1509, %v1510
        %v1512 = vadd.f32 %v636, %v652
        %v1513 = vrot.slane %v1512, 4
        %v1514 = vadd.f32 %v1512, %v1513
        %v1515 = vrot.slane %v1514, 2
        %v1516 = vadd.f32 %v1514, %v1515
        %v1517 = vrot.slane %v1516, 1
        %v1518 = vadd.f32 %v1516, %v1517
        %v1519 = vadd.f32 %v637, %v653
        %v1520 = vrot.slane %v1519, 4
        %v1521 = vadd.f32 %v1519, %v1520
        %v1522 = vrot.slane %v1521, 2
        %v1523 = vadd.f32 %v1521, %v1522
        %v1524 = vrot.slane %v1523, 1
        %v1525 = vadd.f32 %v1523, %v1524
        %v1526 = vadd.f32 %v638, %v654
        %v1527 = vrot.slane %v1526, 4
        %v1528 = vadd.f32 %v1526, %v1527
        %v1529 = vrot.slane %v1528, 2
        %v1530 = vadd.f32 %v1528, %v1529
        %v1531 = vrot.slane %v1530, 1
        %v1532 = vadd.f32 %v1530, %v1531
        %v1533 = vadd.f32 %v639, %v655
        %v1534 = vrot.slane %v1533, 4
        %v1535 = vadd.f32 %v1533, %v1534
        %v1536 = vrot.slane %v1535, 2
        %v1537 = vadd.f32 %v1535, %v1536
        %v1538 = vrot.slane %v1537, 1
        %v1539 = vadd.f32 %v1537, %v1538
        %v1540 = vadd.f32 %v640, %v656
        %v1541 = vrot.slane %v1540, 4
        %v1542 = vadd.f32 %v1540, %v1541
        %v1543 = vrot.slane %v1542, 2
        %v1544 = vadd.f32 %v1542, %v1543
        %v1545 = vrot.slane %v1544, 1
        %v1546 = vadd.f32 %v1544, %v1545
        %v1547 = vadd.f32 %v641, %v657
        %v1548 = vrot.slane %v1547, 4
        %v1549 = vadd.f32 %v1547, %v1548
        %v1550 = vrot.slane %v1549, 2
        %v1551 = vadd.f32 %v1549, %v1550
        %v1552 = vrot.slane %v1551, 1
        %v1553 = vadd.f32 %v1551, %v1552
        %v1554 = vrcp.pop 16.0
        %v1555 = vmul.f32 %v664, %v1554
        %v1556 = vmul.f32 %v671, %v1554
        %v1557 = vmul.f32 %v678, %v1554
        %v1558 = vmul.f32 %v685, %v1554
        %v1559 = vmul.f32 %v692, %v1554
        %v1560 = vmul.f32 %v699, %v1554
        %v1561 = vmul.f32 %v706, %v1554
        %v1562 = vmul.f32 %v713, %v1554
        %v1563 = vmul.f32 %v720, %v1554
        %v1564 = vmul.f32 %v727, %v1554
        %v1565 = vmul.f32 %v734, %v1554
        %v1566 = vmul.f32 %v741, %v1554
        %v1567 = vmul.f32 %v748, %v1554
        %v1568 = vmul.f32 %v755, %v1554
        %v1569 = vmul.f32 %v762, %v1554
        %v1570 = vmul.f32 %v769, %v1554
        %v1571 = vmul.f32 %v776, %v1554
        %v1572 = vmul.f32 %v783, %v1554
        %v1573 = vmul.f32 %v790, %v1554
        %v1574 = vmul.f32 %v797, %v1554
        %v1575 = vmul.f32 %v804, %v1554
        %v1576 = vmul.f32 %v811, %v1554
        %v1577 = vmul.f32 %v818, %v1554
        %v1578 = vmul.f32 %v825, %v1554
        %v1579 = vmul.f32 %v832, %v1554
        %v1580 = vmul.f32 %v839, %v1554
        %v1581 = vmul.f32 %v846, %v1554
        %v1582 = vmul.f32 %v853, %v1554
        %v1583 = vmul.f32 %v860, %v1554
        %v1584 = vmul.f32 %v867, %v1554
        %v1585 = vmul.f32 %v874, %v1554
        %v1586 = vmul.f32 %v881, %v1554
        %v1587 = vmul.f32 %v888, %v1554
        %v1588 = vmul.f32 %v895, %v1554
        %v1589 = vmul.f32 %v902, %v1554
        %v1590 = vmul.f32 %v909, %v1554
        %v1591 = vmul.f32 %v916, %v1554
        %v1592 = vmul.f32 %v923, %v1554
        %v1593 = vmul.f32 %v930, %v1554
        %v1594 = vmul.f32 %v937, %v1554
        %v1595 = vmul.f32 %v944, %v1554
        %v1596 = vmul.f32 %v951, %v1554
        %v1597 = vmul.f32 %v958, %v1554
        %v1598 = vmul.f32 %v965, %v1554
        %v1599 = vmul.f32 %v972, %v1554
        %v1600 = vmul.f32 %v979, %v1554
        %v1601 = vmul.f32 %v986, %v1554
        %v1602 = vmul.f32 %v993, %v1554
        %v1603 = vmul.f32 %v1000, %v1554
        %v1604 = vmul.f32 %v1007, %v1554
        %v1605 = vmul.f32 %v1014, %v1554
        %v1606 = vmul.f32 %v1021, %v1554
        %v1607 = vmul.f32 %v1028, %v1554
        %v1608 = vmul.f32 %v1035, %v1554
        %v1609 = vmul.f32 %v1042, %v1554
        %v1610 = vmul.f32 %v1049, %v1554
        %v1611 = vmul.f32 %v1056, %v1554
        %v1612 = vmul.f32 %v1063, %v1554
        %v1613 = vmul.f32 %v1070, %v1554
        %v1614 = vmul.f32 %v1077, %v1554
        %v1615 = vmul.f32 %v1084, %v1554
        %v1616 = vmul.f32 %v1091, %v1554
        %v1617 = vmul.f32 %v1098, %v1554
        %v1618 = vmul.f32 %v1105, %v1554
        %v1619 = vmul.f32 %v1112, %v1554
        %v1620 = vmul.f32 %v1119, %v1554
        %v1621 = vmul.f32 %v1126, %v1554
        %v1622 = vmul.f32 %v1133, %v1554
        %v1623 = vmul.f32 %v1140, %v1554
        %v1624 = vmul.f32 %v1147, %v1554
        %v1625 = vmul.f32 %v1154, %v1554
        %v1626 = vmul.f32 %v1161, %v1554
        %v1627 = vmul.f32 %v1168, %v1554
        %v1628 = vmul.f32 %v1175, %v1554
        %v1629 = vmul.f32 %v1182, %v1554
        %v1630 = vmul.f32 %v1189, %v1554
        %v1631 = vmul.f32 %v1196, %v1554
        %v1632 = vmul.f32 %v1203, %v1554
        %v1633 = vmul.f32 %v1210, %v1554
        %v1634 = vmul.f32 %v1217, %v1554
        %v1635 = vmul.f32 %v1224, %v1554
        %v1636 = vmul.f32 %v1231, %v1554
        %v1637 = vmul.f32 %v1238, %v1554
        %v1638 = vmul.f32 %v1245, %v1554
        %v1639 = vmul.f32 %v1252, %v1554
        %v1640 = vmul.f32 %v1259, %v1554
        %v1641 = vmul.f32 %v1266, %v1554
        %v1642 = vmul.f32 %v1273, %v1554
        %v1643 = vmul.f32 %v1280, %v1554
        %v1644 = vmul.f32 %v1287, %v1554
        %v1645 = vmul.f32 %v1294, %v1554
        %v1646 = vmul.f32 %v1301, %v1554
        %v1647 = vmul.f32 %v1308, %v1554
        %v1648 = vmul.f32 %v1315, %v1554
        %v1649 = vmul.f32 %v1322, %v1554
        %v1650 = vmul.f32 %v1329, %v1554
        %v1651 = vmul.f32 %v1336, %v1554
        %v1652 = vmul.f32 %v1343, %v1554
        %v1653 = vmul.f32 %v1350, %v1554
        %v1654 = vmul.f32 %v1357, %v1554
        %v1655 = vmul.f32 %v1364, %v1554
        %v1656 = vmul.f32 %v1371, %v1554
        %v1657 = vmul.f32 %v1378, %v1554
        %v1658 = vmul.f32 %v1385, %v1554
        %v1659 = vmul.f32 %v1392, %v1554
        %v1660 = vmul.f32 %v1399, %v1554
        %v1661 = vmul.f32 %v1406, %v1554
        %v1662 = vmul.f32 %v1413, %v1554
        %v1663 = vmul.f32 %v1420, %v1554
        %v1664 = vmul.f32 %v1427, %v1554
        %v1665 = vmul.f32 %v1434, %v1554
        %v1666 = vmul.f32 %v1441, %v1554
        %v1667 = vmul.f32 %v1448, %v1554
        %v1668 = vmul.f32 %v1455, %v1554
        %v1669 = vmul.f32 %v1462, %v1554
        %v1670 = vmul.f32 %v1469, %v1554
        %v1671 = vmul.f32 %v1476, %v1554
        %v1672 = vmul.f32 %v1483, %v1554
        %v1673 = vmul.f32 %v1490, %v1554
        %v1674 = vmul.f32 %v1497, %v1554
        %v1675 = vmul.f32 %v1504, %v1554
        %v1676 = vmul.f32 %v1511, %v1554
        %v1677 = vmul.f32 %v1518, %v1554
        %v1678 = vmul.f32 %v1525, %v1554
        %v1679 = vmul.f32 %v1532, %v1554
        %v1680 = vmul.f32 %v1539, %v1554
        %v1681 = vmul.f32 %v1546, %v1554
        %v1682 = vmul.f32 %v1553, %v1554
        %v1683 = vmax.f32 %v402, %v418
        %v1684 = vrot.slane %v1683, 4
        %v1685 = vmax.f32 %v1683, %v1684
        %v1686 = vrot.slane %v1685, 2
        %v1687 = vmax.f32 %v1685, %v1686
        %v1688 = vrot.slane %v1687, 1
        %v1689 = vmax.f32 %v1687, %v1688
        %v1690 = vmax.f32 %v403, %v419
        %v1691 = vrot.slane %v1690, 4
        %v1692 = vmax.f32 %v1690, %v1691
        %v1693 = vrot.slane %v1692, 2
        %v1694 = vmax.f32 %v1692, %v1693
        %v1695 = vrot.slane %v1694, 1
        %v1696 = vmax.f32 %v1694, %v1695
        %v1697 = vmax.f32 %v404, %v420
        %v1698 = vrot.slane %v1697, 4
        %v1699 = vmax.f32 %v1697, %v1698
        %v1700 = vrot.slane %v1699, 2
        %v1701 = vmax.f32 %v1699, %v1700
        %v1702 = vrot.slane %v1701, 1
        %v1703 = vmax.f32 %v1701, %v1702
        %v1704 = vmax.f32 %v405, %v421
        %v1705 = vrot.slane %v1704, 4
        %v1706 = vmax.f32 %v1704, %v1705
        %v1707 = vrot.slane %v1706, 2
        %v1708 = vmax.f32 %v1706, %v1707
        %v1709 = vrot.slane %v1708, 1
        %v1710 = vmax.f32 %v1708, %v1709
        %v1711 = vmax.f32 %v406, %v422
        %v1712 = vrot.slane %v1711, 4
        %v1713 = vmax.f32 %v1711, %v1712
        %v1714 = vrot.slane %v1713, 2
        %v1715 = vmax.f32 %v1713, %v1714
        %v1716 = vrot.slane %v1715, 1
        %v1717 = vmax.f32 %v1715, %v1716
        %v1718 = vmax.f32 %v407, %v423
        %v1719 = vrot.slane %v1718, 4
        %v1720 = vmax.f32 %v1718, %v1719
        %v1721 = vrot.slane %v1720, 2
        %v1722 = vmax.f32 %v1720, %v1721
        %v1723 = vrot.slane %v1722, 1
        %v1724 = vmax.f32 %v1722, %v1723
        %v1725 = vmax.f32 %v408, %v424
        %v1726 = vrot.slane %v1725, 4
        %v1727 = vmax.f32 %v1725, %v1726
        %v1728 = vrot.slane %v1727, 2
        %v1729 = vmax.f32 %v1727, %v1728
        %v1730 = vrot.slane %v1729, 1
        %v1731 = vmax.f32 %v1729, %v1730
        %v1732 = vmax.f32 %v409, %v425
        %v1733 = vrot.slane %v1732, 4
        %v1734 = vmax.f32 %v1732, %v1733
        %v1735 = vrot.slane %v1734, 2
        %v1736 = vmax.f32 %v1734, %v1735
        %v1737 = vrot.slane %v1736, 1
        %v1738 = vmax.f32 %v1736, %v1737
        %v1739 = vmax.f32 %v410, %v426
        %v1740 = vrot.slane %v1739, 4
        %v1741 = vmax.f32 %v1739, %v1740
        %v1742 = vrot.slane %v1741, 2
        %v1743 = vmax.f32 %v1741, %v1742
        %v1744 = vrot.slane %v1743, 1
        %v1745 = vmax.f32 %v1743, %v1744
        %v1746 = vmax.f32 %v411, %v427
        %v1747 = vrot.slane %v1746, 4
        %v1748 = vmax.f32 %v1746, %v1747
        %v1749 = vrot.slane %v1748, 2
        %v1750 = vmax.f32 %v1748, %v1749
        %v1751 = vrot.slane %v1750, 1
        %v1752 = vmax.f32 %v1750, %v1751
        %v1753 = vmax.f32 %v412, %v428
        %v1754 = vrot.slane %v1753, 4
        %v1755 = vmax.f32 %v1753, %v1754
        %v1756 = vrot.slane %v1755, 2
        %v1757 = vmax.f32 %v1755, %v1756
        %v1758 = vrot.slane %v1757, 1
        %v1759 = vmax.f32 %v1757, %v1758
        %v1760 = vmax.f32 %v413, %v429
        %v1761 = vrot.slane %v1760, 4
        %v1762 = vmax.f32 %v1760, %v1761
        %v1763 = vrot.slane %v1762, 2
        %v1764 = vmax.f32 %v1762, %v1763
        %v1765 = vrot.slane %v1764, 1
        %v1766 = vmax.f32 %v1764, %v1765
        %v1767 = vmax.f32 %v414, %v430
        %v1768 = vrot.slane %v1767, 4
        %v1769 = vmax.f32 %v1767, %v1768
        %v1770 = vrot.slane %v1769, 2
        %v1771 = vmax.f32 %v1769, %v1770
        %v1772 = vrot.slane %v1771, 1
        %v1773 = vmax.f32 %v1771, %v1772
        %v1774 = vmax.f32 %v415, %v431
        %v1775 = vrot.slane %v1774, 4
        %v1776 = vmax.f32 %v1774, %v1775
        %v1777 = vrot.slane %v1776, 2
        %v1778 = vmax.f32 %v1776, %v1777
        %v1779 = vrot.slane %v1778, 1
        %v1780 = vmax.f32 %v1778, %v1779
        %v1781 = vmax.f32 %v416, %v432
        %v1782 = vrot.slane %v1781, 4
        %v1783 = vmax.f32 %v1781, %v1782
        %v1784 = vrot.slane %v1783, 2
        %v1785 = vmax.f32 %v1783, %v1784
        %v1786 = vrot.slane %v1785, 1
        %v1787 = vmax.f32 %v1785, %v1786
        %v1788 = vmax.f32 %v417, %v433
        %v1789 = vrot.slane %v1788, 4
        %v1790 = vmax.f32 %v1788, %v1789
        %v1791 = vrot.slane %v1790, 2
        %v1792 = vmax.f32 %v1790, %v1791
        %v1793 = vrot.slane %v1792, 1
        %v1794 = vmax.f32 %v1792, %v1793
        %v1795 = vmax.f32 %v434, %v450
        %v1796 = vrot.slane %v1795, 4
        %v1797 = vmax.f32 %v1795, %v1796
        %v1798 = vrot.slane %v1797, 2
        %v1799 = vmax.f32 %v1797, %v1798
        %v1800 = vrot.slane %v1799, 1
        %v1801 = vmax.f32 %v1799, %v1800
        %v1802 = vmax.f32 %v435, %v451
        %v1803 = vrot.slane %v1802, 4
        %v1804 = vmax.f32 %v1802, %v1803
        %v1805 = vrot.slane %v1804, 2
        %v1806 = vmax.f32 %v1804, %v1805
        %v1807 = vrot.slane %v1806, 1
        %v1808 = vmax.f32 %v1806, %v1807
        %v1809 = vmax.f32 %v436, %v452
        %v1810 = vrot.slane %v1809, 4
        %v1811 = vmax.f32 %v1809, %v1810
        %v1812 = vrot.slane %v1811, 2
        %v1813 = vmax.f32 %v1811, %v1812
        %v1814 = vrot.slane %v1813, 1
        %v1815 = vmax.f32 %v1813, %v1814
        %v1816 = vmax.f32 %v437, %v453
        %v1817 = vrot.slane %v1816, 4
        %v1818 = vmax.f32 %v1816, %v1817
        %v1819 = vrot.slane %v1818, 2
        %v1820 = vmax.f32 %v1818, %v1819
        %v1821 = vrot.slane %v1820, 1
        %v1822 = vmax.f32 %v1820, %v1821
        %v1823 = vmax.f32 %v438, %v454
        %v1824 = vrot.slane %v1823, 4
        %v1825 = vmax.f32 %v1823, %v1824
        %v1826 = vrot.slane %v1825, 2
        %v1827 = vmax.f32 %v1825, %v1826
        %v1828 = vrot.slane %v1827, 1
        %v1829 = vmax.f32 %v1827, %v1828
        %v1830 = vmax.f32 %v439, %v455
        %v1831 = vrot.slane %v1830, 4
        %v1832 = vmax.f32 %v1830, %v1831
        %v1833 = vrot.slane %v1832, 2
        %v1834 = vmax.f32 %v1832, %v1833
        %v1835 = vrot.slane %v1834, 1
        %v1836 = vmax.f32 %v1834, %v1835
        %v1837 = vmax.f32 %v440, %v456
        %v1838 = vrot.slane %v1837, 4
        %v1839 = vmax.f32 %v1837, %v1838
        %v1840 = vrot.slane %v1839, 2
        %v1841 = vmax.f32 %v1839, %v1840
        %v1842 = vrot.slane %v1841, 1
        %v1843 = vmax.f32 %v1841, %v1842
        %v1844 = vmax.f32 %v441, %v457
        %v1845 = vrot.slane %v1844, 4
        %v1846 = vmax.f32 %v1844, %v1845
        %v1847 = vrot.slane %v1846, 2
        %v1848 = vmax.f32 %v1846, %v1847
        %v1849 = vrot.slane %v1848, 1
        %v1850 = vmax.f32 %v1848, %v1849
        %v1851 = vmax.f32 %v442, %v458
        %v1852 = vrot.slane %v1851, 4
        %v1853 = vmax.f32 %v1851, %v1852
        %v1854 = vrot.slane %v1853, 2
        %v1855 = vmax.f32 %v1853, %v1854
        %v1856 = vrot.slane %v1855, 1
        %v1857 = vmax.f32 %v1855, %v1856
        %v1858 = vmax.f32 %v443, %v459
        %v1859 = vrot.slane %v1858, 4
        %v1860 = vmax.f32 %v1858, %v1859
        %v1861 = vrot.slane %v1860, 2
        %v1862 = vmax.f32 %v1860, %v1861
        %v1863 = vrot.slane %v1862, 1
        %v1864 = vmax.f32 %v1862, %v1863
        %v1865 = vmax.f32 %v444, %v460
        %v1866 = vrot.slane %v1865, 4
        %v1867 = vmax.f32 %v1865, %v1866
        %v1868 = vrot.slane %v1867, 2
        %v1869 = vmax.f32 %v1867, %v1868
        %v1870 = vrot.slane %v1869, 1
        %v1871 = vmax.f32 %v1869, %v1870
        %v1872 = vmax.f32 %v445, %v461
        %v1873 = vrot.slane %v1872, 4
        %v1874 = vmax.f32 %v1872, %v1873
        %v1875 = vrot.slane %v1874, 2
        %v1876 = vmax.f32 %v1874, %v1875
        %v1877 = vrot.slane %v1876, 1
        %v1878 = vmax.f32 %v1876, %v1877
        %v1879 = vmax.f32 %v446, %v462
        %v1880 = vrot.slane %v1879, 4
        %v1881 = vmax.f32 %v1879, %v1880
        %v1882 = vrot.slane %v1881, 2
        %v1883 = vmax.f32 %v1881, %v1882
        %v1884 = vrot.slane %v1883, 1
        %v1885 = vmax.f32 %v1883, %v1884
        %v1886 = vmax.f32 %v447, %v463
        %v1887 = vrot.slane %v1886, 4
        %v1888 = vmax.f32 %v1886, %v1887
        %v1889 = vrot.slane %v1888, 2
        %v1890 = vmax.f32 %v1888, %v1889
        %v1891 = vrot.slane %v1890, 1
        %v1892 = vmax.f32 %v1890, %v1891
        %v1893 = vmax.f32 %v448, %v464
        %v1894 = vrot.slane %v1893, 4
        %v1895 = vmax.f32 %v1893, %v1894
        %v1896 = vrot.slane %v1895, 2
        %v1897 = vmax.f32 %v1895, %v1896
        %v1898 = vrot.slane %v1897, 1
        %v1899 = vmax.f32 %v1897, %v1898
        %v1900 = vmax.f32 %v449, %v465
        %v1901 = vrot.slane %v1900, 4
        %v1902 = vmax.f32 %v1900, %v1901
        %v1903 = vrot.slane %v1902, 2
        %v1904 = vmax.f32 %v1902, %v1903
        %v1905 = vrot.slane %v1904, 1
        %v1906 = vmax.f32 %v1904, %v1905
        %v1907 = vmax.f32 %v466, %v482
        %v1908 = vrot.slane %v1907, 4
        %v1909 = vmax.f32 %v1907, %v1908
        %v1910 = vrot.slane %v1909, 2
        %v1911 = vmax.f32 %v1909, %v1910
        %v1912 = vrot.slane %v1911, 1
        %v1913 = vmax.f32 %v1911, %v1912
        %v1914 = vmax.f32 %v467, %v483
        %v1915 = vrot.slane %v1914, 4
        %v1916 = vmax.f32 %v1914, %v1915
        %v1917 = vrot.slane %v1916, 2
        %v1918 = vmax.f32 %v1916, %v1917
        %v1919 = vrot.slane %v1918, 1
        %v1920 = vmax.f32 %v1918, %v1919
        %v1921 = vmax.f32 %v468, %v484
        %v1922 = vrot.slane %v1921, 4
        %v1923 = vmax.f32 %v1921, %v1922
        %v1924 = vrot.slane %v1923, 2
        %v1925 = vmax.f32 %v1923, %v1924
        %v1926 = vrot.slane %v1925, 1
        %v1927 = vmax.f32 %v1925, %v1926
        %v1928 = vmax.f32 %v469, %v485
        %v1929 = vrot.slane %v1928, 4
        %v1930 = vmax.f32 %v1928, %v1929
        %v1931 = vrot.slane %v1930, 2
        %v1932 = vmax.f32 %v1930, %v1931
        %v1933 = vrot.slane %v1932, 1
        %v1934 = vmax.f32 %v1932, %v1933
        %v1935 = vmax.f32 %v470, %v486
        %v1936 = vrot.slane %v1935, 4
        %v1937 = vmax.f32 %v1935, %v1936
        %v1938 = vrot.slane %v1937, 2
        %v1939 = vmax.f32 %v1937, %v1938
        %v1940 = vrot.slane %v1939, 1
        %v1941 = vmax.f32 %v1939, %v1940
        %v1942 = vmax.f32 %v471, %v487
        %v1943 = vrot.slane %v1942, 4
        %v1944 = vmax.f32 %v1942, %v1943
        %v1945 = vrot.slane %v1944, 2
        %v1946 = vmax.f32 %v1944, %v1945
        %v1947 = vrot.slane %v1946, 1
        %v1948 = vmax.f32 %v1946, %v1947
        %v1949 = vmax.f32 %v472, %v488
        %v1950 = vrot.slane %v1949, 4
        %v1951 = vmax.f32 %v1949, %v1950
        %v1952 = vrot.slane %v1951, 2
        %v1953 = vmax.f32 %v1951, %v1952
        %v1954 = vrot.slane %v1953, 1
        %v1955 = vmax.f32 %v1953, %v1954
        %v1956 = vmax.f32 %v473, %v489
        %v1957 = vrot.slane %v1956, 4
        %v1958 = vmax.f32 %v1956, %v1957
        %v1959 = vrot.slane %v1958, 2
        %v1960 = vmax.f32 %v1958, %v1959
        %v1961 = vrot.slane %v1960, 1
        %v1962 = vmax.f32 %v1960, %v1961
        %v1963 = vmax.f32 %v474, %v490
        %v1964 = vrot.slane %v1963, 4
        %v1965 = vmax.f32 %v1963, %v1964
        %v1966 = vrot.slane %v1965, 2
        %v1967 = vmax.f32 %v1965, %v1966
        %v1968 = vrot.slane %v1967, 1
        %v1969 = vmax.f32 %v1967, %v1968
        %v1970 = vmax.f32 %v475, %v491
        %v1971 = vrot.slane %v1970, 4
        %v1972 = vmax.f32 %v1970, %v1971
        %v1973 = vrot.slane %v1972, 2
        %v1974 = vmax.f32 %v1972, %v1973
        %v1975 = vrot.slane %v1974, 1
        %v1976 = vmax.f32 %v1974, %v1975
        %v1977 = vmax.f32 %v476, %v492
        %v1978 = vrot.slane %v1977, 4
        %v1979 = vmax.f32 %v1977, %v1978
        %v1980 = vrot.slane %v1979, 2
        %v1981 = vmax.f32 %v1979, %v1980
        %v1982 = vrot.slane %v1981, 1
        %v1983 = vmax.f32 %v1981, %v1982
        %v1984 = vmax.f32 %v477, %v493
        %v1985 = vrot.slane %v1984, 4
        %v1986 = vmax.f32 %v1984, %v1985
        %v1987 = vrot.slane %v1986, 2
        %v1988 = vmax.f32 %v1986, %v1987
        %v1989 = vrot.slane %v1988, 1
        %v1990 = vmax.f32 %v1988, %v1989
        %v1991 = vmax.f32 %v478, %v494
        %v1992 = vrot.slane %v1991, 4
        %v1993 = vmax.f32 %v1991, %v1992
        %v1994 = vrot.slane %v1993, 2
        %v1995 = vmax.f32 %v1993, %v1994
        %v1996 = vrot.slane %v1995, 1
        %v1997 = vmax.f32 %v1995, %v1996
        %v1998 = vmax.f32 %v479, %v495
        %v1999 = vrot.slane %v1998, 4
        %v2000 = vmax.f32 %v1998, %v1999
        %v2001 = vrot.slane %v2000, 2
        %v2002 = vmax.f32 %v2000, %v2001
        %v2003 = vrot.slane %v2002, 1
        %v2004 = vmax.f32 %v2002, %v2003
        %v2005 = vmax.f32 %v480, %v496
        %v2006 = vrot.slane %v2005, 4
        %v2007 = vmax.f32 %v2005, %v2006
        %v2008 = vrot.slane %v2007, 2
        %v2009 = vmax.f32 %v2007, %v2008
        %v2010 = vrot.slane %v2009, 1
        %v2011 = vmax.f32 %v2009, %v2010
        %v2012 = vmax.f32 %v481, %v497
        %v2013 = vrot.slane %v2012, 4
        %v2014 = vmax.f32 %v2012, %v2013
        %v2015 = vrot.slane %v2014, 2
        %v2016 = vmax.f32 %v2014, %v2015
        %v2017 = vrot.slane %v2016, 1
        %v2018 = vmax.f32 %v2016, %v2017
        %v2019 = vmax.f32 %v498, %v514
        %v2020 = vrot.slane %v2019, 4
        %v2021 = vmax.f32 %v2019, %v2020
        %v2022 = vrot.slane %v2021, 2
        %v2023 = vmax.f32 %v2021, %v2022
        %v2024 = vrot.slane %v2023, 1
        %v2025 = vmax.f32 %v2023, %v2024
        %v2026 = vmax.f32 %v499, %v515
        %v2027 = vrot.slane %v2026, 4
        %v2028 = vmax.f32 %v2026, %v2027
        %v2029 = vrot.slane %v2028, 2
        %v2030 = vmax.f32 %v2028, %v2029
        %v2031 = vrot.slane %v2030, 1
        %v2032 = vmax.f32 %v2030, %v2031
        %v2033 = vmax.f32 %v500, %v516
        %v2034 = vrot.slane %v2033, 4
        %v2035 = vmax.f32 %v2033, %v2034
        %v2036 = vrot.slane %v2035, 2
        %v2037 = vmax.f32 %v2035, %v2036
        %v2038 = vrot.slane %v2037, 1
        %v2039 = vmax.f32 %v2037, %v2038
        %v2040 = vmax.f32 %v501, %v517
        %v2041 = vrot.slane %v2040, 4
        %v2042 = vmax.f32 %v2040, %v2041
        %v2043 = vrot.slane %v2042, 2
        %v2044 = vmax.f32 %v2042, %v2043
        %v2045 = vrot.slane %v2044, 1
        %v2046 = vmax.f32 %v2044, %v2045
        %v2047 = vmax.f32 %v502, %v518
        %v2048 = vrot.slane %v2047, 4
        %v2049 = vmax.f32 %v2047, %v2048
        %v2050 = vrot.slane %v2049, 2
        %v2051 = vmax.f32 %v2049, %v2050
        %v2052 = vrot.slane %v2051, 1
        %v2053 = vmax.f32 %v2051, %v2052
        %v2054 = vmax.f32 %v503, %v519
        %v2055 = vrot.slane %v2054, 4
        %v2056 = vmax.f32 %v2054, %v2055
        %v2057 = vrot.slane %v2056, 2
        %v2058 = vmax.f32 %v2056, %v2057
        %v2059 = vrot.slane %v2058, 1
        %v2060 = vmax.f32 %v2058, %v2059
        %v2061 = vmax.f32 %v504, %v520
        %v2062 = vrot.slane %v2061, 4
        %v2063 = vmax.f32 %v2061, %v2062
        %v2064 = vrot.slane %v2063, 2
        %v2065 = vmax.f32 %v2063, %v2064
        %v2066 = vrot.slane %v2065, 1
        %v2067 = vmax.f32 %v2065, %v2066
        %v2068 = vmax.f32 %v505, %v521
        %v2069 = vrot.slane %v2068, 4
        %v2070 = vmax.f32 %v2068, %v2069
        %v2071 = vrot.slane %v2070, 2
        %v2072 = vmax.f32 %v2070, %v2071
        %v2073 = vrot.slane %v2072, 1
        %v2074 = vmax.f32 %v2072, %v2073
        %v2075 = vmax.f32 %v506, %v522
        %v2076 = vrot.slane %v2075, 4
        %v2077 = vmax.f32 %v2075, %v2076
        %v2078 = vrot.slane %v2077, 2
        %v2079 = vmax.f32 %v2077, %v2078
        %v2080 = vrot.slane %v2079, 1
        %v2081 = vmax.f32 %v2079, %v2080
        %v2082 = vmax.f32 %v507, %v523
        %v2083 = vrot.slane %v2082, 4
        %v2084 = vmax.f32 %v2082, %v2083
        %v2085 = vrot.slane %v2084, 2
        %v2086 = vmax.f32 %v2084, %v2085
        %v2087 = vrot.slane %v2086, 1
        %v2088 = vmax.f32 %v2086, %v2087
        %v2089 = vmax.f32 %v508, %v524
        %v2090 = vrot.slane %v2089, 4
        %v2091 = vmax.f32 %v2089, %v2090
        %v2092 = vrot.slane %v2091, 2
        %v2093 = vmax.f32 %v2091, %v2092
        %v2094 = vrot.slane %v2093, 1
        %v2095 = vmax.f32 %v2093, %v2094
        %v2096 = vmax.f32 %v509, %v525
        %v2097 = vrot.slane %v2096, 4
        %v2098 = vmax.f32 %v2096, %v2097
        %v2099 = vrot.slane %v2098, 2
        %v2100 = vmax.f32 %v2098, %v2099
        %v2101 = vrot.slane %v2100, 1
        %v2102 = vmax.f32 %v2100, %v2101
        %v2103 = vmax.f32 %v510, %v526
        %v2104 = vrot.slane %v2103, 4
        %v2105 = vmax.f32 %v2103, %v2104
        %v2106 = vrot.slane %v2105, 2
        %v2107 = vmax.f32 %v2105, %v2106
        %v2108 = vrot.slane %v2107, 1
        %v2109 = vmax.f32 %v2107, %v2108
        %v2110 = vmax.f32 %v511, %v527
        %v2111 = vrot.slane %v2110, 4
        %v2112 = vmax.f32 %v2110, %v2111
        %v2113 = vrot.slane %v2112, 2
        %v2114 = vmax.f32 %v2112, %v2113
        %v2115 = vrot.slane %v2114, 1
        %v2116 = vmax.f32 %v2114, %v2115
        %v2117 = vmax.f32 %v512, %v528
        %v2118 = vrot.slane %v2117, 4
        %v2119 = vmax.f32 %v2117, %v2118
        %v2120 = vrot.slane %v2119, 2
        %v2121 = vmax.f32 %v2119, %v2120
        %v2122 = vrot.slane %v2121, 1
        %v2123 = vmax.f32 %v2121, %v2122
        %v2124 = vmax.f32 %v513, %v529
        %v2125 = vrot.slane %v2124, 4
        %v2126 = vmax.f32 %v2124, %v2125
        %v2127 = vrot.slane %v2126, 2
        %v2128 = vmax.f32 %v2126, %v2127
        %v2129 = vrot.slane %v2128, 1
        %v2130 = vmax.f32 %v2128, %v2129
        %v2131 = vmax.f32 %v530, %v546
        %v2132 = vrot.slane %v2131, 4
        %v2133 = vmax.f32 %v2131, %v2132
        %v2134 = vrot.slane %v2133, 2
        %v2135 = vmax.f32 %v2133, %v2134
        %v2136 = vrot.slane %v2135, 1
        %v2137 = vmax.f32 %v2135, %v2136
        %v2138 = vmax.f32 %v531, %v547
        %v2139 = vrot.slane %v2138, 4
        %v2140 = vmax.f32 %v2138, %v2139
        %v2141 = vrot.slane %v2140, 2
        %v2142 = vmax.f32 %v2140, %v2141
        %v2143 = vrot.slane %v2142, 1
        %v2144 = vmax.f32 %v2142, %v2143
        %v2145 = vmax.f32 %v532, %v548
        %v2146 = vrot.slane %v2145, 4
        %v2147 = vmax.f32 %v2145, %v2146
        %v2148 = vrot.slane %v2147, 2
        %v2149 = vmax.f32 %v2147, %v2148
        %v2150 = vrot.slane %v2149, 1
        %v2151 = vmax.f32 %v2149, %v2150
        %v2152 = vmax.f32 %v533, %v549
        %v2153 = vrot.slane %v2152, 4
        %v2154 = vmax.f32 %v2152, %v2153
        %v2155 = vrot.slane %v2154, 2
        %v2156 = vmax.f32 %v2154, %v2155
        %v2157 = vrot.slane %v2156, 1
        %v2158 = vmax.f32 %v2156, %v2157
        %v2159 = vmax.f32 %v534, %v550
        %v2160 = vrot.slane %v2159, 4
        %v2161 = vmax.f32 %v2159, %v2160
        %v2162 = vrot.slane %v2161, 2
        %v2163 = vmax.f32 %v2161, %v2162
        %v2164 = vrot.slane %v2163, 1
        %v2165 = vmax.f32 %v2163, %v2164
        %v2166 = vmax.f32 %v535, %v551
        %v2167 = vrot.slane %v2166, 4
        %v2168 = vmax.f32 %v2166, %v2167
        %v2169 = vrot.slane %v2168, 2
        %v2170 = vmax.f32 %v2168, %v2169
        %v2171 = vrot.slane %v2170, 1
        %v2172 = vmax.f32 %v2170, %v2171
        %v2173 = vmax.f32 %v536, %v552
        %v2174 = vrot.slane %v2173, 4
        %v2175 = vmax.f32 %v2173, %v2174
        %v2176 = vrot.slane %v2175, 2
        %v2177 = vmax.f32 %v2175, %v2176
        %v2178 = vrot.slane %v2177, 1
        %v2179 = vmax.f32 %v2177, %v2178
        %v2180 = vmax.f32 %v537, %v553
        %v2181 = vrot.slane %v2180, 4
        %v2182 = vmax.f32 %v2180, %v2181
        %v2183 = vrot.slane %v2182, 2
        %v2184 = vmax.f32 %v2182, %v2183
        %v2185 = vrot.slane %v2184, 1
        %v2186 = vmax.f32 %v2184, %v2185
        %v2187 = vmax.f32 %v538, %v554
        %v2188 = vrot.slane %v2187, 4
        %v2189 = vmax.f32 %v2187, %v2188
        %v2190 = vrot.slane %v2189, 2
        %v2191 = vmax.f32 %v2189, %v2190
        %v2192 = vrot.slane %v2191, 1
        %v2193 = vmax.f32 %v2191, %v2192
        %v2194 = vmax.f32 %v539, %v555
        %v2195 = vrot.slane %v2194, 4
        %v2196 = vmax.f32 %v2194, %v2195
        %v2197 = vrot.slane %v2196, 2
        %v2198 = vmax.f32 %v2196, %v2197
        %v2199 = vrot.slane %v2198, 1
        %v2200 = vmax.f32 %v2198, %v2199
        %v2201 = vmax.f32 %v540, %v556
        %v2202 = vrot.slane %v2201, 4
        %v2203 = vmax.f32 %v2201, %v2202
        %v2204 = vrot.slane %v2203, 2
        %v2205 = vmax.f32 %v2203, %v2204
        %v2206 = vrot.slane %v2205, 1
        %v2207 = vmax.f32 %v2205, %v2206
        %v2208 = vmax.f32 %v541, %v557
        %v2209 = vrot.slane %v2208, 4
        %v2210 = vmax.f32 %v2208, %v2209
        %v2211 = vrot.slane %v2210, 2
        %v2212 = vmax.f32 %v2210, %v2211
        %v2213 = vrot.slane %v2212, 1
        %v2214 = vmax.f32 %v2212, %v2213
        %v2215 = vmax.f32 %v542, %v558
        %v2216 = vrot.slane %v2215, 4
        %v2217 = vmax.f32 %v2215, %v2216
        %v2218 = vrot.slane %v2217, 2
        %v2219 = vmax.f32 %v2217, %v2218
        %v2220 = vrot.slane %v2219, 1
        %v2221 = vmax.f32 %v2219, %v2220
        %v2222 = vmax.f32 %v543, %v559
        %v2223 = vrot.slane %v2222, 4
        %v2224 = vmax.f32 %v2222, %v2223
        %v2225 = vrot.slane %v2224, 2
        %v2226 = vmax.f32 %v2224, %v2225
        %v2227 = vrot.slane %v2226, 1
        %v2228 = vmax.f32 %v2226, %v2227
        %v2229 = vmax.f32 %v544, %v560
        %v2230 = vrot.slane %v2229, 4
        %v2231 = vmax.f32 %v2229, %v2230
        %v2232 = vrot.slane %v2231, 2
        %v2233 = vmax.f32 %v2231, %v2232
        %v2234 = vrot.slane %v2233, 1
        %v2235 = vmax.f32 %v2233, %v2234
        %v2236 = vmax.f32 %v545, %v561
        %v2237 = vrot.slane %v2236, 4
        %v2238 = vmax.f32 %v2236, %v2237
        %v2239 = vrot.slane %v2238, 2
        %v2240 = vmax.f32 %v2238, %v2239
        %v2241 = vrot.slane %v2240, 1
        %v2242 = vmax.f32 %v2240, %v2241
        %v2243 = vmax.f32 %v562, %v578
        %v2244 = vrot.slane %v2243, 4
        %v2245 = vmax.f32 %v2243, %v2244
        %v2246 = vrot.slane %v2245, 2
        %v2247 = vmax.f32 %v2245, %v2246
        %v2248 = vrot.slane %v2247, 1
        %v2249 = vmax.f32 %v2247, %v2248
        %v2250 = vmax.f32 %v563, %v579
        %v2251 = vrot.slane %v2250, 4
        %v2252 = vmax.f32 %v2250, %v2251
        %v2253 = vrot.slane %v2252, 2
        %v2254 = vmax.f32 %v2252, %v2253
        %v2255 = vrot.slane %v2254, 1
        %v2256 = vmax.f32 %v2254, %v2255
        %v2257 = vmax.f32 %v564, %v580
        %v2258 = vrot.slane %v2257, 4
        %v2259 = vmax.f32 %v2257, %v2258
        %v2260 = vrot.slane %v2259, 2
        %v2261 = vmax.f32 %v2259, %v2260
        %v2262 = vrot.slane %v2261, 1
        %v2263 = vmax.f32 %v2261, %v2262
        %v2264 = vmax.f32 %v565, %v581
        %v2265 = vrot.slane %v2264, 4
        %v2266 = vmax.f32 %v2264, %v2265
        %v2267 = vrot.slane %v2266, 2
        %v2268 = vmax.f32 %v2266, %v2267
        %v2269 = vrot.slane %v2268, 1
        %v2270 = vmax.f32 %v2268, %v2269
        %v2271 = vmax.f32 %v566, %v582
        %v2272 = vrot.slane %v2271, 4
        %v2273 = vmax.f32 %v2271, %v2272
        %v2274 = vrot.slane %v2273, 2
        %v2275 = vmax.f32 %v2273, %v2274
        %v2276 = vrot.slane %v2275, 1
        %v2277 = vmax.f32 %v2275, %v2276
        %v2278 = vmax.f32 %v567, %v583
        %v2279 = vrot.slane %v2278, 4
        %v2280 = vmax.f32 %v2278, %v2279
        %v2281 = vrot.slane %v2280, 2
        %v2282 = vmax.f32 %v2280, %v2281
        %v2283 = vrot.slane %v2282, 1
        %v2284 = vmax.f32 %v2282, %v2283
        %v2285 = vmax.f32 %v568, %v584
        %v2286 = vrot.slane %v2285, 4
        %v2287 = vmax.f32 %v2285, %v2286
        %v2288 = vrot.slane %v2287, 2
        %v2289 = vmax.f32 %v2287, %v2288
        %v2290 = vrot.slane %v2289, 1
        %v2291 = vmax.f32 %v2289, %v2290
        %v2292 = vmax.f32 %v569, %v585
        %v2293 = vrot.slane %v2292, 4
        %v2294 = vmax.f32 %v2292, %v2293
        %v2295 = vrot.slane %v2294, 2
        %v2296 = vmax.f32 %v2294, %v2295
        %v2297 = vrot.slane %v2296, 1
        %v2298 = vmax.f32 %v2296, %v2297
        %v2299 = vmax.f32 %v570, %v586
        %v2300 = vrot.slane %v2299, 4
        %v2301 = vmax.f32 %v2299, %v2300
        %v2302 = vrot.slane %v2301, 2
        %v2303 = vmax.f32 %v2301, %v2302
        %v2304 = vrot.slane %v2303, 1
        %v2305 = vmax.f32 %v2303, %v2304
        %v2306 = vmax.f32 %v571, %v587
        %v2307 = vrot.slane %v2306, 4
        %v2308 = vmax.f32 %v2306, %v2307
        %v2309 = vrot.slane %v2308, 2
        %v2310 = vmax.f32 %v2308, %v2309
        %v2311 = vrot.slane %v2310, 1
        %v2312 = vmax.f32 %v2310, %v2311
        %v2313 = vmax.f32 %v572, %v588
        %v2314 = vrot.slane %v2313, 4
        %v2315 = vmax.f32 %v2313, %v2314
        %v2316 = vrot.slane %v2315, 2
        %v2317 = vmax.f32 %v2315, %v2316
        %v2318 = vrot.slane %v2317, 1
        %v2319 = vmax.f32 %v2317, %v2318
        %v2320 = vmax.f32 %v573, %v589
        %v2321 = vrot.slane %v2320, 4
        %v2322 = vmax.f32 %v2320, %v2321
        %v2323 = vrot.slane %v2322, 2
        %v2324 = vmax.f32 %v2322, %v2323
        %v2325 = vrot.slane %v2324, 1
        %v2326 = vmax.f32 %v2324, %v2325
        %v2327 = vmax.f32 %v574, %v590
        %v2328 = vrot.slane %v2327, 4
        %v2329 = vmax.f32 %v2327, %v2328
        %v2330 = vrot.slane %v2329, 2
        %v2331 = vmax.f32 %v2329, %v2330
        %v2332 = vrot.slane %v2331, 1
        %v2333 = vmax.f32 %v2331, %v2332
        %v2334 = vmax.f32 %v575, %v591
        %v2335 = vrot.slane %v2334, 4
        %v2336 = vmax.f32 %v2334, %v2335
        %v2337 = vrot.slane %v2336, 2
        %v2338 = vmax.f32 %v2336, %v2337
        %v2339 = vrot.slane %v2338, 1
        %v2340 = vmax.f32 %v2338, %v2339
        %v2341 = vmax.f32 %v576, %v592
        %v2342 = vrot.slane %v2341, 4
        %v2343 = vmax.f32 %v2341, %v2342
        %v2344 = vrot.slane %v2343, 2
        %v2345 = vmax.f32 %v2343, %v2344
        %v2346 = vrot.slane %v2345, 1
        %v2347 = vmax.f32 %v2345, %v2346
        %v2348 = vmax.f32 %v577, %v593
        %v2349 = vrot.slane %v2348, 4
        %v2350 = vmax.f32 %v2348, %v2349
        %v2351 = vrot.slane %v2350, 2
        %v2352 = vmax.f32 %v2350, %v2351
        %v2353 = vrot.slane %v2352, 1
        %v2354 = vmax.f32 %v2352, %v2353
        %v2355 = vmax.f32 %v594, %v610
        %v2356 = vrot.slane %v2355, 4
        %v2357 = vmax.f32 %v2355, %v2356
        %v2358 = vrot.slane %v2357, 2
        %v2359 = vmax.f32 %v2357, %v2358
        %v2360 = vrot.slane %v2359, 1
        %v2361 = vmax.f32 %v2359, %v2360
        %v2362 = vmax.f32 %v595, %v611
        %v2363 = vrot.slane %v2362, 4
        %v2364 = vmax.f32 %v2362, %v2363
        %v2365 = vrot.slane %v2364, 2
        %v2366 = vmax.f32 %v2364, %v2365
        %v2367 = vrot.slane %v2366, 1
        %v2368 = vmax.f32 %v2366, %v2367
        %v2369 = vmax.f32 %v596, %v612
        %v2370 = vrot.slane %v2369, 4
        %v2371 = vmax.f32 %v2369, %v2370
        %v2372 = vrot.slane %v2371, 2
        %v2373 = vmax.f32 %v2371, %v2372
        %v2374 = vrot.slane %v2373, 1
        %v2375 = vmax.f32 %v2373, %v2374
        %v2376 = vmax.f32 %v597, %v613
        %v2377 = vrot.slane %v2376, 4
        %v2378 = vmax.f32 %v2376, %v2377
        %v2379 = vrot.slane %v2378, 2
        %v2380 = vmax.f32 %v2378, %v2379
        %v2381 = vrot.slane %v2380, 1
        %v2382 = vmax.f32 %v2380, %v2381
        %v2383 = vmax.f32 %v598, %v614
        %v2384 = vrot.slane %v2383, 4
        %v2385 = vmax.f32 %v2383, %v2384
        %v2386 = vrot.slane %v2385, 2
        %v2387 = vmax.f32 %v2385, %v2386
        %v2388 = vrot.slane %v2387, 1
        %v2389 = vmax.f32 %v2387, %v2388
        %v2390 = vmax.f32 %v599, %v615
        %v2391 = vrot.slane %v2390, 4
        %v2392 = vmax.f32 %v2390, %v2391
        %v2393 = vrot.slane %v2392, 2
        %v2394 = vmax.f32 %v2392, %v2393
        %v2395 = vrot.slane %v2394, 1
        %v2396 = vmax.f32 %v2394, %v2395
        %v2397 = vmax.f32 %v600, %v616
        %v2398 = vrot.slane %v2397, 4
        %v2399 = vmax.f32 %v2397, %v2398
        %v2400 = vrot.slane %v2399, 2
        %v2401 = vmax.f32 %v2399, %v2400
        %v2402 = vrot.slane %v2401, 1
        %v2403 = vmax.f32 %v2401, %v2402
        %v2404 = vmax.f32 %v601, %v617
        %v2405 = vrot.slane %v2404, 4
        %v2406 = vmax.f32 %v2404, %v2405
        %v2407 = vrot.slane %v2406, 2
        %v2408 = vmax.f32 %v2406, %v2407
        %v2409 = vrot.slane %v2408, 1
        %v2410 = vmax.f32 %v2408, %v2409
        %v2411 = vmax.f32 %v602, %v618
        %v2412 = vrot.slane %v2411, 4
        %v2413 = vmax.f32 %v2411, %v2412
        %v2414 = vrot.slane %v2413, 2
        %v2415 = vmax.f32 %v2413, %v2414
        %v2416 = vrot.slane %v2415, 1
        %v2417 = vmax.f32 %v2415, %v2416
        %v2418 = vmax.f32 %v603, %v619
        %v2419 = vrot.slane %v2418, 4
        %v2420 = vmax.f32 %v2418, %v2419
        %v2421 = vrot.slane %v2420, 2
        %v2422 = vmax.f32 %v2420, %v2421
        %v2423 = vrot.slane %v2422, 1
        %v2424 = vmax.f32 %v2422, %v2423
        %v2425 = vmax.f32 %v604, %v620
        %v2426 = vrot.slane %v2425, 4
        %v2427 = vmax.f32 %v2425, %v2426
        %v2428 = vrot.slane %v2427, 2
        %v2429 = vmax.f32 %v2427, %v2428
        %v2430 = vrot.slane %v2429, 1
        %v2431 = vmax.f32 %v2429, %v2430
        %v2432 = vmax.f32 %v605, %v621
        %v2433 = vrot.slane %v2432, 4
        %v2434 = vmax.f32 %v2432, %v2433
        %v2435 = vrot.slane %v2434, 2
        %v2436 = vmax.f32 %v2434, %v2435
        %v2437 = vrot.slane %v2436, 1
        %v2438 = vmax.f32 %v2436, %v2437
        %v2439 = vmax.f32 %v606, %v622
        %v2440 = vrot.slane %v2439, 4
        %v2441 = vmax.f32 %v2439, %v2440
        %v2442 = vrot.slane %v2441, 2
        %v2443 = vmax.f32 %v2441, %v2442
        %v2444 = vrot.slane %v2443, 1
        %v2445 = vmax.f32 %v2443, %v2444
        %v2446 = vmax.f32 %v607, %v623
        %v2447 = vrot.slane %v2446, 4
        %v2448 = vmax.f32 %v2446, %v2447
        %v2449 = vrot.slane %v2448, 2
        %v2450 = vmax.f32 %v2448, %v2449
        %v2451 = vrot.slane %v2450, 1
        %v2452 = vmax.f32 %v2450, %v2451
        %v2453 = vmax.f32 %v608, %v624
        %v2454 = vrot.slane %v2453, 4
        %v2455 = vmax.f32 %v2453, %v2454
        %v2456 = vrot.slane %v2455, 2
        %v2457 = vmax.f32 %v2455, %v2456
        %v2458 = vrot.slane %v2457, 1
        %v2459 = vmax.f32 %v2457, %v2458
        %v2460 = vmax.f32 %v609, %v625
        %v2461 = vrot.slane %v2460, 4
        %v2462 = vmax.f32 %v2460, %v2461
        %v2463 = vrot.slane %v2462, 2
        %v2464 = vmax.f32 %v2462, %v2463
        %v2465 = vrot.slane %v2464, 1
        %v2466 = vmax.f32 %v2464, %v2465
        %v2467 = vmax.f32 %v626, %v642
        %v2468 = vrot.slane %v2467, 4
        %v2469 = vmax.f32 %v2467, %v2468
        %v2470 = vrot.slane %v2469, 2
        %v2471 = vmax.f32 %v2469, %v2470
        %v2472 = vrot.slane %v2471, 1
        %v2473 = vmax.f32 %v2471, %v2472
        %v2474 = vmax.f32 %v627, %v643
        %v2475 = vrot.slane %v2474, 4
        %v2476 = vmax.f32 %v2474, %v2475
        %v2477 = vrot.slane %v2476, 2
        %v2478 = vmax.f32 %v2476, %v2477
        %v2479 = vrot.slane %v2478, 1
        %v2480 = vmax.f32 %v2478, %v2479
        %v2481 = vmax.f32 %v628, %v644
        %v2482 = vrot.slane %v2481, 4
        %v2483 = vmax.f32 %v2481, %v2482
        %v2484 = vrot.slane %v2483, 2
        %v2485 = vmax.f32 %v2483, %v2484
        %v2486 = vrot.slane %v2485, 1
        %v2487 = vmax.f32 %v2485, %v2486
        %v2488 = vmax.f32 %v629, %v645
        %v2489 = vrot.slane %v2488, 4
        %v2490 = vmax.f32 %v2488, %v2489
        %v2491 = vrot.slane %v2490, 2
        %v2492 = vmax.f32 %v2490, %v2491
        %v2493 = vrot.slane %v2492, 1
        %v2494 = vmax.f32 %v2492, %v2493
        %v2495 = vmax.f32 %v630, %v646
        %v2496 = vrot.slane %v2495, 4
        %v2497 = vmax.f32 %v2495, %v2496
        %v2498 = vrot.slane %v2497, 2
        %v2499 = vmax.f32 %v2497, %v2498
        %v2500 = vrot.slane %v2499, 1
        %v2501 = vmax.f32 %v2499, %v2500
        %v2502 = vmax.f32 %v631, %v647
        %v2503 = vrot.slane %v2502, 4
        %v2504 = vmax.f32 %v2502, %v2503
        %v2505 = vrot.slane %v2504, 2
        %v2506 = vmax.f32 %v2504, %v2505
        %v2507 = vrot.slane %v2506, 1
        %v2508 = vmax.f32 %v2506, %v2507
        %v2509 = vmax.f32 %v632, %v648
        %v2510 = vrot.slane %v2509, 4
        %v2511 = vmax.f32 %v2509, %v2510
        %v2512 = vrot.slane %v2511, 2
        %v2513 = vmax.f32 %v2511, %v2512
        %v2514 = vrot.slane %v2513, 1
        %v2515 = vmax.f32 %v2513, %v2514
        %v2516 = vmax.f32 %v633, %v649
        %v2517 = vrot.slane %v2516, 4
        %v2518 = vmax.f32 %v2516, %v2517
        %v2519 = vrot.slane %v2518, 2
        %v2520 = vmax.f32 %v2518, %v2519
        %v2521 = vrot.slane %v2520, 1
        %v2522 = vmax.f32 %v2520, %v2521
        %v2523 = vmax.f32 %v634, %v650
        %v2524 = vrot.slane %v2523, 4
        %v2525 = vmax.f32 %v2523, %v2524
        %v2526 = vrot.slane %v2525, 2
        %v2527 = vmax.f32 %v2525, %v2526
        %v2528 = vrot.slane %v2527, 1
        %v2529 = vmax.f32 %v2527, %v2528
        %v2530 = vmax.f32 %v635, %v651
        %v2531 = vrot.slane %v2530, 4
        %v2532 = vmax.f32 %v2530, %v2531
        %v2533 = vrot.slane %v2532, 2
        %v2534 = vmax.f32 %v2532, %v2533
        %v2535 = vrot.slane %v2534, 1
        %v2536 = vmax.f32 %v2534, %v2535
        %v2537 = vmax.f32 %v636, %v652
        %v2538 = vrot.slane %v2537, 4
        %v2539 = vmax.f32 %v2537, %v2538
        %v2540 = vrot.slane %v2539, 2
        %v2541 = vmax.f32 %v2539, %v2540
        %v2542 = vrot.slane %v2541, 1
        %v2543 = vmax.f32 %v2541, %v2542
        %v2544 = vmax.f32 %v637, %v653
        %v2545 = vrot.slane %v2544, 4
        %v2546 = vmax.f32 %v2544, %v2545
        %v2547 = vrot.slane %v2546, 2
        %v2548 = vmax.f32 %v2546, %v2547
        %v2549 = vrot.slane %v2548, 1
        %v2550 = vmax.f32 %v2548, %v2549
        %v2551 = vmax.f32 %v638, %v654
        %v2552 = vrot.slane %v2551, 4
        %v2553 = vmax.f32 %v2551, %v2552
        %v2554 = vrot.slane %v2553, 2
        %v2555 = vmax.f32 %v2553, %v2554
        %v2556 = vrot.slane %v2555, 1
        %v2557 = vmax.f32 %v2555, %v2556
        %v2558 = vmax.f32 %v639, %v655
        %v2559 = vrot.slane %v2558, 4
        %v2560 = vmax.f32 %v2558, %v2559
        %v2561 = vrot.slane %v2560, 2
        %v2562 = vmax.f32 %v2560, %v2561
        %v2563 = vrot.slane %v2562, 1
        %v2564 = vmax.f32 %v2562, %v2563
        %v2565 = vmax.f32 %v640, %v656
        %v2566 = vrot.slane %v2565, 4
        %v2567 = vmax.f32 %v2565, %v2566
        %v2568 = vrot.slane %v2567, 2
        %v2569 = vmax.f32 %v2567, %v2568
        %v2570 = vrot.slane %v2569, 1
        %v2571 = vmax.f32 %v2569, %v2570
        %v2572 = vmax.f32 %v641, %v657
        %v2573 = vrot.slane %v2572, 4
        %v2574 = vmax.f32 %v2572, %v2573
        %v2575 = vrot.slane %v2574, 2
        %v2576 = vmax.f32 %v2574, %v2575
        %v2577 = vrot.slane %v2576, 1
        %v2578 = vmax.f32 %v2576, %v2577
        %v2579 = vld [vmem:[%s310] sm:$0xff]
        %v2580 = vld [vmem:[%s310 + $0x8] sm:$0xff]
        %v2581 = vld [vmem:[%s310 + $0x10] sm:$0xff]
        %v2582 = vld [vmem:[%s310 + $0x18] sm:$0xff]
        %v2583 = vld [vmem:[%s310 + $0x20] sm:$0xff]
        %v2584 = vld [vmem:[%s310 + $0x28] sm:$0xff]
        %v2585 = vld [vmem:[%s310 + $0x30] sm:$0xff]
        %v2586 = vld [vmem:[%s310 + $0x38] sm:$0xff]
        %v2587 = vld [vmem:[%s310 + $0x40] sm:$0xff]
        %v2588 = vld [vmem:[%s310 + $0x48] sm:$0xff]
        %v2589 = vld [vmem:[%s310 + $0x50] sm:$0xff]
        %v2590 = vld [vmem:[%s310 + $0x58] sm:$0xff]
        %v2591 = vld [vmem:[%s310 + $0x60] sm:$0xff]
        %v2592 = vld [vmem:[%s310 + $0x68] sm:$0xff]
        %v2593 = vld [vmem:[%s310 + $0x70] sm:$0xff]
        %v2594 = vld [vmem:[%s310 + $0x78] sm:$0xff]
        %v2595 = vld [vmem:[%s310 + $0x80] sm:$0xff]
        %v2596 = vld [vmem:[%s310 + $0x88] sm:$0xff]
        %v2597 = vld [vmem:[%s310 + $0x90] sm:$0xff]
        %v2598 = vld [vmem:[%s310 + $0x98] sm:$0xff]
        %v2599 = vld [vmem:[%s310 + $0xa0] sm:$0xff]
        %v2600 = vld [vmem:[%s310 + $0xa8] sm:$0xff]
        %v2601 = vld [vmem:[%s310 + $0xb0] sm:$0xff]
        %v2602 = vld [vmem:[%s310 + $0xb8] sm:$0xff]
        %v2603 = vld [vmem:[%s310 + $0xc0] sm:$0xff]
        %v2604 = vld [vmem:[%s310 + $0xc8] sm:$0xff]
        %v2605 = vld [vmem:[%s310 + $0xd0] sm:$0xff]
        %v2606 = vld [vmem:[%s310 + $0xd8] sm:$0xff]
        %v2607 = vld [vmem:[%s310 + $0xe0] sm:$0xff]
        %v2608 = vld [vmem:[%s310 + $0xe8] sm:$0xff]
        %v2609 = vld [vmem:[%s310 + $0xf0] sm:$0xff]
        %v2610 = vld [vmem:[%s310 + $0xf8] sm:$0xff]
        %v2611 = vld [vmem:[%s310 + $0x100] sm:$0xff]
        %v2612 = vld [vmem:[%s310 + $0x108] sm:$0xff]
        %v2613 = vld [vmem:[%s310 + $0x110] sm:$0xff]
        %v2614 = vld [vmem:[%s310 + $0x118] sm:$0xff]
        %v2615 = vld [vmem:[%s310 + $0x120] sm:$0xff]
        %v2616 = vld [vmem:[%s310 + $0x128] sm:$0xff]
        %v2617 = vld [vmem:[%s310 + $0x130] sm:$0xff]
        %v2618 = vld [vmem:[%s310 + $0x138] sm:$0xff]
        %v2619 = vld [vmem:[%s310 + $0x140] sm:$0xff]
        %v2620 = vld [vmem:[%s310 + $0x148] sm:$0xff]
        %v2621 = vld [vmem:[%s310 + $0x150] sm:$0xff]
        %v2622 = vld [vmem:[%s310 + $0x158] sm:$0xff]
        %v2623 = vld [vmem:[%s310 + $0x160] sm:$0xff]
        %v2624 = vld [vmem:[%s310 + $0x168] sm:$0xff]
        %v2625 = vld [vmem:[%s310 + $0x170] sm:$0xff]
        %v2626 = vld [vmem:[%s310 + $0x178] sm:$0xff]
        %v2627 = vld [vmem:[%s310 + $0x180] sm:$0xff]
        %v2628 = vld [vmem:[%s310 + $0x188] sm:$0xff]
        %v2629 = vld [vmem:[%s310 + $0x190] sm:$0xff]
        %v2630 = vld [vmem:[%s310 + $0x198] sm:$0xff]
        %v2631 = vld [vmem:[%s310 + $0x1a0] sm:$0xff]
        %v2632 = vld [vmem:[%s310 + $0x1a8] sm:$0xff]
        %v2633 = vld [vmem:[%s310 + $0x1b0] sm:$0xff]
        %v2634 = vld [vmem:[%s310 + $0x1b8] sm:$0xff]
        %v2635 = vld [vmem:[%s310 + $0x1c0] sm:$0xff]
        %v2636 = vld [vmem:[%s310 + $0x1c8] sm:$0xff]
        %v2637 = vld [vmem:[%s310 + $0x1d0] sm:$0xff]
        %v2638 = vld [vmem:[%s310 + $0x1d8] sm:$0xff]
        %v2639 = vld [vmem:[%s310 + $0x1e0] sm:$0xff]
        %v2640 = vld [vmem:[%s310 + $0x1e8] sm:$0xff]
        %v2641 = vld [vmem:[%s310 + $0x1f0] sm:$0xff]
        %v2642 = vld [vmem:[%s310 + $0x1f8] sm:$0xff]
        %v2643 = vld [vmem:[%s310 + $0x200] sm:$0xff]
        %v2644 = vld [vmem:[%s310 + $0x208] sm:$0xff]
        %v2645 = vld [vmem:[%s310 + $0x210] sm:$0xff]
        %v2646 = vld [vmem:[%s310 + $0x218] sm:$0xff]
        %v2647 = vld [vmem:[%s310 + $0x220] sm:$0xff]
        %v2648 = vld [vmem:[%s310 + $0x228] sm:$0xff]
        %v2649 = vld [vmem:[%s310 + $0x230] sm:$0xff]
        %v2650 = vld [vmem:[%s310 + $0x238] sm:$0xff]
        %v2651 = vld [vmem:[%s310 + $0x240] sm:$0xff]
        %v2652 = vld [vmem:[%s310 + $0x248] sm:$0xff]
        %v2653 = vld [vmem:[%s310 + $0x250] sm:$0xff]
        %v2654 = vld [vmem:[%s310 + $0x258] sm:$0xff]
        %v2655 = vld [vmem:[%s310 + $0x260] sm:$0xff]
        %v2656 = vld [vmem:[%s310 + $0x268] sm:$0xff]
        %v2657 = vld [vmem:[%s310 + $0x270] sm:$0xff]
        %v2658 = vld [vmem:[%s310 + $0x278] sm:$0xff]
        %v2659 = vld [vmem:[%s310 + $0x280] sm:$0xff]
        %v2660 = vld [vmem:[%s310 + $0x288] sm:$0xff]
        %v2661 = vld [vmem:[%s310 + $0x290] sm:$0xff]
        %v2662 = vld [vmem:[%s310 + $0x298] sm:$0xff]
        %v2663 = vld [vmem:[%s310 + $0x2a0] sm:$0xff]
        %v2664 = vld [vmem:[%s310 + $0x2a8] sm:$0xff]
        %v2665 = vld [vmem:[%s310 + $0x2b0] sm:$0xff]
        %v2666 = vld [vmem:[%s310 + $0x2b8] sm:$0xff]
        %v2667 = vld [vmem:[%s310 + $0x2c0] sm:$0xff]
        %v2668 = vld [vmem:[%s310 + $0x2c8] sm:$0xff]
        %v2669 = vld [vmem:[%s310 + $0x2d0] sm:$0xff]
        %v2670 = vld [vmem:[%s310 + $0x2d8] sm:$0xff]
        %v2671 = vld [vmem:[%s310 + $0x2e0] sm:$0xff]
        %v2672 = vld [vmem:[%s310 + $0x2e8] sm:$0xff]
        %v2673 = vld [vmem:[%s310 + $0x2f0] sm:$0xff]
        %v2674 = vld [vmem:[%s310 + $0x2f8] sm:$0xff]
        %v2675 = vld [vmem:[%s310 + $0x300] sm:$0xff]
        %v2676 = vld [vmem:[%s310 + $0x308] sm:$0xff]
        %v2677 = vld [vmem:[%s310 + $0x310] sm:$0xff]
        %v2678 = vld [vmem:[%s310 + $0x318] sm:$0xff]
        %v2679 = vld [vmem:[%s310 + $0x320] sm:$0xff]
        %v2680 = vld [vmem:[%s310 + $0x328] sm:$0xff]
        %v2681 = vld [vmem:[%s310 + $0x330] sm:$0xff]
        %v2682 = vld [vmem:[%s310 + $0x338] sm:$0xff]
        %v2683 = vld [vmem:[%s310 + $0x340] sm:$0xff]
        %v2684 = vld [vmem:[%s310 + $0x348] sm:$0xff]
        %v2685 = vld [vmem:[%s310 + $0x350] sm:$0xff]
        %v2686 = vld [vmem:[%s310 + $0x358] sm:$0xff]
        %v2687 = vld [vmem:[%s310 + $0x360] sm:$0xff]
        %v2688 = vld [vmem:[%s310 + $0x368] sm:$0xff]
        %v2689 = vld [vmem:[%s310 + $0x370] sm:$0xff]
        %v2690 = vld [vmem:[%s310 + $0x378] sm:$0xff]
        %v2691 = vld [vmem:[%s310 + $0x380] sm:$0xff]
        %v2692 = vld [vmem:[%s310 + $0x388] sm:$0xff]
        %v2693 = vld [vmem:[%s310 + $0x390] sm:$0xff]
        %v2694 = vld [vmem:[%s310 + $0x398] sm:$0xff]
        %v2695 = vld [vmem:[%s310 + $0x3a0] sm:$0xff]
        %v2696 = vld [vmem:[%s310 + $0x3a8] sm:$0xff]
        %v2697 = vld [vmem:[%s310 + $0x3b0] sm:$0xff]
        %v2698 = vld [vmem:[%s310 + $0x3b8] sm:$0xff]
        %v2699 = vld [vmem:[%s310 + $0x3c0] sm:$0xff]
        %v2700 = vld [vmem:[%s310 + $0x3c8] sm:$0xff]
        %v2701 = vld [vmem:[%s310 + $0x3d0] sm:$0xff]
        %v2702 = vld [vmem:[%s310 + $0x3d8] sm:$0xff]
        %v2703 = vld [vmem:[%s310 + $0x3e0] sm:$0xff]
        %v2704 = vld [vmem:[%s310 + $0x3e8] sm:$0xff]
        %v2705 = vld [vmem:[%s310 + $0x3f0] sm:$0xff]
        %v2706 = vld [vmem:[%s310 + $0x3f8] sm:$0xff]
        %v2707 = vld [vmem:[%s310 + $0x400] sm:$0xff]
        %v2708 = vld [vmem:[%s310 + $0x408] sm:$0xff]
        %v2709 = vld [vmem:[%s310 + $0x410] sm:$0xff]
        %v2710 = vld [vmem:[%s310 + $0x418] sm:$0xff]
        %v2711 = vld [vmem:[%s310 + $0x420] sm:$0xff]
        %v2712 = vld [vmem:[%s310 + $0x428] sm:$0xff]
        %v2713 = vld [vmem:[%s310 + $0x430] sm:$0xff]
        %v2714 = vld [vmem:[%s310 + $0x438] sm:$0xff]
        %v2715 = vld [vmem:[%s310 + $0x440] sm:$0xff]
        %v2716 = vld [vmem:[%s310 + $0x448] sm:$0xff]
        %v2717 = vld [vmem:[%s310 + $0x450] sm:$0xff]
        %v2718 = vld [vmem:[%s310 + $0x458] sm:$0xff]
        %v2719 = vld [vmem:[%s310 + $0x460] sm:$0xff]
        %v2720 = vld [vmem:[%s310 + $0x468] sm:$0xff]
        %v2721 = vld [vmem:[%s310 + $0x470] sm:$0xff]
        %v2722 = vld [vmem:[%s310 + $0x478] sm:$0xff]
        %v2723 = vld [vmem:[%s310 + $0x480] sm:$0xff]
        %v2724 = vld [vmem:[%s310 + $0x488] sm:$0xff]
        %v2725 = vld [vmem:[%s310 + $0x490] sm:$0xff]
        %v2726 = vld [vmem:[%s310 + $0x498] sm:$0xff]
        %v2727 = vld [vmem:[%s310 + $0x4a0] sm:$0xff]
        %v2728 = vld [vmem:[%s310 + $0x4a8] sm:$0xff]
        %v2729 = vld [vmem:[%s310 + $0x4b0] sm:$0xff]
        %v2730 = vld [vmem:[%s310 + $0x4b8] sm:$0xff]
        %v2731 = vld [vmem:[%s310 + $0x4c0] sm:$0xff]
        %v2732 = vld [vmem:[%s310 + $0x4c8] sm:$0xff]
        %v2733 = vld [vmem:[%s310 + $0x4d0] sm:$0xff]
        %v2734 = vld [vmem:[%s310 + $0x4d8] sm:$0xff]
        %v2735 = vld [vmem:[%s310 + $0x4e0] sm:$0xff]
        %v2736 = vld [vmem:[%s310 + $0x4e8] sm:$0xff]
        %v2737 = vld [vmem:[%s310 + $0x4f0] sm:$0xff]
        %v2738 = vld [vmem:[%s310 + $0x4f8] sm:$0xff]
        %v2739 = vld [vmem:[%s310 + $0x500] sm:$0xff]
        %v2740 = vld [vmem:[%s310 + $0x508] sm:$0xff]
        %v2741 = vld [vmem:[%s310 + $0x510] sm:$0xff]
        %v2742 = vld [vmem:[%s310 + $0x518] sm:$0xff]
        %v2743 = vld [vmem:[%s310 + $0x520] sm:$0xff]
        %v2744 = vld [vmem:[%s310 + $0x528] sm:$0xff]
        %v2745 = vld [vmem:[%s310 + $0x530] sm:$0xff]
        %v2746 = vld [vmem:[%s310 + $0x538] sm:$0xff]
        %v2747 = vld [vmem:[%s310 + $0x540] sm:$0xff]
        %v2748 = vld [vmem:[%s310 + $0x548] sm:$0xff]
        %v2749 = vld [vmem:[%s310 + $0x550] sm:$0xff]
        %v2750 = vld [vmem:[%s310 + $0x558] sm:$0xff]
        %v2751 = vld [vmem:[%s310 + $0x560] sm:$0xff]
        %v2752 = vld [vmem:[%s310 + $0x568] sm:$0xff]
        %v2753 = vld [vmem:[%s310 + $0x570] sm:$0xff]
        %v2754 = vld [vmem:[%s310 + $0x578] sm:$0xff]
        %v2755 = vld [vmem:[%s310 + $0x580] sm:$0xff]
        %v2756 = vld [vmem:[%s310 + $0x588] sm:$0xff]
        %v2757 = vld [vmem:[%s310 + $0x590] sm:$0xff]
        %v2758 = vld [vmem:[%s310 + $0x598] sm:$0xff]
        %v2759 = vld [vmem:[%s310 + $0x5a0] sm:$0xff]
        %v2760 = vld [vmem:[%s310 + $0x5a8] sm:$0xff]
        %v2761 = vld [vmem:[%s310 + $0x5b0] sm:$0xff]
        %v2762 = vld [vmem:[%s310 + $0x5b8] sm:$0xff]
        %v2763 = vld [vmem:[%s310 + $0x5c0] sm:$0xff]
        %v2764 = vld [vmem:[%s310 + $0x5c8] sm:$0xff]
        %v2765 = vld [vmem:[%s310 + $0x5d0] sm:$0xff]
        %v2766 = vld [vmem:[%s310 + $0x5d8] sm:$0xff]
        %v2767 = vld [vmem:[%s310 + $0x5e0] sm:$0xff]
        %v2768 = vld [vmem:[%s310 + $0x5e8] sm:$0xff]
        %v2769 = vld [vmem:[%s310 + $0x5f0] sm:$0xff]
        %v2770 = vld [vmem:[%s310 + $0x5f8] sm:$0xff]
        %v2771 = vld [vmem:[%s310 + $0x600] sm:$0xff]
        %v2772 = vld [vmem:[%s310 + $0x608] sm:$0xff]
        %v2773 = vld [vmem:[%s310 + $0x610] sm:$0xff]
        %v2774 = vld [vmem:[%s310 + $0x618] sm:$0xff]
        %v2775 = vld [vmem:[%s310 + $0x620] sm:$0xff]
        %v2776 = vld [vmem:[%s310 + $0x628] sm:$0xff]
        %v2777 = vld [vmem:[%s310 + $0x630] sm:$0xff]
        %v2778 = vld [vmem:[%s310 + $0x638] sm:$0xff]
        %v2779 = vld [vmem:[%s310 + $0x640] sm:$0xff]
        %v2780 = vld [vmem:[%s310 + $0x648] sm:$0xff]
        %v2781 = vld [vmem:[%s310 + $0x650] sm:$0xff]
        %v2782 = vld [vmem:[%s310 + $0x658] sm:$0xff]
        %v2783 = vld [vmem:[%s310 + $0x660] sm:$0xff]
        %v2784 = vld [vmem:[%s310 + $0x668] sm:$0xff]
        %v2785 = vld [vmem:[%s310 + $0x670] sm:$0xff]
        %v2786 = vld [vmem:[%s310 + $0x678] sm:$0xff]
        %v2787 = vld [vmem:[%s310 + $0x680] sm:$0xff]
        %v2788 = vld [vmem:[%s310 + $0x688] sm:$0xff]
        %v2789 = vld [vmem:[%s310 + $0x690] sm:$0xff]
        %v2790 = vld [vmem:[%s310 + $0x698] sm:$0xff]
        %v2791 = vld [vmem:[%s310 + $0x6a0] sm:$0xff]
        %v2792 = vld [vmem:[%s310 + $0x6a8] sm:$0xff]
        %v2793 = vld [vmem:[%s310 + $0x6b0] sm:$0xff]
        %v2794 = vld [vmem:[%s310 + $0x6b8] sm:$0xff]
        %v2795 = vld [vmem:[%s310 + $0x6c0] sm:$0xff]
        %v2796 = vld [vmem:[%s310 + $0x6c8] sm:$0xff]
        %v2797 = vld [vmem:[%s310 + $0x6d0] sm:$0xff]
        %v2798 = vld [vmem:[%s310 + $0x6d8] sm:$0xff]
        %v2799 = vld [vmem:[%s310 + $0x6e0] sm:$0xff]
        %v2800 = vld [vmem:[%s310 + $0x6e8] sm:$0xff]
        %v2801 = vld [vmem:[%s310 + $0x6f0] sm:$0xff]
        %v2802 = vld [vmem:[%s310 + $0x6f8] sm:$0xff]
        %v2803 = vld [vmem:[%s310 + $0x700] sm:$0xff]
        %v2804 = vld [vmem:[%s310 + $0x708] sm:$0xff]
        %v2805 = vld [vmem:[%s310 + $0x710] sm:$0xff]
        %v2806 = vld [vmem:[%s310 + $0x718] sm:$0xff]
        %v2807 = vld [vmem:[%s310 + $0x720] sm:$0xff]
        %v2808 = vld [vmem:[%s310 + $0x728] sm:$0xff]
        %v2809 = vld [vmem:[%s310 + $0x730] sm:$0xff]
        %v2810 = vld [vmem:[%s310 + $0x738] sm:$0xff]
        %v2811 = vld [vmem:[%s310 + $0x740] sm:$0xff]
        %v2812 = vld [vmem:[%s310 + $0x748] sm:$0xff]
        %v2813 = vld [vmem:[%s310 + $0x750] sm:$0xff]
        %v2814 = vld [vmem:[%s310 + $0x758] sm:$0xff]
        %v2815 = vld [vmem:[%s310 + $0x760] sm:$0xff]
        %v2816 = vld [vmem:[%s310 + $0x768] sm:$0xff]
        %v2817 = vld [vmem:[%s310 + $0x770] sm:$0xff]
        %v2818 = vld [vmem:[%s310 + $0x778] sm:$0xff]
        %v2819 = vld [vmem:[%s310 + $0x780] sm:$0xff]
        %v2820 = vld [vmem:[%s310 + $0x788] sm:$0xff]
        %v2821 = vld [vmem:[%s310 + $0x790] sm:$0xff]
        %v2822 = vld [vmem:[%s310 + $0x798] sm:$0xff]
        %v2823 = vld [vmem:[%s310 + $0x7a0] sm:$0xff]
        %v2824 = vld [vmem:[%s310 + $0x7a8] sm:$0xff]
        %v2825 = vld [vmem:[%s310 + $0x7b0] sm:$0xff]
        %v2826 = vld [vmem:[%s310 + $0x7b8] sm:$0xff]
        %v2827 = vld [vmem:[%s310 + $0x7c0] sm:$0xff]
        %v2828 = vld [vmem:[%s310 + $0x7c8] sm:$0xff]
        %v2829 = vld [vmem:[%s310 + $0x7d0] sm:$0xff]
        %v2830 = vld [vmem:[%s310 + $0x7d8] sm:$0xff]
        %v2831 = vld [vmem:[%s310 + $0x7e0] sm:$0xff]
        %v2832 = vld [vmem:[%s310 + $0x7e8] sm:$0xff]
        %v2833 = vld [vmem:[%s310 + $0x7f0] sm:$0xff]
        %v2834 = vld [vmem:[%s310 + $0x7f8] sm:$0xff]
        %v2835 = vld [vmem:[%s310 + $0x800] sm:$0xff]
        %v2836 = vld [vmem:[%s310 + $0x808] sm:$0xff]
        %v2837 = vld [vmem:[%s310 + $0x810] sm:$0xff]
        %v2838 = vld [vmem:[%s310 + $0x818] sm:$0xff]
        %v2839 = vld [vmem:[%s310 + $0x820] sm:$0xff]
        %v2840 = vld [vmem:[%s310 + $0x828] sm:$0xff]
        %v2841 = vld [vmem:[%s310 + $0x830] sm:$0xff]
        %v2842 = vld [vmem:[%s310 + $0x838] sm:$0xff]
        %v2843 = vld [vmem:[%s310 + $0x840] sm:$0xff]
        %v2844 = vld [vmem:[%s310 + $0x848] sm:$0xff]
        %v2845 = vld [vmem:[%s310 + $0x850] sm:$0xff]
        %v2846 = vld [vmem:[%s310 + $0x858] sm:$0xff]
        %v2847 = vld [vmem:[%s310 + $0x860] sm:$0xff]
        %v2848 = vld [vmem:[%s310 + $0x868] sm:$0xff]
        %v2849 = vld [vmem:[%s310 + $0x870] sm:$0xff]
        %v2850 = vld [vmem:[%s310 + $0x878] sm:$0xff]
        %v2851 = vld [vmem:[%s310 + $0x880] sm:$0xff]
        %v2852 = vld [vmem:[%s310 + $0x888] sm:$0xff]
        %v2853 = vld [vmem:[%s310 + $0x890] sm:$0xff]
        %v2854 = vld [vmem:[%s310 + $0x898] sm:$0xff]
        %v2855 = vld [vmem:[%s310 + $0x8a0] sm:$0xff]
        %v2856 = vld [vmem:[%s310 + $0x8a8] sm:$0xff]
        %v2857 = vld [vmem:[%s310 + $0x8b0] sm:$0xff]
        %v2858 = vld [vmem:[%s310 + $0x8b8] sm:$0xff]
        %v2859 = vld [vmem:[%s310 + $0x8c0] sm:$0xff]
        %v2860 = vld [vmem:[%s310 + $0x8c8] sm:$0xff]
        %v2861 = vld [vmem:[%s310 + $0x8d0] sm:$0xff]
        %v2862 = vld [vmem:[%s310 + $0x8d8] sm:$0xff]
        %v2863 = vld [vmem:[%s310 + $0x8e0] sm:$0xff]
        %v2864 = vld [vmem:[%s310 + $0x8e8] sm:$0xff]
        %v2865 = vld [vmem:[%s310 + $0x8f0] sm:$0xff]
        %v2866 = vld [vmem:[%s310 + $0x8f8] sm:$0xff]
        %v2867 = vld [vmem:[%s310 + $0x900] sm:$0xff]
        %v2868 = vld [vmem:[%s310 + $0x908] sm:$0xff]
        %v2869 = vld [vmem:[%s310 + $0x910] sm:$0xff]
        %v2870 = vld [vmem:[%s310 + $0x918] sm:$0xff]
        %v2871 = vld [vmem:[%s310 + $0x920] sm:$0xff]
        %v2872 = vld [vmem:[%s310 + $0x928] sm:$0xff]
        %v2873 = vld [vmem:[%s310 + $0x930] sm:$0xff]
        %v2874 = vld [vmem:[%s310 + $0x938] sm:$0xff]
        %v2875 = vld [vmem:[%s310 + $0x940] sm:$0xff]
        %v2876 = vld [vmem:[%s310 + $0x948] sm:$0xff]
        %v2877 = vld [vmem:[%s310 + $0x950] sm:$0xff]
        %v2878 = vld [vmem:[%s310 + $0x958] sm:$0xff]
        %v2879 = vld [vmem:[%s310 + $0x960] sm:$0xff]
        %v2880 = vld [vmem:[%s310 + $0x968] sm:$0xff]
        %v2881 = vld [vmem:[%s310 + $0x970] sm:$0xff]
        %v2882 = vld [vmem:[%s310 + $0x978] sm:$0xff]
        %v2883 = vld [vmem:[%s310 + $0x980] sm:$0xff]
        %v2884 = vld [vmem:[%s310 + $0x988] sm:$0xff]
        %v2885 = vld [vmem:[%s310 + $0x990] sm:$0xff]
        %v2886 = vld [vmem:[%s310 + $0x998] sm:$0xff]
        %v2887 = vld [vmem:[%s310 + $0x9a0] sm:$0xff]
        %v2888 = vld [vmem:[%s310 + $0x9a8] sm:$0xff]
        %v2889 = vld [vmem:[%s310 + $0x9b0] sm:$0xff]
        %v2890 = vld [vmem:[%s310 + $0x9b8] sm:$0xff]
        %v2891 = vld [vmem:[%s310 + $0x9c0] sm:$0xff]
        %v2892 = vld [vmem:[%s310 + $0x9c8] sm:$0xff]
        %v2893 = vld [vmem:[%s310 + $0x9d0] sm:$0xff]
        %v2894 = vld [vmem:[%s310 + $0x9d8] sm:$0xff]
        %v2895 = vld [vmem:[%s310 + $0x9e0] sm:$0xff]
        %v2896 = vld [vmem:[%s310 + $0x9e8] sm:$0xff]
        %v2897 = vld [vmem:[%s310 + $0x9f0] sm:$0xff]
        %v2898 = vld [vmem:[%s310 + $0x9f8] sm:$0xff]
        %v2899 = vld [vmem:[%s310 + $0xa00] sm:$0xff]
        %v2900 = vld [vmem:[%s310 + $0xa08] sm:$0xff]
        %v2901 = vld [vmem:[%s310 + $0xa10] sm:$0xff]
        %v2902 = vld [vmem:[%s310 + $0xa18] sm:$0xff]
        %v2903 = vld [vmem:[%s310 + $0xa20] sm:$0xff]
        %v2904 = vld [vmem:[%s310 + $0xa28] sm:$0xff]
        %v2905 = vld [vmem:[%s310 + $0xa30] sm:$0xff]
        %v2906 = vld [vmem:[%s310 + $0xa38] sm:$0xff]
        %v2907 = vld [vmem:[%s310 + $0xa40] sm:$0xff]
        %v2908 = vld [vmem:[%s310 + $0xa48] sm:$0xff]
        %v2909 = vld [vmem:[%s310 + $0xa50] sm:$0xff]
        %v2910 = vld [vmem:[%s310 + $0xa58] sm:$0xff]
        %v2911 = vld [vmem:[%s310 + $0xa60] sm:$0xff]
        %v2912 = vld [vmem:[%s310 + $0xa68] sm:$0xff]
        %v2913 = vld [vmem:[%s310 + $0xa70] sm:$0xff]
        %v2914 = vld [vmem:[%s310 + $0xa78] sm:$0xff]
        %v2915 = vld [vmem:[%s310 + $0xa80] sm:$0xff]
        %v2916 = vld [vmem:[%s310 + $0xa88] sm:$0xff]
        %v2917 = vld [vmem:[%s310 + $0xa90] sm:$0xff]
        %v2918 = vld [vmem:[%s310 + $0xa98] sm:$0xff]
        %v2919 = vld [vmem:[%s310 + $0xaa0] sm:$0xff]
        %v2920 = vld [vmem:[%s310 + $0xaa8] sm:$0xff]
        %v2921 = vld [vmem:[%s310 + $0xab0] sm:$0xff]
        %v2922 = vld [vmem:[%s310 + $0xab8] sm:$0xff]
        %v2923 = vld [vmem:[%s310 + $0xac0] sm:$0xff]
        %v2924 = vld [vmem:[%s310 + $0xac8] sm:$0xff]
        %v2925 = vld [vmem:[%s310 + $0xad0] sm:$0xff]
        %v2926 = vld [vmem:[%s310 + $0xad8] sm:$0xff]
        %v2927 = vld [vmem:[%s310 + $0xae0] sm:$0xff]
        %v2928 = vld [vmem:[%s310 + $0xae8] sm:$0xff]
        %v2929 = vld [vmem:[%s310 + $0xaf0] sm:$0xff]
        %v2930 = vld [vmem:[%s310 + $0xaf8] sm:$0xff]
        %v2931 = vld [vmem:[%s310 + $0xb00] sm:$0xff]
        %v2932 = vld [vmem:[%s310 + $0xb08] sm:$0xff]
        %v2933 = vld [vmem:[%s310 + $0xb10] sm:$0xff]
        %v2934 = vld [vmem:[%s310 + $0xb18] sm:$0xff]
        %v2935 = vld [vmem:[%s310 + $0xb20] sm:$0xff]
        %v2936 = vld [vmem:[%s310 + $0xb28] sm:$0xff]
        %v2937 = vld [vmem:[%s310 + $0xb30] sm:$0xff]
        %v2938 = vld [vmem:[%s310 + $0xb38] sm:$0xff]
        %v2939 = vld [vmem:[%s310 + $0xb40] sm:$0xff]
        %v2940 = vld [vmem:[%s310 + $0xb48] sm:$0xff]
        %v2941 = vld [vmem:[%s310 + $0xb50] sm:$0xff]
        %v2942 = vld [vmem:[%s310 + $0xb58] sm:$0xff]
        %v2943 = vld [vmem:[%s310 + $0xb60] sm:$0xff]
        %v2944 = vld [vmem:[%s310 + $0xb68] sm:$0xff]
        %v2945 = vld [vmem:[%s310 + $0xb70] sm:$0xff]
        %v2946 = vld [vmem:[%s310 + $0xb78] sm:$0xff]
        %v2947 = vld [vmem:[%s310 + $0xb80] sm:$0xff]
        %v2948 = vld [vmem:[%s310 + $0xb88] sm:$0xff]
        %v2949 = vld [vmem:[%s310 + $0xb90] sm:$0xff]
        %v2950 = vld [vmem:[%s310 + $0xb98] sm:$0xff]
        %v2951 = vld [vmem:[%s310 + $0xba0] sm:$0xff]
        %v2952 = vld [vmem:[%s310 + $0xba8] sm:$0xff]
        %v2953 = vld [vmem:[%s310 + $0xbb0] sm:$0xff]
        %v2954 = vld [vmem:[%s310 + $0xbb8] sm:$0xff]
        %v2955 = vld [vmem:[%s310 + $0xbc0] sm:$0xff]
        %v2956 = vld [vmem:[%s310 + $0xbc8] sm:$0xff]
        %v2957 = vld [vmem:[%s310 + $0xbd0] sm:$0xff]
        %v2958 = vld [vmem:[%s310 + $0xbd8] sm:$0xff]
        %v2959 = vld [vmem:[%s310 + $0xbe0] sm:$0xff]
        %v2960 = vld [vmem:[%s310 + $0xbe8] sm:$0xff]
        %v2961 = vld [vmem:[%s310 + $0xbf0] sm:$0xff]
        %v2962 = vld [vmem:[%s310 + $0xbf8] sm:$0xff]
        %v2963 = vld [vmem:[%s310 + $0xc00] sm:$0xff]
        %v2964 = vld [vmem:[%s310 + $0xc08] sm:$0xff]
        %v2965 = vld [vmem:[%s310 + $0xc10] sm:$0xff]
        %v2966 = vld [vmem:[%s310 + $0xc18] sm:$0xff]
        %v2967 = vld [vmem:[%s310 + $0xc20] sm:$0xff]
        %v2968 = vld [vmem:[%s310 + $0xc28] sm:$0xff]
        %v2969 = vld [vmem:[%s310 + $0xc30] sm:$0xff]
        %v2970 = vld [vmem:[%s310 + $0xc38] sm:$0xff]
        %v2971 = vld [vmem:[%s310 + $0xc40] sm:$0xff]
        %v2972 = vld [vmem:[%s310 + $0xc48] sm:$0xff]
        %v2973 = vld [vmem:[%s310 + $0xc50] sm:$0xff]
        %v2974 = vld [vmem:[%s310 + $0xc58] sm:$0xff]
        %v2975 = vld [vmem:[%s310 + $0xc60] sm:$0xff]
        %v2976 = vld [vmem:[%s310 + $0xc68] sm:$0xff]
        %v2977 = vld [vmem:[%s310 + $0xc70] sm:$0xff]
        %v2978 = vld [vmem:[%s310 + $0xc78] sm:$0xff]
        %v2979 = vld [vmem:[%s310 + $0xc80] sm:$0xff]
        %v2980 = vld [vmem:[%s310 + $0xc88] sm:$0xff]
        %v2981 = vld [vmem:[%s310 + $0xc90] sm:$0xff]
        %v2982 = vld [vmem:[%s310 + $0xc98] sm:$0xff]
        %v2983 = vld [vmem:[%s310 + $0xca0] sm:$0xff]
        %v2984 = vld [vmem:[%s310 + $0xca8] sm:$0xff]
        %v2985 = vld [vmem:[%s310 + $0xcb0] sm:$0xff]
        %v2986 = vld [vmem:[%s310 + $0xcb8] sm:$0xff]
        %v2987 = vld [vmem:[%s310 + $0xcc0] sm:$0xff]
        %v2988 = vld [vmem:[%s310 + $0xcc8] sm:$0xff]
        %v2989 = vld [vmem:[%s310 + $0xcd0] sm:$0xff]
        %v2990 = vld [vmem:[%s310 + $0xcd8] sm:$0xff]
        %v2991 = vld [vmem:[%s310 + $0xce0] sm:$0xff]
        %v2992 = vld [vmem:[%s310 + $0xce8] sm:$0xff]
        %v2993 = vld [vmem:[%s310 + $0xcf0] sm:$0xff]
        %v2994 = vld [vmem:[%s310 + $0xcf8] sm:$0xff]
        %v2995 = vld [vmem:[%s310 + $0xd00] sm:$0xff]
        %v2996 = vld [vmem:[%s310 + $0xd08] sm:$0xff]
        %v2997 = vld [vmem:[%s310 + $0xd10] sm:$0xff]
        %v2998 = vld [vmem:[%s310 + $0xd18] sm:$0xff]
        %v2999 = vld [vmem:[%s310 + $0xd20] sm:$0xff]
        %v3000 = vld [vmem:[%s310 + $0xd28] sm:$0xff]
        %v3001 = vld [vmem:[%s310 + $0xd30] sm:$0xff]
        %v3002 = vld [vmem:[%s310 + $0xd38] sm:$0xff]
        %v3003 = vld [vmem:[%s310 + $0xd40] sm:$0xff]
        %v3004 = vld [vmem:[%s310 + $0xd48] sm:$0xff]
        %v3005 = vld [vmem:[%s310 + $0xd50] sm:$0xff]
        %v3006 = vld [vmem:[%s310 + $0xd58] sm:$0xff]
        %v3007 = vld [vmem:[%s310 + $0xd60] sm:$0xff]
        %v3008 = vld [vmem:[%s310 + $0xd68] sm:$0xff]
        %v3009 = vld [vmem:[%s310 + $0xd70] sm:$0xff]
        %v3010 = vld [vmem:[%s310 + $0xd78] sm:$0xff]
        %v3011 = vld [vmem:[%s310 + $0xd80] sm:$0xff]
        %v3012 = vld [vmem:[%s310 + $0xd88] sm:$0xff]
        %v3013 = vld [vmem:[%s310 + $0xd90] sm:$0xff]
        %v3014 = vld [vmem:[%s310 + $0xd98] sm:$0xff]
        %v3015 = vld [vmem:[%s310 + $0xda0] sm:$0xff]
        %v3016 = vld [vmem:[%s310 + $0xda8] sm:$0xff]
        %v3017 = vld [vmem:[%s310 + $0xdb0] sm:$0xff]
        %v3018 = vld [vmem:[%s310 + $0xdb8] sm:$0xff]
        %v3019 = vld [vmem:[%s310 + $0xdc0] sm:$0xff]
        %v3020 = vld [vmem:[%s310 + $0xdc8] sm:$0xff]
        %v3021 = vld [vmem:[%s310 + $0xdd0] sm:$0xff]
        %v3022 = vld [vmem:[%s310 + $0xdd8] sm:$0xff]
        %v3023 = vld [vmem:[%s310 + $0xde0] sm:$0xff]
        %v3024 = vld [vmem:[%s310 + $0xde8] sm:$0xff]
        %v3025 = vld [vmem:[%s310 + $0xdf0] sm:$0xff]
        %v3026 = vld [vmem:[%s310 + $0xdf8] sm:$0xff]
        %v3027 = vld [vmem:[%s310 + $0xe00] sm:$0xff]
        %v3028 = vld [vmem:[%s310 + $0xe08] sm:$0xff]
        %v3029 = vld [vmem:[%s310 + $0xe10] sm:$0xff]
        %v3030 = vld [vmem:[%s310 + $0xe18] sm:$0xff]
        %v3031 = vld [vmem:[%s310 + $0xe20] sm:$0xff]
        %v3032 = vld [vmem:[%s310 + $0xe28] sm:$0xff]
        %v3033 = vld [vmem:[%s310 + $0xe30] sm:$0xff]
        %v3034 = vld [vmem:[%s310 + $0xe38] sm:$0xff]
        %v3035 = vld [vmem:[%s310 + $0xe40] sm:$0xff]
        %v3036 = vld [vmem:[%s310 + $0xe48] sm:$0xff]
        %v3037 = vld [vmem:[%s310 + $0xe50] sm:$0xff]
        %v3038 = vld [vmem:[%s310 + $0xe58] sm:$0xff]
        %v3039 = vld [vmem:[%s310 + $0xe60] sm:$0xff]
        %v3040 = vld [vmem:[%s310 + $0xe68] sm:$0xff]
        %v3041 = vld [vmem:[%s310 + $0xe70] sm:$0xff]
        %v3042 = vld [vmem:[%s310 + $0xe78] sm:$0xff]
        %v3043 = vld [vmem:[%s310 + $0xe80] sm:$0xff]
        %v3044 = vld [vmem:[%s310 + $0xe88] sm:$0xff]
        %v3045 = vld [vmem:[%s310 + $0xe90] sm:$0xff]
        %v3046 = vld [vmem:[%s310 + $0xe98] sm:$0xff]
        %v3047 = vld [vmem:[%s310 + $0xea0] sm:$0xff]
        %v3048 = vld [vmem:[%s310 + $0xea8] sm:$0xff]
        %v3049 = vld [vmem:[%s310 + $0xeb0] sm:$0xff]
        %v3050 = vld [vmem:[%s310 + $0xeb8] sm:$0xff]
        %v3051 = vld [vmem:[%s310 + $0xec0] sm:$0xff]
        %v3052 = vld [vmem:[%s310 + $0xec8] sm:$0xff]
        %v3053 = vld [vmem:[%s310 + $0xed0] sm:$0xff]
        %v3054 = vld [vmem:[%s310 + $0xed8] sm:$0xff]
        %v3055 = vld [vmem:[%s310 + $0xee0] sm:$0xff]
        %v3056 = vld [vmem:[%s310 + $0xee8] sm:$0xff]
        %v3057 = vld [vmem:[%s310 + $0xef0] sm:$0xff]
        %v3058 = vld [vmem:[%s310 + $0xef8] sm:$0xff]
        %v3059 = vld [vmem:[%s310 + $0xf00] sm:$0xff]
        %v3060 = vld [vmem:[%s310 + $0xf08] sm:$0xff]
        %v3061 = vld [vmem:[%s310 + $0xf10] sm:$0xff]
        %v3062 = vld [vmem:[%s310 + $0xf18] sm:$0xff]
        %v3063 = vld [vmem:[%s310 + $0xf20] sm:$0xff]
        %v3064 = vld [vmem:[%s310 + $0xf28] sm:$0xff]
        %v3065 = vld [vmem:[%s310 + $0xf30] sm:$0xff]
        %v3066 = vld [vmem:[%s310 + $0xf38] sm:$0xff]
        %v3067 = vld [vmem:[%s310 + $0xf40] sm:$0xff]
        %v3068 = vld [vmem:[%s310 + $0xf48] sm:$0xff]
        %v3069 = vld [vmem:[%s310 + $0xf50] sm:$0xff]
        %v3070 = vld [vmem:[%s310 + $0xf58] sm:$0xff]
        %v3071 = vld [vmem:[%s310 + $0xf60] sm:$0xff]
        %v3072 = vld [vmem:[%s310 + $0xf68] sm:$0xff]
        %v3073 = vld [vmem:[%s310 + $0xf70] sm:$0xff]
        %v3074 = vld [vmem:[%s310 + $0xf78] sm:$0xff]
        %v3075 = vld [vmem:[%s310 + $0xf80] sm:$0xff]
        %v3076 = vld [vmem:[%s310 + $0xf88] sm:$0xff]
        %v3077 = vld [vmem:[%s310 + $0xf90] sm:$0xff]
        %v3078 = vld [vmem:[%s310 + $0xf98] sm:$0xff]
        %v3079 = vld [vmem:[%s310 + $0xfa0] sm:$0xff]
        %v3080 = vld [vmem:[%s310 + $0xfa8] sm:$0xff]
        %v3081 = vld [vmem:[%s310 + $0xfb0] sm:$0xff]
        %v3082 = vld [vmem:[%s310 + $0xfb8] sm:$0xff]
        %v3083 = vld [vmem:[%s310 + $0xfc0] sm:$0xff]
        %v3084 = vld [vmem:[%s310 + $0xfc8] sm:$0xff]
        %v3085 = vld [vmem:[%s310 + $0xfd0] sm:$0xff]
        %v3086 = vld [vmem:[%s310 + $0xfd8] sm:$0xff]
        %v3087 = vld [vmem:[%s310 + $0xfe0] sm:$0xff]
        %v3088 = vld [vmem:[%s310 + $0xfe8] sm:$0xff]
        %v3089 = vld [vmem:[%s310 + $0xff0] sm:$0xff]
        %v3090 = vld [vmem:[%s310 + $0xff8] sm:$0xff]
        %v3091 = vld [vmem:[%s319] sm:$0xf]
        %v3092 = vpack.c.bf16 %v1555, %v1555
        %v3093 = vpack.c.bf16 %v1556, %v1556
        %v3094 = vpack.c.bf16 %v1557, %v1557
        %v3095 = vpack.c.bf16 %v1558, %v1558
        %v3096 = vpack.c.bf16 %v1559, %v1559
        %v3097 = vpack.c.bf16 %v1560, %v1560
        %v3098 = vpack.c.bf16 %v1561, %v1561
        %v3099 = vpack.c.bf16 %v1562, %v1562
        %v3100 = vpack.c.bf16 %v1563, %v1563
        %v3101 = vpack.c.bf16 %v1564, %v1564
        %v3102 = vpack.c.bf16 %v1565, %v1565
        %v3103 = vpack.c.bf16 %v1566, %v1566
        %v3104 = vpack.c.bf16 %v1567, %v1567
        %v3105 = vpack.c.bf16 %v1568, %v1568
        %v3106 = vpack.c.bf16 %v1569, %v1569
        %v3107 = vpack.c.bf16 %v1570, %v1570
        %v3108 = vpack.c.bf16 %v1571, %v1571
        %v3109 = vpack.c.bf16 %v1572, %v1572
        %v3110 = vpack.c.bf16 %v1573, %v1573
        %v3111 = vpack.c.bf16 %v1574, %v1574
        %v3112 = vpack.c.bf16 %v1575, %v1575
        %v3113 = vpack.c.bf16 %v1576, %v1576
        %v3114 = vpack.c.bf16 %v1577, %v1577
        %v3115 = vpack.c.bf16 %v1578, %v1578
        %v3116 = vpack.c.bf16 %v1579, %v1579
        %v3117 = vpack.c.bf16 %v1580, %v1580
        %v3118 = vpack.c.bf16 %v1581, %v1581
        %v3119 = vpack.c.bf16 %v1582, %v1582
        %v3120 = vpack.c.bf16 %v1583, %v1583
        %v3121 = vpack.c.bf16 %v1584, %v1584
        %v3122 = vpack.c.bf16 %v1585, %v1585
        %v3123 = vpack.c.bf16 %v1586, %v1586
        %v3124 = vpack.c.bf16 %v1587, %v1587
        %v3125 = vpack.c.bf16 %v1588, %v1588
        %v3126 = vpack.c.bf16 %v1589, %v1589
        %v3127 = vpack.c.bf16 %v1590, %v1590
        %v3128 = vpack.c.bf16 %v1591, %v1591
        %v3129 = vpack.c.bf16 %v1592, %v1592
        %v3130 = vpack.c.bf16 %v1593, %v1593
        %v3131 = vpack.c.bf16 %v1594, %v1594
        %v3132 = vpack.c.bf16 %v1595, %v1595
        %v3133 = vpack.c.bf16 %v1596, %v1596
        %v3134 = vpack.c.bf16 %v1597, %v1597
        %v3135 = vpack.c.bf16 %v1598, %v1598
        %v3136 = vpack.c.bf16 %v1599, %v1599
        %v3137 = vpack.c.bf16 %v1600, %v1600
        %v3138 = vpack.c.bf16 %v1601, %v1601
        %v3139 = vpack.c.bf16 %v1602, %v1602
        %v3140 = vpack.c.bf16 %v1603, %v1603
        %v3141 = vpack.c.bf16 %v1604, %v1604
        %v3142 = vpack.c.bf16 %v1605, %v1605
        %v3143 = vpack.c.bf16 %v1606, %v1606
        %v3144 = vpack.c.bf16 %v1607, %v1607
        %v3145 = vpack.c.bf16 %v1608, %v1608
        %v3146 = vpack.c.bf16 %v1609, %v1609
        %v3147 = vpack.c.bf16 %v1610, %v1610
        %v3148 = vpack.c.bf16 %v1611, %v1611
        %v3149 = vpack.c.bf16 %v1612, %v1612
        %v3150 = vpack.c.bf16 %v1613, %v1613
        %v3151 = vpack.c.bf16 %v1614, %v1614
        %v3152 = vpack.c.bf16 %v1615, %v1615
        %v3153 = vpack.c.bf16 %v1616, %v1616
        %v3154 = vpack.c.bf16 %v1617, %v1617
        %v3155 = vpack.c.bf16 %v1618, %v1618
        %v3156 = vpack.c.bf16 %v1619, %v1619
        %v3157 = vpack.c.bf16 %v1620, %v1620
        %v3158 = vpack.c.bf16 %v1621, %v1621
        %v3159 = vpack.c.bf16 %v1622, %v1622
        %v3160 = vpack.c.bf16 %v1623, %v1623
        %v3161 = vpack.c.bf16 %v1624, %v1624
        %v3162 = vpack.c.bf16 %v1625, %v1625
        %v3163 = vpack.c.bf16 %v1626, %v1626
        %v3164 = vpack.c.bf16 %v1627, %v1627
        %v3165 = vpack.c.bf16 %v1628, %v1628
        %v3166 = vpack.c.bf16 %v1629, %v1629
        %v3167 = vpack.c.bf16 %v1630, %v1630
        %v3168 = vpack.c.bf16 %v1631, %v1631
        %v3169 = vpack.c.bf16 %v1632, %v1632
        %v3170 = vpack.c.bf16 %v1633, %v1633
        %v3171 = vpack.c.bf16 %v1634, %v1634
        %v3172 = vpack.c.bf16 %v1635, %v1635
        %v3173 = vpack.c.bf16 %v1636, %v1636
        %v3174 = vpack.c.bf16 %v1637, %v1637
        %v3175 = vpack.c.bf16 %v1638, %v1638
        %v3176 = vpack.c.bf16 %v1639, %v1639
        %v3177 = vpack.c.bf16 %v1640, %v1640
        %v3178 = vpack.c.bf16 %v1641, %v1641
        %v3179 = vpack.c.bf16 %v1642, %v1642
        %v3180 = vpack.c.bf16 %v1643, %v1643
        %v3181 = vpack.c.bf16 %v1644, %v1644
        %v3182 = vpack.c.bf16 %v1645, %v1645
        %v3183 = vpack.c.bf16 %v1646, %v1646
        %v3184 = vpack.c.bf16 %v1647, %v1647
        %v3185 = vpack.c.bf16 %v1648, %v1648
        %v3186 = vpack.c.bf16 %v1649, %v1649
        %v3187 = vpack.c.bf16 %v1650, %v1650
        %v3188 = vpack.c.bf16 %v1651, %v1651
        %v3189 = vpack.c.bf16 %v1652, %v1652
        %v3190 = vpack.c.bf16 %v1653, %v1653
        %v3191 = vpack.c.bf16 %v1654, %v1654
        %v3192 = vpack.c.bf16 %v1655, %v1655
        %v3193 = vpack.c.bf16 %v1656, %v1656
        %v3194 = vpack.c.bf16 %v1657, %v1657
        %v3195 = vpack.c.bf16 %v1658, %v1658
        %v3196 = vpack.c.bf16 %v1659, %v1659
        %v3197 = vpack.c.bf16 %v1660, %v1660
        %v3198 = vpack.c.bf16 %v1661, %v1661
        %v3199 = vpack.c.bf16 %v1662, %v1662
        %v3200 = vpack.c.bf16 %v1663, %v1663
        %v3201 = vpack.c.bf16 %v1664, %v1664
        %v3202 = vpack.c.bf16 %v1665, %v1665
        %v3203 = vpack.c.bf16 %v1666, %v1666
        %v3204 = vpack.c.bf16 %v1667, %v1667
        %v3205 = vpack.c.bf16 %v1668, %v1668
        %v3206 = vpack.c.bf16 %v1669, %v1669
        %v3207 = vpack.c.bf16 %v1670, %v1670
        %v3208 = vpack.c.bf16 %v1671, %v1671
        %v3209 = vpack.c.bf16 %v1672, %v1672
        %v3210 = vpack.c.bf16 %v1673, %v1673
        %v3211 = vpack.c.bf16 %v1674, %v1674
        %v3212 = vpack.c.bf16 %v1675, %v1675
        %v3213 = vpack.c.bf16 %v1676, %v1676
        %v3214 = vpack.c.bf16 %v1677, %v1677
        %v3215 = vpack.c.bf16 %v1678, %v1678
        %v3216 = vpack.c.bf16 %v1679, %v1679
        %v3217 = vpack.c.bf16 %v1680, %v1680
        %v3218 = vpack.c.bf16 %v1681, %v1681
        %v3219 = vpack.c.bf16 %v1682, %v1682
        %v3221 = vlaneseq
        %v3222 = vshrl.u32 %v3221, 7
        %v3223 = vsub.s32 0, %v3222
        %v3224 = vrot.slane %v3091, %v3223
        %v3225 = vlaneseq
        %v3226 = vshrl.u32 %v3225, 7
        %v3227 = vsub.s32 1, %v3226
        %v3228 = vrot.slane %v3091, %v3227
        %v3229 = vlaneseq
        %v3230 = vshrl.u32 %v3229, 7
        %v3231 = vsub.s32 2, %v3230
        %v3232 = vrot.slane %v3091, %v3231
        %v3233 = vlaneseq
        %v3234 = vshrl.u32 %v3233, 7
        %v3235 = vsub.s32 3, %v3234
        %v3236 = vrot.slane %v3091, %v3235
        %v3369 = vunpack.c.l.b16 %v3092
        %v3370 = vunpack.c.l.b16 %v3093
        %v3371 = vunpack.c.l.b16 %v3094
        %v3372 = vunpack.c.l.b16 %v3095
        %v3373 = vunpack.c.l.b16 %v3096
        %v3374 = vunpack.c.l.b16 %v3097
        %v3375 = vunpack.c.l.b16 %v3098
        %v3376 = vunpack.c.l.b16 %v3099
        %v3377 = vunpack.c.l.b16 %v3100
        %v3378 = vunpack.c.l.b16 %v3101
        %v3379 = vunpack.c.l.b16 %v3102
        %v3380 = vunpack.c.l.b16 %v3103
        %v3381 = vunpack.c.l.b16 %v3104
        %v3382 = vunpack.c.l.b16 %v3105
        %v3383 = vunpack.c.l.b16 %v3106
        %v3384 = vunpack.c.l.b16 %v3107
        %v3385 = vunpack.c.l.b16 %v3108
        %v3386 = vunpack.c.l.b16 %v3109
        %v3387 = vunpack.c.l.b16 %v3110
        %v3388 = vunpack.c.l.b16 %v3111
        %v3389 = vunpack.c.l.b16 %v3112
        %v3390 = vunpack.c.l.b16 %v3113
        %v3391 = vunpack.c.l.b16 %v3114
        %v3392 = vunpack.c.l.b16 %v3115
        %v3393 = vunpack.c.l.b16 %v3116
        %v3394 = vunpack.c.l.b16 %v3117
        %v3395 = vunpack.c.l.b16 %v3118
        %v3396 = vunpack.c.l.b16 %v3119
        %v3397 = vunpack.c.l.b16 %v3120
        %v3398 = vunpack.c.l.b16 %v3121
        %v3399 = vunpack.c.l.b16 %v3122
        %v3400 = vunpack.c.l.b16 %v3123
        %v3401 = vunpack.c.l.b16 %v3124
        %v3402 = vunpack.c.l.b16 %v3125
        %v3403 = vunpack.c.l.b16 %v3126
        %v3404 = vunpack.c.l.b16 %v3127
        %v3405 = vunpack.c.l.b16 %v3128
        %v3406 = vunpack.c.l.b16 %v3129
        %v3407 = vunpack.c.l.b16 %v3130
        %v3408 = vunpack.c.l.b16 %v3131
        %v3409 = vunpack.c.l.b16 %v3132
        %v3410 = vunpack.c.l.b16 %v3133
        %v3411 = vunpack.c.l.b16 %v3134
        %v3412 = vunpack.c.l.b16 %v3135
        %v3413 = vunpack.c.l.b16 %v3136
        %v3414 = vunpack.c.l.b16 %v3137
        %v3415 = vunpack.c.l.b16 %v3138
        %v3416 = vunpack.c.l.b16 %v3139
        %v3417 = vunpack.c.l.b16 %v3140
        %v3418 = vunpack.c.l.b16 %v3141
        %v3419 = vunpack.c.l.b16 %v3142
        %v3420 = vunpack.c.l.b16 %v3143
        %v3421 = vunpack.c.l.b16 %v3144
        %v3422 = vunpack.c.l.b16 %v3145
        %v3423 = vunpack.c.l.b16 %v3146
        %v3424 = vunpack.c.l.b16 %v3147
        %v3425 = vunpack.c.l.b16 %v3148
        %v3426 = vunpack.c.l.b16 %v3149
        %v3427 = vunpack.c.l.b16 %v3150
        %v3428 = vunpack.c.l.b16 %v3151
        %v3429 = vunpack.c.l.b16 %v3152
        %v3430 = vunpack.c.l.b16 %v3153
        %v3431 = vunpack.c.l.b16 %v3154
        %v3432 = vunpack.c.l.b16 %v3155
        %v3433 = vunpack.c.l.b16 %v3156
        %v3434 = vunpack.c.l.b16 %v3157
        %v3435 = vunpack.c.l.b16 %v3158
        %v3436 = vunpack.c.l.b16 %v3159
        %v3437 = vunpack.c.l.b16 %v3160
        %v3438 = vunpack.c.l.b16 %v3161
        %v3439 = vunpack.c.l.b16 %v3162
        %v3440 = vunpack.c.l.b16 %v3163
        %v3441 = vunpack.c.l.b16 %v3164
        %v3442 = vunpack.c.l.b16 %v3165
        %v3443 = vunpack.c.l.b16 %v3166
        %v3444 = vunpack.c.l.b16 %v3167
        %v3445 = vunpack.c.l.b16 %v3168
        %v3446 = vunpack.c.l.b16 %v3169
        %v3447 = vunpack.c.l.b16 %v3170
        %v3448 = vunpack.c.l.b16 %v3171
        %v3449 = vunpack.c.l.b16 %v3172
        %v3450 = vunpack.c.l.b16 %v3173
        %v3451 = vunpack.c.l.b16 %v3174
        %v3452 = vunpack.c.l.b16 %v3175
        %v3453 = vunpack.c.l.b16 %v3176
        %v3454 = vunpack.c.l.b16 %v3177
        %v3455 = vunpack.c.l.b16 %v3178
        %v3456 = vunpack.c.l.b16 %v3179
        %v3457 = vunpack.c.l.b16 %v3180
        %v3458 = vunpack.c.l.b16 %v3181
        %v3459 = vunpack.c.l.b16 %v3182
        %v3460 = vunpack.c.l.b16 %v3183
        %v3461 = vunpack.c.l.b16 %v3184
        %v3462 = vunpack.c.l.b16 %v3185
        %v3463 = vunpack.c.l.b16 %v3186
        %v3464 = vunpack.c.l.b16 %v3187
        %v3465 = vunpack.c.l.b16 %v3188
        %v3466 = vunpack.c.l.b16 %v3189
        %v3467 = vunpack.c.l.b16 %v3190
        %v3468 = vunpack.c.l.b16 %v3191
        %v3469 = vunpack.c.l.b16 %v3192
        %v3470 = vunpack.c.l.b16 %v3193
        %v3471 = vunpack.c.l.b16 %v3194
        %v3472 = vunpack.c.l.b16 %v3195
        %v3473 = vunpack.c.l.b16 %v3196
        %v3474 = vunpack.c.l.b16 %v3197
        %v3475 = vunpack.c.l.b16 %v3198
        %v3476 = vunpack.c.l.b16 %v3199
        %v3477 = vunpack.c.l.b16 %v3200
        %v3478 = vunpack.c.l.b16 %v3201
        %v3479 = vunpack.c.l.b16 %v3202
        %v3480 = vunpack.c.l.b16 %v3203
        %v3481 = vunpack.c.l.b16 %v3204
        %v3482 = vunpack.c.l.b16 %v3205
        %v3483 = vunpack.c.l.b16 %v3206
        %v3484 = vunpack.c.l.b16 %v3207
        %v3485 = vunpack.c.l.b16 %v3208
        %v3486 = vunpack.c.l.b16 %v3209
        %v3487 = vunpack.c.l.b16 %v3210
        %v3488 = vunpack.c.l.b16 %v3211
        %v3489 = vunpack.c.l.b16 %v3212
        %v3490 = vunpack.c.l.b16 %v3213
        %v3491 = vunpack.c.l.b16 %v3214
        %v3492 = vunpack.c.l.b16 %v3215
        %v3493 = vunpack.c.l.b16 %v3216
        %v3494 = vunpack.c.l.b16 %v3217
        %v3495 = vunpack.c.l.b16 %v3218
        %v3496 = vunpack.c.l.b16 %v3219
        %vm3497 = vcmask 1041409
        %v3498 = vsel %vm3497, %v3385, %v3369
        %vm3499 = vcmask 1042434
        %v3500 = vsel %vm3499, %v3401, %v3498
        %vm3501 = vcmask 1043459
        %v3502 = vsel %vm3501, %v3417, %v3500
        %vm3503 = vcmask 1044484
        %v3504 = vsel %vm3503, %v3433, %v3502
        %vm3505 = vcmask 1045509
        %v3506 = vsel %vm3505, %v3449, %v3504
        %vm3507 = vcmask 1046534
        %v3508 = vsel %vm3507, %v3465, %v3506
        %vm3509 = vcmask 1047559
        %v3510 = vsel %vm3509, %v3481, %v3508
        %v3511 = vsel %vm3497, %v3386, %v3370
        %v3512 = vsel %vm3499, %v3402, %v3511
        %v3513 = vsel %vm3501, %v3418, %v3512
        %v3514 = vsel %vm3503, %v3434, %v3513
        %v3515 = vsel %vm3505, %v3450, %v3514
        %v3516 = vsel %vm3507, %v3466, %v3515
        %v3517 = vsel %vm3509, %v3482, %v3516
        %v3518 = vsel %vm3497, %v3387, %v3371
        %v3519 = vsel %vm3499, %v3403, %v3518
        %v3520 = vsel %vm3501, %v3419, %v3519
        %v3521 = vsel %vm3503, %v3435, %v3520
        %v3522 = vsel %vm3505, %v3451, %v3521
        %v3523 = vsel %vm3507, %v3467, %v3522
        %v3524 = vsel %vm3509, %v3483, %v3523
        %v3525 = vsel %vm3497, %v3388, %v3372
        %v3526 = vsel %vm3499, %v3404, %v3525
        %v3527 = vsel %vm3501, %v3420, %v3526
        %v3528 = vsel %vm3503, %v3436, %v3527
        %v3529 = vsel %vm3505, %v3452, %v3528
        %v3530 = vsel %vm3507, %v3468, %v3529
        %v3531 = vsel %vm3509, %v3484, %v3530
        %v3532 = vsel %vm3497, %v3389, %v3373
        %v3533 = vsel %vm3499, %v3405, %v3532
        %v3534 = vsel %vm3501, %v3421, %v3533
        %v3535 = vsel %vm3503, %v3437, %v3534
        %v3536 = vsel %vm3505, %v3453, %v3535
        %v3537 = vsel %vm3507, %v3469, %v3536
        %v3538 = vsel %vm3509, %v3485, %v3537
        %v3539 = vsel %vm3497, %v3390, %v3374
        %v3540 = vsel %vm3499, %v3406, %v3539
        %v3541 = vsel %vm3501, %v3422, %v3540
        %v3542 = vsel %vm3503, %v3438, %v3541
        %v3543 = vsel %vm3505, %v3454, %v3542
        %v3544 = vsel %vm3507, %v3470, %v3543
        %v3545 = vsel %vm3509, %v3486, %v3544
        %v3546 = vsel %vm3497, %v3391, %v3375
        %v3547 = vsel %vm3499, %v3407, %v3546
        %v3548 = vsel %vm3501, %v3423, %v3547
        %v3549 = vsel %vm3503, %v3439, %v3548
        %v3550 = vsel %vm3505, %v3455, %v3549
        %v3551 = vsel %vm3507, %v3471, %v3550
        %v3552 = vsel %vm3509, %v3487, %v3551
        %v3553 = vsel %vm3497, %v3392, %v3376
        %v3554 = vsel %vm3499, %v3408, %v3553
        %v3555 = vsel %vm3501, %v3424, %v3554
        %v3556 = vsel %vm3503, %v3440, %v3555
        %v3557 = vsel %vm3505, %v3456, %v3556
        %v3558 = vsel %vm3507, %v3472, %v3557
        %v3559 = vsel %vm3509, %v3488, %v3558
        %v3560 = vsel %vm3497, %v3393, %v3377
        %v3561 = vsel %vm3499, %v3409, %v3560
        %v3562 = vsel %vm3501, %v3425, %v3561
        %v3563 = vsel %vm3503, %v3441, %v3562
        %v3564 = vsel %vm3505, %v3457, %v3563
        %v3565 = vsel %vm3507, %v3473, %v3564
        %v3566 = vsel %vm3509, %v3489, %v3565
        %v3567 = vsel %vm3497, %v3394, %v3378
        %v3568 = vsel %vm3499, %v3410, %v3567
        %v3569 = vsel %vm3501, %v3426, %v3568
        %v3570 = vsel %vm3503, %v3442, %v3569
        %v3571 = vsel %vm3505, %v3458, %v3570
        %v3572 = vsel %vm3507, %v3474, %v3571
        %v3573 = vsel %vm3509, %v3490, %v3572
        %v3574 = vsel %vm3497, %v3395, %v3379
        %v3575 = vsel %vm3499, %v3411, %v3574
        %v3576 = vsel %vm3501, %v3427, %v3575
        %v3577 = vsel %vm3503, %v3443, %v3576
        %v3578 = vsel %vm3505, %v3459, %v3577
        %v3579 = vsel %vm3507, %v3475, %v3578
        %v3580 = vsel %vm3509, %v3491, %v3579
        %v3581 = vsel %vm3497, %v3396, %v3380
        %v3582 = vsel %vm3499, %v3412, %v3581
        %v3583 = vsel %vm3501, %v3428, %v3582
        %v3584 = vsel %vm3503, %v3444, %v3583
        %v3585 = vsel %vm3505, %v3460, %v3584
        %v3586 = vsel %vm3507, %v3476, %v3585
        %v3587 = vsel %vm3509, %v3492, %v3586
        %v3588 = vsel %vm3497, %v3397, %v3381
        %v3589 = vsel %vm3499, %v3413, %v3588
        %v3590 = vsel %vm3501, %v3429, %v3589
        %v3591 = vsel %vm3503, %v3445, %v3590
        %v3592 = vsel %vm3505, %v3461, %v3591
        %v3593 = vsel %vm3507, %v3477, %v3592
        %v3594 = vsel %vm3509, %v3493, %v3593
        %v3595 = vsel %vm3497, %v3398, %v3382
        %v3596 = vsel %vm3499, %v3414, %v3595
        %v3597 = vsel %vm3501, %v3430, %v3596
        %v3598 = vsel %vm3503, %v3446, %v3597
        %v3599 = vsel %vm3505, %v3462, %v3598
        %v3600 = vsel %vm3507, %v3478, %v3599
        %v3601 = vsel %vm3509, %v3494, %v3600
        %v3602 = vsel %vm3497, %v3399, %v3383
        %v3603 = vsel %vm3499, %v3415, %v3602
        %v3604 = vsel %vm3501, %v3431, %v3603
        %v3605 = vsel %vm3503, %v3447, %v3604
        %v3606 = vsel %vm3505, %v3463, %v3605
        %v3607 = vsel %vm3507, %v3479, %v3606
        %v3608 = vsel %vm3509, %v3495, %v3607
        %v3609 = vsel %vm3497, %v3400, %v3384
        %v3610 = vsel %vm3499, %v3416, %v3609
        %v3611 = vsel %vm3501, %v3432, %v3610
        %v3612 = vsel %vm3503, %v3448, %v3611
        %v3613 = vsel %vm3505, %v3464, %v3612
        %v3614 = vsel %vm3507, %v3480, %v3613
        %v3615 = vsel %vm3509, %v3496, %v3614
        %v3616 = vpack.c.b16 %v3510, %v3510
        %v3617 = vpack.c.b16 %v3517, %v3517
        %v3618 = vpack.c.b16 %v3524, %v3524
        %v3619 = vpack.c.b16 %v3531, %v3531
        %v3620 = vpack.c.b16 %v3538, %v3538
        %v3621 = vpack.c.b16 %v3545, %v3545
        %v3622 = vpack.c.b16 %v3552, %v3552
        %v3623 = vpack.c.b16 %v3559, %v3559
        %v3624 = vpack.c.b16 %v3566, %v3566
        %v3625 = vpack.c.b16 %v3573, %v3573
        %v3626 = vpack.c.b16 %v3580, %v3580
        %v3627 = vpack.c.b16 %v3587, %v3587
        %v3628 = vpack.c.b16 %v3594, %v3594
        %v3629 = vpack.c.b16 %v3601, %v3601
        %v3630 = vpack.c.b16 %v3608, %v3608
        %v3631 = vpack.c.b16 %v3615, %v3615
        %v4160 = vunpack.c.l.b16 %v2579
        %v4161 = vunpack.c.h.b16 %v2579
        %v4162 = vunpack.c.l.b16 %v2580
        %v4163 = vunpack.c.h.b16 %v2580
        %v4164 = vunpack.c.l.b16 %v2581
        %v4165 = vunpack.c.h.b16 %v2581
        %v4166 = vunpack.c.l.b16 %v2582
        %v4167 = vunpack.c.h.b16 %v2582
        %v4168 = vunpack.c.l.b16 %v2583
        %v4169 = vunpack.c.h.b16 %v2583
        %v4170 = vunpack.c.l.b16 %v2584
        %v4171 = vunpack.c.h.b16 %v2584
        %v4172 = vunpack.c.l.b16 %v2585
        %v4173 = vunpack.c.h.b16 %v2585
        %v4174 = vunpack.c.l.b16 %v2586
        %v4175 = vunpack.c.h.b16 %v2586
        %v4176 = vunpack.c.l.b16 %v2587
        %v4177 = vunpack.c.h.b16 %v2587
        %v4178 = vunpack.c.l.b16 %v2588
        %v4179 = vunpack.c.h.b16 %v2588
        %v4180 = vunpack.c.l.b16 %v2589
        %v4181 = vunpack.c.h.b16 %v2589
        %v4182 = vunpack.c.l.b16 %v2590
        %v4183 = vunpack.c.h.b16 %v2590
        %v4184 = vunpack.c.l.b16 %v2591
        %v4185 = vunpack.c.h.b16 %v2591
        %v4186 = vunpack.c.l.b16 %v2592
        %v4187 = vunpack.c.h.b16 %v2592
        %v4188 = vunpack.c.l.b16 %v2593
        %v4189 = vunpack.c.h.b16 %v2593
        %v4190 = vunpack.c.l.b16 %v2594
        %v4191 = vunpack.c.h.b16 %v2594
        %v4192 = vunpack.c.l.b16 %v2595
        %v4193 = vunpack.c.h.b16 %v2595
        %v4194 = vunpack.c.l.b16 %v2596
        %v4195 = vunpack.c.h.b16 %v2596
        %v4196 = vunpack.c.l.b16 %v2597
        %v4197 = vunpack.c.h.b16 %v2597
        %v4198 = vunpack.c.l.b16 %v2598
        %v4199 = vunpack.c.h.b16 %v2598
        %v4200 = vunpack.c.l.b16 %v2599
        %v4201 = vunpack.c.h.b16 %v2599
        %v4202 = vunpack.c.l.b16 %v2600
        %v4203 = vunpack.c.h.b16 %v2600
        %v4204 = vunpack.c.l.b16 %v2601
        %v4205 = vunpack.c.h.b16 %v2601
        %v4206 = vunpack.c.l.b16 %v2602
        %v4207 = vunpack.c.h.b16 %v2602
        %v4208 = vunpack.c.l.b16 %v2603
        %v4209 = vunpack.c.h.b16 %v2603
        %v4210 = vunpack.c.l.b16 %v2604
        %v4211 = vunpack.c.h.b16 %v2604
        %v4212 = vunpack.c.l.b16 %v2605
        %v4213 = vunpack.c.h.b16 %v2605
        %v4214 = vunpack.c.l.b16 %v2606
        %v4215 = vunpack.c.h.b16 %v2606
        %v4216 = vunpack.c.l.b16 %v2607
        %v4217 = vunpack.c.h.b16 %v2607
        %v4218 = vunpack.c.l.b16 %v2608
        %v4219 = vunpack.c.h.b16 %v2608
        %v4220 = vunpack.c.l.b16 %v2609
        %v4221 = vunpack.c.h.b16 %v2609
        %v4222 = vunpack.c.l.b16 %v2610
        %v4223 = vunpack.c.h.b16 %v2610
        %v4224 = vunpack.c.l.b16 %v2611
        %v4225 = vunpack.c.h.b16 %v2611
        %v4226 = vunpack.c.l.b16 %v2612
        %v4227 = vunpack.c.h.b16 %v2612
        %v4228 = vunpack.c.l.b16 %v2613
        %v4229 = vunpack.c.h.b16 %v2613
        %v4230 = vunpack.c.l.b16 %v2614
        %v4231 = vunpack.c.h.b16 %v2614
        %v4232 = vunpack.c.l.b16 %v2615
        %v4233 = vunpack.c.h.b16 %v2615
        %v4234 = vunpack.c.l.b16 %v2616
        %v4235 = vunpack.c.h.b16 %v2616
        %v4236 = vunpack.c.l.b16 %v2617
        %v4237 = vunpack.c.h.b16 %v2617
        %v4238 = vunpack.c.l.b16 %v2618
        %v4239 = vunpack.c.h.b16 %v2618
        %v4240 = vunpack.c.l.b16 %v2619
        %v4241 = vunpack.c.h.b16 %v2619
        %v4242 = vunpack.c.l.b16 %v2620
        %v4243 = vunpack.c.h.b16 %v2620
        %v4244 = vunpack.c.l.b16 %v2621
        %v4245 = vunpack.c.h.b16 %v2621
        %v4246 = vunpack.c.l.b16 %v2622
        %v4247 = vunpack.c.h.b16 %v2622
        %v4248 = vunpack.c.l.b16 %v2623
        %v4249 = vunpack.c.h.b16 %v2623
        %v4250 = vunpack.c.l.b16 %v2624
        %v4251 = vunpack.c.h.b16 %v2624
        %v4252 = vunpack.c.l.b16 %v2625
        %v4253 = vunpack.c.h.b16 %v2625
        %v4254 = vunpack.c.l.b16 %v2626
        %v4255 = vunpack.c.h.b16 %v2626
        %v4256 = vunpack.c.l.b16 %v2627
        %v4257 = vunpack.c.h.b16 %v2627
        %v4258 = vunpack.c.l.b16 %v2628
        %v4259 = vunpack.c.h.b16 %v2628
        %v4260 = vunpack.c.l.b16 %v2629
        %v4261 = vunpack.c.h.b16 %v2629
        %v4262 = vunpack.c.l.b16 %v2630
        %v4263 = vunpack.c.h.b16 %v2630
        %v4264 = vunpack.c.l.b16 %v2631
        %v4265 = vunpack.c.h.b16 %v2631
        %v4266 = vunpack.c.l.b16 %v2632
        %v4267 = vunpack.c.h.b16 %v2632
        %v4268 = vunpack.c.l.b16 %v2633
        %v4269 = vunpack.c.h.b16 %v2633
        %v4270 = vunpack.c.l.b16 %v2634
        %v4271 = vunpack.c.h.b16 %v2634
        %v4272 = vunpack.c.l.b16 %v2635
        %v4273 = vunpack.c.h.b16 %v2635
        %v4274 = vunpack.c.l.b16 %v2636
        %v4275 = vunpack.c.h.b16 %v2636
        %v4276 = vunpack.c.l.b16 %v2637
        %v4277 = vunpack.c.h.b16 %v2637
        %v4278 = vunpack.c.l.b16 %v2638
        %v4279 = vunpack.c.h.b16 %v2638
        %v4280 = vunpack.c.l.b16 %v2639
        %v4281 = vunpack.c.h.b16 %v2639
        %v4282 = vunpack.c.l.b16 %v2640
        %v4283 = vunpack.c.h.b16 %v2640
        %v4284 = vunpack.c.l.b16 %v2641
        %v4285 = vunpack.c.h.b16 %v2641
        %v4286 = vunpack.c.l.b16 %v2642
        %v4287 = vunpack.c.h.b16 %v2642
        %v4288 = vunpack.c.l.b16 %v2643
        %v4289 = vunpack.c.h.b16 %v2643
        %v4290 = vunpack.c.l.b16 %v2644
        %v4291 = vunpack.c.h.b16 %v2644
        %v4292 = vunpack.c.l.b16 %v2645
        %v4293 = vunpack.c.h.b16 %v2645
        %v4294 = vunpack.c.l.b16 %v2646
        %v4295 = vunpack.c.h.b16 %v2646
        %v4296 = vunpack.c.l.b16 %v2647
        %v4297 = vunpack.c.h.b16 %v2647
        %v4298 = vunpack.c.l.b16 %v2648
        %v4299 = vunpack.c.h.b16 %v2648
        %v4300 = vunpack.c.l.b16 %v2649
        %v4301 = vunpack.c.h.b16 %v2649
        %v4302 = vunpack.c.l.b16 %v2650
        %v4303 = vunpack.c.h.b16 %v2650
        %v4304 = vunpack.c.l.b16 %v2651
        %v4305 = vunpack.c.h.b16 %v2651
        %v4306 = vunpack.c.l.b16 %v2652
        %v4307 = vunpack.c.h.b16 %v2652
        %v4308 = vunpack.c.l.b16 %v2653
        %v4309 = vunpack.c.h.b16 %v2653
        %v4310 = vunpack.c.l.b16 %v2654
        %v4311 = vunpack.c.h.b16 %v2654
        %v4312 = vunpack.c.l.b16 %v2655
        %v4313 = vunpack.c.h.b16 %v2655
        %v4314 = vunpack.c.l.b16 %v2656
        %v4315 = vunpack.c.h.b16 %v2656
        %v4316 = vunpack.c.l.b16 %v2657
        %v4317 = vunpack.c.h.b16 %v2657
        %v4318 = vunpack.c.l.b16 %v2658
        %v4319 = vunpack.c.h.b16 %v2658
        %v4320 = vunpack.c.l.b16 %v2659
        %v4321 = vunpack.c.h.b16 %v2659
        %v4322 = vunpack.c.l.b16 %v2660
        %v4323 = vunpack.c.h.b16 %v2660
        %v4324 = vunpack.c.l.b16 %v2661
        %v4325 = vunpack.c.h.b16 %v2661
        %v4326 = vunpack.c.l.b16 %v2662
        %v4327 = vunpack.c.h.b16 %v2662
        %v4328 = vunpack.c.l.b16 %v2663
        %v4329 = vunpack.c.h.b16 %v2663
        %v4330 = vunpack.c.l.b16 %v2664
        %v4331 = vunpack.c.h.b16 %v2664
        %v4332 = vunpack.c.l.b16 %v2665
        %v4333 = vunpack.c.h.b16 %v2665
        %v4334 = vunpack.c.l.b16 %v2666
        %v4335 = vunpack.c.h.b16 %v2666
        %v4336 = vunpack.c.l.b16 %v2667
        %v4337 = vunpack.c.h.b16 %v2667
        %v4338 = vunpack.c.l.b16 %v2668
        %v4339 = vunpack.c.h.b16 %v2668
        %v4340 = vunpack.c.l.b16 %v2669
        %v4341 = vunpack.c.h.b16 %v2669
        %v4342 = vunpack.c.l.b16 %v2670
        %v4343 = vunpack.c.h.b16 %v2670
        %v4344 = vunpack.c.l.b16 %v2671
        %v4345 = vunpack.c.h.b16 %v2671
        %v4346 = vunpack.c.l.b16 %v2672
        %v4347 = vunpack.c.h.b16 %v2672
        %v4348 = vunpack.c.l.b16 %v2673
        %v4349 = vunpack.c.h.b16 %v2673
        %v4350 = vunpack.c.l.b16 %v2674
        %v4351 = vunpack.c.h.b16 %v2674
        %v4352 = vunpack.c.l.b16 %v2675
        %v4353 = vunpack.c.h.b16 %v2675
        %v4354 = vunpack.c.l.b16 %v2676
        %v4355 = vunpack.c.h.b16 %v2676
        %v4356 = vunpack.c.l.b16 %v2677
        %v4357 = vunpack.c.h.b16 %v2677
        %v4358 = vunpack.c.l.b16 %v2678
        %v4359 = vunpack.c.h.b16 %v2678
        %v4360 = vunpack.c.l.b16 %v2679
        %v4361 = vunpack.c.h.b16 %v2679
        %v4362 = vunpack.c.l.b16 %v2680
        %v4363 = vunpack.c.h.b16 %v2680
        %v4364 = vunpack.c.l.b16 %v2681
        %v4365 = vunpack.c.h.b16 %v2681
        %v4366 = vunpack.c.l.b16 %v2682
        %v4367 = vunpack.c.h.b16 %v2682
        %v4368 = vunpack.c.l.b16 %v2683
        %v4369 = vunpack.c.h.b16 %v2683
        %v4370 = vunpack.c.l.b16 %v2684
        %v4371 = vunpack.c.h.b16 %v2684
        %v4372 = vunpack.c.l.b16 %v2685
        %v4373 = vunpack.c.h.b16 %v2685
        %v4374 = vunpack.c.l.b16 %v2686
        %v4375 = vunpack.c.h.b16 %v2686
        %v4376 = vunpack.c.l.b16 %v2687
        %v4377 = vunpack.c.h.b16 %v2687
        %v4378 = vunpack.c.l.b16 %v2688
        %v4379 = vunpack.c.h.b16 %v2688
        %v4380 = vunpack.c.l.b16 %v2689
        %v4381 = vunpack.c.h.b16 %v2689
        %v4382 = vunpack.c.l.b16 %v2690
        %v4383 = vunpack.c.h.b16 %v2690
        %v4384 = vunpack.c.l.b16 %v2691
        %v4385 = vunpack.c.h.b16 %v2691
        %v4386 = vunpack.c.l.b16 %v2692
        %v4387 = vunpack.c.h.b16 %v2692
        %v4388 = vunpack.c.l.b16 %v2693
        %v4389 = vunpack.c.h.b16 %v2693
        %v4390 = vunpack.c.l.b16 %v2694
        %v4391 = vunpack.c.h.b16 %v2694
        %v4392 = vunpack.c.l.b16 %v2695
        %v4393 = vunpack.c.h.b16 %v2695
        %v4394 = vunpack.c.l.b16 %v2696
        %v4395 = vunpack.c.h.b16 %v2696
        %v4396 = vunpack.c.l.b16 %v2697
        %v4397 = vunpack.c.h.b16 %v2697
        %v4398 = vunpack.c.l.b16 %v2698
        %v4399 = vunpack.c.h.b16 %v2698
        %v4400 = vunpack.c.l.b16 %v2699
        %v4401 = vunpack.c.h.b16 %v2699
        %v4402 = vunpack.c.l.b16 %v2700
        %v4403 = vunpack.c.h.b16 %v2700
        %v4404 = vunpack.c.l.b16 %v2701
        %v4405 = vunpack.c.h.b16 %v2701
        %v4406 = vunpack.c.l.b16 %v2702
        %v4407 = vunpack.c.h.b16 %v2702
        %v4408 = vunpack.c.l.b16 %v2703
        %v4409 = vunpack.c.h.b16 %v2703
        %v4410 = vunpack.c.l.b16 %v2704
        %v4411 = vunpack.c.h.b16 %v2704
        %v4412 = vunpack.c.l.b16 %v2705
        %v4413 = vunpack.c.h.b16 %v2705
        %v4414 = vunpack.c.l.b16 %v2706
        %v4415 = vunpack.c.h.b16 %v2706
        %v4416 = vunpack.c.l.b16 %v2707
        %v4417 = vunpack.c.h.b16 %v2707
        %v4418 = vunpack.c.l.b16 %v2708
        %v4419 = vunpack.c.h.b16 %v2708
        %v4420 = vunpack.c.l.b16 %v2709
        %v4421 = vunpack.c.h.b16 %v2709
        %v4422 = vunpack.c.l.b16 %v2710
        %v4423 = vunpack.c.h.b16 %v2710
        %v4424 = vunpack.c.l.b16 %v2711
        %v4425 = vunpack.c.h.b16 %v2711
        %v4426 = vunpack.c.l.b16 %v2712
        %v4427 = vunpack.c.h.b16 %v2712
        %v4428 = vunpack.c.l.b16 %v2713
        %v4429 = vunpack.c.h.b16 %v2713
        %v4430 = vunpack.c.l.b16 %v2714
        %v4431 = vunpack.c.h.b16 %v2714
        %v4432 = vunpack.c.l.b16 %v2715
        %v4433 = vunpack.c.h.b16 %v2715
        %v4434 = vunpack.c.l.b16 %v2716
        %v4435 = vunpack.c.h.b16 %v2716
        %v4436 = vunpack.c.l.b16 %v2717
        %v4437 = vunpack.c.h.b16 %v2717
        %v4438 = vunpack.c.l.b16 %v2718
        %v4439 = vunpack.c.h.b16 %v2718
        %v4440 = vunpack.c.l.b16 %v2719
        %v4441 = vunpack.c.h.b16 %v2719
        %v4442 = vunpack.c.l.b16 %v2720
        %v4443 = vunpack.c.h.b16 %v2720
        %v4444 = vunpack.c.l.b16 %v2721
        %v4445 = vunpack.c.h.b16 %v2721
        %v4446 = vunpack.c.l.b16 %v2722
        %v4447 = vunpack.c.h.b16 %v2722
        %v4448 = vunpack.c.l.b16 %v2723
        %v4449 = vunpack.c.h.b16 %v2723
        %v4450 = vunpack.c.l.b16 %v2724
        %v4451 = vunpack.c.h.b16 %v2724
        %v4452 = vunpack.c.l.b16 %v2725
        %v4453 = vunpack.c.h.b16 %v2725
        %v4454 = vunpack.c.l.b16 %v2726
        %v4455 = vunpack.c.h.b16 %v2726
        %v4456 = vunpack.c.l.b16 %v2727
        %v4457 = vunpack.c.h.b16 %v2727
        %v4458 = vunpack.c.l.b16 %v2728
        %v4459 = vunpack.c.h.b16 %v2728
        %v4460 = vunpack.c.l.b16 %v2729
        %v4461 = vunpack.c.h.b16 %v2729
        %v4462 = vunpack.c.l.b16 %v2730
        %v4463 = vunpack.c.h.b16 %v2730
        %v4464 = vunpack.c.l.b16 %v2731
        %v4465 = vunpack.c.h.b16 %v2731
        %v4466 = vunpack.c.l.b16 %v2732
        %v4467 = vunpack.c.h.b16 %v2732
        %v4468 = vunpack.c.l.b16 %v2733
        %v4469 = vunpack.c.h.b16 %v2733
        %v4470 = vunpack.c.l.b16 %v2734
        %v4471 = vunpack.c.h.b16 %v2734
        %v4472 = vunpack.c.l.b16 %v2735
        %v4473 = vunpack.c.h.b16 %v2735
        %v4474 = vunpack.c.l.b16 %v2736
        %v4475 = vunpack.c.h.b16 %v2736
        %v4476 = vunpack.c.l.b16 %v2737
        %v4477 = vunpack.c.h.b16 %v2737
        %v4478 = vunpack.c.l.b16 %v2738
        %v4479 = vunpack.c.h.b16 %v2738
        %v4480 = vunpack.c.l.b16 %v2739
        %v4481 = vunpack.c.h.b16 %v2739
        %v4482 = vunpack.c.l.b16 %v2740
        %v4483 = vunpack.c.h.b16 %v2740
        %v4484 = vunpack.c.l.b16 %v2741
        %v4485 = vunpack.c.h.b16 %v2741
        %v4486 = vunpack.c.l.b16 %v2742
        %v4487 = vunpack.c.h.b16 %v2742
        %v4488 = vunpack.c.l.b16 %v2743
        %v4489 = vunpack.c.h.b16 %v2743
        %v4490 = vunpack.c.l.b16 %v2744
        %v4491 = vunpack.c.h.b16 %v2744
        %v4492 = vunpack.c.l.b16 %v2745
        %v4493 = vunpack.c.h.b16 %v2745
        %v4494 = vunpack.c.l.b16 %v2746
        %v4495 = vunpack.c.h.b16 %v2746
        %v4496 = vunpack.c.l.b16 %v2747
        %v4497 = vunpack.c.h.b16 %v2747
        %v4498 = vunpack.c.l.b16 %v2748
        %v4499 = vunpack.c.h.b16 %v2748
        %v4500 = vunpack.c.l.b16 %v2749
        %v4501 = vunpack.c.h.b16 %v2749
        %v4502 = vunpack.c.l.b16 %v2750
        %v4503 = vunpack.c.h.b16 %v2750
        %v4504 = vunpack.c.l.b16 %v2751
        %v4505 = vunpack.c.h.b16 %v2751
        %v4506 = vunpack.c.l.b16 %v2752
        %v4507 = vunpack.c.h.b16 %v2752
        %v4508 = vunpack.c.l.b16 %v2753
        %v4509 = vunpack.c.h.b16 %v2753
        %v4510 = vunpack.c.l.b16 %v2754
        %v4511 = vunpack.c.h.b16 %v2754
        %v4512 = vunpack.c.l.b16 %v2755
        %v4513 = vunpack.c.h.b16 %v2755
        %v4514 = vunpack.c.l.b16 %v2756
        %v4515 = vunpack.c.h.b16 %v2756
        %v4516 = vunpack.c.l.b16 %v2757
        %v4517 = vunpack.c.h.b16 %v2757
        %v4518 = vunpack.c.l.b16 %v2758
        %v4519 = vunpack.c.h.b16 %v2758
        %v4520 = vunpack.c.l.b16 %v2759
        %v4521 = vunpack.c.h.b16 %v2759
        %v4522 = vunpack.c.l.b16 %v2760
        %v4523 = vunpack.c.h.b16 %v2760
        %v4524 = vunpack.c.l.b16 %v2761
        %v4525 = vunpack.c.h.b16 %v2761
        %v4526 = vunpack.c.l.b16 %v2762
        %v4527 = vunpack.c.h.b16 %v2762
        %v4528 = vunpack.c.l.b16 %v2763
        %v4529 = vunpack.c.h.b16 %v2763
        %v4530 = vunpack.c.l.b16 %v2764
        %v4531 = vunpack.c.h.b16 %v2764
        %v4532 = vunpack.c.l.b16 %v2765
        %v4533 = vunpack.c.h.b16 %v2765
        %v4534 = vunpack.c.l.b16 %v2766
        %v4535 = vunpack.c.h.b16 %v2766
        %v4536 = vunpack.c.l.b16 %v2767
        %v4537 = vunpack.c.h.b16 %v2767
        %v4538 = vunpack.c.l.b16 %v2768
        %v4539 = vunpack.c.h.b16 %v2768
        %v4540 = vunpack.c.l.b16 %v2769
        %v4541 = vunpack.c.h.b16 %v2769
        %v4542 = vunpack.c.l.b16 %v2770
        %v4543 = vunpack.c.h.b16 %v2770
        %v4544 = vunpack.c.l.b16 %v2771
        %v4545 = vunpack.c.h.b16 %v2771
        %v4546 = vunpack.c.l.b16 %v2772
        %v4547 = vunpack.c.h.b16 %v2772
        %v4548 = vunpack.c.l.b16 %v2773
        %v4549 = vunpack.c.h.b16 %v2773
        %v4550 = vunpack.c.l.b16 %v2774
        %v4551 = vunpack.c.h.b16 %v2774
        %v4552 = vunpack.c.l.b16 %v2775
        %v4553 = vunpack.c.h.b16 %v2775
        %v4554 = vunpack.c.l.b16 %v2776
        %v4555 = vunpack.c.h.b16 %v2776
        %v4556 = vunpack.c.l.b16 %v2777
        %v4557 = vunpack.c.h.b16 %v2777
        %v4558 = vunpack.c.l.b16 %v2778
        %v4559 = vunpack.c.h.b16 %v2778
        %v4560 = vunpack.c.l.b16 %v2779
        %v4561 = vunpack.c.h.b16 %v2779
        %v4562 = vunpack.c.l.b16 %v2780
        %v4563 = vunpack.c.h.b16 %v2780
        %v4564 = vunpack.c.l.b16 %v2781
        %v4565 = vunpack.c.h.b16 %v2781
        %v4566 = vunpack.c.l.b16 %v2782
        %v4567 = vunpack.c.h.b16 %v2782
        %v4568 = vunpack.c.l.b16 %v2783
        %v4569 = vunpack.c.h.b16 %v2783
        %v4570 = vunpack.c.l.b16 %v2784
        %v4571 = vunpack.c.h.b16 %v2784
        %v4572 = vunpack.c.l.b16 %v2785
        %v4573 = vunpack.c.h.b16 %v2785
        %v4574 = vunpack.c.l.b16 %v2786
        %v4575 = vunpack.c.h.b16 %v2786
        %v4576 = vunpack.c.l.b16 %v2787
        %v4577 = vunpack.c.h.b16 %v2787
        %v4578 = vunpack.c.l.b16 %v2788
        %v4579 = vunpack.c.h.b16 %v2788
        %v4580 = vunpack.c.l.b16 %v2789
        %v4581 = vunpack.c.h.b16 %v2789
        %v4582 = vunpack.c.l.b16 %v2790
        %v4583 = vunpack.c.h.b16 %v2790
        %v4584 = vunpack.c.l.b16 %v2791
        %v4585 = vunpack.c.h.b16 %v2791
        %v4586 = vunpack.c.l.b16 %v2792
        %v4587 = vunpack.c.h.b16 %v2792
        %v4588 = vunpack.c.l.b16 %v2793
        %v4589 = vunpack.c.h.b16 %v2793
        %v4590 = vunpack.c.l.b16 %v2794
        %v4591 = vunpack.c.h.b16 %v2794
        %v4592 = vunpack.c.l.b16 %v2795
        %v4593 = vunpack.c.h.b16 %v2795
        %v4594 = vunpack.c.l.b16 %v2796
        %v4595 = vunpack.c.h.b16 %v2796
        %v4596 = vunpack.c.l.b16 %v2797
        %v4597 = vunpack.c.h.b16 %v2797
        %v4598 = vunpack.c.l.b16 %v2798
        %v4599 = vunpack.c.h.b16 %v2798
        %v4600 = vunpack.c.l.b16 %v2799
        %v4601 = vunpack.c.h.b16 %v2799
        %v4602 = vunpack.c.l.b16 %v2800
        %v4603 = vunpack.c.h.b16 %v2800
        %v4604 = vunpack.c.l.b16 %v2801
        %v4605 = vunpack.c.h.b16 %v2801
        %v4606 = vunpack.c.l.b16 %v2802
        %v4607 = vunpack.c.h.b16 %v2802
        %v4608 = vunpack.c.l.b16 %v2803
        %v4609 = vunpack.c.h.b16 %v2803
        %v4610 = vunpack.c.l.b16 %v2804
        %v4611 = vunpack.c.h.b16 %v2804
        %v4612 = vunpack.c.l.b16 %v2805
        %v4613 = vunpack.c.h.b16 %v2805
        %v4614 = vunpack.c.l.b16 %v2806
        %v4615 = vunpack.c.h.b16 %v2806
        %v4616 = vunpack.c.l.b16 %v2807
        %v4617 = vunpack.c.h.b16 %v2807
        %v4618 = vunpack.c.l.b16 %v2808
        %v4619 = vunpack.c.h.b16 %v2808
        %v4620 = vunpack.c.l.b16 %v2809
        %v4621 = vunpack.c.h.b16 %v2809
        %v4622 = vunpack.c.l.b16 %v2810
        %v4623 = vunpack.c.h.b16 %v2810
        %v4624 = vunpack.c.l.b16 %v2811
        %v4625 = vunpack.c.h.b16 %v2811
        %v4626 = vunpack.c.l.b16 %v2812
        %v4627 = vunpack.c.h.b16 %v2812
        %v4628 = vunpack.c.l.b16 %v2813
        %v4629 = vunpack.c.h.b16 %v2813
        %v4630 = vunpack.c.l.b16 %v2814
        %v4631 = vunpack.c.h.b16 %v2814
        %v4632 = vunpack.c.l.b16 %v2815
        %v4633 = vunpack.c.h.b16 %v2815
        %v4634 = vunpack.c.l.b16 %v2816
        %v4635 = vunpack.c.h.b16 %v2816
        %v4636 = vunpack.c.l.b16 %v2817
        %v4637 = vunpack.c.h.b16 %v2817
        %v4638 = vunpack.c.l.b16 %v2818
        %v4639 = vunpack.c.h.b16 %v2818
        %v4640 = vunpack.c.l.b16 %v2819
        %v4641 = vunpack.c.h.b16 %v2819
        %v4642 = vunpack.c.l.b16 %v2820
        %v4643 = vunpack.c.h.b16 %v2820
        %v4644 = vunpack.c.l.b16 %v2821
        %v4645 = vunpack.c.h.b16 %v2821
        %v4646 = vunpack.c.l.b16 %v2822
        %v4647 = vunpack.c.h.b16 %v2822
        %v4648 = vunpack.c.l.b16 %v2823
        %v4649 = vunpack.c.h.b16 %v2823
        %v4650 = vunpack.c.l.b16 %v2824
        %v4651 = vunpack.c.h.b16 %v2824
        %v4652 = vunpack.c.l.b16 %v2825
        %v4653 = vunpack.c.h.b16 %v2825
        %v4654 = vunpack.c.l.b16 %v2826
        %v4655 = vunpack.c.h.b16 %v2826
        %v4656 = vunpack.c.l.b16 %v2827
        %v4657 = vunpack.c.h.b16 %v2827
        %v4658 = vunpack.c.l.b16 %v2828
        %v4659 = vunpack.c.h.b16 %v2828
        %v4660 = vunpack.c.l.b16 %v2829
        %v4661 = vunpack.c.h.b16 %v2829
        %v4662 = vunpack.c.l.b16 %v2830
        %v4663 = vunpack.c.h.b16 %v2830
        %v4664 = vunpack.c.l.b16 %v2831
        %v4665 = vunpack.c.h.b16 %v2831
        %v4666 = vunpack.c.l.b16 %v2832
        %v4667 = vunpack.c.h.b16 %v2832
        %v4668 = vunpack.c.l.b16 %v2833
        %v4669 = vunpack.c.h.b16 %v2833
        %v4670 = vunpack.c.l.b16 %v2834
        %v4671 = vunpack.c.h.b16 %v2834
        %v4672 = vunpack.c.l.b16 %v2835
        %v4673 = vunpack.c.h.b16 %v2835
        %v4674 = vunpack.c.l.b16 %v2836
        %v4675 = vunpack.c.h.b16 %v2836
        %v4676 = vunpack.c.l.b16 %v2837
        %v4677 = vunpack.c.h.b16 %v2837
        %v4678 = vunpack.c.l.b16 %v2838
        %v4679 = vunpack.c.h.b16 %v2838
        %v4680 = vunpack.c.l.b16 %v2839
        %v4681 = vunpack.c.h.b16 %v2839
        %v4682 = vunpack.c.l.b16 %v2840
        %v4683 = vunpack.c.h.b16 %v2840
        %v4684 = vunpack.c.l.b16 %v2841
        %v4685 = vunpack.c.h.b16 %v2841
        %v4686 = vunpack.c.l.b16 %v2842
        %v4687 = vunpack.c.h.b16 %v2842
        %v4688 = vunpack.c.l.b16 %v2843
        %v4689 = vunpack.c.h.b16 %v2843
        %v4690 = vunpack.c.l.b16 %v2844
        %v4691 = vunpack.c.h.b16 %v2844
        %v4692 = vunpack.c.l.b16 %v2845
        %v4693 = vunpack.c.h.b16 %v2845
        %v4694 = vunpack.c.l.b16 %v2846
        %v4695 = vunpack.c.h.b16 %v2846
        %v4696 = vunpack.c.l.b16 %v2847
        %v4697 = vunpack.c.h.b16 %v2847
        %v4698 = vunpack.c.l.b16 %v2848
        %v4699 = vunpack.c.h.b16 %v2848
        %v4700 = vunpack.c.l.b16 %v2849
        %v4701 = vunpack.c.h.b16 %v2849
        %v4702 = vunpack.c.l.b16 %v2850
        %v4703 = vunpack.c.h.b16 %v2850
        %v4704 = vunpack.c.l.b16 %v2851
        %v4705 = vunpack.c.h.b16 %v2851
        %v4706 = vunpack.c.l.b16 %v2852
        %v4707 = vunpack.c.h.b16 %v2852
        %v4708 = vunpack.c.l.b16 %v2853
        %v4709 = vunpack.c.h.b16 %v2853
        %v4710 = vunpack.c.l.b16 %v2854
        %v4711 = vunpack.c.h.b16 %v2854
        %v4712 = vunpack.c.l.b16 %v2855
        %v4713 = vunpack.c.h.b16 %v2855
        %v4714 = vunpack.c.l.b16 %v2856
        %v4715 = vunpack.c.h.b16 %v2856
        %v4716 = vunpack.c.l.b16 %v2857
        %v4717 = vunpack.c.h.b16 %v2857
        %v4718 = vunpack.c.l.b16 %v2858
        %v4719 = vunpack.c.h.b16 %v2858
        %v4720 = vunpack.c.l.b16 %v2859
        %v4721 = vunpack.c.h.b16 %v2859
        %v4722 = vunpack.c.l.b16 %v2860
        %v4723 = vunpack.c.h.b16 %v2860
        %v4724 = vunpack.c.l.b16 %v2861
        %v4725 = vunpack.c.h.b16 %v2861
        %v4726 = vunpack.c.l.b16 %v2862
        %v4727 = vunpack.c.h.b16 %v2862
        %v4728 = vunpack.c.l.b16 %v2863
        %v4729 = vunpack.c.h.b16 %v2863
        %v4730 = vunpack.c.l.b16 %v2864
        %v4731 = vunpack.c.h.b16 %v2864
        %v4732 = vunpack.c.l.b16 %v2865
        %v4733 = vunpack.c.h.b16 %v2865
        %v4734 = vunpack.c.l.b16 %v2866
        %v4735 = vunpack.c.h.b16 %v2866
        %v4736 = vunpack.c.l.b16 %v2867
        %v4737 = vunpack.c.h.b16 %v2867
        %v4738 = vunpack.c.l.b16 %v2868
        %v4739 = vunpack.c.h.b16 %v2868
        %v4740 = vunpack.c.l.b16 %v2869
        %v4741 = vunpack.c.h.b16 %v2869
        %v4742 = vunpack.c.l.b16 %v2870
        %v4743 = vunpack.c.h.b16 %v2870
        %v4744 = vunpack.c.l.b16 %v2871
        %v4745 = vunpack.c.h.b16 %v2871
        %v4746 = vunpack.c.l.b16 %v2872
        %v4747 = vunpack.c.h.b16 %v2872
        %v4748 = vunpack.c.l.b16 %v2873
        %v4749 = vunpack.c.h.b16 %v2873
        %v4750 = vunpack.c.l.b16 %v2874
        %v4751 = vunpack.c.h.b16 %v2874
        %v4752 = vunpack.c.l.b16 %v2875
        %v4753 = vunpack.c.h.b16 %v2875
        %v4754 = vunpack.c.l.b16 %v2876
        %v4755 = vunpack.c.h.b16 %v2876
        %v4756 = vunpack.c.l.b16 %v2877
        %v4757 = vunpack.c.h.b16 %v2877
        %v4758 = vunpack.c.l.b16 %v2878
        %v4759 = vunpack.c.h.b16 %v2878
        %v4760 = vunpack.c.l.b16 %v2879
        %v4761 = vunpack.c.h.b16 %v2879
        %v4762 = vunpack.c.l.b16 %v2880
        %v4763 = vunpack.c.h.b16 %v2880
        %v4764 = vunpack.c.l.b16 %v2881
        %v4765 = vunpack.c.h.b16 %v2881
        %v4766 = vunpack.c.l.b16 %v2882
        %v4767 = vunpack.c.h.b16 %v2882
        %v4768 = vunpack.c.l.b16 %v2883
        %v4769 = vunpack.c.h.b16 %v2883
        %v4770 = vunpack.c.l.b16 %v2884
        %v4771 = vunpack.c.h.b16 %v2884
        %v4772 = vunpack.c.l.b16 %v2885
        %v4773 = vunpack.c.h.b16 %v2885
        %v4774 = vunpack.c.l.b16 %v2886
        %v4775 = vunpack.c.h.b16 %v2886
        %v4776 = vunpack.c.l.b16 %v2887
        %v4777 = vunpack.c.h.b16 %v2887
        %v4778 = vunpack.c.l.b16 %v2888
        %v4779 = vunpack.c.h.b16 %v2888
        %v4780 = vunpack.c.l.b16 %v2889
        %v4781 = vunpack.c.h.b16 %v2889
        %v4782 = vunpack.c.l.b16 %v2890
        %v4783 = vunpack.c.h.b16 %v2890
        %v4784 = vunpack.c.l.b16 %v2891
        %v4785 = vunpack.c.h.b16 %v2891
        %v4786 = vunpack.c.l.b16 %v2892
        %v4787 = vunpack.c.h.b16 %v2892
        %v4788 = vunpack.c.l.b16 %v2893
        %v4789 = vunpack.c.h.b16 %v2893
        %v4790 = vunpack.c.l.b16 %v2894
        %v4791 = vunpack.c.h.b16 %v2894
        %v4792 = vunpack.c.l.b16 %v2895
        %v4793 = vunpack.c.h.b16 %v2895
        %v4794 = vunpack.c.l.b16 %v2896
        %v4795 = vunpack.c.h.b16 %v2896
        %v4796 = vunpack.c.l.b16 %v2897
        %v4797 = vunpack.c.h.b16 %v2897
        %v4798 = vunpack.c.l.b16 %v2898
        %v4799 = vunpack.c.h.b16 %v2898
        %v4800 = vunpack.c.l.b16 %v2899
        %v4801 = vunpack.c.h.b16 %v2899
        %v4802 = vunpack.c.l.b16 %v2900
        %v4803 = vunpack.c.h.b16 %v2900
        %v4804 = vunpack.c.l.b16 %v2901
        %v4805 = vunpack.c.h.b16 %v2901
        %v4806 = vunpack.c.l.b16 %v2902
        %v4807 = vunpack.c.h.b16 %v2902
        %v4808 = vunpack.c.l.b16 %v2903
        %v4809 = vunpack.c.h.b16 %v2903
        %v4810 = vunpack.c.l.b16 %v2904
        %v4811 = vunpack.c.h.b16 %v2904
        %v4812 = vunpack.c.l.b16 %v2905
        %v4813 = vunpack.c.h.b16 %v2905
        %v4814 = vunpack.c.l.b16 %v2906
        %v4815 = vunpack.c.h.b16 %v2906
        %v4816 = vunpack.c.l.b16 %v2907
        %v4817 = vunpack.c.h.b16 %v2907
        %v4818 = vunpack.c.l.b16 %v2908
        %v4819 = vunpack.c.h.b16 %v2908
        %v4820 = vunpack.c.l.b16 %v2909
        %v4821 = vunpack.c.h.b16 %v2909
        %v4822 = vunpack.c.l.b16 %v2910
        %v4823 = vunpack.c.h.b16 %v2910
        %v4824 = vunpack.c.l.b16 %v2911
        %v4825 = vunpack.c.h.b16 %v2911
        %v4826 = vunpack.c.l.b16 %v2912
        %v4827 = vunpack.c.h.b16 %v2912
        %v4828 = vunpack.c.l.b16 %v2913
        %v4829 = vunpack.c.h.b16 %v2913
        %v4830 = vunpack.c.l.b16 %v2914
        %v4831 = vunpack.c.h.b16 %v2914
        %v4832 = vunpack.c.l.b16 %v2915
        %v4833 = vunpack.c.h.b16 %v2915
        %v4834 = vunpack.c.l.b16 %v2916
        %v4835 = vunpack.c.h.b16 %v2916
        %v4836 = vunpack.c.l.b16 %v2917
        %v4837 = vunpack.c.h.b16 %v2917
        %v4838 = vunpack.c.l.b16 %v2918
        %v4839 = vunpack.c.h.b16 %v2918
        %v4840 = vunpack.c.l.b16 %v2919
        %v4841 = vunpack.c.h.b16 %v2919
        %v4842 = vunpack.c.l.b16 %v2920
        %v4843 = vunpack.c.h.b16 %v2920
        %v4844 = vunpack.c.l.b16 %v2921
        %v4845 = vunpack.c.h.b16 %v2921
        %v4846 = vunpack.c.l.b16 %v2922
        %v4847 = vunpack.c.h.b16 %v2922
        %v4848 = vunpack.c.l.b16 %v2923
        %v4849 = vunpack.c.h.b16 %v2923
        %v4850 = vunpack.c.l.b16 %v2924
        %v4851 = vunpack.c.h.b16 %v2924
        %v4852 = vunpack.c.l.b16 %v2925
        %v4853 = vunpack.c.h.b16 %v2925
        %v4854 = vunpack.c.l.b16 %v2926
        %v4855 = vunpack.c.h.b16 %v2926
        %v4856 = vunpack.c.l.b16 %v2927
        %v4857 = vunpack.c.h.b16 %v2927
        %v4858 = vunpack.c.l.b16 %v2928
        %v4859 = vunpack.c.h.b16 %v2928
        %v4860 = vunpack.c.l.b16 %v2929
        %v4861 = vunpack.c.h.b16 %v2929
        %v4862 = vunpack.c.l.b16 %v2930
        %v4863 = vunpack.c.h.b16 %v2930
        %v4864 = vunpack.c.l.b16 %v2931
        %v4865 = vunpack.c.h.b16 %v2931
        %v4866 = vunpack.c.l.b16 %v2932
        %v4867 = vunpack.c.h.b16 %v2932
        %v4868 = vunpack.c.l.b16 %v2933
        %v4869 = vunpack.c.h.b16 %v2933
        %v4870 = vunpack.c.l.b16 %v2934
        %v4871 = vunpack.c.h.b16 %v2934
        %v4872 = vunpack.c.l.b16 %v2935
        %v4873 = vunpack.c.h.b16 %v2935
        %v4874 = vunpack.c.l.b16 %v2936
        %v4875 = vunpack.c.h.b16 %v2936
        %v4876 = vunpack.c.l.b16 %v2937
        %v4877 = vunpack.c.h.b16 %v2937
        %v4878 = vunpack.c.l.b16 %v2938
        %v4879 = vunpack.c.h.b16 %v2938
        %v4880 = vunpack.c.l.b16 %v2939
        %v4881 = vunpack.c.h.b16 %v2939
        %v4882 = vunpack.c.l.b16 %v2940
        %v4883 = vunpack.c.h.b16 %v2940
        %v4884 = vunpack.c.l.b16 %v2941
        %v4885 = vunpack.c.h.b16 %v2941
        %v4886 = vunpack.c.l.b16 %v2942
        %v4887 = vunpack.c.h.b16 %v2942
        %v4888 = vunpack.c.l.b16 %v2943
        %v4889 = vunpack.c.h.b16 %v2943
        %v4890 = vunpack.c.l.b16 %v2944
        %v4891 = vunpack.c.h.b16 %v2944
        %v4892 = vunpack.c.l.b16 %v2945
        %v4893 = vunpack.c.h.b16 %v2945
        %v4894 = vunpack.c.l.b16 %v2946
        %v4895 = vunpack.c.h.b16 %v2946
        %v4896 = vunpack.c.l.b16 %v2947
        %v4897 = vunpack.c.h.b16 %v2947
        %v4898 = vunpack.c.l.b16 %v2948
        %v4899 = vunpack.c.h.b16 %v2948
        %v4900 = vunpack.c.l.b16 %v2949
        %v4901 = vunpack.c.h.b16 %v2949
        %v4902 = vunpack.c.l.b16 %v2950
        %v4903 = vunpack.c.h.b16 %v2950
        %v4904 = vunpack.c.l.b16 %v2951
        %v4905 = vunpack.c.h.b16 %v2951
        %v4906 = vunpack.c.l.b16 %v2952
        %v4907 = vunpack.c.h.b16 %v2952
        %v4908 = vunpack.c.l.b16 %v2953
        %v4909 = vunpack.c.h.b16 %v2953
        %v4910 = vunpack.c.l.b16 %v2954
        %v4911 = vunpack.c.h.b16 %v2954
        %v4912 = vunpack.c.l.b16 %v2955
        %v4913 = vunpack.c.h.b16 %v2955
        %v4914 = vunpack.c.l.b16 %v2956
        %v4915 = vunpack.c.h.b16 %v2956
        %v4916 = vunpack.c.l.b16 %v2957
        %v4917 = vunpack.c.h.b16 %v2957
        %v4918 = vunpack.c.l.b16 %v2958
        %v4919 = vunpack.c.h.b16 %v2958
        %v4920 = vunpack.c.l.b16 %v2959
        %v4921 = vunpack.c.h.b16 %v2959
        %v4922 = vunpack.c.l.b16 %v2960
        %v4923 = vunpack.c.h.b16 %v2960
        %v4924 = vunpack.c.l.b16 %v2961
        %v4925 = vunpack.c.h.b16 %v2961
        %v4926 = vunpack.c.l.b16 %v2962
        %v4927 = vunpack.c.h.b16 %v2962
        %v4928 = vunpack.c.l.b16 %v2963
        %v4929 = vunpack.c.h.b16 %v2963
        %v4930 = vunpack.c.l.b16 %v2964
        %v4931 = vunpack.c.h.b16 %v2964
        %v4932 = vunpack.c.l.b16 %v2965
        %v4933 = vunpack.c.h.b16 %v2965
        %v4934 = vunpack.c.l.b16 %v2966
        %v4935 = vunpack.c.h.b16 %v2966
        %v4936 = vunpack.c.l.b16 %v2967
        %v4937 = vunpack.c.h.b16 %v2967
        %v4938 = vunpack.c.l.b16 %v2968
        %v4939 = vunpack.c.h.b16 %v2968
        %v4940 = vunpack.c.l.b16 %v2969
        %v4941 = vunpack.c.h.b16 %v2969
        %v4942 = vunpack.c.l.b16 %v2970
        %v4943 = vunpack.c.h.b16 %v2970
        %v4944 = vunpack.c.l.b16 %v2971
        %v4945 = vunpack.c.h.b16 %v2971
        %v4946 = vunpack.c.l.b16 %v2972
        %v4947 = vunpack.c.h.b16 %v2972
        %v4948 = vunpack.c.l.b16 %v2973
        %v4949 = vunpack.c.h.b16 %v2973
        %v4950 = vunpack.c.l.b16 %v2974
        %v4951 = vunpack.c.h.b16 %v2974
        %v4952 = vunpack.c.l.b16 %v2975
        %v4953 = vunpack.c.h.b16 %v2975
        %v4954 = vunpack.c.l.b16 %v2976
        %v4955 = vunpack.c.h.b16 %v2976
        %v4956 = vunpack.c.l.b16 %v2977
        %v4957 = vunpack.c.h.b16 %v2977
        %v4958 = vunpack.c.l.b16 %v2978
        %v4959 = vunpack.c.h.b16 %v2978
        %v4960 = vunpack.c.l.b16 %v2979
        %v4961 = vunpack.c.h.b16 %v2979
        %v4962 = vunpack.c.l.b16 %v2980
        %v4963 = vunpack.c.h.b16 %v2980
        %v4964 = vunpack.c.l.b16 %v2981
        %v4965 = vunpack.c.h.b16 %v2981
        %v4966 = vunpack.c.l.b16 %v2982
        %v4967 = vunpack.c.h.b16 %v2982
        %v4968 = vunpack.c.l.b16 %v2983
        %v4969 = vunpack.c.h.b16 %v2983
        %v4970 = vunpack.c.l.b16 %v2984
        %v4971 = vunpack.c.h.b16 %v2984
        %v4972 = vunpack.c.l.b16 %v2985
        %v4973 = vunpack.c.h.b16 %v2985
        %v4974 = vunpack.c.l.b16 %v2986
        %v4975 = vunpack.c.h.b16 %v2986
        %v4976 = vunpack.c.l.b16 %v2987
        %v4977 = vunpack.c.h.b16 %v2987
        %v4978 = vunpack.c.l.b16 %v2988
        %v4979 = vunpack.c.h.b16 %v2988
        %v4980 = vunpack.c.l.b16 %v2989
        %v4981 = vunpack.c.h.b16 %v2989
        %v4982 = vunpack.c.l.b16 %v2990
        %v4983 = vunpack.c.h.b16 %v2990
        %v4984 = vunpack.c.l.b16 %v2991
        %v4985 = vunpack.c.h.b16 %v2991
        %v4986 = vunpack.c.l.b16 %v2992
        %v4987 = vunpack.c.h.b16 %v2992
        %v4988 = vunpack.c.l.b16 %v2993
        %v4989 = vunpack.c.h.b16 %v2993
        %v4990 = vunpack.c.l.b16 %v2994
        %v4991 = vunpack.c.h.b16 %v2994
        %v4992 = vunpack.c.l.b16 %v2995
        %v4993 = vunpack.c.h.b16 %v2995
        %v4994 = vunpack.c.l.b16 %v2996
        %v4995 = vunpack.c.h.b16 %v2996
        %v4996 = vunpack.c.l.b16 %v2997
        %v4997 = vunpack.c.h.b16 %v2997
        %v4998 = vunpack.c.l.b16 %v2998
        %v4999 = vunpack.c.h.b16 %v2998
        %v5000 = vunpack.c.l.b16 %v2999
        %v5001 = vunpack.c.h.b16 %v2999
        %v5002 = vunpack.c.l.b16 %v3000
        %v5003 = vunpack.c.h.b16 %v3000
        %v5004 = vunpack.c.l.b16 %v3001
        %v5005 = vunpack.c.h.b16 %v3001
        %v5006 = vunpack.c.l.b16 %v3002
        %v5007 = vunpack.c.h.b16 %v3002
        %v5008 = vunpack.c.l.b16 %v3003
        %v5009 = vunpack.c.h.b16 %v3003
        %v5010 = vunpack.c.l.b16 %v3004
        %v5011 = vunpack.c.h.b16 %v3004
        %v5012 = vunpack.c.l.b16 %v3005
        %v5013 = vunpack.c.h.b16 %v3005
        %v5014 = vunpack.c.l.b16 %v3006
        %v5015 = vunpack.c.h.b16 %v3006
        %v5016 = vunpack.c.l.b16 %v3007
        %v5017 = vunpack.c.h.b16 %v3007
        %v5018 = vunpack.c.l.b16 %v3008
        %v5019 = vunpack.c.h.b16 %v3008
        %v5020 = vunpack.c.l.b16 %v3009
        %v5021 = vunpack.c.h.b16 %v3009
        %v5022 = vunpack.c.l.b16 %v3010
        %v5023 = vunpack.c.h.b16 %v3010
        %v5024 = vunpack.c.l.b16 %v3011
        %v5025 = vunpack.c.h.b16 %v3011
        %v5026 = vunpack.c.l.b16 %v3012
        %v5027 = vunpack.c.h.b16 %v3012
        %v5028 = vunpack.c.l.b16 %v3013
        %v5029 = vunpack.c.h.b16 %v3013
        %v5030 = vunpack.c.l.b16 %v3014
        %v5031 = vunpack.c.h.b16 %v3014
        %v5032 = vunpack.c.l.b16 %v3015
        %v5033 = vunpack.c.h.b16 %v3015
        %v5034 = vunpack.c.l.b16 %v3016
        %v5035 = vunpack.c.h.b16 %v3016
        %v5036 = vunpack.c.l.b16 %v3017
        %v5037 = vunpack.c.h.b16 %v3017
        %v5038 = vunpack.c.l.b16 %v3018
        %v5039 = vunpack.c.h.b16 %v3018
        %v5040 = vunpack.c.l.b16 %v3019
        %v5041 = vunpack.c.h.b16 %v3019
        %v5042 = vunpack.c.l.b16 %v3020
        %v5043 = vunpack.c.h.b16 %v3020
        %v5044 = vunpack.c.l.b16 %v3021
        %v5045 = vunpack.c.h.b16 %v3021
        %v5046 = vunpack.c.l.b16 %v3022
        %v5047 = vunpack.c.h.b16 %v3022
        %v5048 = vunpack.c.l.b16 %v3023
        %v5049 = vunpack.c.h.b16 %v3023
        %v5050 = vunpack.c.l.b16 %v3024
        %v5051 = vunpack.c.h.b16 %v3024
        %v5052 = vunpack.c.l.b16 %v3025
        %v5053 = vunpack.c.h.b16 %v3025
        %v5054 = vunpack.c.l.b16 %v3026
        %v5055 = vunpack.c.h.b16 %v3026
        %v5056 = vunpack.c.l.b16 %v3027
        %v5057 = vunpack.c.h.b16 %v3027
        %v5058 = vunpack.c.l.b16 %v3028
        %v5059 = vunpack.c.h.b16 %v3028
        %v5060 = vunpack.c.l.b16 %v3029
        %v5061 = vunpack.c.h.b16 %v3029
        %v5062 = vunpack.c.l.b16 %v3030
        %v5063 = vunpack.c.h.b16 %v3030
        %v5064 = vunpack.c.l.b16 %v3031
        %v5065 = vunpack.c.h.b16 %v3031
        %v5066 = vunpack.c.l.b16 %v3032
        %v5067 = vunpack.c.h.b16 %v3032
        %v5068 = vunpack.c.l.b16 %v3033
        %v5069 = vunpack.c.h.b16 %v3033
        %v5070 = vunpack.c.l.b16 %v3034
        %v5071 = vunpack.c.h.b16 %v3034
        %v5072 = vunpack.c.l.b16 %v3035
        %v5073 = vunpack.c.h.b16 %v3035
        %v5074 = vunpack.c.l.b16 %v3036
        %v5075 = vunpack.c.h.b16 %v3036
        %v5076 = vunpack.c.l.b16 %v3037
        %v5077 = vunpack.c.h.b16 %v3037
        %v5078 = vunpack.c.l.b16 %v3038
        %v5079 = vunpack.c.h.b16 %v3038
        %v5080 = vunpack.c.l.b16 %v3039
        %v5081 = vunpack.c.h.b16 %v3039
        %v5082 = vunpack.c.l.b16 %v3040
        %v5083 = vunpack.c.h.b16 %v3040
        %v5084 = vunpack.c.l.b16 %v3041
        %v5085 = vunpack.c.h.b16 %v3041
        %v5086 = vunpack.c.l.b16 %v3042
        %v5087 = vunpack.c.h.b16 %v3042
        %v5088 = vunpack.c.l.b16 %v3043
        %v5089 = vunpack.c.h.b16 %v3043
        %v5090 = vunpack.c.l.b16 %v3044
        %v5091 = vunpack.c.h.b16 %v3044
        %v5092 = vunpack.c.l.b16 %v3045
        %v5093 = vunpack.c.h.b16 %v3045
        %v5094 = vunpack.c.l.b16 %v3046
        %v5095 = vunpack.c.h.b16 %v3046
        %v5096 = vunpack.c.l.b16 %v3047
        %v5097 = vunpack.c.h.b16 %v3047
        %v5098 = vunpack.c.l.b16 %v3048
        %v5099 = vunpack.c.h.b16 %v3048
        %v5100 = vunpack.c.l.b16 %v3049
        %v5101 = vunpack.c.h.b16 %v3049
        %v5102 = vunpack.c.l.b16 %v3050
        %v5103 = vunpack.c.h.b16 %v3050
        %v5104 = vunpack.c.l.b16 %v3051
        %v5105 = vunpack.c.h.b16 %v3051
        %v5106 = vunpack.c.l.b16 %v3052
        %v5107 = vunpack.c.h.b16 %v3052
        %v5108 = vunpack.c.l.b16 %v3053
        %v5109 = vunpack.c.h.b16 %v3053
        %v5110 = vunpack.c.l.b16 %v3054
        %v5111 = vunpack.c.h.b16 %v3054
        %v5112 = vunpack.c.l.b16 %v3055
        %v5113 = vunpack.c.h.b16 %v3055
        %v5114 = vunpack.c.l.b16 %v3056
        %v5115 = vunpack.c.h.b16 %v3056
        %v5116 = vunpack.c.l.b16 %v3057
        %v5117 = vunpack.c.h.b16 %v3057
        %v5118 = vunpack.c.l.b16 %v3058
        %v5119 = vunpack.c.h.b16 %v3058
        %v5120 = vunpack.c.l.b16 %v3059
        %v5121 = vunpack.c.h.b16 %v3059
        %v5122 = vunpack.c.l.b16 %v3060
        %v5123 = vunpack.c.h.b16 %v3060
        %v5124 = vunpack.c.l.b16 %v3061
        %v5125 = vunpack.c.h.b16 %v3061
        %v5126 = vunpack.c.l.b16 %v3062
        %v5127 = vunpack.c.h.b16 %v3062
        %v5128 = vunpack.c.l.b16 %v3063
        %v5129 = vunpack.c.h.b16 %v3063
        %v5130 = vunpack.c.l.b16 %v3064
        %v5131 = vunpack.c.h.b16 %v3064
        %v5132 = vunpack.c.l.b16 %v3065
        %v5133 = vunpack.c.h.b16 %v3065
        %v5134 = vunpack.c.l.b16 %v3066
        %v5135 = vunpack.c.h.b16 %v3066
        %v5136 = vunpack.c.l.b16 %v3067
        %v5137 = vunpack.c.h.b16 %v3067
        %v5138 = vunpack.c.l.b16 %v3068
        %v5139 = vunpack.c.h.b16 %v3068
        %v5140 = vunpack.c.l.b16 %v3069
        %v5141 = vunpack.c.h.b16 %v3069
        %v5142 = vunpack.c.l.b16 %v3070
        %v5143 = vunpack.c.h.b16 %v3070
        %v5144 = vunpack.c.l.b16 %v3071
        %v5145 = vunpack.c.h.b16 %v3071
        %v5146 = vunpack.c.l.b16 %v3072
        %v5147 = vunpack.c.h.b16 %v3072
        %v5148 = vunpack.c.l.b16 %v3073
        %v5149 = vunpack.c.h.b16 %v3073
        %v5150 = vunpack.c.l.b16 %v3074
        %v5151 = vunpack.c.h.b16 %v3074
        %v5152 = vunpack.c.l.b16 %v3075
        %v5153 = vunpack.c.h.b16 %v3075
        %v5154 = vunpack.c.l.b16 %v3076
        %v5155 = vunpack.c.h.b16 %v3076
        %v5156 = vunpack.c.l.b16 %v3077
        %v5157 = vunpack.c.h.b16 %v3077
        %v5158 = vunpack.c.l.b16 %v3078
        %v5159 = vunpack.c.h.b16 %v3078
        %v5160 = vunpack.c.l.b16 %v3079
        %v5161 = vunpack.c.h.b16 %v3079
        %v5162 = vunpack.c.l.b16 %v3080
        %v5163 = vunpack.c.h.b16 %v3080
        %v5164 = vunpack.c.l.b16 %v3081
        %v5165 = vunpack.c.h.b16 %v3081
        %v5166 = vunpack.c.l.b16 %v3082
        %v5167 = vunpack.c.h.b16 %v3082
        %v5168 = vunpack.c.l.b16 %v3083
        %v5169 = vunpack.c.h.b16 %v3083
        %v5170 = vunpack.c.l.b16 %v3084
        %v5171 = vunpack.c.h.b16 %v3084
        %v5172 = vunpack.c.l.b16 %v3085
        %v5173 = vunpack.c.h.b16 %v3085
        %v5174 = vunpack.c.l.b16 %v3086
        %v5175 = vunpack.c.h.b16 %v3086
        %v5176 = vunpack.c.l.b16 %v3087
        %v5177 = vunpack.c.h.b16 %v3087
        %v5178 = vunpack.c.l.b16 %v3088
        %v5179 = vunpack.c.h.b16 %v3088
        %v5180 = vunpack.c.l.b16 %v3089
        %v5181 = vunpack.c.h.b16 %v3089
        %v5182 = vunpack.c.l.b16 %v3090
        %v5183 = vunpack.c.h.b16 %v3090
        %v5184 = vpack.c.b16 %v4164, %v4160
        %v5185 = vpack.c.b16 %v4165, %v4161
        %v5186 = vpack.c.b16 %v4166, %v4162
        %v5187 = vpack.c.b16 %v4167, %v4163
        %v5188 = vpack.c.b16 %v4172, %v4168
        %v5189 = vpack.c.b16 %v4173, %v4169
        %v5190 = vpack.c.b16 %v4174, %v4170
        %v5191 = vpack.c.b16 %v4175, %v4171
        %v5192 = vpack.c.b16 %v4180, %v4176
        %v5193 = vpack.c.b16 %v4181, %v4177
        %v5194 = vpack.c.b16 %v4182, %v4178
        %v5195 = vpack.c.b16 %v4183, %v4179
        %v5196 = vpack.c.b16 %v4188, %v4184
        %v5197 = vpack.c.b16 %v4189, %v4185
        %v5198 = vpack.c.b16 %v4190, %v4186
        %v5199 = vpack.c.b16 %v4191, %v4187
        %v5200 = vpack.c.b16 %v4196, %v4192
        %v5201 = vpack.c.b16 %v4197, %v4193
        %v5202 = vpack.c.b16 %v4198, %v4194
        %v5203 = vpack.c.b16 %v4199, %v4195
        %v5204 = vpack.c.b16 %v4204, %v4200
        %v5205 = vpack.c.b16 %v4205, %v4201
        %v5206 = vpack.c.b16 %v4206, %v4202
        %v5207 = vpack.c.b16 %v4207, %v4203
        %v5208 = vpack.c.b16 %v4212, %v4208
        %v5209 = vpack.c.b16 %v4213, %v4209
        %v5210 = vpack.c.b16 %v4214, %v4210
        %v5211 = vpack.c.b16 %v4215, %v4211
        %v5212 = vpack.c.b16 %v4220, %v4216
        %v5213 = vpack.c.b16 %v4221, %v4217
        %v5214 = vpack.c.b16 %v4222, %v4218
        %v5215 = vpack.c.b16 %v4223, %v4219
        %v5216 = vpack.c.b16 %v4228, %v4224
        %v5217 = vpack.c.b16 %v4229, %v4225
        %v5218 = vpack.c.b16 %v4230, %v4226
        %v5219 = vpack.c.b16 %v4231, %v4227
        %v5220 = vpack.c.b16 %v4236, %v4232
        %v5221 = vpack.c.b16 %v4237, %v4233
        %v5222 = vpack.c.b16 %v4238, %v4234
        %v5223 = vpack.c.b16 %v4239, %v4235
        %v5224 = vpack.c.b16 %v4244, %v4240
        %v5225 = vpack.c.b16 %v4245, %v4241
        %v5226 = vpack.c.b16 %v4246, %v4242
        %v5227 = vpack.c.b16 %v4247, %v4243
        %v5228 = vpack.c.b16 %v4252, %v4248
        %v5229 = vpack.c.b16 %v4253, %v4249
        %v5230 = vpack.c.b16 %v4254, %v4250
        %v5231 = vpack.c.b16 %v4255, %v4251
        %v5232 = vpack.c.b16 %v4260, %v4256
        %v5233 = vpack.c.b16 %v4261, %v4257
        %v5234 = vpack.c.b16 %v4262, %v4258
        %v5235 = vpack.c.b16 %v4263, %v4259
        %v5236 = vpack.c.b16 %v4268, %v4264
        %v5237 = vpack.c.b16 %v4269, %v4265
        %v5238 = vpack.c.b16 %v4270, %v4266
        %v5239 = vpack.c.b16 %v4271, %v4267
        %v5240 = vpack.c.b16 %v4276, %v4272
        %v5241 = vpack.c.b16 %v4277, %v4273
        %v5242 = vpack.c.b16 %v4278, %v4274
        %v5243 = vpack.c.b16 %v4279, %v4275
        %v5244 = vpack.c.b16 %v4284, %v4280
        %v5245 = vpack.c.b16 %v4285, %v4281
        %v5246 = vpack.c.b16 %v4286, %v4282
        %v5247 = vpack.c.b16 %v4287, %v4283
        %v5248 = vpack.c.b16 %v4292, %v4288
        %v5249 = vpack.c.b16 %v4293, %v4289
        %v5250 = vpack.c.b16 %v4294, %v4290
        %v5251 = vpack.c.b16 %v4295, %v4291
        %v5252 = vpack.c.b16 %v4300, %v4296
        %v5253 = vpack.c.b16 %v4301, %v4297
        %v5254 = vpack.c.b16 %v4302, %v4298
        %v5255 = vpack.c.b16 %v4303, %v4299
        %v5256 = vpack.c.b16 %v4308, %v4304
        %v5257 = vpack.c.b16 %v4309, %v4305
        %v5258 = vpack.c.b16 %v4310, %v4306
        %v5259 = vpack.c.b16 %v4311, %v4307
        %v5260 = vpack.c.b16 %v4316, %v4312
        %v5261 = vpack.c.b16 %v4317, %v4313
        %v5262 = vpack.c.b16 %v4318, %v4314
        %v5263 = vpack.c.b16 %v4319, %v4315
        %v5264 = vpack.c.b16 %v4324, %v4320
        %v5265 = vpack.c.b16 %v4325, %v4321
        %v5266 = vpack.c.b16 %v4326, %v4322
        %v5267 = vpack.c.b16 %v4327, %v4323
        %v5268 = vpack.c.b16 %v4332, %v4328
        %v5269 = vpack.c.b16 %v4333, %v4329
        %v5270 = vpack.c.b16 %v4334, %v4330
        %v5271 = vpack.c.b16 %v4335, %v4331
        %v5272 = vpack.c.b16 %v4340, %v4336
        %v5273 = vpack.c.b16 %v4341, %v4337
        %v5274 = vpack.c.b16 %v4342, %v4338
        %v5275 = vpack.c.b16 %v4343, %v4339
        %v5276 = vpack.c.b16 %v4348, %v4344
        %v5277 = vpack.c.b16 %v4349, %v4345
        %v5278 = vpack.c.b16 %v4350, %v4346
        %v5279 = vpack.c.b16 %v4351, %v4347
        %v5280 = vpack.c.b16 %v4356, %v4352
        %v5281 = vpack.c.b16 %v4357, %v4353
        %v5282 = vpack.c.b16 %v4358, %v4354
        %v5283 = vpack.c.b16 %v4359, %v4355
        %v5284 = vpack.c.b16 %v4364, %v4360
        %v5285 = vpack.c.b16 %v4365, %v4361
        %v5286 = vpack.c.b16 %v4366, %v4362
        %v5287 = vpack.c.b16 %v4367, %v4363
        %v5288 = vpack.c.b16 %v4372, %v4368
        %v5289 = vpack.c.b16 %v4373, %v4369
        %v5290 = vpack.c.b16 %v4374, %v4370
        %v5291 = vpack.c.b16 %v4375, %v4371
        %v5292 = vpack.c.b16 %v4380, %v4376
        %v5293 = vpack.c.b16 %v4381, %v4377
        %v5294 = vpack.c.b16 %v4382, %v4378
        %v5295 = vpack.c.b16 %v4383, %v4379
        %v5296 = vpack.c.b16 %v4388, %v4384
        %v5297 = vpack.c.b16 %v4389, %v4385
        %v5298 = vpack.c.b16 %v4390, %v4386
        %v5299 = vpack.c.b16 %v4391, %v4387
        %v5300 = vpack.c.b16 %v4396, %v4392
        %v5301 = vpack.c.b16 %v4397, %v4393
        %v5302 = vpack.c.b16 %v4398, %v4394
        %v5303 = vpack.c.b16 %v4399, %v4395
        %v5304 = vpack.c.b16 %v4404, %v4400
        %v5305 = vpack.c.b16 %v4405, %v4401
        %v5306 = vpack.c.b16 %v4406, %v4402
        %v5307 = vpack.c.b16 %v4407, %v4403
        %v5308 = vpack.c.b16 %v4412, %v4408
        %v5309 = vpack.c.b16 %v4413, %v4409
        %v5310 = vpack.c.b16 %v4414, %v4410
        %v5311 = vpack.c.b16 %v4415, %v4411
        %v5312 = vpack.c.b16 %v4420, %v4416
        %v5313 = vpack.c.b16 %v4421, %v4417
        %v5314 = vpack.c.b16 %v4422, %v4418
        %v5315 = vpack.c.b16 %v4423, %v4419
        %v5316 = vpack.c.b16 %v4428, %v4424
        %v5317 = vpack.c.b16 %v4429, %v4425
        %v5318 = vpack.c.b16 %v4430, %v4426
        %v5319 = vpack.c.b16 %v4431, %v4427
        %v5320 = vpack.c.b16 %v4436, %v4432
        %v5321 = vpack.c.b16 %v4437, %v4433
        %v5322 = vpack.c.b16 %v4438, %v4434
        %v5323 = vpack.c.b16 %v4439, %v4435
        %v5324 = vpack.c.b16 %v4444, %v4440
        %v5325 = vpack.c.b16 %v4445, %v4441
        %v5326 = vpack.c.b16 %v4446, %v4442
        %v5327 = vpack.c.b16 %v4447, %v4443
        %v5328 = vpack.c.b16 %v4452, %v4448
        %v5329 = vpack.c.b16 %v4453, %v4449
        %v5330 = vpack.c.b16 %v4454, %v4450
        %v5331 = vpack.c.b16 %v4455, %v4451
        %v5332 = vpack.c.b16 %v4460, %v4456
        %v5333 = vpack.c.b16 %v4461, %v4457
        %v5334 = vpack.c.b16 %v4462, %v4458
        %v5335 = vpack.c.b16 %v4463, %v4459
        %v5336 = vpack.c.b16 %v4468, %v4464
        %v5337 = vpack.c.b16 %v4469, %v4465
        %v5338 = vpack.c.b16 %v4470, %v4466
        %v5339 = vpack.c.b16 %v4471, %v4467
        %v5340 = vpack.c.b16 %v4476, %v4472
        %v5341 = vpack.c.b16 %v4477, %v4473
        %v5342 = vpack.c.b16 %v4478, %v4474
        %v5343 = vpack.c.b16 %v4479, %v4475
        %v5344 = vpack.c.b16 %v4484, %v4480
        %v5345 = vpack.c.b16 %v4485, %v4481
        %v5346 = vpack.c.b16 %v4486, %v4482
        %v5347 = vpack.c.b16 %v4487, %v4483
        %v5348 = vpack.c.b16 %v4492, %v4488
        %v5349 = vpack.c.b16 %v4493, %v4489
        %v5350 = vpack.c.b16 %v4494, %v4490
        %v5351 = vpack.c.b16 %v4495, %v4491
        %v5352 = vpack.c.b16 %v4500, %v4496
        %v5353 = vpack.c.b16 %v4501, %v4497
        %v5354 = vpack.c.b16 %v4502, %v4498
        %v5355 = vpack.c.b16 %v4503, %v4499
        %v5356 = vpack.c.b16 %v4508, %v4504
        %v5357 = vpack.c.b16 %v4509, %v4505
        %v5358 = vpack.c.b16 %v4510, %v4506
        %v5359 = vpack.c.b16 %v4511, %v4507
        %v5360 = vpack.c.b16 %v4516, %v4512
        %v5361 = vpack.c.b16 %v4517, %v4513
        %v5362 = vpack.c.b16 %v4518, %v4514
        %v5363 = vpack.c.b16 %v4519, %v4515
        %v5364 = vpack.c.b16 %v4524, %v4520
        %v5365 = vpack.c.b16 %v4525, %v4521
        %v5366 = vpack.c.b16 %v4526, %v4522
        %v5367 = vpack.c.b16 %v4527, %v4523
        %v5368 = vpack.c.b16 %v4532, %v4528
        %v5369 = vpack.c.b16 %v4533, %v4529
        %v5370 = vpack.c.b16 %v4534, %v4530
        %v5371 = vpack.c.b16 %v4535, %v4531
        %v5372 = vpack.c.b16 %v4540, %v4536
        %v5373 = vpack.c.b16 %v4541, %v4537
        %v5374 = vpack.c.b16 %v4542, %v4538
        %v5375 = vpack.c.b16 %v4543, %v4539
        %v5376 = vpack.c.b16 %v4548, %v4544
        %v5377 = vpack.c.b16 %v4549, %v4545
        %v5378 = vpack.c.b16 %v4550, %v4546
        %v5379 = vpack.c.b16 %v4551, %v4547
        %v5380 = vpack.c.b16 %v4556, %v4552
        %v5381 = vpack.c.b16 %v4557, %v4553
        %v5382 = vpack.c.b16 %v4558, %v4554
        %v5383 = vpack.c.b16 %v4559, %v4555
        %v5384 = vpack.c.b16 %v4564, %v4560
        %v5385 = vpack.c.b16 %v4565, %v4561
        %v5386 = vpack.c.b16 %v4566, %v4562
        %v5387 = vpack.c.b16 %v4567, %v4563
        %v5388 = vpack.c.b16 %v4572, %v4568
        %v5389 = vpack.c.b16 %v4573, %v4569
        %v5390 = vpack.c.b16 %v4574, %v4570
        %v5391 = vpack.c.b16 %v4575, %v4571
        %v5392 = vpack.c.b16 %v4580, %v4576
        %v5393 = vpack.c.b16 %v4581, %v4577
        %v5394 = vpack.c.b16 %v4582, %v4578
        %v5395 = vpack.c.b16 %v4583, %v4579
        %v5396 = vpack.c.b16 %v4588, %v4584
        %v5397 = vpack.c.b16 %v4589, %v4585
        %v5398 = vpack.c.b16 %v4590, %v4586
        %v5399 = vpack.c.b16 %v4591, %v4587
        %v5400 = vpack.c.b16 %v4596, %v4592
        %v5401 = vpack.c.b16 %v4597, %v4593
        %v5402 = vpack.c.b16 %v4598, %v4594
        %v5403 = vpack.c.b16 %v4599, %v4595
        %v5404 = vpack.c.b16 %v4604, %v4600
        %v5405 = vpack.c.b16 %v4605, %v4601
        %v5406 = vpack.c.b16 %v4606, %v4602
        %v5407 = vpack.c.b16 %v4607, %v4603
        %v5408 = vpack.c.b16 %v4612, %v4608
        %v5409 = vpack.c.b16 %v4613, %v4609
        %v5410 = vpack.c.b16 %v4614, %v4610
        %v5411 = vpack.c.b16 %v4615, %v4611
        %v5412 = vpack.c.b16 %v4620, %v4616
        %v5413 = vpack.c.b16 %v4621, %v4617
        %v5414 = vpack.c.b16 %v4622, %v4618
        %v5415 = vpack.c.b16 %v4623, %v4619
        %v5416 = vpack.c.b16 %v4628, %v4624
        %v5417 = vpack.c.b16 %v4629, %v4625
        %v5418 = vpack.c.b16 %v4630, %v4626
        %v5419 = vpack.c.b16 %v4631, %v4627
        %v5420 = vpack.c.b16 %v4636, %v4632
        %v5421 = vpack.c.b16 %v4637, %v4633
        %v5422 = vpack.c.b16 %v4638, %v4634
        %v5423 = vpack.c.b16 %v4639, %v4635
        %v5424 = vpack.c.b16 %v4644, %v4640
        %v5425 = vpack.c.b16 %v4645, %v4641
        %v5426 = vpack.c.b16 %v4646, %v4642
        %v5427 = vpack.c.b16 %v4647, %v4643
        %v5428 = vpack.c.b16 %v4652, %v4648
        %v5429 = vpack.c.b16 %v4653, %v4649
        %v5430 = vpack.c.b16 %v4654, %v4650
        %v5431 = vpack.c.b16 %v4655, %v4651
        %v5432 = vpack.c.b16 %v4660, %v4656
        %v5433 = vpack.c.b16 %v4661, %v4657
        %v5434 = vpack.c.b16 %v4662, %v4658
        %v5435 = vpack.c.b16 %v4663, %v4659
        %v5436 = vpack.c.b16 %v4668, %v4664
        %v5437 = vpack.c.b16 %v4669, %v4665
        %v5438 = vpack.c.b16 %v4670, %v4666
        %v5439 = vpack.c.b16 %v4671, %v4667
        %v5440 = vpack.c.b16 %v4676, %v4672
        %v5441 = vpack.c.b16 %v4677, %v4673
        %v5442 = vpack.c.b16 %v4678, %v4674
        %v5443 = vpack.c.b16 %v4679, %v4675
        %v5444 = vpack.c.b16 %v4684, %v4680
        %v5445 = vpack.c.b16 %v4685, %v4681
        %v5446 = vpack.c.b16 %v4686, %v4682
        %v5447 = vpack.c.b16 %v4687, %v4683
        %v5448 = vpack.c.b16 %v4692, %v4688
        %v5449 = vpack.c.b16 %v4693, %v4689
        %v5450 = vpack.c.b16 %v4694, %v4690
        %v5451 = vpack.c.b16 %v4695, %v4691
        %v5452 = vpack.c.b16 %v4700, %v4696
        %v5453 = vpack.c.b16 %v4701, %v4697
        %v5454 = vpack.c.b16 %v4702, %v4698
        %v5455 = vpack.c.b16 %v4703, %v4699
        %v5456 = vpack.c.b16 %v4708, %v4704
        %v5457 = vpack.c.b16 %v4709, %v4705
        %v5458 = vpack.c.b16 %v4710, %v4706
        %v5459 = vpack.c.b16 %v4711, %v4707
        %v5460 = vpack.c.b16 %v4716, %v4712
        %v5461 = vpack.c.b16 %v4717, %v4713
        %v5462 = vpack.c.b16 %v4718, %v4714
        %v5463 = vpack.c.b16 %v4719, %v4715
        %v5464 = vpack.c.b16 %v4724, %v4720
        %v5465 = vpack.c.b16 %v4725, %v4721
        %v5466 = vpack.c.b16 %v4726, %v4722
        %v5467 = vpack.c.b16 %v4727, %v4723
        %v5468 = vpack.c.b16 %v4732, %v4728
        %v5469 = vpack.c.b16 %v4733, %v4729
        %v5470 = vpack.c.b16 %v4734, %v4730
        %v5471 = vpack.c.b16 %v4735, %v4731
        %v5472 = vpack.c.b16 %v4740, %v4736
        %v5473 = vpack.c.b16 %v4741, %v4737
        %v5474 = vpack.c.b16 %v4742, %v4738
        %v5475 = vpack.c.b16 %v4743, %v4739
        %v5476 = vpack.c.b16 %v4748, %v4744
        %v5477 = vpack.c.b16 %v4749, %v4745
        %v5478 = vpack.c.b16 %v4750, %v4746
        %v5479 = vpack.c.b16 %v4751, %v4747
        %v5480 = vpack.c.b16 %v4756, %v4752
        %v5481 = vpack.c.b16 %v4757, %v4753
        %v5482 = vpack.c.b16 %v4758, %v4754
        %v5483 = vpack.c.b16 %v4759, %v4755
        %v5484 = vpack.c.b16 %v4764, %v4760
        %v5485 = vpack.c.b16 %v4765, %v4761
        %v5486 = vpack.c.b16 %v4766, %v4762
        %v5487 = vpack.c.b16 %v4767, %v4763
        %v5488 = vpack.c.b16 %v4772, %v4768
        %v5489 = vpack.c.b16 %v4773, %v4769
        %v5490 = vpack.c.b16 %v4774, %v4770
        %v5491 = vpack.c.b16 %v4775, %v4771
        %v5492 = vpack.c.b16 %v4780, %v4776
        %v5493 = vpack.c.b16 %v4781, %v4777
        %v5494 = vpack.c.b16 %v4782, %v4778
        %v5495 = vpack.c.b16 %v4783, %v4779
        %v5496 = vpack.c.b16 %v4788, %v4784
        %v5497 = vpack.c.b16 %v4789, %v4785
        %v5498 = vpack.c.b16 %v4790, %v4786
        %v5499 = vpack.c.b16 %v4791, %v4787
        %v5500 = vpack.c.b16 %v4796, %v4792
        %v5501 = vpack.c.b16 %v4797, %v4793
        %v5502 = vpack.c.b16 %v4798, %v4794
        %v5503 = vpack.c.b16 %v4799, %v4795
        %v5504 = vpack.c.b16 %v4804, %v4800
        %v5505 = vpack.c.b16 %v4805, %v4801
        %v5506 = vpack.c.b16 %v4806, %v4802
        %v5507 = vpack.c.b16 %v4807, %v4803
        %v5508 = vpack.c.b16 %v4812, %v4808
        %v5509 = vpack.c.b16 %v4813, %v4809
        %v5510 = vpack.c.b16 %v4814, %v4810
        %v5511 = vpack.c.b16 %v4815, %v4811
        %v5512 = vpack.c.b16 %v4820, %v4816
        %v5513 = vpack.c.b16 %v4821, %v4817
        %v5514 = vpack.c.b16 %v4822, %v4818
        %v5515 = vpack.c.b16 %v4823, %v4819
        %v5516 = vpack.c.b16 %v4828, %v4824
        %v5517 = vpack.c.b16 %v4829, %v4825
        %v5518 = vpack.c.b16 %v4830, %v4826
        %v5519 = vpack.c.b16 %v4831, %v4827
        %v5520 = vpack.c.b16 %v4836, %v4832
        %v5521 = vpack.c.b16 %v4837, %v4833
        %v5522 = vpack.c.b16 %v4838, %v4834
        %v5523 = vpack.c.b16 %v4839, %v4835
        %v5524 = vpack.c.b16 %v4844, %v4840
        %v5525 = vpack.c.b16 %v4845, %v4841
        %v5526 = vpack.c.b16 %v4846, %v4842
        %v5527 = vpack.c.b16 %v4847, %v4843
        %v5528 = vpack.c.b16 %v4852, %v4848
        %v5529 = vpack.c.b16 %v4853, %v4849
        %v5530 = vpack.c.b16 %v4854, %v4850
        %v5531 = vpack.c.b16 %v4855, %v4851
        %v5532 = vpack.c.b16 %v4860, %v4856
        %v5533 = vpack.c.b16 %v4861, %v4857
        %v5534 = vpack.c.b16 %v4862, %v4858
        %v5535 = vpack.c.b16 %v4863, %v4859
        %v5536 = vpack.c.b16 %v4868, %v4864
        %v5537 = vpack.c.b16 %v4869, %v4865
        %v5538 = vpack.c.b16 %v4870, %v4866
        %v5539 = vpack.c.b16 %v4871, %v4867
        %v5540 = vpack.c.b16 %v4876, %v4872
        %v5541 = vpack.c.b16 %v4877, %v4873
        %v5542 = vpack.c.b16 %v4878, %v4874
        %v5543 = vpack.c.b16 %v4879, %v4875
        %v5544 = vpack.c.b16 %v4884, %v4880
        %v5545 = vpack.c.b16 %v4885, %v4881
        %v5546 = vpack.c.b16 %v4886, %v4882
        %v5547 = vpack.c.b16 %v4887, %v4883
        %v5548 = vpack.c.b16 %v4892, %v4888
        %v5549 = vpack.c.b16 %v4893, %v4889
        %v5550 = vpack.c.b16 %v4894, %v4890
        %v5551 = vpack.c.b16 %v4895, %v4891
        %v5552 = vpack.c.b16 %v4900, %v4896
        %v5553 = vpack.c.b16 %v4901, %v4897
        %v5554 = vpack.c.b16 %v4902, %v4898
        %v5555 = vpack.c.b16 %v4903, %v4899
        %v5556 = vpack.c.b16 %v4908, %v4904
        %v5557 = vpack.c.b16 %v4909, %v4905
        %v5558 = vpack.c.b16 %v4910, %v4906
        %v5559 = vpack.c.b16 %v4911, %v4907
        %v5560 = vpack.c.b16 %v4916, %v4912
        %v5561 = vpack.c.b16 %v4917, %v4913
        %v5562 = vpack.c.b16 %v4918, %v4914
        %v5563 = vpack.c.b16 %v4919, %v4915
        %v5564 = vpack.c.b16 %v4924, %v4920
        %v5565 = vpack.c.b16 %v4925, %v4921
        %v5566 = vpack.c.b16 %v4926, %v4922
        %v5567 = vpack.c.b16 %v4927, %v4923
        %v5568 = vpack.c.b16 %v4932, %v4928
        %v5569 = vpack.c.b16 %v4933, %v4929
        %v5570 = vpack.c.b16 %v4934, %v4930
        %v5571 = vpack.c.b16 %v4935, %v4931
        %v5572 = vpack.c.b16 %v4940, %v4936
        %v5573 = vpack.c.b16 %v4941, %v4937
        %v5574 = vpack.c.b16 %v4942, %v4938
        %v5575 = vpack.c.b16 %v4943, %v4939
        %v5576 = vpack.c.b16 %v4948, %v4944
        %v5577 = vpack.c.b16 %v4949, %v4945
        %v5578 = vpack.c.b16 %v4950, %v4946
        %v5579 = vpack.c.b16 %v4951, %v4947
        %v5580 = vpack.c.b16 %v4956, %v4952
        %v5581 = vpack.c.b16 %v4957, %v4953
        %v5582 = vpack.c.b16 %v4958, %v4954
        %v5583 = vpack.c.b16 %v4959, %v4955
        %v5584 = vpack.c.b16 %v4964, %v4960
        %v5585 = vpack.c.b16 %v4965, %v4961
        %v5586 = vpack.c.b16 %v4966, %v4962
        %v5587 = vpack.c.b16 %v4967, %v4963
        %v5588 = vpack.c.b16 %v4972, %v4968
        %v5589 = vpack.c.b16 %v4973, %v4969
        %v5590 = vpack.c.b16 %v4974, %v4970
        %v5591 = vpack.c.b16 %v4975, %v4971
        %v5592 = vpack.c.b16 %v4980, %v4976
        %v5593 = vpack.c.b16 %v4981, %v4977
        %v5594 = vpack.c.b16 %v4982, %v4978
        %v5595 = vpack.c.b16 %v4983, %v4979
        %v5596 = vpack.c.b16 %v4988, %v4984
        %v5597 = vpack.c.b16 %v4989, %v4985
        %v5598 = vpack.c.b16 %v4990, %v4986
        %v5599 = vpack.c.b16 %v4991, %v4987
        %v5600 = vpack.c.b16 %v4996, %v4992
        %v5601 = vpack.c.b16 %v4997, %v4993
        %v5602 = vpack.c.b16 %v4998, %v4994
        %v5603 = vpack.c.b16 %v4999, %v4995
        %v5604 = vpack.c.b16 %v5004, %v5000
        %v5605 = vpack.c.b16 %v5005, %v5001
        %v5606 = vpack.c.b16 %v5006, %v5002
        %v5607 = vpack.c.b16 %v5007, %v5003
        %v5608 = vpack.c.b16 %v5012, %v5008
        %v5609 = vpack.c.b16 %v5013, %v5009
        %v5610 = vpack.c.b16 %v5014, %v5010
        %v5611 = vpack.c.b16 %v5015, %v5011
        %v5612 = vpack.c.b16 %v5020, %v5016
        %v5613 = vpack.c.b16 %v5021, %v5017
        %v5614 = vpack.c.b16 %v5022, %v5018
        %v5615 = vpack.c.b16 %v5023, %v5019
        %v5616 = vpack.c.b16 %v5028, %v5024
        %v5617 = vpack.c.b16 %v5029, %v5025
        %v5618 = vpack.c.b16 %v5030, %v5026
        %v5619 = vpack.c.b16 %v5031, %v5027
        %v5620 = vpack.c.b16 %v5036, %v5032
        %v5621 = vpack.c.b16 %v5037, %v5033
        %v5622 = vpack.c.b16 %v5038, %v5034
        %v5623 = vpack.c.b16 %v5039, %v5035
        %v5624 = vpack.c.b16 %v5044, %v5040
        %v5625 = vpack.c.b16 %v5045, %v5041
        %v5626 = vpack.c.b16 %v5046, %v5042
        %v5627 = vpack.c.b16 %v5047, %v5043
        %v5628 = vpack.c.b16 %v5052, %v5048
        %v5629 = vpack.c.b16 %v5053, %v5049
        %v5630 = vpack.c.b16 %v5054, %v5050
        %v5631 = vpack.c.b16 %v5055, %v5051
        %v5632 = vpack.c.b16 %v5060, %v5056
        %v5633 = vpack.c.b16 %v5061, %v5057
        %v5634 = vpack.c.b16 %v5062, %v5058
        %v5635 = vpack.c.b16 %v5063, %v5059
        %v5636 = vpack.c.b16 %v5068, %v5064
        %v5637 = vpack.c.b16 %v5069, %v5065
        %v5638 = vpack.c.b16 %v5070, %v5066
        %v5639 = vpack.c.b16 %v5071, %v5067
        %v5640 = vpack.c.b16 %v5076, %v5072
        %v5641 = vpack.c.b16 %v5077, %v5073
        %v5642 = vpack.c.b16 %v5078, %v5074
        %v5643 = vpack.c.b16 %v5079, %v5075
        %v5644 = vpack.c.b16 %v5084, %v5080
        %v5645 = vpack.c.b16 %v5085, %v5081
        %v5646 = vpack.c.b16 %v5086, %v5082
        %v5647 = vpack.c.b16 %v5087, %v5083
        %v5648 = vpack.c.b16 %v5092, %v5088
        %v5649 = vpack.c.b16 %v5093, %v5089
        %v5650 = vpack.c.b16 %v5094, %v5090
        %v5651 = vpack.c.b16 %v5095, %v5091
        %v5652 = vpack.c.b16 %v5100, %v5096
        %v5653 = vpack.c.b16 %v5101, %v5097
        %v5654 = vpack.c.b16 %v5102, %v5098
        %v5655 = vpack.c.b16 %v5103, %v5099
        %v5656 = vpack.c.b16 %v5108, %v5104
        %v5657 = vpack.c.b16 %v5109, %v5105
        %v5658 = vpack.c.b16 %v5110, %v5106
        %v5659 = vpack.c.b16 %v5111, %v5107
        %v5660 = vpack.c.b16 %v5116, %v5112
        %v5661 = vpack.c.b16 %v5117, %v5113
        %v5662 = vpack.c.b16 %v5118, %v5114
        %v5663 = vpack.c.b16 %v5119, %v5115
        %v5664 = vpack.c.b16 %v5124, %v5120
        %v5665 = vpack.c.b16 %v5125, %v5121
        %v5666 = vpack.c.b16 %v5126, %v5122
        %v5667 = vpack.c.b16 %v5127, %v5123
        %v5668 = vpack.c.b16 %v5132, %v5128
        %v5669 = vpack.c.b16 %v5133, %v5129
        %v5670 = vpack.c.b16 %v5134, %v5130
        %v5671 = vpack.c.b16 %v5135, %v5131
        %v5672 = vpack.c.b16 %v5140, %v5136
        %v5673 = vpack.c.b16 %v5141, %v5137
        %v5674 = vpack.c.b16 %v5142, %v5138
        %v5675 = vpack.c.b16 %v5143, %v5139
        %v5676 = vpack.c.b16 %v5148, %v5144
        %v5677 = vpack.c.b16 %v5149, %v5145
        %v5678 = vpack.c.b16 %v5150, %v5146
        %v5679 = vpack.c.b16 %v5151, %v5147
        %v5680 = vpack.c.b16 %v5156, %v5152
        %v5681 = vpack.c.b16 %v5157, %v5153
        %v5682 = vpack.c.b16 %v5158, %v5154
        %v5683 = vpack.c.b16 %v5159, %v5155
        %v5684 = vpack.c.b16 %v5164, %v5160
        %v5685 = vpack.c.b16 %v5165, %v5161
        %v5686 = vpack.c.b16 %v5166, %v5162
        %v5687 = vpack.c.b16 %v5167, %v5163
        %v5688 = vpack.c.b16 %v5172, %v5168
        %v5689 = vpack.c.b16 %v5173, %v5169
        %v5690 = vpack.c.b16 %v5174, %v5170
        %v5691 = vpack.c.b16 %v5175, %v5171
        %v5692 = vpack.c.b16 %v5180, %v5176
        %v5693 = vpack.c.b16 %v5181, %v5177
        %v5694 = vpack.c.b16 %v5182, %v5178
        %v5695 = vpack.c.b16 %v5183, %v5179
        %6208 = vmatprep.subr.bf16.mxu0 %v5213
        %6209 = vmatpush1.bf16.msra.mxu0 %v5212
        %6210 = vmatprep.subr.bf16.mxu0 %v5209
        %6211 = vmatpush1.bf16.msra.mxu0 %v5208
        %6212 = vmatprep.subr.bf16.mxu0 %v5205
        %6213 = vmatpush1.bf16.msra.mxu0 %v5204
        %6214 = vmatprep.subr.bf16.mxu0 %v5201
        %6215 = vmatpush1.bf16.msra.mxu0 %v5200
        %6216 = vmatprep.subr.bf16.mxu0 %v5197
        %6217 = vmatpush1.bf16.msra.mxu0 %v5196
        %6218 = vmatprep.subr.bf16.mxu0 %v5193
        %6219 = vmatpush1.bf16.msra.mxu0 %v5192
        %6220 = vmatprep.subr.bf16.mxu0 %v5189
        %6221 = vmatpush1.bf16.msra.mxu0 %v5188
        %6222 = vmatprep.subr.bf16.mxu0 %v5185
        %6223 = vmatpush1.bf16.msra.mxu0 %v5184
        %6224 = vmatprep.subr.bf16.mxu0 %v5245
        %6225 = vmatpush2.bf16.msra.mxu0 %v5244
        %6226 = vmatprep.subr.bf16.mxu0 %v5241
        %6227 = vmatpush2.bf16.msra.mxu0 %v5240
        %6228 = vmatprep.subr.bf16.mxu0 %v5237
        %6229 = vmatpush2.bf16.msra.mxu0 %v5236
        %6230 = vmatprep.subr.bf16.mxu0 %v5233
        %6231 = vmatpush2.bf16.msra.mxu0 %v5232
        %6232 = vmatprep.subr.bf16.mxu0 %v5229
        %6233 = vmatpush2.bf16.msra.mxu0 %v5228
        %6234 = vmatprep.subr.bf16.mxu0 %v5225
        %6235 = vmatpush2.bf16.msra.mxu0 %v5224
        %6236 = vmatprep.subr.bf16.mxu0 %v5221
        %6237 = vmatpush2.bf16.msra.mxu0 %v5220
        %6238 = vmatprep.subr.bf16.mxu0 %v5217
        %6239 = vmatpush2.bf16.msra.mxu0 %v5216
        %6240 = vmatprep.mubr.bf16.mxu0 %v3617
        %6241 = vmatmul.mubr.bf16.gmra.mxu0 %v3616
        %v6242 = vpop.f32.mrf.mxu0
        %v6243 = vadd.f32 %v3224, %v6242
        %v6244 = vpop.f32.mrf.mxu0
        %v6245 = vadd.f32 %v3228, %v6244
        %v6246 = vpop.f32.mrf.mxu0
        %v6247 = vpop.f32.mrf.mxu0
        %6248 = vdwg.mxu0
        %6249 = vmatprep.subr.bf16.mxu0 %v5277
        %6250 = vmatpush1.bf16.msra.mxu0 %v5276
        %6251 = vmatprep.subr.bf16.mxu0 %v5273
        %6252 = vmatpush1.bf16.msra.mxu0 %v5272
        %6253 = vmatprep.subr.bf16.mxu0 %v5269
        %6254 = vmatpush1.bf16.msra.mxu0 %v5268
        %6255 = vmatprep.subr.bf16.mxu0 %v5265
        %6256 = vmatpush1.bf16.msra.mxu0 %v5264
        %6257 = vmatprep.subr.bf16.mxu0 %v5261
        %6258 = vmatpush1.bf16.msra.mxu0 %v5260
        %6259 = vmatprep.subr.bf16.mxu0 %v5257
        %6260 = vmatpush1.bf16.msra.mxu0 %v5256
        %6261 = vmatprep.subr.bf16.mxu0 %v5253
        %6262 = vmatpush1.bf16.msra.mxu0 %v5252
        %6263 = vmatprep.subr.bf16.mxu0 %v5249
        %6264 = vmatpush1.bf16.msra.mxu0 %v5248
        %6265 = vmatprep.subr.bf16.mxu0 %v5309
        %6266 = vmatpush2.bf16.msra.mxu0 %v5308
        %6267 = vmatprep.subr.bf16.mxu0 %v5305
        %6268 = vmatpush2.bf16.msra.mxu0 %v5304
        %6269 = vmatprep.subr.bf16.mxu0 %v5301
        %6270 = vmatpush2.bf16.msra.mxu0 %v5300
        %6271 = vmatprep.subr.bf16.mxu0 %v5297
        %6272 = vmatpush2.bf16.msra.mxu0 %v5296
        %6273 = vmatprep.subr.bf16.mxu0 %v5293
        %6274 = vmatpush2.bf16.msra.mxu0 %v5292
        %6275 = vmatprep.subr.bf16.mxu0 %v5289
        %6276 = vmatpush2.bf16.msra.mxu0 %v5288
        %6277 = vmatprep.subr.bf16.mxu0 %v5285
        %6278 = vmatpush2.bf16.msra.mxu0 %v5284
        %6279 = vmatprep.subr.bf16.mxu0 %v5281
        %6280 = vmatpush2.bf16.msra.mxu0 %v5280
        %6281 = vmatprep.mubr.bf16.mxu0 %v3619
        %6282 = vmatmul.mubr.bf16.gmra.mxu0 %v3618
        %v6283 = vpop.f32.mrf.mxu0
        %v6284 = vadd.f32 %v6243, %v6283
        %v6285 = vpop.f32.mrf.mxu0
        %v6286 = vadd.f32 %v6245, %v6285
        %v6287 = vpop.f32.mrf.mxu0
        %v6288 = vpop.f32.mrf.mxu0
        %6289 = vdwg.mxu0
        %6290 = vmatprep.subr.bf16.mxu0 %v5341
        %6291 = vmatpush1.bf16.msra.mxu0 %v5340
        %6292 = vmatprep.subr.bf16.mxu0 %v5337
        %6293 = vmatpush1.bf16.msra.mxu0 %v5336
        %6294 = vmatprep.subr.bf16.mxu0 %v5333
        %6295 = vmatpush1.bf16.msra.mxu0 %v5332
        %6296 = vmatprep.subr.bf16.mxu0 %v5329
        %6297 = vmatpush1.bf16.msra.mxu0 %v5328
        %6298 = vmatprep.subr.bf16.mxu0 %v5325
        %6299 = vmatpush1.bf16.msra.mxu0 %v5324
        %6300 = vmatprep.subr.bf16.mxu0 %v5321
        %6301 = vmatpush1.bf16.msra.mxu0 %v5320
        %6302 = vmatprep.subr.bf16.mxu0 %v5317
        %6303 = vmatpush1.bf16.msra.mxu0 %v5316
        %6304 = vmatprep.subr.bf16.mxu0 %v5313
        %6305 = vmatpush1.bf16.msra.mxu0 %v5312
        %6306 = vmatprep.subr.bf16.mxu0 %v5373
        %6307 = vmatpush2.bf16.msra.mxu0 %v5372
        %6308 = vmatprep.subr.bf16.mxu0 %v5369
        %6309 = vmatpush2.bf16.msra.mxu0 %v5368
        %6310 = vmatprep.subr.bf16.mxu0 %v5365
        %6311 = vmatpush2.bf16.msra.mxu0 %v5364
        %6312 = vmatprep.subr.bf16.mxu0 %v5361
        %6313 = vmatpush2.bf16.msra.mxu0 %v5360
        %6314 = vmatprep.subr.bf16.mxu0 %v5357
        %6315 = vmatpush2.bf16.msra.mxu0 %v5356
        %6316 = vmatprep.subr.bf16.mxu0 %v5353
        %6317 = vmatpush2.bf16.msra.mxu0 %v5352
        %6318 = vmatprep.subr.bf16.mxu0 %v5349
        %6319 = vmatpush2.bf16.msra.mxu0 %v5348
        %6320 = vmatprep.subr.bf16.mxu0 %v5345
        %6321 = vmatpush2.bf16.msra.mxu0 %v5344
        %6322 = vmatprep.mubr.bf16.mxu0 %v3621
        %6323 = vmatmul.mubr.bf16.gmra.mxu0 %v3620
        %v6324 = vpop.f32.mrf.mxu0
        %v6325 = vadd.f32 %v6284, %v6324
        %v6326 = vpop.f32.mrf.mxu0
        %v6327 = vadd.f32 %v6286, %v6326
        %v6328 = vpop.f32.mrf.mxu0
        %v6329 = vpop.f32.mrf.mxu0
        %6330 = vdwg.mxu0
        %6331 = vmatprep.subr.bf16.mxu0 %v5405
        %6332 = vmatpush1.bf16.msra.mxu0 %v5404
        %6333 = vmatprep.subr.bf16.mxu0 %v5401
        %6334 = vmatpush1.bf16.msra.mxu0 %v5400
        %6335 = vmatprep.subr.bf16.mxu0 %v5397
        %6336 = vmatpush1.bf16.msra.mxu0 %v5396
        %6337 = vmatprep.subr.bf16.mxu0 %v5393
        %6338 = vmatpush1.bf16.msra.mxu0 %v5392
        %6339 = vmatprep.subr.bf16.mxu0 %v5389
        %6340 = vmatpush1.bf16.msra.mxu0 %v5388
        %6341 = vmatprep.subr.bf16.mxu0 %v5385
        %6342 = vmatpush1.bf16.msra.mxu0 %v5384
        %6343 = vmatprep.subr.bf16.mxu0 %v5381
        %6344 = vmatpush1.bf16.msra.mxu0 %v5380
        %6345 = vmatprep.subr.bf16.mxu0 %v5377
        %6346 = vmatpush1.bf16.msra.mxu0 %v5376
        %6347 = vmatprep.subr.bf16.mxu0 %v5437
        %6348 = vmatpush2.bf16.msra.mxu0 %v5436
        %6349 = vmatprep.subr.bf16.mxu0 %v5433
        %6350 = vmatpush2.bf16.msra.mxu0 %v5432
        %6351 = vmatprep.subr.bf16.mxu0 %v5429
        %6352 = vmatpush2.bf16.msra.mxu0 %v5428
        %6353 = vmatprep.subr.bf16.mxu0 %v5425
        %6354 = vmatpush2.bf16.msra.mxu0 %v5424
        %6355 = vmatprep.subr.bf16.mxu0 %v5421
        %6356 = vmatpush2.bf16.msra.mxu0 %v5420
        %6357 = vmatprep.subr.bf16.mxu0 %v5417
        %6358 = vmatpush2.bf16.msra.mxu0 %v5416
        %6359 = vmatprep.subr.bf16.mxu0 %v5413
        %6360 = vmatpush2.bf16.msra.mxu0 %v5412
        %6361 = vmatprep.subr.bf16.mxu0 %v5409
        %6362 = vmatpush2.bf16.msra.mxu0 %v5408
        %6363 = vmatprep.mubr.bf16.mxu0 %v3623
        %6364 = vmatmul.mubr.bf16.gmra.mxu0 %v3622
        %v6365 = vpop.f32.mrf.mxu0
        %v6366 = vadd.f32 %v6325, %v6365
        %v6367 = vpop.f32.mrf.mxu0
        %v6368 = vadd.f32 %v6327, %v6367
        %v6369 = vpop.f32.mrf.mxu0
        %v6370 = vpop.f32.mrf.mxu0
        %6371 = vdwg.mxu0
        %6372 = vmatprep.subr.bf16.mxu0 %v5469
        %6373 = vmatpush1.bf16.msra.mxu0 %v5468
        %6374 = vmatprep.subr.bf16.mxu0 %v5465
        %6375 = vmatpush1.bf16.msra.mxu0 %v5464
        %6376 = vmatprep.subr.bf16.mxu0 %v5461
        %6377 = vmatpush1.bf16.msra.mxu0 %v5460
        %6378 = vmatprep.subr.bf16.mxu0 %v5457
        %6379 = vmatpush1.bf16.msra.mxu0 %v5456
        %6380 = vmatprep.subr.bf16.mxu0 %v5453
        %6381 = vmatpush1.bf16.msra.mxu0 %v5452
        %6382 = vmatprep.subr.bf16.mxu0 %v5449
        %6383 = vmatpush1.bf16.msra.mxu0 %v5448
        %6384 = vmatprep.subr.bf16.mxu0 %v5445
        %6385 = vmatpush1.bf16.msra.mxu0 %v5444
        %6386 = vmatprep.subr.bf16.mxu0 %v5441
        %6387 = vmatpush1.bf16.msra.mxu0 %v5440
        %6388 = vmatprep.subr.bf16.mxu0 %v5501
        %6389 = vmatpush2.bf16.msra.mxu0 %v5500
        %6390 = vmatprep.subr.bf16.mxu0 %v5497
        %6391 = vmatpush2.bf16.msra.mxu0 %v5496
        %6392 = vmatprep.subr.bf16.mxu0 %v5493
        %6393 = vmatpush2.bf16.msra.mxu0 %v5492
        %6394 = vmatprep.subr.bf16.mxu0 %v5489
        %6395 = vmatpush2.bf16.msra.mxu0 %v5488
        %6396 = vmatprep.subr.bf16.mxu0 %v5485
        %6397 = vmatpush2.bf16.msra.mxu0 %v5484
        %6398 = vmatprep.subr.bf16.mxu0 %v5481
        %6399 = vmatpush2.bf16.msra.mxu0 %v5480
        %6400 = vmatprep.subr.bf16.mxu0 %v5477
        %6401 = vmatpush2.bf16.msra.mxu0 %v5476
        %6402 = vmatprep.subr.bf16.mxu0 %v5473
        %6403 = vmatpush2.bf16.msra.mxu0 %v5472
        %6404 = vmatprep.mubr.bf16.mxu0 %v3625
        %6405 = vmatmul.mubr.bf16.gmra.mxu0 %v3624
        %v6406 = vpop.f32.mrf.mxu0
        %v6407 = vadd.f32 %v6366, %v6406
        %v6408 = vpop.f32.mrf.mxu0
        %v6409 = vadd.f32 %v6368, %v6408
        %v6410 = vpop.f32.mrf.mxu0
        %v6411 = vpop.f32.mrf.mxu0
        %6412 = vdwg.mxu0
        %6413 = vmatprep.subr.bf16.mxu0 %v5533
        %6414 = vmatpush1.bf16.msra.mxu0 %v5532
        %6415 = vmatprep.subr.bf16.mxu0 %v5529
        %6416 = vmatpush1.bf16.msra.mxu0 %v5528
        %6417 = vmatprep.subr.bf16.mxu0 %v5525
        %6418 = vmatpush1.bf16.msra.mxu0 %v5524
        %6419 = vmatprep.subr.bf16.mxu0 %v5521
        %6420 = vmatpush1.bf16.msra.mxu0 %v5520
        %6421 = vmatprep.subr.bf16.mxu0 %v5517
        %6422 = vmatpush1.bf16.msra.mxu0 %v5516
        %6423 = vmatprep.subr.bf16.mxu0 %v5513
        %6424 = vmatpush1.bf16.msra.mxu0 %v5512
        %6425 = vmatprep.subr.bf16.mxu0 %v5509
        %6426 = vmatpush1.bf16.msra.mxu0 %v5508
        %6427 = vmatprep.subr.bf16.mxu0 %v5505
        %6428 = vmatpush1.bf16.msra.mxu0 %v5504
        %6429 = vmatprep.subr.bf16.mxu0 %v5565
        %6430 = vmatpush2.bf16.msra.mxu0 %v5564
        %6431 = vmatprep.subr.bf16.mxu0 %v5561
        %6432 = vmatpush2.bf16.msra.mxu0 %v5560
        %6433 = vmatprep.subr.bf16.mxu0 %v5557
        %6434 = vmatpush2.bf16.msra.mxu0 %v5556
        %6435 = vmatprep.subr.bf16.mxu0 %v5553
        %6436 = vmatpush2.bf16.msra.mxu0 %v5552
        %6437 = vmatprep.subr.bf16.mxu0 %v5549
        %6438 = vmatpush2.bf16.msra.mxu0 %v5548
        %6439 = vmatprep.subr.bf16.mxu0 %v5545
        %6440 = vmatpush2.bf16.msra.mxu0 %v5544
        %6441 = vmatprep.subr.bf16.mxu0 %v5541
        %6442 = vmatpush2.bf16.msra.mxu0 %v5540
        %6443 = vmatprep.subr.bf16.mxu0 %v5537
        %6444 = vmatpush2.bf16.msra.mxu0 %v5536
        %6445 = vmatprep.mubr.bf16.mxu0 %v3627
        %6446 = vmatmul.mubr.bf16.gmra.mxu0 %v3626
        %v6447 = vpop.f32.mrf.mxu0
        %v6448 = vadd.f32 %v6407, %v6447
        %v6449 = vpop.f32.mrf.mxu0
        %v6450 = vadd.f32 %v6409, %v6449
        %v6451 = vpop.f32.mrf.mxu0
        %v6452 = vpop.f32.mrf.mxu0
        %6453 = vdwg.mxu0
        %6454 = vmatprep.subr.bf16.mxu0 %v5597
        %6455 = vmatpush1.bf16.msra.mxu0 %v5596
        %6456 = vmatprep.subr.bf16.mxu0 %v5593
        %6457 = vmatpush1.bf16.msra.mxu0 %v5592
        %6458 = vmatprep.subr.bf16.mxu0 %v5589
        %6459 = vmatpush1.bf16.msra.mxu0 %v5588
        %6460 = vmatprep.subr.bf16.mxu0 %v5585
        %6461 = vmatpush1.bf16.msra.mxu0 %v5584
        %6462 = vmatprep.subr.bf16.mxu0 %v5581
        %6463 = vmatpush1.bf16.msra.mxu0 %v5580
        %6464 = vmatprep.subr.bf16.mxu0 %v5577
        %6465 = vmatpush1.bf16.msra.mxu0 %v5576
        %6466 = vmatprep.subr.bf16.mxu0 %v5573
        %6467 = vmatpush1.bf16.msra.mxu0 %v5572
        %6468 = vmatprep.subr.bf16.mxu0 %v5569
        %6469 = vmatpush1.bf16.msra.mxu0 %v5568
        %6470 = vmatprep.subr.bf16.mxu0 %v5629
        %6471 = vmatpush2.bf16.msra.mxu0 %v5628
        %6472 = vmatprep.subr.bf16.mxu0 %v5625
        %6473 = vmatpush2.bf16.msra.mxu0 %v5624
        %6474 = vmatprep.subr.bf16.mxu0 %v5621
        %6475 = vmatpush2.bf16.msra.mxu0 %v5620
        %6476 = vmatprep.subr.bf16.mxu0 %v5617
        %6477 = vmatpush2.bf16.msra.mxu0 %v5616
        %6478 = vmatprep.subr.bf16.mxu0 %v5613
        %6479 = vmatpush2.bf16.msra.mxu0 %v5612
        %6480 = vmatprep.subr.bf16.mxu0 %v5609
        %6481 = vmatpush2.bf16.msra.mxu0 %v5608
        %6482 = vmatprep.subr.bf16.mxu0 %v5605
        %6483 = vmatpush2.bf16.msra.mxu0 %v5604
        %6484 = vmatprep.subr.bf16.mxu0 %v5601
        %6485 = vmatpush2.bf16.msra.mxu0 %v5600
        %6486 = vmatprep.mubr.bf16.mxu0 %v3629
        %6487 = vmatmul.mubr.bf16.gmra.mxu0 %v3628
        %v6488 = vpop.f32.mrf.mxu0
        %v6489 = vadd.f32 %v6448, %v6488
        %v6490 = vpop.f32.mrf.mxu0
        %v6491 = vadd.f32 %v6450, %v6490
        %v6492 = vpop.f32.mrf.mxu0
        %v6493 = vpop.f32.mrf.mxu0
        %6494 = vdwg.mxu0
        %6495 = vmatprep.subr.bf16.mxu0 %v5661
        %6496 = vmatpush1.bf16.msra.mxu0 %v5660
        %6497 = vmatprep.subr.bf16.mxu0 %v5657
        %6498 = vmatpush1.bf16.msra.mxu0 %v5656
        %6499 = vmatprep.subr.bf16.mxu0 %v5653
        %6500 = vmatpush1.bf16.msra.mxu0 %v5652
        %6501 = vmatprep.subr.bf16.mxu0 %v5649
        %6502 = vmatpush1.bf16.msra.mxu0 %v5648
        %6503 = vmatprep.subr.bf16.mxu0 %v5645
        %6504 = vmatpush1.bf16.msra.mxu0 %v5644
        %6505 = vmatprep.subr.bf16.mxu0 %v5641
        %6506 = vmatpush1.bf16.msra.mxu0 %v5640
        %6507 = vmatprep.subr.bf16.mxu0 %v5637
        %6508 = vmatpush1.bf16.msra.mxu0 %v5636
        %6509 = vmatprep.subr.bf16.mxu0 %v5633
        %6510 = vmatpush1.bf16.msra.mxu0 %v5632
        %6511 = vmatprep.subr.bf16.mxu0 %v5693
        %6512 = vmatpush2.bf16.msra.mxu0 %v5692
        %6513 = vmatprep.subr.bf16.mxu0 %v5689
        %6514 = vmatpush2.bf16.msra.mxu0 %v5688
        %6515 = vmatprep.subr.bf16.mxu0 %v5685
        %6516 = vmatpush2.bf16.msra.mxu0 %v5684
        %6517 = vmatprep.subr.bf16.mxu0 %v5681
        %6518 = vmatpush2.bf16.msra.mxu0 %v5680
        %6519 = vmatprep.subr.bf16.mxu0 %v5677
        %6520 = vmatpush2.bf16.msra.mxu0 %v5676
        %6521 = vmatprep.subr.bf16.mxu0 %v5673
        %6522 = vmatpush2.bf16.msra.mxu0 %v5672
        %6523 = vmatprep.subr.bf16.mxu0 %v5669
        %6524 = vmatpush2.bf16.msra.mxu0 %v5668
        %6525 = vmatprep.subr.bf16.mxu0 %v5665
        %6526 = vmatpush2.bf16.msra.mxu0 %v5664
        %6527 = vmatprep.mubr.bf16.mxu0 %v3631
        %6528 = vmatmul.mubr.bf16.gmra.mxu0 %v3630
        %v6529 = vpop.f32.mrf.mxu0
        %v6530 = vadd.f32 %v6489, %v6529
        %v6531 = vpop.f32.mrf.mxu0
        %v6532 = vadd.f32 %v6491, %v6531
        %v6533 = vpop.f32.mrf.mxu0
        %v6534 = vpop.f32.mrf.mxu0
        %6535 = vdwg.mxu0
        %6536 = vmatprep.subr.bf16.mxu0 %v5215
        %6537 = vmatpush1.bf16.msra.mxu0 %v5214
        %6538 = vmatprep.subr.bf16.mxu0 %v5211
        %6539 = vmatpush1.bf16.msra.mxu0 %v5210
        %6540 = vmatprep.subr.bf16.mxu0 %v5207
        %6541 = vmatpush1.bf16.msra.mxu0 %v5206
        %6542 = vmatprep.subr.bf16.mxu0 %v5203
        %6543 = vmatpush1.bf16.msra.mxu0 %v5202
        %6544 = vmatprep.subr.bf16.mxu0 %v5199
        %6545 = vmatpush1.bf16.msra.mxu0 %v5198
        %6546 = vmatprep.subr.bf16.mxu0 %v5195
        %6547 = vmatpush1.bf16.msra.mxu0 %v5194
        %6548 = vmatprep.subr.bf16.mxu0 %v5191
        %6549 = vmatpush1.bf16.msra.mxu0 %v5190
        %6550 = vmatprep.subr.bf16.mxu0 %v5187
        %6551 = vmatpush1.bf16.msra.mxu0 %v5186
        %6552 = vmatprep.subr.bf16.mxu0 %v5247
        %6553 = vmatpush2.bf16.msra.mxu0 %v5246
        %6554 = vmatprep.subr.bf16.mxu0 %v5243
        %6555 = vmatpush2.bf16.msra.mxu0 %v5242
        %6556 = vmatprep.subr.bf16.mxu0 %v5239
        %6557 = vmatpush2.bf16.msra.mxu0 %v5238
        %6558 = vmatprep.subr.bf16.mxu0 %v5235
        %6559 = vmatpush2.bf16.msra.mxu0 %v5234
        %6560 = vmatprep.subr.bf16.mxu0 %v5231
        %6561 = vmatpush2.bf16.msra.mxu0 %v5230
        %6562 = vmatprep.subr.bf16.mxu0 %v5227
        %6563 = vmatpush2.bf16.msra.mxu0 %v5226
        %6564 = vmatprep.subr.bf16.mxu0 %v5223
        %6565 = vmatpush2.bf16.msra.mxu0 %v5222
        %6566 = vmatprep.subr.bf16.mxu0 %v5219
        %6567 = vmatpush2.bf16.msra.mxu0 %v5218
        %6568 = vmatprep.mubr.bf16.mxu0 %v3617
        %6569 = vmatmul.mubr.bf16.gmra.mxu0 %v3616
        %v6570 = vpop.f32.mrf.mxu0
        %v6571 = vadd.f32 %v3232, %v6570
        %v6572 = vpop.f32.mrf.mxu0
        %v6573 = vadd.f32 %v3236, %v6572
        %v6574 = vpop.f32.mrf.mxu0
        %v6575 = vpop.f32.mrf.mxu0
        %6576 = vdwg.mxu0
        %6577 = vmatprep.subr.bf16.mxu0 %v5279
        %6578 = vmatpush1.bf16.msra.mxu0 %v5278
        %6579 = vmatprep.subr.bf16.mxu0 %v5275
        %6580 = vmatpush1.bf16.msra.mxu0 %v5274
        %6581 = vmatprep.subr.bf16.mxu0 %v5271
        %6582 = vmatpush1.bf16.msra.mxu0 %v5270
        %6583 = vmatprep.subr.bf16.mxu0 %v5267
        %6584 = vmatpush1.bf16.msra.mxu0 %v5266
        %6585 = vmatprep.subr.bf16.mxu0 %v5263
        %6586 = vmatpush1.bf16.msra.mxu0 %v5262
        %6587 = vmatprep.subr.bf16.mxu0 %v5259
        %6588 = vmatpush1.bf16.msra.mxu0 %v5258
        %6589 = vmatprep.subr.bf16.mxu0 %v5255
        %6590 = vmatpush1.bf16.msra.mxu0 %v5254
        %6591 = vmatprep.subr.bf16.mxu0 %v5251
        %6592 = vmatpush1.bf16.msra.mxu0 %v5250
        %6593 = vmatprep.subr.bf16.mxu0 %v5311
        %6594 = vmatpush2.bf16.msra.mxu0 %v5310
        %6595 = vmatprep.subr.bf16.mxu0 %v5307
        %6596 = vmatpush2.bf16.msra.mxu0 %v5306
        %6597 = vmatprep.subr.bf16.mxu0 %v5303
        %6598 = vmatpush2.bf16.msra.mxu0 %v5302
        %6599 = vmatprep.subr.bf16.mxu0 %v5299
        %6600 = vmatpush2.bf16.msra.mxu0 %v5298
        %6601 = vmatprep.subr.bf16.mxu0 %v5295
        %6602 = vmatpush2.bf16.msra.mxu0 %v5294
        %6603 = vmatprep.subr.bf16.mxu0 %v5291
        %6604 = vmatpush2.bf16.msra.mxu0 %v5290
        %6605 = vmatprep.subr.bf16.mxu0 %v5287
        %6606 = vmatpush2.bf16.msra.mxu0 %v5286
        %6607 = vmatprep.subr.bf16.mxu0 %v5283
        %6608 = vmatpush2.bf16.msra.mxu0 %v5282
        %6609 = vmatprep.mubr.bf16.mxu0 %v3619
        %6610 = vmatmul.mubr.bf16.gmra.mxu0 %v3618
        %v6611 = vpop.f32.mrf.mxu0
        %v6612 = vadd.f32 %v6571, %v6611
        %v6613 = vpop.f32.mrf.mxu0
        %v6614 = vadd.f32 %v6573, %v6613
        %v6615 = vpop.f32.mrf.mxu0
        %v6616 = vpop.f32.mrf.mxu0
        %6617 = vdwg.mxu0
        %6618 = vmatprep.subr.bf16.mxu0 %v5343
        %6619 = vmatpush1.bf16.msra.mxu0 %v5342
        %6620 = vmatprep.subr.bf16.mxu0 %v5339
        %6621 = vmatpush1.bf16.msra.mxu0 %v5338
        %6622 = vmatprep.subr.bf16.mxu0 %v5335
        %6623 = vmatpush1.bf16.msra.mxu0 %v5334
        %6624 = vmatprep.subr.bf16.mxu0 %v5331
        %6625 = vmatpush1.bf16.msra.mxu0 %v5330
        %6626 = vmatprep.subr.bf16.mxu0 %v5327
        %6627 = vmatpush1.bf16.msra.mxu0 %v5326
        %6628 = vmatprep.subr.bf16.mxu0 %v5323
        %6629 = vmatpush1.bf16.msra.mxu0 %v5322
        %6630 = vmatprep.subr.bf16.mxu0 %v5319
        %6631 = vmatpush1.bf16.msra.mxu0 %v5318
        %6632 = vmatprep.subr.bf16.mxu0 %v5315
        %6633 = vmatpush1.bf16.msra.mxu0 %v5314
        %6634 = vmatprep.subr.bf16.mxu0 %v5375
        %6635 = vmatpush2.bf16.msra.mxu0 %v5374
        %6636 = vmatprep.subr.bf16.mxu0 %v5371
        %6637 = vmatpush2.bf16.msra.mxu0 %v5370
        %6638 = vmatprep.subr.bf16.mxu0 %v5367
        %6639 = vmatpush2.bf16.msra.mxu0 %v5366
        %6640 = vmatprep.subr.bf16.mxu0 %v5363
        %6641 = vmatpush2.bf16.msra.mxu0 %v5362
        %6642 = vmatprep.subr.bf16.mxu0 %v5359
        %6643 = vmatpush2.bf16.msra.mxu0 %v5358
        %6644 = vmatprep.subr.bf16.mxu0 %v5355
        %6645 = vmatpush2.bf16.msra.mxu0 %v5354
        %6646 = vmatprep.subr.bf16.mxu0 %v5351
        %6647 = vmatpush2.bf16.msra.mxu0 %v5350
        %6648 = vmatprep.subr.bf16.mxu0 %v5347
        %6649 = vmatpush2.bf16.msra.mxu0 %v5346
        %6650 = vmatprep.mubr.bf16.mxu0 %v3621
        %6651 = vmatmul.mubr.bf16.gmra.mxu0 %v3620
        %v6652 = vpop.f32.mrf.mxu0
        %v6653 = vadd.f32 %v6612, %v6652
        %v6654 = vpop.f32.mrf.mxu0
        %v6655 = vadd.f32 %v6614, %v6654
        %v6656 = vpop.f32.mrf.mxu0
        %v6657 = vpop.f32.mrf.mxu0
        %6658 = vdwg.mxu0
        %6659 = vmatprep.subr.bf16.mxu0 %v5407
        %6660 = vmatpush1.bf16.msra.mxu0 %v5406
        %6661 = vmatprep.subr.bf16.mxu0 %v5403
        %6662 = vmatpush1.bf16.msra.mxu0 %v5402
        %6663 = vmatprep.subr.bf16.mxu0 %v5399
        %6664 = vmatpush1.bf16.msra.mxu0 %v5398
        %6665 = vmatprep.subr.bf16.mxu0 %v5395
        %6666 = vmatpush1.bf16.msra.mxu0 %v5394
        %6667 = vmatprep.subr.bf16.mxu0 %v5391
        %6668 = vmatpush1.bf16.msra.mxu0 %v5390
        %6669 = vmatprep.subr.bf16.mxu0 %v5387
        %6670 = vmatpush1.bf16.msra.mxu0 %v5386
        %6671 = vmatprep.subr.bf16.mxu0 %v5383
        %6672 = vmatpush1.bf16.msra.mxu0 %v5382
        %6673 = vmatprep.subr.bf16.mxu0 %v5379
        %6674 = vmatpush1.bf16.msra.mxu0 %v5378
        %6675 = vmatprep.subr.bf16.mxu0 %v5439
        %6676 = vmatpush2.bf16.msra.mxu0 %v5438
        %6677 = vmatprep.subr.bf16.mxu0 %v5435
        %6678 = vmatpush2.bf16.msra.mxu0 %v5434
        %6679 = vmatprep.subr.bf16.mxu0 %v5431
        %6680 = vmatpush2.bf16.msra.mxu0 %v5430
        %6681 = vmatprep.subr.bf16.mxu0 %v5427
        %6682 = vmatpush2.bf16.msra.mxu0 %v5426
        %6683 = vmatprep.subr.bf16.mxu0 %v5423
        %6684 = vmatpush2.bf16.msra.mxu0 %v5422
        %6685 = vmatprep.subr.bf16.mxu0 %v5419
        %6686 = vmatpush2.bf16.msra.mxu0 %v5418
        %6687 = vmatprep.subr.bf16.mxu0 %v5415
        %6688 = vmatpush2.bf16.msra.mxu0 %v5414
        %6689 = vmatprep.subr.bf16.mxu0 %v5411
        %6690 = vmatpush2.bf16.msra.mxu0 %v5410
        %6691 = vmatprep.mubr.bf16.mxu0 %v3623
        %6692 = vmatmul.mubr.bf16.gmra.mxu0 %v3622
        %v6693 = vpop.f32.mrf.mxu0
        %v6694 = vadd.f32 %v6653, %v6693
        %v6695 = vpop.f32.mrf.mxu0
        %v6696 = vadd.f32 %v6655, %v6695
        %v6697 = vpop.f32.mrf.mxu0
        %v6698 = vpop.f32.mrf.mxu0
        %6699 = vdwg.mxu0
        %6700 = vmatprep.subr.bf16.mxu0 %v5471
        %6701 = vmatpush1.bf16.msra.mxu0 %v5470
        %6702 = vmatprep.subr.bf16.mxu0 %v5467
        %6703 = vmatpush1.bf16.msra.mxu0 %v5466
        %6704 = vmatprep.subr.bf16.mxu0 %v5463
        %6705 = vmatpush1.bf16.msra.mxu0 %v5462
        %6706 = vmatprep.subr.bf16.mxu0 %v5459
        %6707 = vmatpush1.bf16.msra.mxu0 %v5458
        %6708 = vmatprep.subr.bf16.mxu0 %v5455
        %6709 = vmatpush1.bf16.msra.mxu0 %v5454
        %6710 = vmatprep.subr.bf16.mxu0 %v5451
        %6711 = vmatpush1.bf16.msra.mxu0 %v5450
        %6712 = vmatprep.subr.bf16.mxu0 %v5447
        %6713 = vmatpush1.bf16.msra.mxu0 %v5446
        %6714 = vmatprep.subr.bf16.mxu0 %v5443
        %6715 = vmatpush1.bf16.msra.mxu0 %v5442
        %6716 = vmatprep.subr.bf16.mxu0 %v5503
        %6717 = vmatpush2.bf16.msra.mxu0 %v5502
        %6718 = vmatprep.subr.bf16.mxu0 %v5499
        %6719 = vmatpush2.bf16.msra.mxu0 %v5498
        %6720 = vmatprep.subr.bf16.mxu0 %v5495
        %6721 = vmatpush2.bf16.msra.mxu0 %v5494
        %6722 = vmatprep.subr.bf16.mxu0 %v5491
        %6723 = vmatpush2.bf16.msra.mxu0 %v5490
        %6724 = vmatprep.subr.bf16.mxu0 %v5487
        %6725 = vmatpush2.bf16.msra.mxu0 %v5486
        %6726 = vmatprep.subr.bf16.mxu0 %v5483
        %6727 = vmatpush2.bf16.msra.mxu0 %v5482
        %6728 = vmatprep.subr.bf16.mxu0 %v5479
        %6729 = vmatpush2.bf16.msra.mxu0 %v5478
        %6730 = vmatprep.subr.bf16.mxu0 %v5475
        %6731 = vmatpush2.bf16.msra.mxu0 %v5474
        %6732 = vmatprep.mubr.bf16.mxu0 %v3625
        %6733 = vmatmul.mubr.bf16.gmra.mxu0 %v3624
        %v6734 = vpop.f32.mrf.mxu0
        %v6735 = vadd.f32 %v6694, %v6734
        %v6736 = vpop.f32.mrf.mxu0
        %v6737 = vadd.f32 %v6696, %v6736
        %v6738 = vpop.f32.mrf.mxu0
        %v6739 = vpop.f32.mrf.mxu0
        %6740 = vdwg.mxu0
        %6741 = vmatprep.subr.bf16.mxu0 %v5535
        %6742 = vmatpush1.bf16.msra.mxu0 %v5534
        %6743 = vmatprep.subr.bf16.mxu0 %v5531
        %6744 = vmatpush1.bf16.msra.mxu0 %v5530
        %6745 = vmatprep.subr.bf16.mxu0 %v5527
        %6746 = vmatpush1.bf16.msra.mxu0 %v5526
        %6747 = vmatprep.subr.bf16.mxu0 %v5523
        %6748 = vmatpush1.bf16.msra.mxu0 %v5522
        %6749 = vmatprep.subr.bf16.mxu0 %v5519
        %6750 = vmatpush1.bf16.msra.mxu0 %v5518
        %6751 = vmatprep.subr.bf16.mxu0 %v5515
        %6752 = vmatpush1.bf16.msra.mxu0 %v5514
        %6753 = vmatprep.subr.bf16.mxu0 %v5511
        %6754 = vmatpush1.bf16.msra.mxu0 %v5510
        %6755 = vmatprep.subr.bf16.mxu0 %v5507
        %6756 = vmatpush1.bf16.msra.mxu0 %v5506
        %6757 = vmatprep.subr.bf16.mxu0 %v5567
        %6758 = vmatpush2.bf16.msra.mxu0 %v5566
        %6759 = vmatprep.subr.bf16.mxu0 %v5563
        %6760 = vmatpush2.bf16.msra.mxu0 %v5562
        %6761 = vmatprep.subr.bf16.mxu0 %v5559
        %6762 = vmatpush2.bf16.msra.mxu0 %v5558
        %6763 = vmatprep.subr.bf16.mxu0 %v5555
        %6764 = vmatpush2.bf16.msra.mxu0 %v5554
        %6765 = vmatprep.subr.bf16.mxu0 %v5551
        %6766 = vmatpush2.bf16.msra.mxu0 %v5550
        %6767 = vmatprep.subr.bf16.mxu0 %v5547
        %6768 = vmatpush2.bf16.msra.mxu0 %v5546
        %6769 = vmatprep.subr.bf16.mxu0 %v5543
        %6770 = vmatpush2.bf16.msra.mxu0 %v5542
        %6771 = vmatprep.subr.bf16.mxu0 %v5539
        %6772 = vmatpush2.bf16.msra.mxu0 %v5538
        %6773 = vmatprep.mubr.bf16.mxu0 %v3627
        %6774 = vmatmul.mubr.bf16.gmra.mxu0 %v3626
        %v6775 = vpop.f32.mrf.mxu0
        %v6776 = vadd.f32 %v6735, %v6775
        %v6777 = vpop.f32.mrf.mxu0
        %v6778 = vadd.f32 %v6737, %v6777
        %v6779 = vpop.f32.mrf.mxu0
        %v6780 = vpop.f32.mrf.mxu0
        %6781 = vdwg.mxu0
        %6782 = vmatprep.subr.bf16.mxu0 %v5599
        %6783 = vmatpush1.bf16.msra.mxu0 %v5598
        %6784 = vmatprep.subr.bf16.mxu0 %v5595
        %6785 = vmatpush1.bf16.msra.mxu0 %v5594
        %6786 = vmatprep.subr.bf16.mxu0 %v5591
        %6787 = vmatpush1.bf16.msra.mxu0 %v5590
        %6788 = vmatprep.subr.bf16.mxu0 %v5587
        %6789 = vmatpush1.bf16.msra.mxu0 %v5586
        %6790 = vmatprep.subr.bf16.mxu0 %v5583
        %6791 = vmatpush1.bf16.msra.mxu0 %v5582
        %6792 = vmatprep.subr.bf16.mxu0 %v5579
        %6793 = vmatpush1.bf16.msra.mxu0 %v5578
        %6794 = vmatprep.subr.bf16.mxu0 %v5575
        %6795 = vmatpush1.bf16.msra.mxu0 %v5574
        %6796 = vmatprep.subr.bf16.mxu0 %v5571
        %6797 = vmatpush1.bf16.msra.mxu0 %v5570
        %6798 = vmatprep.subr.bf16.mxu0 %v5631
        %6799 = vmatpush2.bf16.msra.mxu0 %v5630
        %6800 = vmatprep.subr.bf16.mxu0 %v5627
        %6801 = vmatpush2.bf16.msra.mxu0 %v5626
        %6802 = vmatprep.subr.bf16.mxu0 %v5623
        %6803 = vmatpush2.bf16.msra.mxu0 %v5622
        %6804 = vmatprep.subr.bf16.mxu0 %v5619
        %6805 = vmatpush2.bf16.msra.mxu0 %v5618
        %6806 = vmatprep.subr.bf16.mxu0 %v5615
        %6807 = vmatpush2.bf16.msra.mxu0 %v5614
        %6808 = vmatprep.subr.bf16.mxu0 %v5611
        %6809 = vmatpush2.bf16.msra.mxu0 %v5610
        %6810 = vmatprep.subr.bf16.mxu0 %v5607
        %6811 = vmatpush2.bf16.msra.mxu0 %v5606
        %6812 = vmatprep.subr.bf16.mxu0 %v5603
        %6813 = vmatpush2.bf16.msra.mxu0 %v5602
        %6814 = vmatprep.mubr.bf16.mxu0 %v3629
        %6815 = vmatmul.mubr.bf16.gmra.mxu0 %v3628
        %v6816 = vpop.f32.mrf.mxu0
        %v6817 = vadd.f32 %v6776, %v6816
        %v6818 = vpop.f32.mrf.mxu0
        %v6819 = vadd.f32 %v6778, %v6818
        %v6820 = vpop.f32.mrf.mxu0
        %v6821 = vpop.f32.mrf.mxu0
        %6822 = vdwg.mxu0
        %6823 = vmatprep.subr.bf16.mxu0 %v5663
        %6824 = vmatpush1.bf16.msra.mxu0 %v5662
        %6825 = vmatprep.subr.bf16.mxu0 %v5659
        %6826 = vmatpush1.bf16.msra.mxu0 %v5658
        %6827 = vmatprep.subr.bf16.mxu0 %v5655
        %6828 = vmatpush1.bf16.msra.mxu0 %v5654
        %6829 = vmatprep.subr.bf16.mxu0 %v5651
        %6830 = vmatpush1.bf16.msra.mxu0 %v5650
        %6831 = vmatprep.subr.bf16.mxu0 %v5647
        %6832 = vmatpush1.bf16.msra.mxu0 %v5646
        %6833 = vmatprep.subr.bf16.mxu0 %v5643
        %6834 = vmatpush1.bf16.msra.mxu0 %v5642
        %6835 = vmatprep.subr.bf16.mxu0 %v5639
        %6836 = vmatpush1.bf16.msra.mxu0 %v5638
        %6837 = vmatprep.subr.bf16.mxu0 %v5635
        %6838 = vmatpush1.bf16.msra.mxu0 %v5634
        %6839 = vmatprep.subr.bf16.mxu0 %v5695
        %6840 = vmatpush2.bf16.msra.mxu0 %v5694
        %6841 = vmatprep.subr.bf16.mxu0 %v5691
        %6842 = vmatpush2.bf16.msra.mxu0 %v5690
        %6843 = vmatprep.subr.bf16.mxu0 %v5687
        %6844 = vmatpush2.bf16.msra.mxu0 %v5686
        %6845 = vmatprep.subr.bf16.mxu0 %v5683
        %6846 = vmatpush2.bf16.msra.mxu0 %v5682
        %6847 = vmatprep.subr.bf16.mxu0 %v5679
        %6848 = vmatpush2.bf16.msra.mxu0 %v5678
        %6849 = vmatprep.subr.bf16.mxu0 %v5675
        %6850 = vmatpush2.bf16.msra.mxu0 %v5674
        %6851 = vmatprep.subr.bf16.mxu0 %v5671
        %6852 = vmatpush2.bf16.msra.mxu0 %v5670
        %6853 = vmatprep.subr.bf16.mxu0 %v5667
        %6854 = vmatpush2.bf16.msra.mxu0 %v5666
        %6855 = vmatprep.mubr.bf16.mxu0 %v3631
        %6856 = vmatmul.mubr.bf16.gmra.mxu0 %v3630
        %v6857 = vpop.f32.mrf.mxu0
        %v6858 = vadd.f32 %v6817, %v6857
        %v6859 = vpop.f32.mrf.mxu0
        %v6860 = vadd.f32 %v6819, %v6859
        %v6861 = vpop.f32.mrf.mxu0
        %v6862 = vpop.f32.mrf.mxu0
        %6863 = vdwg.mxu0
        %v6864 = vpack.c.bf16 %v1689, %v1689
        %v6865 = vpack.c.bf16 %v1696, %v1696
        %v6866 = vpack.c.bf16 %v1703, %v1703
        %v6867 = vpack.c.bf16 %v1710, %v1710
        %v6868 = vpack.c.bf16 %v1717, %v1717
        %v6869 = vpack.c.bf16 %v1724, %v1724
        %v6870 = vpack.c.bf16 %v1731, %v1731
        %v6871 = vpack.c.bf16 %v1738, %v1738
        %v6872 = vpack.c.bf16 %v1745, %v1745
        %v6873 = vpack.c.bf16 %v1752, %v1752
        %v6874 = vpack.c.bf16 %v1759, %v1759
        %v6875 = vpack.c.bf16 %v1766, %v1766
        %v6876 = vpack.c.bf16 %v1773, %v1773
        %v6877 = vpack.c.bf16 %v1780, %v1780
        %v6878 = vpack.c.bf16 %v1787, %v1787
        %v6879 = vpack.c.bf16 %v1794, %v1794
        %v6880 = vpack.c.bf16 %v1801, %v1801
        %v6881 = vpack.c.bf16 %v1808, %v1808
        %v6882 = vpack.c.bf16 %v1815, %v1815
        %v6883 = vpack.c.bf16 %v1822, %v1822
        %v6884 = vpack.c.bf16 %v1829, %v1829
        %v6885 = vpack.c.bf16 %v1836, %v1836
        %v6886 = vpack.c.bf16 %v1843, %v1843
        %v6887 = vpack.c.bf16 %v1850, %v1850
        %v6888 = vpack.c.bf16 %v1857, %v1857
        %v6889 = vpack.c.bf16 %v1864, %v1864
        %v6890 = vpack.c.bf16 %v1871, %v1871
        %v6891 = vpack.c.bf16 %v1878, %v1878
        %v6892 = vpack.c.bf16 %v1885, %v1885
        %v6893 = vpack.c.bf16 %v1892, %v1892
        %v6894 = vpack.c.bf16 %v1899, %v1899
        %v6895 = vpack.c.bf16 %v1906, %v1906
        %v6896 = vpack.c.bf16 %v1913, %v1913
        %v6897 = vpack.c.bf16 %v1920, %v1920
        %v6898 = vpack.c.bf16 %v1927, %v1927
        %v6899 = vpack.c.bf16 %v1934, %v1934
        %v6900 = vpack.c.bf16 %v1941, %v1941
        %v6901 = vpack.c.bf16 %v1948, %v1948
        %v6902 = vpack.c.bf16 %v1955, %v1955
        %v6903 = vpack.c.bf16 %v1962, %v1962
        %v6904 = vpack.c.bf16 %v1969, %v1969
        %v6905 = vpack.c.bf16 %v1976, %v1976
        %v6906 = vpack.c.bf16 %v1983, %v1983
        %v6907 = vpack.c.bf16 %v1990, %v1990
        %v6908 = vpack.c.bf16 %v1997, %v1997
        %v6909 = vpack.c.bf16 %v2004, %v2004
        %v6910 = vpack.c.bf16 %v2011, %v2011
        %v6911 = vpack.c.bf16 %v2018, %v2018
        %v6912 = vpack.c.bf16 %v2025, %v2025
        %v6913 = vpack.c.bf16 %v2032, %v2032
        %v6914 = vpack.c.bf16 %v2039, %v2039
        %v6915 = vpack.c.bf16 %v2046, %v2046
        %v6916 = vpack.c.bf16 %v2053, %v2053
        %v6917 = vpack.c.bf16 %v2060, %v2060
        %v6918 = vpack.c.bf16 %v2067, %v2067
        %v6919 = vpack.c.bf16 %v2074, %v2074
        %v6920 = vpack.c.bf16 %v2081, %v2081
        %v6921 = vpack.c.bf16 %v2088, %v2088
        %v6922 = vpack.c.bf16 %v2095, %v2095
        %v6923 = vpack.c.bf16 %v2102, %v2102
        %v6924 = vpack.c.bf16 %v2109, %v2109
        %v6925 = vpack.c.bf16 %v2116, %v2116
        %v6926 = vpack.c.bf16 %v2123, %v2123
        %v6927 = vpack.c.bf16 %v2130, %v2130
        %v6928 = vpack.c.bf16 %v2137, %v2137
        %v6929 = vpack.c.bf16 %v2144, %v2144
        %v6930 = vpack.c.bf16 %v2151, %v2151
        %v6931 = vpack.c.bf16 %v2158, %v2158
        %v6932 = vpack.c.bf16 %v2165, %v2165
        %v6933 = vpack.c.bf16 %v2172, %v2172
        %v6934 = vpack.c.bf16 %v2179, %v2179
        %v6935 = vpack.c.bf16 %v2186, %v2186
        %v6936 = vpack.c.bf16 %v2193, %v2193
        %v6937 = vpack.c.bf16 %v2200, %v2200
        %v6938 = vpack.c.bf16 %v2207, %v2207
        %v6939 = vpack.c.bf16 %v2214, %v2214
        %v6940 = vpack.c.bf16 %v2221, %v2221
        %v6941 = vpack.c.bf16 %v2228, %v2228
        %v6942 = vpack.c.bf16 %v2235, %v2235
        %v6943 = vpack.c.bf16 %v2242, %v2242
        %v6944 = vpack.c.bf16 %v2249, %v2249
        %v6945 = vpack.c.bf16 %v2256, %v2256
        %v6946 = vpack.c.bf16 %v2263, %v2263
        %v6947 = vpack.c.bf16 %v2270, %v2270
        %v6948 = vpack.c.bf16 %v2277, %v2277
        %v6949 = vpack.c.bf16 %v2284, %v2284
        %v6950 = vpack.c.bf16 %v2291, %v2291
        %v6951 = vpack.c.bf16 %v2298, %v2298
        %v6952 = vpack.c.bf16 %v2305, %v2305
        %v6953 = vpack.c.bf16 %v2312, %v2312
        %v6954 = vpack.c.bf16 %v2319, %v2319
        %v6955 = vpack.c.bf16 %v2326, %v2326
        %v6956 = vpack.c.bf16 %v2333, %v2333
        %v6957 = vpack.c.bf16 %v2340, %v2340
        %v6958 = vpack.c.bf16 %v2347, %v2347
        %v6959 = vpack.c.bf16 %v2354, %v2354
        %v6960 = vpack.c.bf16 %v2361, %v2361
        %v6961 = vpack.c.bf16 %v2368, %v2368
        %v6962 = vpack.c.bf16 %v2375, %v2375
        %v6963 = vpack.c.bf16 %v2382, %v2382
        %v6964 = vpack.c.bf16 %v2389, %v2389
        %v6965 = vpack.c.bf16 %v2396, %v2396
        %v6966 = vpack.c.bf16 %v2403, %v2403
        %v6967 = vpack.c.bf16 %v2410, %v2410
        %v6968 = vpack.c.bf16 %v2417, %v2417
        %v6969 = vpack.c.bf16 %v2424, %v2424
        %v6970 = vpack.c.bf16 %v2431, %v2431
        %v6971 = vpack.c.bf16 %v2438, %v2438
        %v6972 = vpack.c.bf16 %v2445, %v2445
        %v6973 = vpack.c.bf16 %v2452, %v2452
        %v6974 = vpack.c.bf16 %v2459, %v2459
        %v6975 = vpack.c.bf16 %v2466, %v2466
        %v6976 = vpack.c.bf16 %v2473, %v2473
        %v6977 = vpack.c.bf16 %v2480, %v2480
        %v6978 = vpack.c.bf16 %v2487, %v2487
        %v6979 = vpack.c.bf16 %v2494, %v2494
        %v6980 = vpack.c.bf16 %v2501, %v2501
        %v6981 = vpack.c.bf16 %v2508, %v2508
        %v6982 = vpack.c.bf16 %v2515, %v2515
        %v6983 = vpack.c.bf16 %v2522, %v2522
        %v6984 = vpack.c.bf16 %v2529, %v2529
        %v6985 = vpack.c.bf16 %v2536, %v2536
        %v6986 = vpack.c.bf16 %v2543, %v2543
        %v6987 = vpack.c.bf16 %v2550, %v2550
        %v6988 = vpack.c.bf16 %v2557, %v2557
        %v6989 = vpack.c.bf16 %v2564, %v2564
        %v6990 = vpack.c.bf16 %v2571, %v2571
        %v6991 = vpack.c.bf16 %v2578, %v2578
        %v7120 = vunpack.c.l.b16 %v6864
        %v7121 = vunpack.c.l.b16 %v6865
        %v7122 = vunpack.c.l.b16 %v6866
        %v7123 = vunpack.c.l.b16 %v6867
        %v7124 = vunpack.c.l.b16 %v6868
        %v7125 = vunpack.c.l.b16 %v6869
        %v7126 = vunpack.c.l.b16 %v6870
        %v7127 = vunpack.c.l.b16 %v6871
        %v7128 = vunpack.c.l.b16 %v6872
        %v7129 = vunpack.c.l.b16 %v6873
        %v7130 = vunpack.c.l.b16 %v6874
        %v7131 = vunpack.c.l.b16 %v6875
        %v7132 = vunpack.c.l.b16 %v6876
        %v7133 = vunpack.c.l.b16 %v6877
        %v7134 = vunpack.c.l.b16 %v6878
        %v7135 = vunpack.c.l.b16 %v6879
        %v7136 = vunpack.c.l.b16 %v6880
        %v7137 = vunpack.c.l.b16 %v6881
        %v7138 = vunpack.c.l.b16 %v6882
        %v7139 = vunpack.c.l.b16 %v6883
        %v7140 = vunpack.c.l.b16 %v6884
        %v7141 = vunpack.c.l.b16 %v6885
        %v7142 = vunpack.c.l.b16 %v6886
        %v7143 = vunpack.c.l.b16 %v6887
        %v7144 = vunpack.c.l.b16 %v6888
        %v7145 = vunpack.c.l.b16 %v6889
        %v7146 = vunpack.c.l.b16 %v6890
        %v7147 = vunpack.c.l.b16 %v6891
        %v7148 = vunpack.c.l.b16 %v6892
        %v7149 = vunpack.c.l.b16 %v6893
        %v7150 = vunpack.c.l.b16 %v6894
        %v7151 = vunpack.c.l.b16 %v6895
        %v7152 = vunpack.c.l.b16 %v6896
        %v7153 = vunpack.c.l.b16 %v6897
        %v7154 = vunpack.c.l.b16 %v6898
        %v7155 = vunpack.c.l.b16 %v6899
        %v7156 = vunpack.c.l.b16 %v6900
        %v7157 = vunpack.c.l.b16 %v6901
        %v7158 = vunpack.c.l.b16 %v6902
        %v7159 = vunpack.c.l.b16 %v6903
        %v7160 = vunpack.c.l.b16 %v6904
        %v7161 = vunpack.c.l.b16 %v6905
        %v7162 = vunpack.c.l.b16 %v6906
        %v7163 = vunpack.c.l.b16 %v6907
        %v7164 = vunpack.c.l.b16 %v6908
        %v7165 = vunpack.c.l.b16 %v6909
        %v7166 = vunpack.c.l.b16 %v6910
        %v7167 = vunpack.c.l.b16 %v6911
        %v7168 = vunpack.c.l.b16 %v6912
        %v7169 = vunpack.c.l.b16 %v6913
        %v7170 = vunpack.c.l.b16 %v6914
        %v7171 = vunpack.c.l.b16 %v6915
        %v7172 = vunpack.c.l.b16 %v6916
        %v7173 = vunpack.c.l.b16 %v6917
        %v7174 = vunpack.c.l.b16 %v6918
        %v7175 = vunpack.c.l.b16 %v6919
        %v7176 = vunpack.c.l.b16 %v6920
        %v7177 = vunpack.c.l.b16 %v6921
        %v7178 = vunpack.c.l.b16 %v6922
        %v7179 = vunpack.c.l.b16 %v6923
        %v7180 = vunpack.c.l.b16 %v6924
        %v7181 = vunpack.c.l.b16 %v6925
        %v7182 = vunpack.c.l.b16 %v6926
        %v7183 = vunpack.c.l.b16 %v6927
        %v7184 = vunpack.c.l.b16 %v6928
        %v7185 = vunpack.c.l.b16 %v6929
        %v7186 = vunpack.c.l.b16 %v6930
        %v7187 = vunpack.c.l.b16 %v6931
        %v7188 = vunpack.c.l.b16 %v6932
        %v7189 = vunpack.c.l.b16 %v6933
        %v7190 = vunpack.c.l.b16 %v6934
        %v7191 = vunpack.c.l.b16 %v6935
        %v7192 = vunpack.c.l.b16 %v6936
        %v7193 = vunpack.c.l.b16 %v6937
        %v7194 = vunpack.c.l.b16 %v6938
        %v7195 = vunpack.c.l.b16 %v6939
        %v7196 = vunpack.c.l.b16 %v6940
        %v7197 = vunpack.c.l.b16 %v6941
        %v7198 = vunpack.c.l.b16 %v6942
        %v7199 = vunpack.c.l.b16 %v6943
        %v7200 = vunpack.c.l.b16 %v6944
        %v7201 = vunpack.c.l.b16 %v6945
        %v7202 = vunpack.c.l.b16 %v6946
        %v7203 = vunpack.c.l.b16 %v6947
        %v7204 = vunpack.c.l.b16 %v6948
        %v7205 = vunpack.c.l.b16 %v6949
        %v7206 = vunpack.c.l.b16 %v6950
        %v7207 = vunpack.c.l.b16 %v6951
        %v7208 = vunpack.c.l.b16 %v6952
        %v7209 = vunpack.c.l.b16 %v6953
        %v7210 = vunpack.c.l.b16 %v6954
        %v7211 = vunpack.c.l.b16 %v6955
        %v7212 = vunpack.c.l.b16 %v6956
        %v7213 = vunpack.c.l.b16 %v6957
        %v7214 = vunpack.c.l.b16 %v6958
        %v7215 = vunpack.c.l.b16 %v6959
        %v7216 = vunpack.c.l.b16 %v6960
        %v7217 = vunpack.c.l.b16 %v6961
        %v7218 = vunpack.c.l.b16 %v6962
        %v7219 = vunpack.c.l.b16 %v6963
        %v7220 = vunpack.c.l.b16 %v6964
        %v7221 = vunpack.c.l.b16 %v6965
        %v7222 = vunpack.c.l.b16 %v6966
        %v7223 = vunpack.c.l.b16 %v6967
        %v7224 = vunpack.c.l.b16 %v6968
        %v7225 = vunpack.c.l.b16 %v6969
        %v7226 = vunpack.c.l.b16 %v6970
        %v7227 = vunpack.c.l.b16 %v6971
        %v7228 = vunpack.c.l.b16 %v6972
        %v7229 = vunpack.c.l.b16 %v6973
        %v7230 = vunpack.c.l.b16 %v6974
        %v7231 = vunpack.c.l.b16 %v6975
        %v7232 = vunpack.c.l.b16 %v6976
        %v7233 = vunpack.c.l.b16 %v6977
        %v7234 = vunpack.c.l.b16 %v6978
        %v7235 = vunpack.c.l.b16 %v6979
        %v7236 = vunpack.c.l.b16 %v6980
        %v7237 = vunpack.c.l.b16 %v6981
        %v7238 = vunpack.c.l.b16 %v6982
        %v7239 = vunpack.c.l.b16 %v6983
        %v7240 = vunpack.c.l.b16 %v6984
        %v7241 = vunpack.c.l.b16 %v6985
        %v7242 = vunpack.c.l.b16 %v6986
        %v7243 = vunpack.c.l.b16 %v6987
        %v7244 = vunpack.c.l.b16 %v6988
        %v7245 = vunpack.c.l.b16 %v6989
        %v7246 = vunpack.c.l.b16 %v6990
        %v7247 = vunpack.c.l.b16 %v6991
        %v7248 = vsel %vm3497, %v7136, %v7120
        %v7249 = vsel %vm3499, %v7152, %v7248
        %v7250 = vsel %vm3501, %v7168, %v7249
        %v7251 = vsel %vm3503, %v7184, %v7250
        %v7252 = vsel %vm3505, %v7200, %v7251
        %v7253 = vsel %vm3507, %v7216, %v7252
        %v7254 = vsel %vm3509, %v7232, %v7253
        %v7255 = vsel %vm3497, %v7137, %v7121
        %v7256 = vsel %vm3499, %v7153, %v7255
        %v7257 = vsel %vm3501, %v7169, %v7256
        %v7258 = vsel %vm3503, %v7185, %v7257
        %v7259 = vsel %vm3505, %v7201, %v7258
        %v7260 = vsel %vm3507, %v7217, %v7259
        %v7261 = vsel %vm3509, %v7233, %v7260
        %v7262 = vsel %vm3497, %v7138, %v7122
        %v7263 = vsel %vm3499, %v7154, %v7262
        %v7264 = vsel %vm3501, %v7170, %v7263
        %v7265 = vsel %vm3503, %v7186, %v7264
        %v7266 = vsel %vm3505, %v7202, %v7265
        %v7267 = vsel %vm3507, %v7218, %v7266
        %v7268 = vsel %vm3509, %v7234, %v7267
        %v7269 = vsel %vm3497, %v7139, %v7123
        %v7270 = vsel %vm3499, %v7155, %v7269
        %v7271 = vsel %vm3501, %v7171, %v7270
        %v7272 = vsel %vm3503, %v7187, %v7271
        %v7273 = vsel %vm3505, %v7203, %v7272
        %v7274 = vsel %vm3507, %v7219, %v7273
        %v7275 = vsel %vm3509, %v7235, %v7274
        %v7276 = vsel %vm3497, %v7140, %v7124
        %v7277 = vsel %vm3499, %v7156, %v7276
        %v7278 = vsel %vm3501, %v7172, %v7277
        %v7279 = vsel %vm3503, %v7188, %v7278
        %v7280 = vsel %vm3505, %v7204, %v7279
        %v7281 = vsel %vm3507, %v7220, %v7280
        %v7282 = vsel %vm3509, %v7236, %v7281
        %v7283 = vsel %vm3497, %v7141, %v7125
        %v7284 = vsel %vm3499, %v7157, %v7283
        %v7285 = vsel %vm3501, %v7173, %v7284
        %v7286 = vsel %vm3503, %v7189, %v7285
        %v7287 = vsel %vm3505, %v7205, %v7286
        %v7288 = vsel %vm3507, %v7221, %v7287
        %v7289 = vsel %vm3509, %v7237, %v7288
        %v7290 = vsel %vm3497, %v7142, %v7126
        %v7291 = vsel %vm3499, %v7158, %v7290
        %v7292 = vsel %vm3501, %v7174, %v7291
        %v7293 = vsel %vm3503, %v7190, %v7292
        %v7294 = vsel %vm3505, %v7206, %v7293
        %v7295 = vsel %vm3507, %v7222, %v7294
        %v7296 = vsel %vm3509, %v7238, %v7295
        %v7297 = vsel %vm3497, %v7143, %v7127
        %v7298 = vsel %vm3499, %v7159, %v7297
        %v7299 = vsel %vm3501, %v7175, %v7298
        %v7300 = vsel %vm3503, %v7191, %v7299
        %v7301 = vsel %vm3505, %v7207, %v7300
        %v7302 = vsel %vm3507, %v7223, %v7301
        %v7303 = vsel %vm3509, %v7239, %v7302
        %v7304 = vsel %vm3497, %v7144, %v7128
        %v7305 = vsel %vm3499, %v7160, %v7304
        %v7306 = vsel %vm3501, %v7176, %v7305
        %v7307 = vsel %vm3503, %v7192, %v7306
        %v7308 = vsel %vm3505, %v7208, %v7307
        %v7309 = vsel %vm3507, %v7224, %v7308
        %v7310 = vsel %vm3509, %v7240, %v7309
        %v7311 = vsel %vm3497, %v7145, %v7129
        %v7312 = vsel %vm3499, %v7161, %v7311
        %v7313 = vsel %vm3501, %v7177, %v7312
        %v7314 = vsel %vm3503, %v7193, %v7313
        %v7315 = vsel %vm3505, %v7209, %v7314
        %v7316 = vsel %vm3507, %v7225, %v7315
        %v7317 = vsel %vm3509, %v7241, %v7316
        %v7318 = vsel %vm3497, %v7146, %v7130
        %v7319 = vsel %vm3499, %v7162, %v7318
        %v7320 = vsel %vm3501, %v7178, %v7319
        %v7321 = vsel %vm3503, %v7194, %v7320
        %v7322 = vsel %vm3505, %v7210, %v7321
        %v7323 = vsel %vm3507, %v7226, %v7322
        %v7324 = vsel %vm3509, %v7242, %v7323
        %v7325 = vsel %vm3497, %v7147, %v7131
        %v7326 = vsel %vm3499, %v7163, %v7325
        %v7327 = vsel %vm3501, %v7179, %v7326
        %v7328 = vsel %vm3503, %v7195, %v7327
        %v7329 = vsel %vm3505, %v7211, %v7328
        %v7330 = vsel %vm3507, %v7227, %v7329
        %v7331 = vsel %vm3509, %v7243, %v7330
        %v7332 = vsel %vm3497, %v7148, %v7132
        %v7333 = vsel %vm3499, %v7164, %v7332
        %v7334 = vsel %vm3501, %v7180, %v7333
        %v7335 = vsel %vm3503, %v7196, %v7334
        %v7336 = vsel %vm3505, %v7212, %v7335
        %v7337 = vsel %vm3507, %v7228, %v7336
        %v7338 = vsel %vm3509, %v7244, %v7337
        %v7339 = vsel %vm3497, %v7149, %v7133
        %v7340 = vsel %vm3499, %v7165, %v7339
        %v7341 = vsel %vm3501, %v7181, %v7340
        %v7342 = vsel %vm3503, %v7197, %v7341
        %v7343 = vsel %vm3505, %v7213, %v7342
        %v7344 = vsel %vm3507, %v7229, %v7343
        %v7345 = vsel %vm3509, %v7245, %v7344
        %v7346 = vsel %vm3497, %v7150, %v7134
        %v7347 = vsel %vm3499, %v7166, %v7346
        %v7348 = vsel %vm3501, %v7182, %v7347
        %v7349 = vsel %vm3503, %v7198, %v7348
        %v7350 = vsel %vm3505, %v7214, %v7349
        %v7351 = vsel %vm3507, %v7230, %v7350
        %v7352 = vsel %vm3509, %v7246, %v7351
        %v7353 = vsel %vm3497, %v7151, %v7135
        %v7354 = vsel %vm3499, %v7167, %v7353
        %v7355 = vsel %vm3501, %v7183, %v7354
        %v7356 = vsel %vm3503, %v7199, %v7355
        %v7357 = vsel %vm3505, %v7215, %v7356
        %v7358 = vsel %vm3507, %v7231, %v7357
        %v7359 = vsel %vm3509, %v7247, %v7358
        %v7360 = vpack.c.b16 %v7254, %v7254
        %v7361 = vpack.c.b16 %v7261, %v7261
        %v7362 = vpack.c.b16 %v7268, %v7268
        %v7363 = vpack.c.b16 %v7275, %v7275
        %v7364 = vpack.c.b16 %v7282, %v7282
        %v7365 = vpack.c.b16 %v7289, %v7289
        %v7366 = vpack.c.b16 %v7296, %v7296
        %v7367 = vpack.c.b16 %v7303, %v7303
        %v7368 = vpack.c.b16 %v7310, %v7310
        %v7369 = vpack.c.b16 %v7317, %v7317
        %v7370 = vpack.c.b16 %v7324, %v7324
        %v7371 = vpack.c.b16 %v7331, %v7331
        %v7372 = vpack.c.b16 %v7338, %v7338
        %v7373 = vpack.c.b16 %v7345, %v7345
        %v7374 = vpack.c.b16 %v7352, %v7352
        %v7375 = vpack.c.b16 %v7359, %v7359
        %7392 = vmatprep.subr.bf16.mxu0 %v5213
        %7393 = vmatpush1.bf16.msra.mxu0 %v5212
        %7394 = vmatprep.subr.bf16.mxu0 %v5209
        %7395 = vmatpush1.bf16.msra.mxu0 %v5208
        %7396 = vmatprep.subr.bf16.mxu0 %v5205
        %7397 = vmatpush1.bf16.msra.mxu0 %v5204
        %7398 = vmatprep.subr.bf16.mxu0 %v5201
        %7399 = vmatpush1.bf16.msra.mxu0 %v5200
        %7400 = vmatprep.subr.bf16.mxu0 %v5197
        %7401 = vmatpush1.bf16.msra.mxu0 %v5196
        %7402 = vmatprep.subr.bf16.mxu0 %v5193
        %7403 = vmatpush1.bf16.msra.mxu0 %v5192
        %7404 = vmatprep.subr.bf16.mxu0 %v5189
        %7405 = vmatpush1.bf16.msra.mxu0 %v5188
        %7406 = vmatprep.subr.bf16.mxu0 %v5185
        %7407 = vmatpush1.bf16.msra.mxu0 %v5184
        %7408 = vmatprep.subr.bf16.mxu0 %v5245
        %7409 = vmatpush2.bf16.msra.mxu0 %v5244
        %7410 = vmatprep.subr.bf16.mxu0 %v5241
        %7411 = vmatpush2.bf16.msra.mxu0 %v5240
        %7412 = vmatprep.subr.bf16.mxu0 %v5237
        %7413 = vmatpush2.bf16.msra.mxu0 %v5236
        %7414 = vmatprep.subr.bf16.mxu0 %v5233
        %7415 = vmatpush2.bf16.msra.mxu0 %v5232
        %7416 = vmatprep.subr.bf16.mxu0 %v5229
        %7417 = vmatpush2.bf16.msra.mxu0 %v5228
        %7418 = vmatprep.subr.bf16.mxu0 %v5225
        %7419 = vmatpush2.bf16.msra.mxu0 %v5224
        %7420 = vmatprep.subr.bf16.mxu0 %v5221
        %7421 = vmatpush2.bf16.msra.mxu0 %v5220
        %7422 = vmatprep.subr.bf16.mxu0 %v5217
        %7423 = vmatpush2.bf16.msra.mxu0 %v5216
        %7424 = vmatprep.mubr.bf16.mxu0 %v7361
        %7425 = vmatmul.mubr.bf16.gmra.mxu0 %v7360
        %v7426 = vpop.f32.mrf.mxu0
        %v7427 = vadd.f32 %v3224, %v7426
        %v7428 = vpop.f32.mrf.mxu0
        %v7429 = vadd.f32 %v3228, %v7428
        %v7430 = vpop.f32.mrf.mxu0
        %v7431 = vpop.f32.mrf.mxu0
        %7432 = vdwg.mxu0
        %7433 = vmatprep.subr.bf16.mxu0 %v5277
        %7434 = vmatpush1.bf16.msra.mxu0 %v5276
        %7435 = vmatprep.subr.bf16.mxu0 %v5273
        %7436 = vmatpush1.bf16.msra.mxu0 %v5272
        %7437 = vmatprep.subr.bf16.mxu0 %v5269
        %7438 = vmatpush1.bf16.msra.mxu0 %v5268
        %7439 = vmatprep.subr.bf16.mxu0 %v5265
        %7440 = vmatpush1.bf16.msra.mxu0 %v5264
        %7441 = vmatprep.subr.bf16.mxu0 %v5261
        %7442 = vmatpush1.bf16.msra.mxu0 %v5260
        %7443 = vmatprep.subr.bf16.mxu0 %v5257
        %7444 = vmatpush1.bf16.msra.mxu0 %v5256
        %7445 = vmatprep.subr.bf16.mxu0 %v5253
        %7446 = vmatpush1.bf16.msra.mxu0 %v5252
        %7447 = vmatprep.subr.bf16.mxu0 %v5249
        %7448 = vmatpush1.bf16.msra.mxu0 %v5248
        %7449 = vmatprep.subr.bf16.mxu0 %v5309
        %7450 = vmatpush2.bf16.msra.mxu0 %v5308
        %7451 = vmatprep.subr.bf16.mxu0 %v5305
        %7452 = vmatpush2.bf16.msra.mxu0 %v5304
        %7453 = vmatprep.subr.bf16.mxu0 %v5301
        %7454 = vmatpush2.bf16.msra.mxu0 %v5300
        %7455 = vmatprep.subr.bf16.mxu0 %v5297
        %7456 = vmatpush2.bf16.msra.mxu0 %v5296
        %7457 = vmatprep.subr.bf16.mxu0 %v5293
        %7458 = vmatpush2.bf16.msra.mxu0 %v5292
        %7459 = vmatprep.subr.bf16.mxu0 %v5289
        %7460 = vmatpush2.bf16.msra.mxu0 %v5288
        %7461 = vmatprep.subr.bf16.mxu0 %v5285
        %7462 = vmatpush2.bf16.msra.mxu0 %v5284
        %7463 = vmatprep.subr.bf16.mxu0 %v5281
        %7464 = vmatpush2.bf16.msra.mxu0 %v5280
        %7465 = vmatprep.mubr.bf16.mxu0 %v7363
        %7466 = vmatmul.mubr.bf16.gmra.mxu0 %v7362
        %v7467 = vpop.f32.mrf.mxu0
        %v7468 = vadd.f32 %v7427, %v7467
        %v7469 = vpop.f32.mrf.mxu0
        %v7470 = vadd.f32 %v7429, %v7469
        %v7471 = vpop.f32.mrf.mxu0
        %v7472 = vpop.f32.mrf.mxu0
        %7473 = vdwg.mxu0
        %7474 = vmatprep.subr.bf16.mxu0 %v5341
        %7475 = vmatpush1.bf16.msra.mxu0 %v5340
        %7476 = vmatprep.subr.bf16.mxu0 %v5337
        %7477 = vmatpush1.bf16.msra.mxu0 %v5336
        %7478 = vmatprep.subr.bf16.mxu0 %v5333
        %7479 = vmatpush1.bf16.msra.mxu0 %v5332
        %7480 = vmatprep.subr.bf16.mxu0 %v5329
        %7481 = vmatpush1.bf16.msra.mxu0 %v5328
        %7482 = vmatprep.subr.bf16.mxu0 %v5325
        %7483 = vmatpush1.bf16.msra.mxu0 %v5324
        %7484 = vmatprep.subr.bf16.mxu0 %v5321
        %7485 = vmatpush1.bf16.msra.mxu0 %v5320
        %7486 = vmatprep.subr.bf16.mxu0 %v5317
        %7487 = vmatpush1.bf16.msra.mxu0 %v5316
        %7488 = vmatprep.subr.bf16.mxu0 %v5313
        %7489 = vmatpush1.bf16.msra.mxu0 %v5312
        %7490 = vmatprep.subr.bf16.mxu0 %v5373
        %7491 = vmatpush2.bf16.msra.mxu0 %v5372
        %7492 = vmatprep.subr.bf16.mxu0 %v5369
        %7493 = vmatpush2.bf16.msra.mxu0 %v5368
        %7494 = vmatprep.subr.bf16.mxu0 %v5365
        %7495 = vmatpush2.bf16.msra.mxu0 %v5364
        %7496 = vmatprep.subr.bf16.mxu0 %v5361
        %7497 = vmatpush2.bf16.msra.mxu0 %v5360
        %7498 = vmatprep.subr.bf16.mxu0 %v5357
        %7499 = vmatpush2.bf16.msra.mxu0 %v5356
        %7500 = vmatprep.subr.bf16.mxu0 %v5353
        %7501 = vmatpush2.bf16.msra.mxu0 %v5352
        %7502 = vmatprep.subr.bf16.mxu0 %v5349
        %7503 = vmatpush2.bf16.msra.mxu0 %v5348
        %7504 = vmatprep.subr.bf16.mxu0 %v5345
        %7505 = vmatpush2.bf16.msra.mxu0 %v5344
        %7506 = vmatprep.mubr.bf16.mxu0 %v7365
        %7507 = vmatmul.mubr.bf16.gmra.mxu0 %v7364
        %v7508 = vpop.f32.mrf.mxu0
        %v7509 = vadd.f32 %v7468, %v7508
        %v7510 = vpop.f32.mrf.mxu0
        %v7511 = vadd.f32 %v7470, %v7510
        %v7512 = vpop.f32.mrf.mxu0
        %v7513 = vpop.f32.mrf.mxu0
        %7514 = vdwg.mxu0
        %7515 = vmatprep.subr.bf16.mxu0 %v5405
        %7516 = vmatpush1.bf16.msra.mxu0 %v5404
        %7517 = vmatprep.subr.bf16.mxu0 %v5401
        %7518 = vmatpush1.bf16.msra.mxu0 %v5400
        %7519 = vmatprep.subr.bf16.mxu0 %v5397
        %7520 = vmatpush1.bf16.msra.mxu0 %v5396
        %7521 = vmatprep.subr.bf16.mxu0 %v5393
        %7522 = vmatpush1.bf16.msra.mxu0 %v5392
        %7523 = vmatprep.subr.bf16.mxu0 %v5389
        %7524 = vmatpush1.bf16.msra.mxu0 %v5388
        %7525 = vmatprep.subr.bf16.mxu0 %v5385
        %7526 = vmatpush1.bf16.msra.mxu0 %v5384
        %7527 = vmatprep.subr.bf16.mxu0 %v5381
        %7528 = vmatpush1.bf16.msra.mxu0 %v5380
        %7529 = vmatprep.subr.bf16.mxu0 %v5377
        %7530 = vmatpush1.bf16.msra.mxu0 %v5376
        %7531 = vmatprep.subr.bf16.mxu0 %v5437
        %7532 = vmatpush2.bf16.msra.mxu0 %v5436
        %7533 = vmatprep.subr.bf16.mxu0 %v5433
        %7534 = vmatpush2.bf16.msra.mxu0 %v5432
        %7535 = vmatprep.subr.bf16.mxu0 %v5429
        %7536 = vmatpush2.bf16.msra.mxu0 %v5428
        %7537 = vmatprep.subr.bf16.mxu0 %v5425
        %7538 = vmatpush2.bf16.msra.mxu0 %v5424
        %7539 = vmatprep.subr.bf16.mxu0 %v5421
        %7540 = vmatpush2.bf16.msra.mxu0 %v5420
        %7541 = vmatprep.subr.bf16.mxu0 %v5417
        %7542 = vmatpush2.bf16.msra.mxu0 %v5416
        %7543 = vmatprep.subr.bf16.mxu0 %v5413
        %7544 = vmatpush2.bf16.msra.mxu0 %v5412
        %7545 = vmatprep.subr.bf16.mxu0 %v5409
        %7546 = vmatpush2.bf16.msra.mxu0 %v5408
        %7547 = vmatprep.mubr.bf16.mxu0 %v7367
        %7548 = vmatmul.mubr.bf16.gmra.mxu0 %v7366
        %v7549 = vpop.f32.mrf.mxu0
        %v7550 = vadd.f32 %v7509, %v7549
        %v7551 = vpop.f32.mrf.mxu0
        %v7552 = vadd.f32 %v7511, %v7551
        %v7553 = vpop.f32.mrf.mxu0
        %v7554 = vpop.f32.mrf.mxu0
        %7555 = vdwg.mxu0
        %7556 = vmatprep.subr.bf16.mxu0 %v5469
        %7557 = vmatpush1.bf16.msra.mxu0 %v5468
        %7558 = vmatprep.subr.bf16.mxu0 %v5465
        %7559 = vmatpush1.bf16.msra.mxu0 %v5464
        %7560 = vmatprep.subr.bf16.mxu0 %v5461
        %7561 = vmatpush1.bf16.msra.mxu0 %v5460
        %7562 = vmatprep.subr.bf16.mxu0 %v5457
        %7563 = vmatpush1.bf16.msra.mxu0 %v5456
        %7564 = vmatprep.subr.bf16.mxu0 %v5453
        %7565 = vmatpush1.bf16.msra.mxu0 %v5452
        %7566 = vmatprep.subr.bf16.mxu0 %v5449
        %7567 = vmatpush1.bf16.msra.mxu0 %v5448
        %7568 = vmatprep.subr.bf16.mxu0 %v5445
        %7569 = vmatpush1.bf16.msra.mxu0 %v5444
        %7570 = vmatprep.subr.bf16.mxu0 %v5441
        %7571 = vmatpush1.bf16.msra.mxu0 %v5440
        %7572 = vmatprep.subr.bf16.mxu0 %v5501
        %7573 = vmatpush2.bf16.msra.mxu0 %v5500
        %7574 = vmatprep.subr.bf16.mxu0 %v5497
        %7575 = vmatpush2.bf16.msra.mxu0 %v5496
        %7576 = vmatprep.subr.bf16.mxu0 %v5493
        %7577 = vmatpush2.bf16.msra.mxu0 %v5492
        %7578 = vmatprep.subr.bf16.mxu0 %v5489
        %7579 = vmatpush2.bf16.msra.mxu0 %v5488
        %7580 = vmatprep.subr.bf16.mxu0 %v5485
        %7581 = vmatpush2.bf16.msra.mxu0 %v5484
        %7582 = vmatprep.subr.bf16.mxu0 %v5481
        %7583 = vmatpush2.bf16.msra.mxu0 %v5480
        %7584 = vmatprep.subr.bf16.mxu0 %v5477
        %7585 = vmatpush2.bf16.msra.mxu0 %v5476
        %7586 = vmatprep.subr.bf16.mxu0 %v5473
        %7587 = vmatpush2.bf16.msra.mxu0 %v5472
        %7588 = vmatprep.mubr.bf16.mxu0 %v7369
        %7589 = vmatmul.mubr.bf16.gmra.mxu0 %v7368
        %v7590 = vpop.f32.mrf.mxu0
        %v7591 = vadd.f32 %v7550, %v7590
        %v7592 = vpop.f32.mrf.mxu0
        %v7593 = vadd.f32 %v7552, %v7592
        %v7594 = vpop.f32.mrf.mxu0
        %v7595 = vpop.f32.mrf.mxu0
        %7596 = vdwg.mxu0
        %7597 = vmatprep.subr.bf16.mxu0 %v5533
        %7598 = vmatpush1.bf16.msra.mxu0 %v5532
        %7599 = vmatprep.subr.bf16.mxu0 %v5529
        %7600 = vmatpush1.bf16.msra.mxu0 %v5528
        %7601 = vmatprep.subr.bf16.mxu0 %v5525
        %7602 = vmatpush1.bf16.msra.mxu0 %v5524
        %7603 = vmatprep.subr.bf16.mxu0 %v5521
        %7604 = vmatpush1.bf16.msra.mxu0 %v5520
        %7605 = vmatprep.subr.bf16.mxu0 %v5517
        %7606 = vmatpush1.bf16.msra.mxu0 %v5516
        %7607 = vmatprep.subr.bf16.mxu0 %v5513
        %7608 = vmatpush1.bf16.msra.mxu0 %v5512
        %7609 = vmatprep.subr.bf16.mxu0 %v5509
        %7610 = vmatpush1.bf16.msra.mxu0 %v5508
        %7611 = vmatprep.subr.bf16.mxu0 %v5505
        %7612 = vmatpush1.bf16.msra.mxu0 %v5504
        %7613 = vmatprep.subr.bf16.mxu0 %v5565
        %7614 = vmatpush2.bf16.msra.mxu0 %v5564
        %7615 = vmatprep.subr.bf16.mxu0 %v5561
        %7616 = vmatpush2.bf16.msra.mxu0 %v5560
        %7617 = vmatprep.subr.bf16.mxu0 %v5557
        %7618 = vmatpush2.bf16.msra.mxu0 %v5556
        %7619 = vmatprep.subr.bf16.mxu0 %v5553
        %7620 = vmatpush2.bf16.msra.mxu0 %v5552
        %7621 = vmatprep.subr.bf16.mxu0 %v5549
        %7622 = vmatpush2.bf16.msra.mxu0 %v5548
        %7623 = vmatprep.subr.bf16.mxu0 %v5545
        %7624 = vmatpush2.bf16.msra.mxu0 %v5544
        %7625 = vmatprep.subr.bf16.mxu0 %v5541
        %7626 = vmatpush2.bf16.msra.mxu0 %v5540
        %7627 = vmatprep.subr.bf16.mxu0 %v5537
        %7628 = vmatpush2.bf16.msra.mxu0 %v5536
        %7629 = vmatprep.mubr.bf16.mxu0 %v7371
        %7630 = vmatmul.mubr.bf16.gmra.mxu0 %v7370
        %v7631 = vpop.f32.mrf.mxu0
        %v7632 = vadd.f32 %v7591, %v7631
        %v7633 = vpop.f32.mrf.mxu0
        %v7634 = vadd.f32 %v7593, %v7633
        %v7635 = vpop.f32.mrf.mxu0
        %v7636 = vpop.f32.mrf.mxu0
        %7637 = vdwg.mxu0
        %7638 = vmatprep.subr.bf16.mxu0 %v5597
        %7639 = vmatpush1.bf16.msra.mxu0 %v5596
        %7640 = vmatprep.subr.bf16.mxu0 %v5593
        %7641 = vmatpush1.bf16.msra.mxu0 %v5592
        %7642 = vmatprep.subr.bf16.mxu0 %v5589
        %7643 = vmatpush1.bf16.msra.mxu0 %v5588
        %7644 = vmatprep.subr.bf16.mxu0 %v5585
        %7645 = vmatpush1.bf16.msra.mxu0 %v5584
        %7646 = vmatprep.subr.bf16.mxu0 %v5581
        %7647 = vmatpush1.bf16.msra.mxu0 %v5580
        %7648 = vmatprep.subr.bf16.mxu0 %v5577
        %7649 = vmatpush1.bf16.msra.mxu0 %v5576
        %7650 = vmatprep.subr.bf16.mxu0 %v5573
        %7651 = vmatpush1.bf16.msra.mxu0 %v5572
        %7652 = vmatprep.subr.bf16.mxu0 %v5569
        %7653 = vmatpush1.bf16.msra.mxu0 %v5568
        %7654 = vmatprep.subr.bf16.mxu0 %v5629
        %7655 = vmatpush2.bf16.msra.mxu0 %v5628
        %7656 = vmatprep.subr.bf16.mxu0 %v5625
        %7657 = vmatpush2.bf16.msra.mxu0 %v5624
        %7658 = vmatprep.subr.bf16.mxu0 %v5621
        %7659 = vmatpush2.bf16.msra.mxu0 %v5620
        %7660 = vmatprep.subr.bf16.mxu0 %v5617
        %7661 = vmatpush2.bf16.msra.mxu0 %v5616
        %7662 = vmatprep.subr.bf16.mxu0 %v5613
        %7663 = vmatpush2.bf16.msra.mxu0 %v5612
        %7664 = vmatprep.subr.bf16.mxu0 %v5609
        %7665 = vmatpush2.bf16.msra.mxu0 %v5608
        %7666 = vmatprep.subr.bf16.mxu0 %v5605
        %7667 = vmatpush2.bf16.msra.mxu0 %v5604
        %7668 = vmatprep.subr.bf16.mxu0 %v5601
        %7669 = vmatpush2.bf16.msra.mxu0 %v5600
        %7670 = vmatprep.mubr.bf16.mxu0 %v7373
        %7671 = vmatmul.mubr.bf16.gmra.mxu0 %v7372
        %v7672 = vpop.f32.mrf.mxu0
        %v7673 = vadd.f32 %v7632, %v7672
        %v7674 = vpop.f32.mrf.mxu0
        %v7675 = vadd.f32 %v7634, %v7674
        %v7676 = vpop.f32.mrf.mxu0
        %v7677 = vpop.f32.mrf.mxu0
        %7678 = vdwg.mxu0
        %7679 = vmatprep.subr.bf16.mxu0 %v5661
        %7680 = vmatpush1.bf16.msra.mxu0 %v5660
        %7681 = vmatprep.subr.bf16.mxu0 %v5657
        %7682 = vmatpush1.bf16.msra.mxu0 %v5656
        %7683 = vmatprep.subr.bf16.mxu0 %v5653
        %7684 = vmatpush1.bf16.msra.mxu0 %v5652
        %7685 = vmatprep.subr.bf16.mxu0 %v5649
        %7686 = vmatpush1.bf16.msra.mxu0 %v5648
        %7687 = vmatprep.subr.bf16.mxu0 %v5645
        %7688 = vmatpush1.bf16.msra.mxu0 %v5644
        %7689 = vmatprep.subr.bf16.mxu0 %v5641
        %7690 = vmatpush1.bf16.msra.mxu0 %v5640
        %7691 = vmatprep.subr.bf16.mxu0 %v5637
        %7692 = vmatpush1.bf16.msra.mxu0 %v5636
        %7693 = vmatprep.subr.bf16.mxu0 %v5633
        %7694 = vmatpush1.bf16.msra.mxu0 %v5632
        %7695 = vmatprep.subr.bf16.mxu0 %v5693
        %7696 = vmatpush2.bf16.msra.mxu0 %v5692
        %7697 = vmatprep.subr.bf16.mxu0 %v5689
        %7698 = vmatpush2.bf16.msra.mxu0 %v5688
        %7699 = vmatprep.subr.bf16.mxu0 %v5685
        %7700 = vmatpush2.bf16.msra.mxu0 %v5684
        %7701 = vmatprep.subr.bf16.mxu0 %v5681
        %7702 = vmatpush2.bf16.msra.mxu0 %v5680
        %7703 = vmatprep.subr.bf16.mxu0 %v5677
        %7704 = vmatpush2.bf16.msra.mxu0 %v5676
        %7705 = vmatprep.subr.bf16.mxu0 %v5673
        %7706 = vmatpush2.bf16.msra.mxu0 %v5672
        %7707 = vmatprep.subr.bf16.mxu0 %v5669
        %7708 = vmatpush2.bf16.msra.mxu0 %v5668
        %7709 = vmatprep.subr.bf16.mxu0 %v5665
        %7710 = vmatpush2.bf16.msra.mxu0 %v5664
        %7711 = vmatprep.mubr.bf16.mxu0 %v7375
        %7712 = vmatmul.mubr.bf16.gmra.mxu0 %v7374
        %v7713 = vpop.f32.mrf.mxu0
        %v7714 = vadd.f32 %v7673, %v7713
        %v7715 = vpop.f32.mrf.mxu0
        %v7716 = vadd.f32 %v7675, %v7715
        %v7717 = vpop.f32.mrf.mxu0
        %v7718 = vpop.f32.mrf.mxu0
        %7719 = vdwg.mxu0
        %7720 = vmatprep.subr.bf16.mxu0 %v5215
        %7721 = vmatpush1.bf16.msra.mxu0 %v5214
        %7722 = vmatprep.subr.bf16.mxu0 %v5211
        %7723 = vmatpush1.bf16.msra.mxu0 %v5210
        %7724 = vmatprep.subr.bf16.mxu0 %v5207
        %7725 = vmatpush1.bf16.msra.mxu0 %v5206
        %7726 = vmatprep.subr.bf16.mxu0 %v5203
        %7727 = vmatpush1.bf16.msra.mxu0 %v5202
        %7728 = vmatprep.subr.bf16.mxu0 %v5199
        %7729 = vmatpush1.bf16.msra.mxu0 %v5198
        %7730 = vmatprep.subr.bf16.mxu0 %v5195
        %7731 = vmatpush1.bf16.msra.mxu0 %v5194
        %7732 = vmatprep.subr.bf16.mxu0 %v5191
        %7733 = vmatpush1.bf16.msra.mxu0 %v5190
        %7734 = vmatprep.subr.bf16.mxu0 %v5187
        %7735 = vmatpush1.bf16.msra.mxu0 %v5186
        %7736 = vmatprep.subr.bf16.mxu0 %v5247
        %7737 = vmatpush2.bf16.msra.mxu0 %v5246
        %7738 = vmatprep.subr.bf16.mxu0 %v5243
        %7739 = vmatpush2.bf16.msra.mxu0 %v5242
        %7740 = vmatprep.subr.bf16.mxu0 %v5239
        %7741 = vmatpush2.bf16.msra.mxu0 %v5238
        %7742 = vmatprep.subr.bf16.mxu0 %v5235
        %7743 = vmatpush2.bf16.msra.mxu0 %v5234
        %7744 = vmatprep.subr.bf16.mxu0 %v5231
        %7745 = vmatpush2.bf16.msra.mxu0 %v5230
        %7746 = vmatprep.subr.bf16.mxu0 %v5227
        %7747 = vmatpush2.bf16.msra.mxu0 %v5226
        %7748 = vmatprep.subr.bf16.mxu0 %v5223
        %7749 = vmatpush2.bf16.msra.mxu0 %v5222
        %7750 = vmatprep.subr.bf16.mxu0 %v5219
        %7751 = vmatpush2.bf16.msra.mxu0 %v5218
        %7752 = vmatprep.mubr.bf16.mxu0 %v7361
        %7753 = vmatmul.mubr.bf16.gmra.mxu0 %v7360
        %v7754 = vpop.f32.mrf.mxu0
        %v7755 = vadd.f32 %v3232, %v7754
        %v7756 = vpop.f32.mrf.mxu0
        %v7757 = vadd.f32 %v3236, %v7756
        %v7758 = vpop.f32.mrf.mxu0
        %v7759 = vpop.f32.mrf.mxu0
        %7760 = vdwg.mxu0
        %7761 = vmatprep.subr.bf16.mxu0 %v5279
        %7762 = vmatpush1.bf16.msra.mxu0 %v5278
        %7763 = vmatprep.subr.bf16.mxu0 %v5275
        %7764 = vmatpush1.bf16.msra.mxu0 %v5274
        %7765 = vmatprep.subr.bf16.mxu0 %v5271
        %7766 = vmatpush1.bf16.msra.mxu0 %v5270
        %7767 = vmatprep.subr.bf16.mxu0 %v5267
        %7768 = vmatpush1.bf16.msra.mxu0 %v5266
        %7769 = vmatprep.subr.bf16.mxu0 %v5263
        %7770 = vmatpush1.bf16.msra.mxu0 %v5262
        %7771 = vmatprep.subr.bf16.mxu0 %v5259
        %7772 = vmatpush1.bf16.msra.mxu0 %v5258
        %7773 = vmatprep.subr.bf16.mxu0 %v5255
        %7774 = vmatpush1.bf16.msra.mxu0 %v5254
        %7775 = vmatprep.subr.bf16.mxu0 %v5251
        %7776 = vmatpush1.bf16.msra.mxu0 %v5250
        %7777 = vmatprep.subr.bf16.mxu0 %v5311
        %7778 = vmatpush2.bf16.msra.mxu0 %v5310
        %7779 = vmatprep.subr.bf16.mxu0 %v5307
        %7780 = vmatpush2.bf16.msra.mxu0 %v5306
        %7781 = vmatprep.subr.bf16.mxu0 %v5303
        %7782 = vmatpush2.bf16.msra.mxu0 %v5302
        %7783 = vmatprep.subr.bf16.mxu0 %v5299
        %7784 = vmatpush2.bf16.msra.mxu0 %v5298
        %7785 = vmatprep.subr.bf16.mxu0 %v5295
        %7786 = vmatpush2.bf16.msra.mxu0 %v5294
        %7787 = vmatprep.subr.bf16.mxu0 %v5291
        %7788 = vmatpush2.bf16.msra.mxu0 %v5290
        %7789 = vmatprep.subr.bf16.mxu0 %v5287
        %7790 = vmatpush2.bf16.msra.mxu0 %v5286
        %7791 = vmatprep.subr.bf16.mxu0 %v5283
        %7792 = vmatpush2.bf16.msra.mxu0 %v5282
        %7793 = vmatprep.mubr.bf16.mxu0 %v7363
        %7794 = vmatmul.mubr.bf16.gmra.mxu0 %v7362
        %v7795 = vpop.f32.mrf.mxu0
        %v7796 = vadd.f32 %v7755, %v7795
        %v7797 = vpop.f32.mrf.mxu0
        %v7798 = vadd.f32 %v7757, %v7797
        %v7799 = vpop.f32.mrf.mxu0
        %v7800 = vpop.f32.mrf.mxu0
        %7801 = vdwg.mxu0
        %7802 = vmatprep.subr.bf16.mxu0 %v5343
        %7803 = vmatpush1.bf16.msra.mxu0 %v5342
        %7804 = vmatprep.subr.bf16.mxu0 %v5339
        %7805 = vmatpush1.bf16.msra.mxu0 %v5338
        %7806 = vmatprep.subr.bf16.mxu0 %v5335
        %7807 = vmatpush1.bf16.msra.mxu0 %v5334
        %7808 = vmatprep.subr.bf16.mxu0 %v5331
        %7809 = vmatpush1.bf16.msra.mxu0 %v5330
        %7810 = vmatprep.subr.bf16.mxu0 %v5327
        %7811 = vmatpush1.bf16.msra.mxu0 %v5326
        %7812 = vmatprep.subr.bf16.mxu0 %v5323
        %7813 = vmatpush1.bf16.msra.mxu0 %v5322
        %7814 = vmatprep.subr.bf16.mxu0 %v5319
        %7815 = vmatpush1.bf16.msra.mxu0 %v5318
        %7816 = vmatprep.subr.bf16.mxu0 %v5315
        %7817 = vmatpush1.bf16.msra.mxu0 %v5314
        %7818 = vmatprep.subr.bf16.mxu0 %v5375
        %7819 = vmatpush2.bf16.msra.mxu0 %v5374
        %7820 = vmatprep.subr.bf16.mxu0 %v5371
        %7821 = vmatpush2.bf16.msra.mxu0 %v5370
        %7822 = vmatprep.subr.bf16.mxu0 %v5367
        %7823 = vmatpush2.bf16.msra.mxu0 %v5366
        %7824 = vmatprep.subr.bf16.mxu0 %v5363
        %7825 = vmatpush2.bf16.msra.mxu0 %v5362
        %7826 = vmatprep.subr.bf16.mxu0 %v5359
        %7827 = vmatpush2.bf16.msra.mxu0 %v5358
        %7828 = vmatprep.subr.bf16.mxu0 %v5355
        %7829 = vmatpush2.bf16.msra.mxu0 %v5354
        %7830 = vmatprep.subr.bf16.mxu0 %v5351
        %7831 = vmatpush2.bf16.msra.mxu0 %v5350
        %7832 = vmatprep.subr.bf16.mxu0 %v5347
        %7833 = vmatpush2.bf16.msra.mxu0 %v5346
        %7834 = vmatprep.mubr.bf16.mxu0 %v7365
        %7835 = vmatmul.mubr.bf16.gmra.mxu0 %v7364
        %v7836 = vpop.f32.mrf.mxu0
        %v7837 = vadd.f32 %v7796, %v7836
        %v7838 = vpop.f32.mrf.mxu0
        %v7839 = vadd.f32 %v7798, %v7838
        %v7840 = vpop.f32.mrf.mxu0
        %v7841 = vpop.f32.mrf.mxu0
        %7842 = vdwg.mxu0
        %7843 = vmatprep.subr.bf16.mxu0 %v5407
        %7844 = vmatpush1.bf16.msra.mxu0 %v5406
        %7845 = vmatprep.subr.bf16.mxu0 %v5403
        %7846 = vmatpush1.bf16.msra.mxu0 %v5402
        %7847 = vmatprep.subr.bf16.mxu0 %v5399
        %7848 = vmatpush1.bf16.msra.mxu0 %v5398
        %7849 = vmatprep.subr.bf16.mxu0 %v5395
        %7850 = vmatpush1.bf16.msra.mxu0 %v5394
        %7851 = vmatprep.subr.bf16.mxu0 %v5391
        %7852 = vmatpush1.bf16.msra.mxu0 %v5390
        %7853 = vmatprep.subr.bf16.mxu0 %v5387
        %7854 = vmatpush1.bf16.msra.mxu0 %v5386
        %7855 = vmatprep.subr.bf16.mxu0 %v5383
        %7856 = vmatpush1.bf16.msra.mxu0 %v5382
        %7857 = vmatprep.subr.bf16.mxu0 %v5379
        %7858 = vmatpush1.bf16.msra.mxu0 %v5378
        %7859 = vmatprep.subr.bf16.mxu0 %v5439
        %7860 = vmatpush2.bf16.msra.mxu0 %v5438
        %7861 = vmatprep.subr.bf16.mxu0 %v5435
        %7862 = vmatpush2.bf16.msra.mxu0 %v5434
        %7863 = vmatprep.subr.bf16.mxu0 %v5431
        %7864 = vmatpush2.bf16.msra.mxu0 %v5430
        %7865 = vmatprep.subr.bf16.mxu0 %v5427
        %7866 = vmatpush2.bf16.msra.mxu0 %v5426
        %7867 = vmatprep.subr.bf16.mxu0 %v5423
        %7868 = vmatpush2.bf16.msra.mxu0 %v5422
        %7869 = vmatprep.subr.bf16.mxu0 %v5419
        %7870 = vmatpush2.bf16.msra.mxu0 %v5418
        %7871 = vmatprep.subr.bf16.mxu0 %v5415
        %7872 = vmatpush2.bf16.msra.mxu0 %v5414
        %7873 = vmatprep.subr.bf16.mxu0 %v5411
        %7874 = vmatpush2.bf16.msra.mxu0 %v5410
        %7875 = vmatprep.mubr.bf16.mxu0 %v7367
        %7876 = vmatmul.mubr.bf16.gmra.mxu0 %v7366
        %v7877 = vpop.f32.mrf.mxu0
        %v7878 = vadd.f32 %v7837, %v7877
        %v7879 = vpop.f32.mrf.mxu0
        %v7880 = vadd.f32 %v7839, %v7879
        %v7881 = vpop.f32.mrf.mxu0
        %v7882 = vpop.f32.mrf.mxu0
        %7883 = vdwg.mxu0
        %7884 = vmatprep.subr.bf16.mxu0 %v5471
        %7885 = vmatpush1.bf16.msra.mxu0 %v5470
        %7886 = vmatprep.subr.bf16.mxu0 %v5467
        %7887 = vmatpush1.bf16.msra.mxu0 %v5466
        %7888 = vmatprep.subr.bf16.mxu0 %v5463
        %7889 = vmatpush1.bf16.msra.mxu0 %v5462
        %7890 = vmatprep.subr.bf16.mxu0 %v5459
        %7891 = vmatpush1.bf16.msra.mxu0 %v5458
        %7892 = vmatprep.subr.bf16.mxu0 %v5455
        %7893 = vmatpush1.bf16.msra.mxu0 %v5454
        %7894 = vmatprep.subr.bf16.mxu0 %v5451
        %7895 = vmatpush1.bf16.msra.mxu0 %v5450
        %7896 = vmatprep.subr.bf16.mxu0 %v5447
        %7897 = vmatpush1.bf16.msra.mxu0 %v5446
        %7898 = vmatprep.subr.bf16.mxu0 %v5443
        %7899 = vmatpush1.bf16.msra.mxu0 %v5442
        %7900 = vmatprep.subr.bf16.mxu0 %v5503
        %7901 = vmatpush2.bf16.msra.mxu0 %v5502
        %7902 = vmatprep.subr.bf16.mxu0 %v5499
        %7903 = vmatpush2.bf16.msra.mxu0 %v5498
        %7904 = vmatprep.subr.bf16.mxu0 %v5495
        %7905 = vmatpush2.bf16.msra.mxu0 %v5494
        %7906 = vmatprep.subr.bf16.mxu0 %v5491
        %7907 = vmatpush2.bf16.msra.mxu0 %v5490
        %7908 = vmatprep.subr.bf16.mxu0 %v5487
        %7909 = vmatpush2.bf16.msra.mxu0 %v5486
        %7910 = vmatprep.subr.bf16.mxu0 %v5483
        %7911 = vmatpush2.bf16.msra.mxu0 %v5482
        %7912 = vmatprep.subr.bf16.mxu0 %v5479
        %7913 = vmatpush2.bf16.msra.mxu0 %v5478
        %7914 = vmatprep.subr.bf16.mxu0 %v5475
        %7915 = vmatpush2.bf16.msra.mxu0 %v5474
        %7916 = vmatprep.mubr.bf16.mxu0 %v7369
        %7917 = vmatmul.mubr.bf16.gmra.mxu0 %v7368
        %v7918 = vpop.f32.mrf.mxu0
        %v7919 = vadd.f32 %v7878, %v7918
        %v7920 = vpop.f32.mrf.mxu0
        %v7921 = vadd.f32 %v7880, %v7920
        %v7922 = vpop.f32.mrf.mxu0
        %v7923 = vpop.f32.mrf.mxu0
        %7924 = vdwg.mxu0
        %7925 = vmatprep.subr.bf16.mxu0 %v5535
        %7926 = vmatpush1.bf16.msra.mxu0 %v5534
        %7927 = vmatprep.subr.bf16.mxu0 %v5531
        %7928 = vmatpush1.bf16.msra.mxu0 %v5530
        %7929 = vmatprep.subr.bf16.mxu0 %v5527
        %7930 = vmatpush1.bf16.msra.mxu0 %v5526
        %7931 = vmatprep.subr.bf16.mxu0 %v5523
        %7932 = vmatpush1.bf16.msra.mxu0 %v5522
        %7933 = vmatprep.subr.bf16.mxu0 %v5519
        %7934 = vmatpush1.bf16.msra.mxu0 %v5518
        %7935 = vmatprep.subr.bf16.mxu0 %v5515
        %7936 = vmatpush1.bf16.msra.mxu0 %v5514
        %7937 = vmatprep.subr.bf16.mxu0 %v5511
        %7938 = vmatpush1.bf16.msra.mxu0 %v5510
        %7939 = vmatprep.subr.bf16.mxu0 %v5507
        %7940 = vmatpush1.bf16.msra.mxu0 %v5506
        %7941 = vmatprep.subr.bf16.mxu0 %v5567
        %7942 = vmatpush2.bf16.msra.mxu0 %v5566
        %7943 = vmatprep.subr.bf16.mxu0 %v5563
        %7944 = vmatpush2.bf16.msra.mxu0 %v5562
        %7945 = vmatprep.subr.bf16.mxu0 %v5559
        %7946 = vmatpush2.bf16.msra.mxu0 %v5558
        %7947 = vmatprep.subr.bf16.mxu0 %v5555
        %7948 = vmatpush2.bf16.msra.mxu0 %v5554
        %7949 = vmatprep.subr.bf16.mxu0 %v5551
        %7950 = vmatpush2.bf16.msra.mxu0 %v5550
        %7951 = vmatprep.subr.bf16.mxu0 %v5547
        %7952 = vmatpush2.bf16.msra.mxu0 %v5546
        %7953 = vmatprep.subr.bf16.mxu0 %v5543
        %7954 = vmatpush2.bf16.msra.mxu0 %v5542
        %7955 = vmatprep.subr.bf16.mxu0 %v5539
        %7956 = vmatpush2.bf16.msra.mxu0 %v5538
        %7957 = vmatprep.mubr.bf16.mxu0 %v7371
        %7958 = vmatmul.mubr.bf16.gmra.mxu0 %v7370
        %v7959 = vpop.f32.mrf.mxu0
        %v7960 = vadd.f32 %v7919, %v7959
        %v7961 = vpop.f32.mrf.mxu0
        %v7962 = vadd.f32 %v7921, %v7961
        %v7963 = vpop.f32.mrf.mxu0
        %v7964 = vpop.f32.mrf.mxu0
        %7965 = vdwg.mxu0
        %7966 = vmatprep.subr.bf16.mxu0 %v5599
        %7967 = vmatpush1.bf16.msra.mxu0 %v5598
        %7968 = vmatprep.subr.bf16.mxu0 %v5595
        %7969 = vmatpush1.bf16.msra.mxu0 %v5594
        %7970 = vmatprep.subr.bf16.mxu0 %v5591
        %7971 = vmatpush1.bf16.msra.mxu0 %v5590
        %7972 = vmatprep.subr.bf16.mxu0 %v5587
        %7973 = vmatpush1.bf16.msra.mxu0 %v5586
        %7974 = vmatprep.subr.bf16.mxu0 %v5583
        %7975 = vmatpush1.bf16.msra.mxu0 %v5582
        %7976 = vmatprep.subr.bf16.mxu0 %v5579
        %7977 = vmatpush1.bf16.msra.mxu0 %v5578
        %7978 = vmatprep.subr.bf16.mxu0 %v5575
        %7979 = vmatpush1.bf16.msra.mxu0 %v5574
        %7980 = vmatprep.subr.bf16.mxu0 %v5571
        %7981 = vmatpush1.bf16.msra.mxu0 %v5570
        %7982 = vmatprep.subr.bf16.mxu0 %v5631
        %7983 = vmatpush2.bf16.msra.mxu0 %v5630
        %7984 = vmatprep.subr.bf16.mxu0 %v5627
        %7985 = vmatpush2.bf16.msra.mxu0 %v5626
        %7986 = vmatprep.subr.bf16.mxu0 %v5623
        %7987 = vmatpush2.bf16.msra.mxu0 %v5622
        %7988 = vmatprep.subr.bf16.mxu0 %v5619
        %7989 = vmatpush2.bf16.msra.mxu0 %v5618
        %7990 = vmatprep.subr.bf16.mxu0 %v5615
        %7991 = vmatpush2.bf16.msra.mxu0 %v5614
        %7992 = vmatprep.subr.bf16.mxu0 %v5611
        %7993 = vmatpush2.bf16.msra.mxu0 %v5610
        %7994 = vmatprep.subr.bf16.mxu0 %v5607
        %7995 = vmatpush2.bf16.msra.mxu0 %v5606
        %7996 = vmatprep.subr.bf16.mxu0 %v5603
        %7997 = vmatpush2.bf16.msra.mxu0 %v5602
        %7998 = vmatprep.mubr.bf16.mxu0 %v7373
        %7999 = vmatmul.mubr.bf16.gmra.mxu0 %v7372
        %v8000 = vpop.f32.mrf.mxu0
        %v8001 = vadd.f32 %v7960, %v8000
        %v8002 = vpop.f32.mrf.mxu0
        %v8003 = vadd.f32 %v7962, %v8002
        %v8004 = vpop.f32.mrf.mxu0
        %v8005 = vpop.f32.mrf.mxu0
        %8006 = vdwg.mxu0
        %8007 = vmatprep.subr.bf16.mxu0 %v5663
        %8008 = vmatpush1.bf16.msra.mxu0 %v5662
        %8009 = vmatprep.subr.bf16.mxu0 %v5659
        %8010 = vmatpush1.bf16.msra.mxu0 %v5658
        %8011 = vmatprep.subr.bf16.mxu0 %v5655
        %8012 = vmatpush1.bf16.msra.mxu0 %v5654
        %8013 = vmatprep.subr.bf16.mxu0 %v5651
        %8014 = vmatpush1.bf16.msra.mxu0 %v5650
        %8015 = vmatprep.subr.bf16.mxu0 %v5647
        %8016 = vmatpush1.bf16.msra.mxu0 %v5646
        %8017 = vmatprep.subr.bf16.mxu0 %v5643
        %8018 = vmatpush1.bf16.msra.mxu0 %v5642
        %8019 = vmatprep.subr.bf16.mxu0 %v5639
        %8020 = vmatpush1.bf16.msra.mxu0 %v5638
        %8021 = vmatprep.subr.bf16.mxu0 %v5635
        %8022 = vmatpush1.bf16.msra.mxu0 %v5634
        %8023 = vmatprep.subr.bf16.mxu0 %v5695
        %8024 = vmatpush2.bf16.msra.mxu0 %v5694
        %8025 = vmatprep.subr.bf16.mxu0 %v5691
        %8026 = vmatpush2.bf16.msra.mxu0 %v5690
        %8027 = vmatprep.subr.bf16.mxu0 %v5687
        %8028 = vmatpush2.bf16.msra.mxu0 %v5686
        %8029 = vmatprep.subr.bf16.mxu0 %v5683
        %8030 = vmatpush2.bf16.msra.mxu0 %v5682
        %8031 = vmatprep.subr.bf16.mxu0 %v5679
        %8032 = vmatpush2.bf16.msra.mxu0 %v5678
        %8033 = vmatprep.subr.bf16.mxu0 %v5675
        %8034 = vmatpush2.bf16.msra.mxu0 %v5674
        %8035 = vmatprep.subr.bf16.mxu0 %v5671
        %8036 = vmatpush2.bf16.msra.mxu0 %v5670
        %8037 = vmatprep.subr.bf16.mxu0 %v5667
        %8038 = vmatpush2.bf16.msra.mxu0 %v5666
        %8039 = vmatprep.mubr.bf16.mxu0 %v7375
        %8040 = vmatmul.mubr.bf16.gmra.mxu0 %v7374
        %v8041 = vpop.f32.mrf.mxu0
        %v8042 = vadd.f32 %v8001, %v8041
        %v8043 = vpop.f32.mrf.mxu0
        %v8044 = vadd.f32 %v8003, %v8043
        %v8045 = vpop.f32.mrf.mxu0
        %v8046 = vpop.f32.mrf.mxu0
        %8047 = vdwg.mxu0
        %v8048 = vld [vmem:[%s328] sm:$0xf]
        %v8049 = vld [vmem:[%s337] sm:$0xf]
        %v8050 = vrot.slane %v6530, 4
        %v8051 = vadd.f32 %v6530, %v8050
        %v8052 = vrot.slane %v8051, 2
        %v8053 = vadd.f32 %v8051, %v8052
        %v8054 = vrot.slane %v8053, 1
        %v8055 = vadd.f32 %v8053, %v8054
        %v8056 = vrot.slane %v6532, 4
        %v8057 = vadd.f32 %v6532, %v8056
        %v8058 = vrot.slane %v8057, 2
        %v8059 = vadd.f32 %v8057, %v8058
        %v8060 = vrot.slane %v8059, 1
        %v8061 = vadd.f32 %v8059, %v8060
        %v8062 = vrot.slane %v6858, 4
        %v8063 = vadd.f32 %v6858, %v8062
        %v8064 = vrot.slane %v8063, 2
        %v8065 = vadd.f32 %v8063, %v8064
        %v8066 = vrot.slane %v8065, 1
        %v8067 = vadd.f32 %v8065, %v8066
        %v8068 = vrot.slane %v6860, 4
        %v8069 = vadd.f32 %v6860, %v8068
        %v8070 = vrot.slane %v8069, 2
        %v8071 = vadd.f32 %v8069, %v8070
        %v8072 = vrot.slane %v8071, 1
        %v8073 = vadd.f32 %v8071, %v8072
        %v8074 = vrcp.pop 8.0
        %v8075 = vmul.f32 %v8055, %v8074
        %v8076 = vmul.f32 %v8061, %v8074
        %v8077 = vmul.f32 %v8067, %v8074
        %v8078 = vmul.f32 %v8073, %v8074
        %v8079 = vsub.f32 %v6530, %v8075
        %v8080 = vsub.f32 %v6532, %v8076
        %v8081 = vsub.f32 %v6858, %v8077
        %v8082 = vsub.f32 %v6860, %v8078
        %v8083 = vmul.f32 %v8079, %v8079
        %v8084 = vmul.f32 %v8080, %v8080
        %v8085 = vmul.f32 %v8081, %v8081
        %v8086 = vmul.f32 %v8082, %v8082
        %v8087 = vrot.slane %v8083, 4
        %v8088 = vadd.f32 %v8083, %v8087
        %v8089 = vrot.slane %v8088, 2
        %v8090 = vadd.f32 %v8088, %v8089
        %v8091 = vrot.slane %v8090, 1
        %v8092 = vadd.f32 %v8090, %v8091
        %v8093 = vrot.slane %v8084, 4
        %v8094 = vadd.f32 %v8084, %v8093
        %v8095 = vrot.slane %v8094, 2
        %v8096 = vadd.f32 %v8094, %v8095
        %v8097 = vrot.slane %v8096, 1
        %v8098 = vadd.f32 %v8096, %v8097
        %v8099 = vrot.slane %v8085, 4
        %v8100 = vadd.f32 %v8085, %v8099
        %v8101 = vrot.slane %v8100, 2
        %v8102 = vadd.f32 %v8100, %v8101
        %v8103 = vrot.slane %v8102, 1
        %v8104 = vadd.f32 %v8102, %v8103
        %v8105 = vrot.slane %v8086, 4
        %v8106 = vadd.f32 %v8086, %v8105
        %v8107 = vrot.slane %v8106, 2
        %v8108 = vadd.f32 %v8106, %v8107
        %v8109 = vrot.slane %v8108, 1
        %v8110 = vadd.f32 %v8108, %v8109
        %v8111 = vmul.f32 %v8092, %v8074
        %v8112 = vmul.f32 %v8098, %v8074
        %v8113 = vmul.f32 %v8104, %v8074
        %v8114 = vmul.f32 %v8110, %v8074
        %v8115 = vadd.f32 %v8111, 1e-05
        %v8116 = vadd.f32 %v8112, 1e-05
        %v8117 = vadd.f32 %v8113, 1e-05
        %v8118 = vadd.f32 %v8114, 1e-05
        %v8119 = vrsqrt.pop %v8115
        %v8120 = vrsqrt.pop %v8116
        %v8121 = vrsqrt.pop %v8117
        %v8122 = vrsqrt.pop %v8118
        %v8123 = vmul.f32 %v8079, %v8119
        %v8124 = vmul.f32 %v8080, %v8120
        %v8125 = vmul.f32 %v8081, %v8121
        %v8126 = vmul.f32 %v8082, %v8122
        %v8128 = vlaneseq
        %v8129 = vshrl.u32 %v8128, 7
        %v8130 = vsub.s32 0, %v8129
        %v8131 = vrot.slane %v8048, %v8130
        %v8132 = vlaneseq
        %v8133 = vshrl.u32 %v8132, 7
        %v8134 = vsub.s32 1, %v8133
        %v8135 = vrot.slane %v8048, %v8134
        %v8136 = vlaneseq
        %v8137 = vshrl.u32 %v8136, 7
        %v8138 = vsub.s32 2, %v8137
        %v8139 = vrot.slane %v8048, %v8138
        %v8140 = vlaneseq
        %v8141 = vshrl.u32 %v8140, 7
        %v8142 = vsub.s32 3, %v8141
        %v8143 = vrot.slane %v8048, %v8142
        %v8148 = vmul.f32 %v8123, %v8131
        %v8149 = vmul.f32 %v8124, %v8135
        %v8150 = vmul.f32 %v8125, %v8139
        %v8151 = vmul.f32 %v8126, %v8143
        %v8153 = vlaneseq
        %v8154 = vshrl.u32 %v8153, 7
        %v8155 = vsub.s32 0, %v8154
        %v8156 = vrot.slane %v8049, %v8155
        %v8157 = vlaneseq
        %v8158 = vshrl.u32 %v8157, 7
        %v8159 = vsub.s32 1, %v8158
        %v8160 = vrot.slane %v8049, %v8159
        %v8161 = vlaneseq
        %v8162 = vshrl.u32 %v8161, 7
        %v8163 = vsub.s32 2, %v8162
        %v8164 = vrot.slane %v8049, %v8163
        %v8165 = vlaneseq
        %v8166 = vshrl.u32 %v8165, 7
        %v8167 = vsub.s32 3, %v8166
        %v8168 = vrot.slane %v8049, %v8167
        %v8173 = vadd.f32 %v8148, %v8156
        %v8174 = vadd.f32 %v8149, %v8160
        %v8175 = vadd.f32 %v8150, %v8164
        %v8176 = vadd.f32 %v8151, %v8168
        %v8177 = vmax.f32 %v8173, 0.0
        %v8178 = vmax.f32 %v8174, 0.0
        %v8179 = vmax.f32 %v8175, 0.0
        %v8180 = vmax.f32 %v8176, 0.0
        %8181 = vst [vmem:[%s394] sm:$0xff] %v8177
        %8182 = vst [vmem:[%s394 + $0x8] sm:$0xff] %v8178
        %8183 = vst [vmem:[%s394 + $0x10] sm:$0xff] %v8179
        %8184 = vst [vmem:[%s394 + $0x18] sm:$0xff] %v8180
        %v8185 = vrot.slane %v7714, 4
        %v8186 = vadd.f32 %v7714, %v8185
        %v8187 = vrot.slane %v8186, 2
        %v8188 = vadd.f32 %v8186, %v8187
        %v8189 = vrot.slane %v8188, 1
        %v8190 = vadd.f32 %v8188, %v8189
        %v8191 = vrot.slane %v7716, 4
        %v8192 = vadd.f32 %v7716, %v8191
        %v8193 = vrot.slane %v8192, 2
        %v8194 = vadd.f32 %v8192, %v8193
        %v8195 = vrot.slane %v8194, 1
        %v8196 = vadd.f32 %v8194, %v8195
        %v8197 = vrot.slane %v8042, 4
        %v8198 = vadd.f32 %v8042, %v8197
        %v8199 = vrot.slane %v8198, 2
        %v8200 = vadd.f32 %v8198, %v8199
        %v8201 = vrot.slane %v8200, 1
        %v8202 = vadd.f32 %v8200, %v8201
        %v8203 = vrot.slane %v8044, 4
        %v8204 = vadd.f32 %v8044, %v8203
        %v8205 = vrot.slane %v8204, 2
        %v8206 = vadd.f32 %v8204, %v8205
        %v8207 = vrot.slane %v8206, 1
        %v8208 = vadd.f32 %v8206, %v8207
        %v8209 = vmul.f32 %v8190, %v8074
        %v8210 = vmul.f32 %v8196, %v8074
        %v8211 = vmul.f32 %v8202, %v8074
        %v8212 = vmul.f32 %v8208, %v8074
        %v8213 = vsub.f32 %v7714, %v8209
        %v8214 = vsub.f32 %v7716, %v8210
        %v8215 = vsub.f32 %v8042, %v8211
        %v8216 = vsub.f32 %v8044, %v8212
        %v8217 = vmul.f32 %v8213, %v8213
        %v8218 = vmul.f32 %v8214, %v8214
        %v8219 = vmul.f32 %v8215, %v8215
        %v8220 = vmul.f32 %v8216, %v8216
        %v8221 = vrot.slane %v8217, 4
        %v8222 = vadd.f32 %v8217, %v8221
        %v8223 = vrot.slane %v8222, 2
        %v8224 = vadd.f32 %v8222, %v8223
        %v8225 = vrot.slane %v8224, 1
        %v8226 = vadd.f32 %v8224, %v8225
        %v8227 = vrot.slane %v8218, 4
        %v8228 = vadd.f32 %v8218, %v8227
        %v8229 = vrot.slane %v8228, 2
        %v8230 = vadd.f32 %v8228, %v8229
        %v8231 = vrot.slane %v8230, 1
        %v8232 = vadd.f32 %v8230, %v8231
        %v8233 = vrot.slane %v8219, 4
        %v8234 = vadd.f32 %v8219, %v8233
        %v8235 = vrot.slane %v8234, 2
        %v8236 = vadd.f32 %v8234, %v8235
        %v8237 = vrot.slane %v8236, 1
        %v8238 = vadd.f32 %v8236, %v8237
        %v8239 = vrot.slane %v8220, 4
        %v8240 = vadd.f32 %v8220, %v8239
        %v8241 = vrot.slane %v8240, 2
        %v8242 = vadd.f32 %v8240, %v8241
        %v8243 = vrot.slane %v8242, 1
        %v8244 = vadd.f32 %v8242, %v8243
        %v8245 = vmul.f32 %v8226, %v8074
        %v8246 = vmul.f32 %v8232, %v8074
        %v8247 = vmul.f32 %v8238, %v8074
        %v8248 = vmul.f32 %v8244, %v8074
        %v8249 = vadd.f32 %v8245, 1e-05
        %v8250 = vadd.f32 %v8246, 1e-05
        %v8251 = vadd.f32 %v8247, 1e-05
        %v8252 = vadd.f32 %v8248, 1e-05
        %v8253 = vrsqrt.pop %v8249
        %v8254 = vrsqrt.pop %v8250
        %v8255 = vrsqrt.pop %v8251
        %v8256 = vrsqrt.pop %v8252
        %v8257 = vmul.f32 %v8213, %v8253
        %v8258 = vmul.f32 %v8214, %v8254
        %v8259 = vmul.f32 %v8215, %v8255
        %v8260 = vmul.f32 %v8216, %v8256
        %v8261 = vmul.f32 %v8257, %v8131
        %v8262 = vmul.f32 %v8258, %v8135
        %v8263 = vmul.f32 %v8259, %v8139
        %v8264 = vmul.f32 %v8260, %v8143
        %v8265 = vadd.f32 %v8261, %v8156
        %v8266 = vadd.f32 %v8262, %v8160
        %v8267 = vadd.f32 %v8263, %v8164
        %v8268 = vadd.f32 %v8264, %v8168
        %v8269 = vmax.f32 %v8265, 0.0
        %v8270 = vmax.f32 %v8266, 0.0
        %v8271 = vmax.f32 %v8267, 0.0
        %v8272 = vmax.f32 %v8268, 0.0
        %8273 = vst [vmem:[%s400] sm:$0xff] %v8269
        %8274 = vst [vmem:[%s400 + $0x8] sm:$0xff] %v8270
        %8275 = vst [vmem:[%s400 + $0x10] sm:$0xff] %v8271
        %8276 = vst [vmem:[%s400 + $0x18] sm:$0xff] %v8272
        %s8277 = smul.u32 4, %s27
        %p8278 = scmp.lt.s32.totalorder %s8277, 7
        %s8279 = scalar_select %p8278, %s8277, 7
        %s8280 = smul.addr %s8279, 8
        %s8281 = scalar_lea.vmem %s5, %s8280
        %s8282 = smul.u32 4, %s27
        %p8283 = scmp.lt.s32.totalorder %s8282, 7
        %s8284 = scalar_select %p8283, %s8282, 7
        %s8285 = smul.addr %s8284, 8
        %s8286 = scalar_lea.vmem %s6, %s8285
        // Predicated region
        $region57: #{avgmax_share_cat_forward.1} parent=39 // pred_check
          %p8287 = pneg %p170
        $region58: #{avgmax_share_cat_forward.1} parent=39 // pred_check_branch
          %8289 = sbr.rel (%p8287) target = $region60
        $region59: #{avgmax_share_cat_forward.1} parent=39 // pred_region
          %s8290 = smul.u32 4, %s27
        $region60: #{avgmax_share_cat_forward.1} parent=39 // pred_fallthru
          _
        // Predicated region
        $region61: #{avgmax_share_cat_forward.1} parent=39 // pred_check
          %p8291 = pneg %p196
        $region62: #{avgmax_share_cat_forward.1} parent=39 // pred_check_branch
          %8293 = sbr.rel (%p8291) target = $region64
        $region63: #{avgmax_share_cat_forward.1} parent=39 // pred_region
          %s8294 = smul.u32 4, %s27
        $region64: #{avgmax_share_cat_forward.1} parent=39 // pred_fallthru
          _
      $region40: #{avgmax_share_cat_forward.1} parent=5 // pred_fallthru
        _
      %p8295 = scmp.le.s32.totalorder 2, %s22
      // Predicated region
      $region65: #{avgmax_share_cat_forward.1} parent=5 // pred_check
        %p8296 = pneg %p8295
      $region66: #{avgmax_share_cat_forward.1} parent=5 // pred_check_branch
        %8298 = sbr.rel (%p8296) target = $region68
      $region67: #{avgmax_share_cat_forward.1} parent=5 // pred_region
        %s8299 = ssub.s32 %s22, 2
        // Predicated region
        $region69: #{avgmax_share_cat_forward.1} parent=67 // pred_check
          %p8300 = pneg %p176
        $region70: #{avgmax_share_cat_forward.1} parent=67 // pred_check_branch
          %8302 = sbr.rel (%p8300) target = $region72
        $region71: #{avgmax_share_cat_forward.1} parent=67 // pred_region
          %s8303 = smul.u32 4, %s28
          %p8304 = scmp.lt.s32.totalorder %s8303, 7
          %s8305 = scalar_select %p8304, %s8303, 7
          %s8306 = smul.addr %s8305, 8
          %s8307 = scalar_lea.vmem %s5, %s8306
        $region72: #{avgmax_share_cat_forward.1} parent=67 // pred_fallthru
          _
        // Predicated region
        $region73: #{avgmax_share_cat_forward.1} parent=67 // pred_check
          %p8308 = pneg %p202
        $region74: #{avgmax_share_cat_forward.1} parent=67 // pred_check_branch
          %8310 = sbr.rel (%p8308) target = $region76
        $region75: #{avgmax_share_cat_forward.1} parent=67 // pred_region
          %s8311 = smul.u32 4, %s28
          %p8312 = scmp.lt.s32.totalorder %s8311, 7
          %s8313 = scalar_select %p8312, %s8311, 7
          %s8314 = smul.addr %s8313, 8
          %s8315 = scalar_lea.vmem %s6, %s8314
        $region76: #{avgmax_share_cat_forward.1} parent=67 // pred_fallthru
          _
      $region68: #{avgmax_share_cat_forward.1} parent=5 // pred_fallthru
        _
    $region6: #{avgmax_share_cat_forward.1} parent=1 // loop_footer
      %s26 = sadd.s32 1, %s22
    $region7: #{avgmax_share_cat_forward.1} parent=1 // loop_footer_branch
      %21 = sbr.rel target = $region3
    $region8: #{avgmax_share_cat_forward.1} parent=1 // loop_exit
      _
    %8316 = vsyncpa [#allocation3], 1
    %s8317 = scalar_lea.sflag [#allocation3], 1
    %8318 = vsyncpa %s8317, 1
    %8319 = vsyncpa [#allocation5], 1
    %s8320 = scalar_lea.sflag [#allocation5], 1
    %8321 = vsyncpa %s8320, 1
    %8322 = vsyncpa [#allocation8], 1
    %s8323 = scalar_lea.sflag [#allocation8], 1
    %8324 = vsyncpa %s8323, 1

</llo_original>
